<compile_context>
chip_gen: v7x
topology: tpu7x:2x2x1
jax: 0.10.0
libtpu: 0.0.40
codegen_flags: <defaults>
</compile_context>

<pallas_src>
import functools
import math

import jax
import jax.numpy as jnp
from jax import lax
from jax.experimental import pallas as pl
from jax.experimental.pallas import tpu as pltpu

_LN_EPS = 1e-5


# ----------------------------------------------------------------------------
# Small helpers
# ----------------------------------------------------------------------------

def _layernorm(z, gamma, beta, eps):
    """Row-wise LayerNorm over the last (lane) dim; gamma/beta are (1, D)."""
    mu = jnp.mean(z, axis=-1, keepdims=True)
    var = jnp.mean((z - mu) * (z - mu), axis=-1, keepdims=True)
    return (z - mu) * lax.rsqrt(var + eps) * gamma + beta


def _split_w_out(w, n_heads):
    """(E_in, E_out) -> (H, E_in, dh): head h = output columns [h*dh, (h+1)*dh)."""
    e_in, e_out = w.shape
    dh = e_out // n_heads
    return w.reshape(e_in, n_heads, dh).transpose(1, 0, 2)


def _split_w_in(w, n_heads):
    """(E_in, E_out) -> (H, dh, E_out): head h = input rows [h*dh, (h+1)*dh)."""
    e_in, e_out = w.shape
    dh = e_in // n_heads
    return w.reshape(n_heads, dh, e_out)


def _split_b(b, n_heads):
    """(E,) -> (H, 1, dh)."""
    dh = b.shape[0] // n_heads
    return b.reshape(n_heads, 1, dh)


# ----------------------------------------------------------------------------
# Fused attention block:  LayerNorm(x + OutProj(MHA(x, kv_src)))
# ----------------------------------------------------------------------------

def _attn_block_kernel(x_ref, kv_ref,
                       wq_ref, bq_ref, wk_ref, bk_ref, wv_ref, bv_ref,
                       wo_ref, bo_ref, g_ref, bt_ref,
                       o_ref, *, n_heads, causal, eps):
    x = x_ref[0]                        # (T, E) — query source (and residual)
    src = kv_ref[0]                     # (S, E) — key/value source
    T, E = x.shape
    S = src.shape[0]
    dh = E // n_heads
    scale = 1.0 / math.sqrt(dh)

    if causal:
        row = lax.broadcasted_iota(jnp.int32, (T, S), 0)
        col = lax.broadcasted_iota(jnp.int32, (T, S), 1)
        allow = row >= col              # tril mask, built in-kernel (no DMA)

    proj = jnp.zeros((T, E), jnp.float32)
    for h in range(n_heads):            # static unroll over heads
        qh = jnp.dot(x, wq_ref[h], preferred_element_type=jnp.float32) + bq_ref[h]
        kh = jnp.dot(src, wk_ref[h], preferred_element_type=jnp.float32) + bk_ref[h]
        vh = jnp.dot(src, wv_ref[h], preferred_element_type=jnp.float32) + bv_ref[h]
        s = lax.dot_general(qh, kh, (((1,), (1,)), ((), ())),
                            preferred_element_type=jnp.float32) * scale   # (T, S)
        if causal:
            s = jnp.where(allow, s, -1e30)
        m = jnp.max(s, axis=-1, keepdims=True)
        e = jnp.exp(s - m)
        p = e * pl.reciprocal(jnp.sum(e, axis=-1, keepdims=True), approx=True)
        oh = jnp.dot(p, vh, preferred_element_type=jnp.float32)           # (T, dh)
        # Accumulate this head's contribution to the output projection:
        # equivalent to concat(heads) @ W_o, but stays lane-dense (T, E).
        proj = proj + jnp.dot(oh, wo_ref[h], preferred_element_type=jnp.float32)
    proj = proj + bo_ref[...]

    z = x + proj                                                          # residual
    o_ref[0] = _layernorm(z, g_ref[...], bt_ref[...], eps).astype(o_ref.dtype)


def attention_block(x, kv_src, ap, gamma, beta, n_heads, causal):
    """x: (N, T, E) queries/residual, kv_src: (N, S, E) keys/values."""
    N, T, E = x.shape
    S = kv_src.shape[1]
    dh = E // n_heads

    wq, bq = _split_w_out(ap["q_w"], n_heads), _split_b(ap["q_b"], n_heads)
    wk, bk = _split_w_out(ap["k_w"], n_heads), _split_b(ap["k_b"], n_heads)
    wv, bv = _split_w_out(ap["v_w"], n_heads), _split_b(ap["v_b"], n_heads)
    wo = _split_w_in(ap["o_w"], n_heads)

    kern = functools.partial(_attn_block_kernel, n_heads=n_heads,
                             causal=causal, eps=_LN_EPS)
    full2 = lambda i: (0, 0)
    full3 = lambda i: (0, 0, 0)
    return pl.pallas_call(
        kern,
        out_shape=jax.ShapeDtypeStruct((N, T, E), x.dtype),
        grid=(N,),
        in_specs=[
            pl.BlockSpec((1, T, E), lambda i: (i, 0, 0)),
            pl.BlockSpec((1, S, E), lambda i: (i, 0, 0)),
            pl.BlockSpec((n_heads, E, dh), full3),
            pl.BlockSpec((n_heads, 1, dh), full3),
            pl.BlockSpec((n_heads, E, dh), full3),
            pl.BlockSpec((n_heads, 1, dh), full3),
            pl.BlockSpec((n_heads, E, dh), full3),
            pl.BlockSpec((n_heads, 1, dh), full3),
            pl.BlockSpec((n_heads, dh, E), full3),
            pl.BlockSpec((1, E), full2),
            pl.BlockSpec((1, E), full2),
            pl.BlockSpec((1, E), full2),
        ],
        out_specs=pl.BlockSpec((1, T, E), lambda i: (i, 0, 0)),
        compiler_params=pltpu.CompilerParams(dimension_semantics=("parallel",)),
    )(x, kv_src, wq, bq, wk, bk, wv, bv, wo,
      ap["o_b"].reshape(1, E), gamma.reshape(1, E), beta.reshape(1, E))


# ----------------------------------------------------------------------------
# Fused feed-forward block:  LayerNorm(x + W2 @ relu(W1 @ x + b1) + b2)
# ----------------------------------------------------------------------------

def _ffn_block_kernel(x_ref, w1_ref, b1_ref, w2_ref, b2_ref, g_ref, bt_ref,
                      o_ref, *, eps):
    x = x_ref[...]                                                     # (tm, E)
    h = jnp.dot(x, w1_ref[...], preferred_element_type=jnp.float32) + b1_ref[...]
    h = jnp.maximum(h, 0.0)
    y = jnp.dot(h, w2_ref[...], preferred_element_type=jnp.float32) + b2_ref[...]
    z = x + y
    o_ref[...] = _layernorm(z, g_ref[...], bt_ref[...], eps).astype(o_ref.dtype)


def ffn_block(x, w1, b1, w2, b2, gamma, beta, row_tile=256):
    N, T, E = x.shape
    M = N * T
    D = w1.shape[1]
    tm = M if M <= row_tile else row_tile          # row_tile is a multiple of 8
    xm = x.reshape(M, E)
    full2 = lambda i: (0, 0)
    out = pl.pallas_call(
        functools.partial(_ffn_block_kernel, eps=_LN_EPS),
        out_shape=jax.ShapeDtypeStruct((M, E), x.dtype),
        grid=(pl.cdiv(M, tm),),
        in_specs=[
            pl.BlockSpec((tm, E), lambda i: (i, 0)),
            pl.BlockSpec((E, D), full2),
            pl.BlockSpec((1, D), full2),
            pl.BlockSpec((D, E), full2),
            pl.BlockSpec((1, E), full2),
            pl.BlockSpec((1, E), full2),
            pl.BlockSpec((1, E), full2),
        ],
        out_specs=pl.BlockSpec((tm, E), lambda i: (i, 0)),
        compiler_params=pltpu.CompilerParams(dimension_semantics=("parallel",)),
    )(xm, w1, b1.reshape(1, D), w2, b2.reshape(1, E),
      gamma.reshape(1, E), beta.reshape(1, E))
    return out.reshape(N, T, E)


# ----------------------------------------------------------------------------
# Tiled linear (visual projection, vocab head)
# ----------------------------------------------------------------------------

def _linear_kernel(x_ref, w_ref, b_ref, o_ref, *, relu):
    y = jnp.dot(x_ref[...], w_ref[...], preferred_element_type=jnp.float32)
    y = y + b_ref[...]
    if relu:
        y = jnp.maximum(y, 0.0)
    o_ref[...] = y.astype(o_ref.dtype)


def linear(x, w, b, relu=False, row_tile=256, col_tile=512):
    """y = x @ w + b.  Tiled over (M, N); K (small) kept whole."""
    M, K = x.shape
    N = w.shape[1]
    tm = M if M <= row_tile else row_tile          # multiple of 8 or full dim
    tn = N if N <= col_tile else col_tile          # multiple of 128 or full dim
    return pl.pallas_call(
        functools.partial(_linear_kernel, relu=relu),
        out_shape=jax.ShapeDtypeStruct((M, N), x.dtype),
        grid=(pl.cdiv(M, tm), pl.cdiv(N, tn)),
        in_specs=[
            pl.BlockSpec((tm, K), lambda i, j: (i, 0)),
            pl.BlockSpec((K, tn), lambda i, j: (0, j)),
            pl.BlockSpec((1, tn), lambda i, j: (0, j)),
        ],
        out_specs=pl.BlockSpec((tm, tn), lambda i, j: (i, j)),
        compiler_params=pltpu.CompilerParams(
            dimension_semantics=("parallel", "parallel")),
    )(x, w, b.reshape(1, N))


# ----------------------------------------------------------------------------
# Model composition (glue in plain JAX, compute in the fused kernels above)
# ----------------------------------------------------------------------------

def sinusoidal_pe(max_len, dim):
    pos = jnp.arange(max_len, dtype=jnp.float32)[:, None]
    i = jnp.arange(0, dim, 2, dtype=jnp.float32)
    div = jnp.exp(-math.log(10000.0) * i / dim)
    pe = jnp.zeros((max_len, dim), jnp.float32)
    pe = pe.at[:, 0::2].set(jnp.sin(pos * div))
    pe = pe.at[:, 1::2].set(jnp.cos(pos * div))
    return pe


def decoder_layer(p, x, memory, n_heads):
    x = attention_block(x, x, p["self_attn"], p["ln1_g"], p["ln1_b"],
                        n_heads, causal=True)
    x = attention_block(x, memory, p["enc_attn"], p["ln2_g"], p["ln2_b"],
                        n_heads, causal=False)
    x = ffn_block(x, p["ff1_w"], p["ff1_b"], p["ff2_w"], p["ff2_b"],
                  p["ln3_g"], p["ln3_b"])
    return x


def captioning_transformer_forward(params, features, captions, n_heads, max_len=50):
    """features: (N, input_dim) f32, captions: (N, T) int32 -> scores (N, T, vocab)."""
    N, T = captions.shape
    if T > max_len:
        raise ValueError(f"sequence length {T} exceeds max_len {max_len}")
    W = params["embedding"].shape[1]
    vocab = params["out_w"].shape[1]

    cap_emb = jnp.take(params["embedding"], captions, axis=0)          # (N, T, W)
    cap_emb = cap_emb + sinusoidal_pe(max_len, W)[None, :T, :]

    memory = linear(features, params["vp_w"], params["vp_b"])[:, None, :]  # (N, 1, W)

    x = cap_emb
    for lp in params["layers"]:
        x = decoder_layer(lp, x, memory, n_heads)

    scores = linear(x.reshape(N * T, W), params["out_w"], params["out_b"])
    return scores.reshape(N, T, vocab)


# ----------------------------------------------------------------------------
# Deterministic parameter initialization (matches shapes of the nn.Module)
# ----------------------------------------------------------------------------

def init_params(key, vocab_size, input_dim, wordvec_dim, n_heads, n_layers,
                dense_dim=2048):
    keys = iter(jax.random.split(key, 256))

    def lin(k_in, k_out, bias_val=1.0):
        w = jax.random.normal(next(keys), (k_in, k_out), jnp.float32) * 0.02
        b = jnp.full((k_out,), bias_val, jnp.float32)
        return w, b

    params = {}
    params["vp_w"], params["vp_b"] = lin(input_dim, wordvec_dim)        # visual_proj
    params["embedding"] = (jax.random.normal(next(keys),
                                             (vocab_size, wordvec_dim),
                                             jnp.float32) * 0.02)

    layers = []
    for _ in range(n_layers):
        lp = {}
        for name in ("self_attn", "enc_attn"):
            ap = {}
            for pref in ("q", "k", "v", "o"):
                ap[pref + "_w"], ap[pref + "_b"] = lin(wordvec_dim, wordvec_dim)
            lp[name] = ap
        lp["ff1_w"], lp["ff1_b"] = lin(wordvec_dim, dense_dim)
        lp["ff2_w"], lp["ff2_b"] = lin(dense_dim, wordvec_dim)
        for i in (1, 2, 3):
            lp[f"ln{i}_g"] = jnp.ones((wordvec_dim,), jnp.float32)
            lp[f"ln{i}_b"] = jnp.zeros((wordvec_dim,), jnp.float32)
        layers.append(lp)
    params["layers"] = layers

    # output head (created after self.apply in the original module)
    params["out_w"], params["out_b"] = lin(wordvec_dim, vocab_size, bias_val=0.0)
    return params


# ----------------------------------------------------------------------------

if __name__ == "__main__":
    key = jax.random.PRNGKey(0)
    k_param, k_feat, k_cap = jax.random.split(key, 3)

    # small, module-consistent shapes
    vocab_size = 16            # len(word_to_idx), includes <NULL>/<START>/<END>
    input_dim = 16             # visual feature dim
    wordvec_dim = 32
    n_heads = 4
    n_layers = 2
    batch, seq = 2, 8
    max_len = 50

    params = init_params(k_param, vocab_size, input_dim, wordvec_dim,
                         n_heads, n_layers, dense_dim=2048)

    features = jax.random.normal(k_feat, (batch, input_dim), jnp.float32)
    captions = jax.random.randint(k_cap, (batch, seq), 0, vocab_size, jnp.int32)

    fwd = jax.jit(functools.partial(captioning_transformer_forward,
                                    n_heads=n_heads, max_len=max_len))
    scores = fwd(params, features, captions)
    jax.block_until_ready(scores)

    assert scores.shape == (batch, seq, vocab_size)
    assert bool(jnp.all(jnp.isfinite(scores)))
    print("KERNEL_OK")
</pallas_src>

<mosaic_0001>
module attributes {stable_mosaic.version = 11 : i64} {
  func.func @_linear_kernel(%arg0: i32, %arg1: i32, %arg2: memref<2x16xf32, #tpu.memory_space<vmem>>, %arg3: memref<16x32xf32, #tpu.memory_space<vmem>>, %arg4: memref<1x32xf32, #tpu.memory_space<vmem>>, %arg5: memref<2x32xf32, #tpu.memory_space<vmem>>) attributes {dimension_semantics = [#tpu.dimension_semantics<parallel>, #tpu.dimension_semantics<parallel>], iteration_bounds = array<i64: 1, 1>, scalar_prefetch = 0 : i64, scratch_operands = 0 : i64, tpu.core_type = #tpu.core_type<tc>, window_params = [{transform_indices = @transform_0, window_bounds = array<i64: 2, 16>}, {transform_indices = @transform_1, window_bounds = array<i64: 16, 32>}, {transform_indices = @transform_2, window_bounds = array<i64: 1, 32>}, {transform_indices = @transform_3, window_bounds = array<i64: 2, 32>}]} {
    %c0 = arith.constant 0 : index
    %c0_0 = arith.constant 0 : index
    %0 = vector.load %arg2[%c0, %c0_0] : memref<2x16xf32, #tpu.memory_space<vmem>>, vector<2x16xf32>
    %c0_1 = arith.constant 0 : index
    %c0_2 = arith.constant 0 : index
    %1 = vector.load %arg3[%c0_1, %c0_2] : memref<16x32xf32, #tpu.memory_space<vmem>>, vector<16x32xf32>
    %cst = arith.constant dense<0.000000e+00> : vector<2x32xf32>
    %2 = tpu.matmul %0, %1, %cst {dimension_numbers = #tpu.dot_dimension_numbers<[1], [0], [0], [1], [0, 0, 1, 1], [], []>} : vector<2x16xf32>, vector<16x32xf32>, vector<2x32xf32> -> vector<2x32xf32>
    %c0_3 = arith.constant 0 : index
    %c0_4 = arith.constant 0 : index
    %3 = vector.load %arg4[%c0_3, %c0_4] : memref<1x32xf32, #tpu.memory_space<vmem>>, vector<1x32xf32>
    %4 = vector.broadcast %3 : vector<1x32xf32> to vector<2x32xf32>
    %5 = arith.addf %2, %4 : vector<2x32xf32>
    %c0_5 = arith.constant 0 : index
    %c0_6 = arith.constant 0 : index
    %6 = vector.load %arg5[%c0_5, %c0_6] : memref<2x32xf32, #tpu.memory_space<vmem>>, vector<2x32xf32>
    tpu.vector_store %arg5[%c0_5, %c0_6], %5 {strides = array<i32>} : memref<2x32xf32, #tpu.memory_space<vmem>>, vector<2x32xf32>,
    return
  }
  func.func @transform_0(%arg0: i32, %arg1: i32) -> (i32, i32) {
    %c0_i32 = arith.constant 0 : i32
    %c0_i32_0 = arith.constant 0 : i32
    return %arg0, %c0_i32 : i32, i32
  }
  func.func @transform_1(%arg0: i32, %arg1: i32) -> (i32, i32) {
    %c0_i32 = arith.constant 0 : i32
    %c0_i32_0 = arith.constant 0 : i32
    return %c0_i32, %arg1 : i32, i32
  }
  func.func @transform_2(%arg0: i32, %arg1: i32) -> (i32, i32) {
    %c0_i32 = arith.constant 0 : i32
    %c0_i32_0 = arith.constant 0 : i32
    return %c0_i32, %arg1 : i32, i32
  }
  func.func @transform_3(%arg0: i32, %arg1: i32) -> (i32, i32) {
    %c0_i32 = arith.constant 0 : i32
    return %arg0, %arg1 : i32, i32
  }
}

module attributes {stable_mosaic.version = 11 : i64} {
  func.func @_attn_block_kernel(%arg0: i32, %arg1: memref<1x8x32xf32, #tpu.memory_space<vmem>>, %arg2: memref<1x1x32xf32, #tpu.memory_space<vmem>>, %arg3: memref<4x32x8xf32, #tpu.memory_space<vmem>>, %arg4: memref<4x1x8xf32, #tpu.memory_space<vmem>>, %arg5: memref<4x32x8xf32, #tpu.memory_space<vmem>>, %arg6: memref<4x1x8xf32, #tpu.memory_space<vmem>>, %arg7: memref<4x32x8xf32, #tpu.memory_space<vmem>>, %arg8: memref<4x1x8xf32, #tpu.memory_space<vmem>>, %arg9: memref<4x8x32xf32, #tpu.memory_space<vmem>>, %arg10: memref<1x32xf32, #tpu.memory_space<vmem>>, %arg11: memref<1x32xf32, #tpu.memory_space<vmem>>, %arg12: memref<1x32xf32, #tpu.memory_space<vmem>>, %arg13: memref<1x8x32xf32, #tpu.memory_space<vmem>>) attributes {dimension_semantics = [#tpu.dimension_semantics<parallel>], iteration_bounds = array<i64: 2>, scalar_prefetch = 0 : i64, scratch_operands = 0 : i64, tpu.core_type = #tpu.core_type<tc>, window_params = [{transform_indices = @transform_0, window_bounds = array<i64: 1, 8, 32>}, {transform_indices = @transform_1, window_bounds = array<i64: 1, 1, 32>}, {pipeline_mode = #tpu.pipeline_mode<synchronous>, transform_indices = @transform_2, window_bounds = array<i64: 4, 32, 8>}, {pipeline_mode = #tpu.pipeline_mode<synchronous>, transform_indices = @transform_3, window_bounds = array<i64: 4, 1, 8>}, {pipeline_mode = #tpu.pipeline_mode<synchronous>, transform_indices = @transform_4, window_bounds = array<i64: 4, 32, 8>}, {pipeline_mode = #tpu.pipeline_mode<synchronous>, transform_indices = @transform_5, window_bounds = array<i64: 4, 1, 8>}, {pipeline_mode = #tpu.pipeline_mode<synchronous>, transform_indices = @transform_6, window_bounds = array<i64: 4, 32, 8>}, {pipeline_mode = #tpu.pipeline_mode<synchronous>, transform_indices = @transform_7, window_bounds = array<i64: 4, 1, 8>}, {pipeline_mode = #tpu.pipeline_mode<synchronous>, transform_indices = @transform_8, window_bounds = array<i64: 4, 8, 32>}, {pipeline_mode = #tpu.pipeline_mode<synchronous>, transform_indices = @transform_9, window_bounds = array<i64: 1, 32>}, {pipeline_mode = #tpu.pipeline_mode<synchronous>, transform_indices = @transform_10, window_bounds = array<i64: 1, 32>}, {pipeline_mode = #tpu.pipeline_mode<synchronous>, transform_indices = @transform_11, window_bounds = array<i64: 1, 32>}, {transform_indices = @transform_12, window_bounds = array<i64: 1, 8, 32>}]} {
    %c0 = arith.constant 0 : index
    %c0_0 = arith.constant 0 : index
    %c0_1 = arith.constant 0 : index
    %0 = vector.load %arg1[%c0, %c0_0, %c0_1] : memref<1x8x32xf32, #tpu.memory_space<vmem>>, vector<1x8x32xf32>
    %1 = vector.shape_cast %0 : vector<1x8x32xf32> to vector<8x32xf32>
    %c0_2 = arith.constant 0 : index
    %c0_3 = arith.constant 0 : index
    %c0_4 = arith.constant 0 : index
    %2 = vector.load %arg2[%c0_2, %c0_3, %c0_4] : memref<1x1x32xf32, #tpu.memory_space<vmem>>, vector<1x1x32xf32>
    %3 = vector.shape_cast %2 : vector<1x1x32xf32> to vector<1x32xf32>
    %cst = arith.constant 0.000000e+00 : f32
    %4 = vector.broadcast %cst : f32 to vector<8x32xf32>
    %c0_5 = arith.constant 0 : index
    %c0_6 = arith.constant 0 : index
    %c0_7 = arith.constant 0 : index
    %5 = vector.load %arg3[%c0_5, %c0_6, %c0_7] : memref<4x32x8xf32, #tpu.memory_space<vmem>>, vector<1x32x8xf32>
    %6 = vector.shape_cast %5 : vector<1x32x8xf32> to vector<32x8xf32>
    %cst_8 = arith.constant dense<0.000000e+00> : vector<8x8xf32>
    %7 = tpu.matmul %1, %6, %cst_8 {dimension_numbers = #tpu.dot_dimension_numbers<[1], [0], [0], [1], [0, 0, 1, 1], [], []>} : vector<8x32xf32>, vector<32x8xf32>, vector<8x8xf32> -> vector<8x8xf32>
    %c0_9 = arith.constant 0 : index
    %c0_10 = arith.constant 0 : index
    %c0_11 = arith.constant 0 : index
    %8 = vector.load %arg4[%c0_9, %c0_10, %c0_11] : memref<4x1x8xf32, #tpu.memory_space<vmem>>, vector<1x1x8xf32>
    %9 = vector.shape_cast %8 : vector<1x1x8xf32> to vector<1x8xf32>
    %10 = vector.broadcast %9 : vector<1x8xf32> to vector<8x8xf32>
    %11 = arith.addf %7, %10 : vector<8x8xf32>
    %c0_12 = arith.constant 0 : index
    %c0_13 = arith.constant 0 : index
    %c0_14 = arith.constant 0 : index
    %12 = vector.load %arg5[%c0_12, %c0_13, %c0_14] : memref<4x32x8xf32, #tpu.memory_space<vmem>>, vector<1x32x8xf32>
    %13 = vector.shape_cast %12 : vector<1x32x8xf32> to vector<32x8xf32>
    %cst_15 = arith.constant dense<0.000000e+00> : vector<1x8xf32>
    %14 = tpu.matmul %3, %13, %cst_15 {dimension_numbers = #tpu.dot_dimension_numbers<[1], [0], [0], [1], [0, 0, 1, 1], [], []>} : vector<1x32xf32>, vector<32x8xf32>, vector<1x8xf32> -> vector<1x8xf32>
    %c0_16 = arith.constant 0 : index
    %c0_17 = arith.constant 0 : index
    %c0_18 = arith.constant 0 : index
    %15 = vector.load %arg6[%c0_16, %c0_17, %c0_18] : memref<4x1x8xf32, #tpu.memory_space<vmem>>, vector<1x1x8xf32>
    %16 = vector.shape_cast %15 : vector<1x1x8xf32> to vector<1x8xf32>
    %17 = arith.addf %14, %16 : vector<1x8xf32>
    %c0_19 = arith.constant 0 : index
    %c0_20 = arith.constant 0 : index
    %c0_21 = arith.constant 0 : index
    %18 = vector.load %arg7[%c0_19, %c0_20, %c0_21] : memref<4x32x8xf32, #tpu.memory_space<vmem>>, vector<1x32x8xf32>
    %19 = vector.shape_cast %18 : vector<1x32x8xf32> to vector<32x8xf32>
    %cst_22 = arith.constant dense<0.000000e+00> : vector<1x8xf32>
    %20 = tpu.matmul %3, %19, %cst_22 {dimension_numbers = #tpu.dot_dimension_numbers<[1], [0], [0], [1], [0, 0, 1, 1], [], []>} : vector<1x32xf32>, vector<32x8xf32>, vector<1x8xf32> -> vector<1x8xf32>
    %c0_23 = arith.constant 0 : index
    %c0_24 = arith.constant 0 : index
    %c0_25 = arith.constant 0 : index
    %21 = vector.load %arg8[%c0_23, %c0_24, %c0_25] : memref<4x1x8xf32, #tpu.memory_space<vmem>>, vector<1x1x8xf32>
    %22 = vector.shape_cast %21 : vector<1x1x8xf32> to vector<1x8xf32>
    %23 = arith.addf %20, %22 : vector<1x8xf32>
    %cst_26 = arith.constant dense<0.000000e+00> : vector<8x1xf32>
    %24 = tpu.matmul %11, %17, %cst_26 {dimension_numbers = #tpu.dot_dimension_numbers<[1], [1], [0], [0], [0, 0, 1, 0], [], []>} : vector<8x8xf32>, vector<1x8xf32>, vector<8x1xf32> -> vector<8x1xf32>
    %cst_27 = arith.constant 0.353553385 : f32
    %25 = vector.broadcast %cst_27 : f32 to vector<8x1xf32>
    %26 = arith.mulf %24, %25 : vector<8x1xf32>
    %cst_28 = arith.constant dense<0xFF800000> : vector<8xf32>
    %27 = vector.multi_reduction <maximumf>, %26, %cst_28 [1] : vector<8x1xf32> to vector<8xf32>
    %28 = vector.shape_cast %27 : vector<8xf32> to vector<8x1xf32>
    %29 = arith.subf %26, %28 : vector<8x1xf32>
    %30 = math.exp %29 : vector<8x1xf32>
    %cst_29 = arith.constant dense<0.000000e+00> : vector<8xf32>
    %31 = vector.multi_reduction <add>, %30, %cst_29 [1] : vector<8x1xf32> to vector<8xf32>
    %32 = vector.shape_cast %31 : vector<8xf32> to vector<8x1xf32>
    %33 = tpu.reciprocal %32 {approx = true} : vector<8x1xf32> -> vector<8x1xf32>
    %34 = arith.mulf %30, %33 : vector<8x1xf32>
    %cst_30 = arith.constant dense<0.000000e+00> : vector<8x8xf32>
    %35 = tpu.matmul %34, %23, %cst_30 {dimension_numbers = #tpu.dot_dimension_numbers<[1], [0], [0], [1], [0, 0, 1, 1], [], []>} : vector<8x1xf32>, vector<1x8xf32>, vector<8x8xf32> -> vector<8x8xf32>
    %c0_31 = arith.constant 0 : index
    %c0_32 = arith.constant 0 : index
    %c0_33 = arith.constant 0 : index
    %36 = vector.load %arg9[%c0_31, %c0_32, %c0_33] : memref<4x8x32xf32, #tpu.memory_space<vmem>>, vector<1x8x32xf32>
    %37 = vector.shape_cast %36 : vector<1x8x32xf32> to vector<8x32xf32>
    %cst_34 = arith.constant dense<0.000000e+00> : vector<8x32xf32>
    %38 = tpu.matmul %35, %37, %cst_34 {dimension_numbers = #tpu.dot_dimension_numbers<[1], [0], [0], [1], [0, 0, 1, 1], [], []>} : vector<8x8xf32>, vector<8x32xf32>, vector<8x32xf32> -> vector<8x32xf32>
    %39 = arith.addf %4, %38 : vector<8x32xf32>
    %c1 = arith.constant 1 : index
    %c0_35 = arith.constant 0 : index
    %c0_36 = arith.constant 0 : index
    %40 = vector.load %arg3[%c1, %c0_35, %c0_36] : memref<4x32x8xf32, #tpu.memory_space<vmem>>, vector<1x32x8xf32>
    %41 = vector.shape_cast %40 : vector<1x32x8xf32> to vector<32x8xf32>
    %cst_37 = arith.constant dense<0.000000e+00> : vector<8x8xf32>
    %42 = tpu.matmul %1, %41, %cst_37 {dimension_numbers = #tpu.dot_dimension_numbers<[1], [0], [0], [1], [0, 0, 1, 1], [], []>} : vector<8x32xf32>, vector<32x8xf32>, vector<8x8xf32> -> vector<8x8xf32>
    %c1_38 = arith.constant 1 : index
    %c0_39 = arith.constant 0 : index
    %c0_40 = arith.constant 0 : index
    %43 = vector.load %arg4[%c1_38, %c0_39, %c0_40] : memref<4x1x8xf32, #tpu.memory_space<vmem>>, vector<1x1x8xf32>
    %44 = vector.shape_cast %43 : vector<1x1x8xf32> to vector<1x8xf32>
    %45 = vector.broadcast %44 : vector<1x8xf32> to vector<8x8xf32>
    %46 = arith.addf %42, %45 : vector<8x8xf32>
    %c1_41 = arith.constant 1 : index
    %c0_42 = arith.constant 0 : index
    %c0_43 = arith.constant 0 : index
    %47 = vector.load %arg5[%c1_41, %c0_42, %c0_43] : memref<4x32x8xf32, #tpu.memory_space<vmem>>, vector<1x32x8xf32>
    %48 = vector.shape_cast %47 : vector<1x32x8xf32> to vector<32x8xf32>
    %cst_44 = arith.constant dense<0.000000e+00> : vector<1x8xf32>
    %49 = tpu.matmul %3, %48, %cst_44 {dimension_numbers = #tpu.dot_dimension_numbers<[1], [0], [0], [1], [0, 0, 1, 1], [], []>} : vector<1x32xf32>, vector<32x8xf32>, vector<1x8xf32> -> vector<1x8xf32>
    %c1_45 = arith.constant 1 : index
    %c0_46 = arith.constant 0 : index
    %c0_47 = arith.constant 0 : index
    %50 = vector.load %arg6[%c1_45, %c0_46, %c0_47] : memref<4x1x8xf32, #tpu.memory_space<vmem>>, vector<1x1x8xf32>
    %51 = vector.shape_cast %50 : vector<1x1x8xf32> to vector<1x8xf32>
    %52 = arith.addf %49, %51 : vector<1x8xf32>
    %c1_48 = arith.constant 1 : index
    %c0_49 = arith.constant 0 : index
    %c0_50 = arith.constant 0 : index
    %53 = vector.load %arg7[%c1_48, %c0_49, %c0_50] : memref<4x32x8xf32, #tpu.memory_space<vmem>>, vector<1x32x8xf32>
    %54 = vector.shape_cast %53 : vector<1x32x8xf32> to vector<32x8xf32>
    %cst_51 = arith.constant dense<0.000000e+00> : vector<1x8xf32>
    %55 = tpu.matmul %3, %54, %cst_51 {dimension_numbers = #tpu.dot_dimension_numbers<[1], [0], [0], [1], [0, 0, 1, 1], [], []>} : vector<1x32xf32>, vector<32x8xf32>, vector<1x8xf32> -> vector<1x8xf32>
    %c1_52 = arith.constant 1 : index
    %c0_53 = arith.constant 0 : index
    %c0_54 = arith.constant 0 : index
    %56 = vector.load %arg8[%c1_52, %c0_53, %c0_54] : memref<4x1x8xf32, #tpu.memory_space<vmem>>, vector<1x1x8xf32>
    %57 = vector.shape_cast %56 : vector<1x1x8xf32> to vector<1x8xf32>
    %58 = arith.addf %55, %57 : vector<1x8xf32>
    %cst_55 = arith.constant dense<0.000000e+00> : vector<8x1xf32>
    %59 = tpu.matmul %46, %52, %cst_55 {dimension_numbers = #tpu.dot_dimension_numbers<[1], [1], [0], [0], [0, 0, 1, 0], [], []>} : vector<8x8xf32>, vector<1x8xf32>, vector<8x1xf32> -> vector<8x1xf32>
    %cst_56 = arith.constant 0.353553385 : f32
    %60 = vector.broadcast %cst_56 : f32 to vector<8x1xf32>
    %61 = arith.mulf %59, %60 : vector<8x1xf32>
    %cst_57 = arith.constant dense<0xFF800000> : vector<8xf32>
    %62 = vector.multi_reduction <maximumf>, %61, %cst_57 [1] : vector<8x1xf32> to vector<8xf32>
    %63 = vector.shape_cast %62 : vector<8xf32> to vector<8x1xf32>
    %64 = arith.subf %61, %63 : vector<8x1xf32>
    %65 = math.exp %64 : vector<8x1xf32>
    %cst_58 = arith.constant dense<0.000000e+00> : vector<8xf32>
    %66 = vector.multi_reduction <add>, %65, %cst_58 [1] : vector<8x1xf32> to vector<8xf32>
    %67 = vector.shape_cast %66 : vector<8xf32> to vector<8x1xf32>
    %68 = tpu.reciprocal %67 {approx = true} : vector<8x1xf32> -> vector<8x1xf32>
    %69 = arith.mulf %65, %68 : vector<8x1xf32>
    %cst_59 = arith.constant dense<0.000000e+00> : vector<8x8xf32>
    %70 = tpu.matmul %69, %58, %cst_59 {dimension_numbers = #tpu.dot_dimension_numbers<[1], [0], [0], [1], [0, 0, 1, 1], [], []>} : vector<8x1xf32>, vector<1x8xf32>, vector<8x8xf32> -> vector<8x8xf32>
    %c1_60 = arith.constant 1 : index
    %c0_61 = arith.constant 0 : index
    %c0_62 = arith.constant 0 : index
    %71 = vector.load %arg9[%c1_60, %c0_61, %c0_62] : memref<4x8x32xf32, #tpu.memory_space<vmem>>, vector<1x8x32xf32>
    %72 = vector.shape_cast %71 : vector<1x8x32xf32> to vector<8x32xf32>
    %cst_63 = arith.constant dense<0.000000e+00> : vector<8x32xf32>
    %73 = tpu.matmul %70, %72, %cst_63 {dimension_numbers = #tpu.dot_dimension_numbers<[1], [0], [0], [1], [0, 0, 1, 1], [], []>} : vector<8x8xf32>, vector<8x32xf32>, vector<8x32xf32> -> vector<8x32xf32>
    %74 = arith.addf %39, %73 : vector<8x32xf32>
    %c2 = arith.constant 2 : index
    %c0_64 = arith.constant 0 : index
    %c0_65 = arith.constant 0 : index
    %75 = vector.load %arg3[%c2, %c0_64, %c0_65] : memref<4x32x8xf32, #tpu.memory_space<vmem>>, vector<1x32x8xf32>
    %76 = vector.shape_cast %75 : vector<1x32x8xf32> to vector<32x8xf32>
    %cst_66 = arith.constant dense<0.000000e+00> : vector<8x8xf32>
    %77 = tpu.matmul %1, %76, %cst_66 {dimension_numbers = #tpu.dot_dimension_numbers<[1], [0], [0], [1], [0, 0, 1, 1], [], []>} : vector<8x32xf32>, vector<32x8xf32>, vector<8x8xf32> -> vector<8x8xf32>
    %c2_67 = arith.constant 2 : index
    %c0_68 = arith.constant 0 : index
    %c0_69 = arith.constant 0 : index
    %78 = vector.load %arg4[%c2_67, %c0_68, %c0_69] : memref<4x1x8xf32, #tpu.memory_space<vmem>>, vector<1x1x8xf32>
    %79 = vector.shape_cast %78 : vector<1x1x8xf32> to vector<1x8xf32>
    %80 = vector.broadcast %79 : vector<1x8xf32> to vector<8x8xf32>
    %81 = arith.addf %77, %80 : vector<8x8xf32>
    %c2_70 = arith.constant 2 : index
    %c0_71 = arith.constant 0 : index
    %c0_72 = arith.constant 0 : index
    %82 = vector.load %arg5[%c2_70, %c0_71, %c0_72] : memref<4x32x8xf32, #tpu.memory_space<vmem>>, vector<1x32x8xf32>
    %83 = vector.shape_cast %82 : vector<1x32x8xf32> to vector<32x8xf32>
    %cst_73 = arith.constant dense<0.000000e+00> : vector<1x8xf32>
    %84 = tpu.matmul %3, %83, %cst_73 {dimension_numbers = #tpu.dot_dimension_numbers<[1], [0], [0], [1], [0, 0, 1, 1], [], []>} : vector<1x32xf32>, vector<32x8xf32>, vector<1x8xf32> -> vector<1x8xf32>
    %c2_74 = arith.constant 2 : index
    %c0_75 = arith.constant 0 : index
    %c0_76 = arith.constant 0 : index
    %85 = vector.load %arg6[%c2_74, %c0_75, %c0_76] : memref<4x1x8xf32, #tpu.memory_space<vmem>>, vector<1x1x8xf32>
    %86 = vector.shape_cast %85 : vector<1x1x8xf32> to vector<1x8xf32>
    %87 = arith.addf %84, %86 : vector<1x8xf32>
    %c2_77 = arith.constant 2 : index
    %c0_78 = arith.constant 0 : index
    %c0_79 = arith.constant 0 : index
    %88 = vector.load %arg7[%c2_77, %c0_78, %c0_79] : memref<4x32x8xf32, #tpu.memory_space<vmem>>, vector<1x32x8xf32>
    %89 = vector.shape_cast %88 : vector<1x32x8xf32> to vector<32x8xf32>
    %cst_80 = arith.constant dense<0.000000e+00> : vector<1x8xf32>
    %90 = tpu.matmul %3, %89, %cst_80 {dimension_numbers = #tpu.dot_dimension_numbers<[1], [0], [0], [1], [0, 0, 1, 1], [], []>} : vector<1x32xf32>, vector<32x8xf32>, vector<1x8xf32> -> vector<1x8xf32>
    %c2_81 = arith.constant 2 : index
    %c0_82 = arith.constant 0 : index
    %c0_83 = arith.constant 0 : index
    %91 = vector.load %arg8[%c2_81, %c0_82, %c0_83] : memref<4x1x8xf32, #tpu.memory_space<vmem>>, vector<1x1x8xf32>
    %92 = vector.shape_cast %91 : vector<1x1x8xf32> to vector<1x8xf32>
    %93 = arith.addf %90, %92 : vector<1x8xf32>
    %cst_84 = arith.constant dense<0.000000e+00> : vector<8x1xf32>
    %94 = tpu.matmul %81, %87, %cst_84 {dimension_numbers = #tpu.dot_dimension_numbers<[1], [1], [0], [0], [0, 0, 1, 0], [], []>} : vector<8x8xf32>, vector<1x8xf32>, vector<8x1xf32> -> vector<8x1xf32>
    %cst_85 = arith.constant 0.353553385 : f32
    %95 = vector.broadcast %cst_85 : f32 to vector<8x1xf32>
    %96 = arith.mulf %94, %95 : vector<8x1xf32>
    %cst_86 = arith.constant dense<0xFF800000> : vector<8xf32>
    %97 = vector.multi_reduction <maximumf>, %96, %cst_86 [1] : vector<8x1xf32> to vector<8xf32>
    %98 = vector.shape_cast %97 : vector<8xf32> to vector<8x1xf32>
    %99 = arith.subf %96, %98 : vector<8x1xf32>
    %100 = math.exp %99 : vector<8x1xf32>
    %cst_87 = arith.constant dense<0.000000e+00> : vector<8xf32>
    %101 = vector.multi_reduction <add>, %100, %cst_87 [1] : vector<8x1xf32> to vector<8xf32>
    %102 = vector.shape_cast %101 : vector<8xf32> to vector<8x1xf32>
    %103 = tpu.reciprocal %102 {approx = true} : vector<8x1xf32> -> vector<8x1xf32>
    %104 = arith.mulf %100, %103 : vector<8x1xf32>
    %cst_88 = arith.constant dense<0.000000e+00> : vector<8x8xf32>
    %105 = tpu.matmul %104, %93, %cst_88 {dimension_numbers = #tpu.dot_dimension_numbers<[1], [0], [0], [1], [0, 0, 1, 1], [], []>} : vector<8x1xf32>, vector<1x8xf32>, vector<8x8xf32> -> vector<8x8xf32>
    %c2_89 = arith.constant 2 : index
    %c0_90 = arith.constant 0 : index
    %c0_91 = arith.constant 0 : index
    %106 = vector.load %arg9[%c2_89, %c0_90, %c0_91] : memref<4x8x32xf32, #tpu.memory_space<vmem>>, vector<1x8x32xf32>
    %107 = vector.shape_cast %106 : vector<1x8x32xf32> to vector<8x32xf32>
    %cst_92 = arith.constant dense<0.000000e+00> : vector<8x32xf32>
    %108 = tpu.matmul %105, %107, %cst_92 {dimension_numbers = #tpu.dot_dimension_numbers<[1], [0], [0], [1], [0, 0, 1, 1], [], []>} : vector<8x8xf32>, vector<8x32xf32>, vector<8x32xf32> -> vector<8x32xf32>
    %109 = arith.addf %74, %108 : vector<8x32xf32>
    %c3 = arith.constant 3 : index
    %c0_93 = arith.constant 0 : index
    %c0_94 = arith.constant 0 : index
    %110 = vector.load %arg3[%c3, %c0_93, %c0_94] : memref<4x32x8xf32, #tpu.memory_space<vmem>>, vector<1x32x8xf32>
    %111 = vector.shape_cast %110 : vector<1x32x8xf32> to vector<32x8xf32>
    %cst_95 = arith.constant dense<0.000000e+00> : vector<8x8xf32>
    %112 = tpu.matmul %1, %111, %cst_95 {dimension_numbers = #tpu.dot_dimension_numbers<[1], [0], [0], [1], [0, 0, 1, 1], [], []>} : vector<8x32xf32>, vector<32x8xf32>, vector<8x8xf32> -> vector<8x8xf32>
    %c3_96 = arith.constant 3 : index
    %c0_97 = arith.constant 0 : index
    %c0_98 = arith.constant 0 : index
    %113 = vector.load %arg4[%c3_96, %c0_97, %c0_98] : memref<4x1x8xf32, #tpu.memory_space<vmem>>, vector<1x1x8xf32>
    %114 = vector.shape_cast %113 : vector<1x1x8xf32> to vector<1x8xf32>
    %115 = vector.broadcast %114 : vector<1x8xf32> to vector<8x8xf32>
    %116 = arith.addf %112, %115 : vector<8x8xf32>
    %c3_99 = arith.constant 3 : index
    %c0_100 = arith.constant 0 : index
    %c0_101 = arith.constant 0 : index
    %117 = vector.load %arg5[%c3_99, %c0_100, %c0_101] : memref<4x32x8xf32, #tpu.memory_space<vmem>>, vector<1x32x8xf32>
    %118 = vector.shape_cast %117 : vector<1x32x8xf32> to vector<32x8xf32>
    %cst_102 = arith.constant dense<0.000000e+00> : vector<1x8xf32>
    %119 = tpu.matmul %3, %118, %cst_102 {dimension_numbers = #tpu.dot_dimension_numbers<[1], [0], [0], [1], [0, 0, 1, 1], [], []>} : vector<1x32xf32>, vector<32x8xf32>, vector<1x8xf32> -> vector<1x8xf32>
    %c3_103 = arith.constant 3 : index
    %c0_104 = arith.constant 0 : index
    %c0_105 = arith.constant 0 : index
    %120 = vector.load %arg6[%c3_103, %c0_104, %c0_105] : memref<4x1x8xf32, #tpu.memory_space<vmem>>, vector<1x1x8xf32>
    %121 = vector.shape_cast %120 : vector<1x1x8xf32> to vector<1x8xf32>
    %122 = arith.addf %119, %121 : vector<1x8xf32>
    %c3_106 = arith.constant 3 : index
    %c0_107 = arith.constant 0 : index
    %c0_108 = arith.constant 0 : index
    %123 = vector.load %arg7[%c3_106, %c0_107, %c0_108] : memref<4x32x8xf32, #tpu.memory_space<vmem>>, vector<1x32x8xf32>
    %124 = vector.shape_cast %123 : vector<1x32x8xf32> to vector<32x8xf32>
    %cst_109 = arith.constant dense<0.000000e+00> : vector<1x8xf32>
    %125 = tpu.matmul %3, %124, %cst_109 {dimension_numbers = #tpu.dot_dimension_numbers<[1], [0], [0], [1], [0, 0, 1, 1], [], []>} : vector<1x32xf32>, vector<32x8xf32>, vector<1x8xf32> -> vector<1x8xf32>
    %c3_110 = arith.constant 3 : index
    %c0_111 = arith.constant 0 : index
    %c0_112 = arith.constant 0 : index
    %126 = vector.load %arg8[%c3_110, %c0_111, %c0_112] : memref<4x1x8xf32, #tpu.memory_space<vmem>>, vector<1x1x8xf32>
    %127 = vector.shape_cast %126 : vector<1x1x8xf32> to vector<1x8xf32>
    %128 = arith.addf %125, %127 : vector<1x8xf32>
    %cst_113 = arith.constant dense<0.000000e+00> : vector<8x1xf32>
    %129 = tpu.matmul %116, %122, %cst_113 {dimension_numbers = #tpu.dot_dimension_numbers<[1], [1], [0], [0], [0, 0, 1, 0], [], []>} : vector<8x8xf32>, vector<1x8xf32>, vector<8x1xf32> -> vector<8x1xf32>
    %cst_114 = arith.constant 0.353553385 : f32
    %130 = vector.broadcast %cst_114 : f32 to vector<8x1xf32>
    %131 = arith.mulf %129, %130 : vector<8x1xf32>
    %cst_115 = arith.constant dense<0xFF800000> : vector<8xf32>
    %132 = vector.multi_reduction <maximumf>, %131, %cst_115 [1] : vector<8x1xf32> to vector<8xf32>
    %133 = vector.shape_cast %132 : vector<8xf32> to vector<8x1xf32>
    %134 = arith.subf %131, %133 : vector<8x1xf32>
    %135 = math.exp %134 : vector<8x1xf32>
    %cst_116 = arith.constant dense<0.000000e+00> : vector<8xf32>
    %136 = vector.multi_reduction <add>, %135, %cst_116 [1] : vector<8x1xf32> to vector<8xf32>
    %137 = vector.shape_cast %136 : vector<8xf32> to vector<8x1xf32>
    %138 = tpu.reciprocal %137 {approx = true} : vector<8x1xf32> -> vector<8x1xf32>
    %139 = arith.mulf %135, %138 : vector<8x1xf32>
    %cst_117 = arith.constant dense<0.000000e+00> : vector<8x8xf32>
    %140 = tpu.matmul %139, %128, %cst_117 {dimension_numbers = #tpu.dot_dimension_numbers<[1], [0], [0], [1], [0, 0, 1, 1], [], []>} : vector<8x1xf32>, vector<1x8xf32>, vector<8x8xf32> -> vector<8x8xf32>
    %c3_118 = arith.constant 3 : index
    %c0_119 = arith.constant 0 : index
    %c0_120 = arith.constant 0 : index
    %141 = vector.load %arg9[%c3_118, %c0_119, %c0_120] : memref<4x8x32xf32, #tpu.memory_space<vmem>>, vector<1x8x32xf32>
    %142 = vector.shape_cast %141 : vector<1x8x32xf32> to vector<8x32xf32>
    %cst_121 = arith.constant dense<0.000000e+00> : vector<8x32xf32>
    %143 = tpu.matmul %140, %142, %cst_121 {dimension_numbers = #tpu.dot_dimension_numbers<[1], [0], [0], [1], [0, 0, 1, 1], [], []>} : vector<8x8xf32>, vector<8x32xf32>, vector<8x32xf32> -> vector<8x32xf32>
    %144 = arith.addf %109, %143 : vector<8x32xf32>
    %c0_122 = arith.constant 0 : index
    %c0_123 = arith.constant 0 : index
    %145 = vector.load %arg10[%c0_122, %c0_123] : memref<1x32xf32, #tpu.memory_space<vmem>>, vector<1x32xf32>
    %146 = vector.broadcast %145 : vector<1x32xf32> to vector<8x32xf32>
    %147 = arith.addf %144, %146 : vector<8x32xf32>
    %148 = arith.addf %1, %147 : vector<8x32xf32>
    %c0_124 = arith.constant 0 : index
    %c0_125 = arith.constant 0 : index
    %149 = vector.load %arg11[%c0_124, %c0_125] : memref<1x32xf32, #tpu.memory_space<vmem>>, vector<1x32xf32>
    %c0_126 = arith.constant 0 : index
    %c0_127 = arith.constant 0 : index
    %150 = vector.load %arg12[%c0_126, %c0_127] : memref<1x32xf32, #tpu.memory_space<vmem>>, vector<1x32xf32>
    %cst_128 = arith.constant dense<0.000000e+00> : vector<8xf32>
    %151 = vector.multi_reduction <add>, %148, %cst_128 [1] : vector<8x32xf32> to vector<8xf32>
    %152 = vector.shape_cast %151 : vector<8xf32> to vector<8x1xf32>
    %cst_129 = arith.constant 3.200000e+01 : f32
    %153 = vector.broadcast %cst_129 : f32 to vector<8x1xf32>
    %154 = arith.divf %152, %153 : vector<8x1xf32>
    %155 = vector.broadcast %154 : vector<8x1xf32> to vector<8x32xf32>
    %156 = arith.subf %148, %155 : vector<8x32xf32>
    %157 = vector.broadcast %154 : vector<8x1xf32> to vector<8x32xf32>
    %158 = arith.subf %148, %157 : vector<8x32xf32>
    %159 = arith.mulf %156, %158 : vector<8x32xf32>
    %cst_130 = arith.constant dense<0.000000e+00> : vector<8xf32>
    %160 = vector.multi_reduction <add>, %159, %cst_130 [1] : vector<8x32xf32> to vector<8xf32>
    %161 = vector.shape_cast %160 : vector<8xf32> to vector<8x1xf32>
    %cst_131 = arith.constant 3.200000e+01 : f32
    %162 = vector.broadcast %cst_131 : f32 to vector<8x1xf32>
    %163 = arith.divf %161, %162 : vector<8x1xf32>
    %164 = vector.broadcast %154 : vector<8x1xf32> to vector<8x32xf32>
    %165 = arith.subf %148, %164 : vector<8x32xf32>
    %cst_132 = arith.constant 9.99999974E-6 : f32
    %166 = vector.broadcast %cst_132 : f32 to vector<8x1xf32>
    %167 = arith.addf %163, %166 : vector<8x1xf32>
    %168 = math.rsqrt %167 : vector<8x1xf32>
    %169 = vector.broadcast %168 : vector<8x1xf32> to vector<8x32xf32>
    %170 = arith.mulf %165, %169 : vector<8x32xf32>
    %171 = vector.broadcast %149 : vector<1x32xf32> to vector<8x32xf32>
    %172 = arith.mulf %170, %171 : vector<8x32xf32>
    %173 = vector.broadcast %150 : vector<1x32xf32> to vector<8x32xf32>
    %174 = arith.addf %172, %173 : vector<8x32xf32>
    %c0_133 = arith.constant 0 : index
    %c0_134 = arith.constant 0 : index
    %c0_135 = arith.constant 0 : index
    %175 = vector.load %arg13[%c0_133, %c0_134, %c0_135] : memref<1x8x32xf32, #tpu.memory_space<vmem>>, vector<1x8x32xf32>
    %176 = vector.shape_cast %175 : vector<1x8x32xf32> to vector<8x32xf32>
    %177 = vector.shape_cast %174 : vector<8x32xf32> to vector<1x8x32xf32>
    tpu.vector_store %arg13[%c0_133, %c0_134, %c0_135], %177 {strides = array<i32>} : memref<1x8x32xf32, #tpu.memory_space<vmem>>, vector<1x8x32xf32>,
    return
  }
  func.func @transform_0(%arg0: i32) -> (i32, i32, i32) {
    %c0_i32 = arith.constant 0 : i32
    %c0_i32_0 = arith.constant 0 : i32
    %c0_i32_1 = arith.constant 0 : i32
    return %arg0, %c0_i32, %c0_i32_0 : i32, i32, i32
  }
  func.func @transform_1(%arg0: i32) -> (i32, i32, i32) {
    %c0_i32 = arith.constant 0 : i32
    %c0_i32_0 = arith.constant 0 : i32
    %c0_i32_1 = arith.constant 0 : i32
    return %arg0, %c0_i32, %c0_i32_0 : i32, i32, i32
  }
  func.func @transform_2(%arg0: i32) -> (i32, i32, i32) {
    %c0_i32 = arith.constant 0 : i32
    %c0_i32_0 = arith.constant 0 : i32
    %c0_i32_1 = arith.constant 0 : i32
    %c0_i32_2 = arith.constant 0 : i32
    return %c0_i32, %c0_i32_0, %c0_i32_1 : i32, i32, i32
  }
  func.func @transform_3(%arg0: i32) -> (i32, i32, i32) {
    %c0_i32 = arith.constant 0 : i32
    %c0_i32_0 = arith.constant 0 : i32
    %c0_i32_1 = arith.constant 0 : i32
    %c0_i32_2 = arith.constant 0 : i32
    return %c0_i32, %c0_i32_0, %c0_i32_1 : i32, i32, i32
  }
  func.func @transform_4(%arg0: i32) -> (i32, i32, i32) {
    %c0_i32 = arith.constant 0 : i32
    %c0_i32_0 = arith.constant 0 : i32
    %c0_i32_1 = arith.constant 0 : i32
    %c0_i32_2 = arith.constant 0 : i32
    return %c0_i32, %c0_i32_0, %c0_i32_1 : i32, i32, i32
  }
  func.func @transform_5(%arg0: i32) -> (i32, i32, i32) {
    %c0_i32 = arith.constant 0 : i32
    %c0_i32_0 = arith.constant 0 : i32
    %c0_i32_1 = arith.constant 0 : i32
    %c0_i32_2 = arith.constant 0 : i32
    return %c0_i32, %c0_i32_0, %c0_i32_1 : i32, i32, i32
  }
  func.func @transform_6(%arg0: i32) -> (i32, i32, i32) {
    %c0_i32 = arith.constant 0 : i32
    %c0_i32_0 = arith.constant 0 : i32
    %c0_i32_1 = arith.constant 0 : i32
    %c0_i32_2 = arith.constant 0 : i32
    return %c0_i32, %c0_i32_0, %c0_i32_1 : i32, i32, i32
  }
  func.func @transform_7(%arg0: i32) -> (i32, i32, i32) {
    %c0_i32 = arith.constant 0 : i32
    %c0_i32_0 = arith.constant 0 : i32
    %c0_i32_1 = arith.constant 0 : i32
    %c0_i32_2 = arith.constant 0 : i32
    return %c0_i32, %c0_i32_0, %c0_i32_1 : i32, i32, i32
  }
  func.func @transform_8(%arg0: i32) -> (i32, i32, i32) {
    %c0_i32 = arith.constant 0 : i32
    %c0_i32_0 = arith.constant 0 : i32
    %c0_i32_1 = arith.constant 0 : i32
    %c0_i32_2 = arith.constant 0 : i32
    return %c0_i32, %c0_i32_0, %c0_i32_1 : i32, i32, i32
  }
  func.func @transform_9(%arg0: i32) -> (i32, i32) {
    %c0_i32 = arith.constant 0 : i32
    %c0_i32_0 = arith.constant 0 : i32
    %c0_i32_1 = arith.constant 0 : i32
    return %c0_i32, %c0_i32_0 : i32, i32
  }
  func.func @transform_10(%arg0: i32) -> (i32, i32) {
    %c0_i32 = arith.constant 0 : i32
    %c0_i32_0 = arith.constant 0 : i32
    %c0_i32_1 = arith.constant 0 : i32
    return %c0_i32, %c0_i32_0 : i32, i32
  }
  func.func @transform_11(%arg0: i32) -> (i32, i32) {
    %c0_i32 = arith.constant 0 : i32
    %c0_i32_0 = arith.constant 0 : i32
    %c0_i32_1 = arith.constant 0 : i32
    return %c0_i32, %c0_i32_0 : i32, i32
  }
  func.func @transform_12(%arg0: i32) -> (i32, i32, i32) {
    %c0_i32 = arith.constant 0 : i32
    %c0_i32_0 = arith.constant 0 : i32
    %c0_i32_1 = arith.constant 0 : i32
    return %arg0, %c0_i32, %c0_i32_0 : i32, i32, i32
  }
}

module attributes {stable_mosaic.version = 11 : i64} {
  func.func @_attn_block_kernel(%arg0: i32, %arg1: memref<1x8x32xf32, #tpu.memory_space<vmem>>, %arg2: memref<1x8x32xf32, #tpu.memory_space<vmem>>, %arg3: memref<4x32x8xf32, #tpu.memory_space<vmem>>, %arg4: memref<4x1x8xf32, #tpu.memory_space<vmem>>, %arg5: memref<4x32x8xf32, #tpu.memory_space<vmem>>, %arg6: memref<4x1x8xf32, #tpu.memory_space<vmem>>, %arg7: memref<4x32x8xf32, #tpu.memory_space<vmem>>, %arg8: memref<4x1x8xf32, #tpu.memory_space<vmem>>, %arg9: memref<4x8x32xf32, #tpu.memory_space<vmem>>, %arg10: memref<1x32xf32, #tpu.memory_space<vmem>>, %arg11: memref<1x32xf32, #tpu.memory_space<vmem>>, %arg12: memref<1x32xf32, #tpu.memory_space<vmem>>, %arg13: memref<1x8x32xf32, #tpu.memory_space<vmem>>) attributes {dimension_semantics = [#tpu.dimension_semantics<parallel>], iteration_bounds = array<i64: 2>, scalar_prefetch = 0 : i64, scratch_operands = 0 : i64, tpu.core_type = #tpu.core_type<tc>, window_params = [{transform_indices = @transform_0, window_bounds = array<i64: 1, 8, 32>}, {transform_indices = @transform_1, window_bounds = array<i64: 1, 8, 32>}, {pipeline_mode = #tpu.pipeline_mode<synchronous>, transform_indices = @transform_2, window_bounds = array<i64: 4, 32, 8>}, {pipeline_mode = #tpu.pipeline_mode<synchronous>, transform_indices = @transform_3, window_bounds = array<i64: 4, 1, 8>}, {pipeline_mode = #tpu.pipeline_mode<synchronous>, transform_indices = @transform_4, window_bounds = array<i64: 4, 32, 8>}, {pipeline_mode = #tpu.pipeline_mode<synchronous>, transform_indices = @transform_5, window_bounds = array<i64: 4, 1, 8>}, {pipeline_mode = #tpu.pipeline_mode<synchronous>, transform_indices = @transform_6, window_bounds = array<i64: 4, 32, 8>}, {pipeline_mode = #tpu.pipeline_mode<synchronous>, transform_indices = @transform_7, window_bounds = array<i64: 4, 1, 8>}, {pipeline_mode = #tpu.pipeline_mode<synchronous>, transform_indices = @transform_8, window_bounds = array<i64: 4, 8, 32>}, {pipeline_mode = #tpu.pipeline_mode<synchronous>, transform_indices = @transform_9, window_bounds = array<i64: 1, 32>}, {pipeline_mode = #tpu.pipeline_mode<synchronous>, transform_indices = @transform_10, window_bounds = array<i64: 1, 32>}, {pipeline_mode = #tpu.pipeline_mode<synchronous>, transform_indices = @transform_11, window_bounds = array<i64: 1, 32>}, {transform_indices = @transform_12, window_bounds = array<i64: 1, 8, 32>}]} {
    %c0 = arith.constant 0 : index
    %c0_0 = arith.constant 0 : index
    %c0_1 = arith.constant 0 : index
    %0 = vector.load %arg1[%c0, %c0_0, %c0_1] : memref<1x8x32xf32, #tpu.memory_space<vmem>>, vector<1x8x32xf32>
    %1 = vector.shape_cast %0 : vector<1x8x32xf32> to vector<8x32xf32>
    %c0_2 = arith.constant 0 : index
    %c0_3 = arith.constant 0 : index
    %c0_4 = arith.constant 0 : index
    %2 = vector.load %arg2[%c0_2, %c0_3, %c0_4] : memref<1x8x32xf32, #tpu.memory_space<vmem>>, vector<1x8x32xf32>
    %3 = vector.shape_cast %2 : vector<1x8x32xf32> to vector<8x32xf32>
    %4 = tpu.iota {dimensions = array<i32: 0>} : vector<8x8xi32>
    %5 = tpu.iota {dimensions = array<i32: 1>} : vector<8x8xi32>
    %6 = arith.cmpi sge, %4, %5 : vector<8x8xi32>
    %cst = arith.constant 0.000000e+00 : f32
    %7 = vector.broadcast %cst : f32 to vector<8x32xf32>
    %c0_5 = arith.constant 0 : index
    %c0_6 = arith.constant 0 : index
    %c0_7 = arith.constant 0 : index
    %8 = vector.load %arg3[%c0_5, %c0_6, %c0_7] : memref<4x32x8xf32, #tpu.memory_space<vmem>>, vector<1x32x8xf32>
    %9 = vector.shape_cast %8 : vector<1x32x8xf32> to vector<32x8xf32>
    %cst_8 = arith.constant dense<0.000000e+00> : vector<8x8xf32>
    %10 = tpu.matmul %1, %9, %cst_8 {dimension_numbers = #tpu.dot_dimension_numbers<[1], [0], [0], [1], [0, 0, 1, 1], [], []>} : vector<8x32xf32>, vector<32x8xf32>, vector<8x8xf32> -> vector<8x8xf32>
    %c0_9 = arith.constant 0 : index
    %c0_10 = arith.constant 0 : index
    %c0_11 = arith.constant 0 : index
    %11 = vector.load %arg4[%c0_9, %c0_10, %c0_11] : memref<4x1x8xf32, #tpu.memory_space<vmem>>, vector<1x1x8xf32>
    %12 = vector.shape_cast %11 : vector<1x1x8xf32> to vector<1x8xf32>
    %13 = vector.broadcast %12 : vector<1x8xf32> to vector<8x8xf32>
    %14 = arith.addf %10, %13 : vector<8x8xf32>
    %c0_12 = arith.constant 0 : index
    %c0_13 = arith.constant 0 : index
    %c0_14 = arith.constant 0 : index
    %15 = vector.load %arg5[%c0_12, %c0_13, %c0_14] : memref<4x32x8xf32, #tpu.memory_space<vmem>>, vector<1x32x8xf32>
    %16 = vector.shape_cast %15 : vector<1x32x8xf32> to vector<32x8xf32>
    %cst_15 = arith.constant dense<0.000000e+00> : vector<8x8xf32>
    %17 = tpu.matmul %3, %16, %cst_15 {dimension_numbers = #tpu.dot_dimension_numbers<[1], [0], [0], [1], [0, 0, 1, 1], [], []>} : vector<8x32xf32>, vector<32x8xf32>, vector<8x8xf32> -> vector<8x8xf32>
    %c0_16 = arith.constant 0 : index
    %c0_17 = arith.constant 0 : index
    %c0_18 = arith.constant 0 : index
    %18 = vector.load %arg6[%c0_16, %c0_17, %c0_18] : memref<4x1x8xf32, #tpu.memory_space<vmem>>, vector<1x1x8xf32>
    %19 = vector.shape_cast %18 : vector<1x1x8xf32> to vector<1x8xf32>
    %20 = vector.broadcast %19 : vector<1x8xf32> to vector<8x8xf32>
    %21 = arith.addf %17, %20 : vector<8x8xf32>
    %c0_19 = arith.constant 0 : index
    %c0_20 = arith.constant 0 : index
    %c0_21 = arith.constant 0 : index
    %22 = vector.load %arg7[%c0_19, %c0_20, %c0_21] : memref<4x32x8xf32, #tpu.memory_space<vmem>>, vector<1x32x8xf32>
    %23 = vector.shape_cast %22 : vector<1x32x8xf32> to vector<32x8xf32>
    %cst_22 = arith.constant dense<0.000000e+00> : vector<8x8xf32>
    %24 = tpu.matmul %3, %23, %cst_22 {dimension_numbers = #tpu.dot_dimension_numbers<[1], [0], [0], [1], [0, 0, 1, 1], [], []>} : vector<8x32xf32>, vector<32x8xf32>, vector<8x8xf32> -> vector<8x8xf32>
    %c0_23 = arith.constant 0 : index
    %c0_24 = arith.constant 0 : index
    %c0_25 = arith.constant 0 : index
    %25 = vector.load %arg8[%c0_23, %c0_24, %c0_25] : memref<4x1x8xf32, #tpu.memory_space<vmem>>, vector<1x1x8xf32>
    %26 = vector.shape_cast %25 : vector<1x1x8xf32> to vector<1x8xf32>
    %27 = vector.broadcast %26 : vector<1x8xf32> to vector<8x8xf32>
    %28 = arith.addf %24, %27 : vector<8x8xf32>
    %cst_26 = arith.constant dense<0.000000e+00> : vector<8x8xf32>
    %29 = tpu.matmul %14, %21, %cst_26 {dimension_numbers = #tpu.dot_dimension_numbers<[1], [1], [0], [0], [0, 0, 1, 0], [], []>} : vector<8x8xf32>, vector<8x8xf32>, vector<8x8xf32> -> vector<8x8xf32>
    %cst_27 = arith.constant 0.353553385 : f32
    %30 = vector.broadcast %cst_27 : f32 to vector<8x8xf32>
    %31 = arith.mulf %29, %30 : vector<8x8xf32>
    %cst_28 = arith.constant -1.000000e+30 : f32
    %32 = vector.broadcast %cst_28 : f32 to vector<8x8xf32>
    %33 = arith.select %6, %31, %32 : vector<8x8xi1>, vector<8x8xf32>
    %cst_29 = arith.constant dense<0xFF800000> : vector<8xf32>
    %34 = vector.multi_reduction <maximumf>, %33, %cst_29 [1] : vector<8x8xf32> to vector<8xf32>
    %35 = vector.shape_cast %34 : vector<8xf32> to vector<8x1xf32>
    %36 = vector.broadcast %35 : vector<8x1xf32> to vector<8x8xf32>
    %37 = arith.subf %33, %36 : vector<8x8xf32>
    %38 = math.exp %37 : vector<8x8xf32>
    %cst_30 = arith.constant dense<0.000000e+00> : vector<8xf32>
    %39 = vector.multi_reduction <add>, %38, %cst_30 [1] : vector<8x8xf32> to vector<8xf32>
    %40 = vector.shape_cast %39 : vector<8xf32> to vector<8x1xf32>
    %41 = tpu.reciprocal %40 {approx = true} : vector<8x1xf32> -> vector<8x1xf32>
    %42 = vector.broadcast %41 : vector<8x1xf32> to vector<8x8xf32>
    %43 = arith.mulf %38, %42 : vector<8x8xf32>
    %cst_31 = arith.constant dense<0.000000e+00> : vector<8x8xf32>
    %44 = tpu.matmul %43, %28, %cst_31 {dimension_numbers = #tpu.dot_dimension_numbers<[1], [0], [0], [1], [0, 0, 1, 1], [], []>} : vector<8x8xf32>, vector<8x8xf32>, vector<8x8xf32> -> vector<8x8xf32>
    %c0_32 = arith.constant 0 : index
    %c0_33 = arith.constant 0 : index
    %c0_34 = arith.constant 0 : index
    %45 = vector.load %arg9[%c0_32, %c0_33, %c0_34] : memref<4x8x32xf32, #tpu.memory_space<vmem>>, vector<1x8x32xf32>
    %46 = vector.shape_cast %45 : vector<1x8x32xf32> to vector<8x32xf32>
    %cst_35 = arith.constant dense<0.000000e+00> : vector<8x32xf32>
    %47 = tpu.matmul %44, %46, %cst_35 {dimension_numbers = #tpu.dot_dimension_numbers<[1], [0], [0], [1], [0, 0, 1, 1], [], []>} : vector<8x8xf32>, vector<8x32xf32>, vector<8x32xf32> -> vector<8x32xf32>
    %48 = arith.addf %7, %47 : vector<8x32xf32>
    %c1 = arith.constant 1 : index
    %c0_36 = arith.constant 0 : index
    %c0_37 = arith.constant 0 : index
    %49 = vector.load %arg3[%c1, %c0_36, %c0_37] : memref<4x32x8xf32, #tpu.memory_space<vmem>>, vector<1x32x8xf32>
    %50 = vector.shape_cast %49 : vector<1x32x8xf32> to vector<32x8xf32>
    %cst_38 = arith.constant dense<0.000000e+00> : vector<8x8xf32>
    %51 = tpu.matmul %1, %50, %cst_38 {dimension_numbers = #tpu.dot_dimension_numbers<[1], [0], [0], [1], [0, 0, 1, 1], [], []>} : vector<8x32xf32>, vector<32x8xf32>, vector<8x8xf32> -> vector<8x8xf32>
    %c1_39 = arith.constant 1 : index
    %c0_40 = arith.constant 0 : index
    %c0_41 = arith.constant 0 : index
    %52 = vector.load %arg4[%c1_39, %c0_40, %c0_41] : memref<4x1x8xf32, #tpu.memory_space<vmem>>, vector<1x1x8xf32>
    %53 = vector.shape_cast %52 : vector<1x1x8xf32> to vector<1x8xf32>
    %54 = vector.broadcast %53 : vector<1x8xf32> to vector<8x8xf32>
    %55 = arith.addf %51, %54 : vector<8x8xf32>
    %c1_42 = arith.constant 1 : index
    %c0_43 = arith.constant 0 : index
    %c0_44 = arith.constant 0 : index
    %56 = vector.load %arg5[%c1_42, %c0_43, %c0_44] : memref<4x32x8xf32, #tpu.memory_space<vmem>>, vector<1x32x8xf32>
    %57 = vector.shape_cast %56 : vector<1x32x8xf32> to vector<32x8xf32>
    %cst_45 = arith.constant dense<0.000000e+00> : vector<8x8xf32>
    %58 = tpu.matmul %3, %57, %cst_45 {dimension_numbers = #tpu.dot_dimension_numbers<[1], [0], [0], [1], [0, 0, 1, 1], [], []>} : vector<8x32xf32>, vector<32x8xf32>, vector<8x8xf32> -> vector<8x8xf32>
    %c1_46 = arith.constant 1 : index
    %c0_47 = arith.constant 0 : index
    %c0_48 = arith.constant 0 : index
    %59 = vector.load %arg6[%c1_46, %c0_47, %c0_48] : memref<4x1x8xf32, #tpu.memory_space<vmem>>, vector<1x1x8xf32>
    %60 = vector.shape_cast %59 : vector<1x1x8xf32> to vector<1x8xf32>
    %61 = vector.broadcast %60 : vector<1x8xf32> to vector<8x8xf32>
    %62 = arith.addf %58, %61 : vector<8x8xf32>
    %c1_49 = arith.constant 1 : index
    %c0_50 = arith.constant 0 : index
    %c0_51 = arith.constant 0 : index
    %63 = vector.load %arg7[%c1_49, %c0_50, %c0_51] : memref<4x32x8xf32, #tpu.memory_space<vmem>>, vector<1x32x8xf32>
    %64 = vector.shape_cast %63 : vector<1x32x8xf32> to vector<32x8xf32>
    %cst_52 = arith.constant dense<0.000000e+00> : vector<8x8xf32>
    %65 = tpu.matmul %3, %64, %cst_52 {dimension_numbers = #tpu.dot_dimension_numbers<[1], [0], [0], [1], [0, 0, 1, 1], [], []>} : vector<8x32xf32>, vector<32x8xf32>, vector<8x8xf32> -> vector<8x8xf32>
    %c1_53 = arith.constant 1 : index
    %c0_54 = arith.constant 0 : index
    %c0_55 = arith.constant 0 : index
    %66 = vector.load %arg8[%c1_53, %c0_54, %c0_55] : memref<4x1x8xf32, #tpu.memory_space<vmem>>, vector<1x1x8xf32>
    %67 = vector.shape_cast %66 : vector<1x1x8xf32> to vector<1x8xf32>
    %68 = vector.broadcast %67 : vector<1x8xf32> to vector<8x8xf32>
    %69 = arith.addf %65, %68 : vector<8x8xf32>
    %cst_56 = arith.constant dense<0.000000e+00> : vector<8x8xf32>
    %70 = tpu.matmul %55, %62, %cst_56 {dimension_numbers = #tpu.dot_dimension_numbers<[1], [1], [0], [0], [0, 0, 1, 0], [], []>} : vector<8x8xf32>, vector<8x8xf32>, vector<8x8xf32> -> vector<8x8xf32>
    %cst_57 = arith.constant 0.353553385 : f32
    %71 = vector.broadcast %cst_57 : f32 to vector<8x8xf32>
    %72 = arith.mulf %70, %71 : vector<8x8xf32>
    %cst_58 = arith.constant -1.000000e+30 : f32
    %73 = vector.broadcast %cst_58 : f32 to vector<8x8xf32>
    %74 = arith.select %6, %72, %73 : vector<8x8xi1>, vector<8x8xf32>
    %cst_59 = arith.constant dense<0xFF800000> : vector<8xf32>
    %75 = vector.multi_reduction <maximumf>, %74, %cst_59 [1] : vector<8x8xf32> to vector<8xf32>
    %76 = vector.shape_cast %75 : vector<8xf32> to vector<8x1xf32>
    %77 = vector.broadcast %76 : vector<8x1xf32> to vector<8x8xf32>
    %78 = arith.subf %74, %77 : vector<8x8xf32>
    %79 = math.exp %78 : vector<8x8xf32>
    %cst_60 = arith.constant dense<0.000000e+00> : vector<8xf32>
    %80 = vector.multi_reduction <add>, %79, %cst_60 [1] : vector<8x8xf32> to vector<8xf32>
    %81 = vector.shape_cast %80 : vector<8xf32> to vector<8x1xf32>
    %82 = tpu.reciprocal %81 {approx = true} : vector<8x1xf32> -> vector<8x1xf32>
    %83 = vector.broadcast %82 : vector<8x1xf32> to vector<8x8xf32>
    %84 = arith.mulf %79, %83 : vector<8x8xf32>
    %cst_61 = arith.constant dense<0.000000e+00> : vector<8x8xf32>
    %85 = tpu.matmul %84, %69, %cst_61 {dimension_numbers = #tpu.dot_dimension_numbers<[1], [0], [0], [1], [0, 0, 1, 1], [], []>} : vector<8x8xf32>, vector<8x8xf32>, vector<8x8xf32> -> vector<8x8xf32>
    %c1_62 = arith.constant 1 : index
    %c0_63 = arith.constant 0 : index
    %c0_64 = arith.constant 0 : index
    %86 = vector.load %arg9[%c1_62, %c0_63, %c0_64] : memref<4x8x32xf32, #tpu.memory_space<vmem>>, vector<1x8x32xf32>
    %87 = vector.shape_cast %86 : vector<1x8x32xf32> to vector<8x32xf32>
    %cst_65 = arith.constant dense<0.000000e+00> : vector<8x32xf32>
    %88 = tpu.matmul %85, %87, %cst_65 {dimension_numbers = #tpu.dot_dimension_numbers<[1], [0], [0], [1], [0, 0, 1, 1], [], []>} : vector<8x8xf32>, vector<8x32xf32>, vector<8x32xf32> -> vector<8x32xf32>
    %89 = arith.addf %48, %88 : vector<8x32xf32>
    %c2 = arith.constant 2 : index
    %c0_66 = arith.constant 0 : index
    %c0_67 = arith.constant 0 : index
    %90 = vector.load %arg3[%c2, %c0_66, %c0_67] : memref<4x32x8xf32, #tpu.memory_space<vmem>>, vector<1x32x8xf32>
    %91 = vector.shape_cast %90 : vector<1x32x8xf32> to vector<32x8xf32>
    %cst_68 = arith.constant dense<0.000000e+00> : vector<8x8xf32>
    %92 = tpu.matmul %1, %91, %cst_68 {dimension_numbers = #tpu.dot_dimension_numbers<[1], [0], [0], [1], [0, 0, 1, 1], [], []>} : vector<8x32xf32>, vector<32x8xf32>, vector<8x8xf32> -> vector<8x8xf32>
    %c2_69 = arith.constant 2 : index
    %c0_70 = arith.constant 0 : index
    %c0_71 = arith.constant 0 : index
    %93 = vector.load %arg4[%c2_69, %c0_70, %c0_71] : memref<4x1x8xf32, #tpu.memory_space<vmem>>, vector<1x1x8xf32>
    %94 = vector.shape_cast %93 : vector<1x1x8xf32> to vector<1x8xf32>
    %95 = vector.broadcast %94 : vector<1x8xf32> to vector<8x8xf32>
    %96 = arith.addf %92, %95 : vector<8x8xf32>
    %c2_72 = arith.constant 2 : index
    %c0_73 = arith.constant 0 : index
    %c0_74 = arith.constant 0 : index
    %97 = vector.load %arg5[%c2_72, %c0_73, %c0_74] : memref<4x32x8xf32, #tpu.memory_space<vmem>>, vector<1x32x8xf32>
    %98 = vector.shape_cast %97 : vector<1x32x8xf32> to vector<32x8xf32>
    %cst_75 = arith.constant dense<0.000000e+00> : vector<8x8xf32>
    %99 = tpu.matmul %3, %98, %cst_75 {dimension_numbers = #tpu.dot_dimension_numbers<[1], [0], [0], [1], [0, 0, 1, 1], [], []>} : vector<8x32xf32>, vector<32x8xf32>, vector<8x8xf32> -> vector<8x8xf32>
    %c2_76 = arith.constant 2 : index
    %c0_77 = arith.constant 0 : index
    %c0_78 = arith.constant 0 : index
    %100 = vector.load %arg6[%c2_76, %c0_77, %c0_78] : memref<4x1x8xf32, #tpu.memory_space<vmem>>, vector<1x1x8xf32>
    %101 = vector.shape_cast %100 : vector<1x1x8xf32> to vector<1x8xf32>
    %102 = vector.broadcast %101 : vector<1x8xf32> to vector<8x8xf32>
    %103 = arith.addf %99, %102 : vector<8x8xf32>
    %c2_79 = arith.constant 2 : index
    %c0_80 = arith.constant 0 : index
    %c0_81 = arith.constant 0 : index
    %104 = vector.load %arg7[%c2_79, %c0_80, %c0_81] : memref<4x32x8xf32, #tpu.memory_space<vmem>>, vector<1x32x8xf32>
    %105 = vector.shape_cast %104 : vector<1x32x8xf32> to vector<32x8xf32>
    %cst_82 = arith.constant dense<0.000000e+00> : vector<8x8xf32>
    %106 = tpu.matmul %3, %105, %cst_82 {dimension_numbers = #tpu.dot_dimension_numbers<[1], [0], [0], [1], [0, 0, 1, 1], [], []>} : vector<8x32xf32>, vector<32x8xf32>, vector<8x8xf32> -> vector<8x8xf32>
    %c2_83 = arith.constant 2 : index
    %c0_84 = arith.constant 0 : index
    %c0_85 = arith.constant 0 : index
    %107 = vector.load %arg8[%c2_83, %c0_84, %c0_85] : memref<4x1x8xf32, #tpu.memory_space<vmem>>, vector<1x1x8xf32>
    %108 = vector.shape_cast %107 : vector<1x1x8xf32> to vector<1x8xf32>
    %109 = vector.broadcast %108 : vector<1x8xf32> to vector<8x8xf32>
    %110 = arith.addf %106, %109 : vector<8x8xf32>
    %cst_86 = arith.constant dense<0.000000e+00> : vector<8x8xf32>
    %111 = tpu.matmul %96, %103, %cst_86 {dimension_numbers = #tpu.dot_dimension_numbers<[1], [1], [0], [0], [0, 0, 1, 0], [], []>} : vector<8x8xf32>, vector<8x8xf32>, vector<8x8xf32> -> vector<8x8xf32>
    %cst_87 = arith.constant 0.353553385 : f32
    %112 = vector.broadcast %cst_87 : f32 to vector<8x8xf32>
    %113 = arith.mulf %111, %112 : vector<8x8xf32>
    %cst_88 = arith.constant -1.000000e+30 : f32
    %114 = vector.broadcast %cst_88 : f32 to vector<8x8xf32>
    %115 = arith.select %6, %113, %114 : vector<8x8xi1>, vector<8x8xf32>
    %cst_89 = arith.constant dense<0xFF800000> : vector<8xf32>
    %116 = vector.multi_reduction <maximumf>, %115, %cst_89 [1] : vector<8x8xf32> to vector<8xf32>
    %117 = vector.shape_cast %116 : vector<8xf32> to vector<8x1xf32>
    %118 = vector.broadcast %117 : vector<8x1xf32> to vector<8x8xf32>
    %119 = arith.subf %115, %118 : vector<8x8xf32>
    %120 = math.exp %119 : vector<8x8xf32>
    %cst_90 = arith.constant dense<0.000000e+00> : vector<8xf32>
    %121 = vector.multi_reduction <add>, %120, %cst_90 [1] : vector<8x8xf32> to vector<8xf32>
    %122 = vector.shape_cast %121 : vector<8xf32> to vector<8x1xf32>
    %123 = tpu.reciprocal %122 {approx = true} : vector<8x1xf32> -> vector<8x1xf32>
    %124 = vector.broadcast %123 : vector<8x1xf32> to vector<8x8xf32>
    %125 = arith.mulf %120, %124 : vector<8x8xf32>
    %cst_91 = arith.constant dense<0.000000e+00> : vector<8x8xf32>
    %126 = tpu.matmul %125, %110, %cst_91 {dimension_numbers = #tpu.dot_dimension_numbers<[1], [0], [0], [1], [0, 0, 1, 1], [], []>} : vector<8x8xf32>, vector<8x8xf32>, vector<8x8xf32> -> vector<8x8xf32>
    %c2_92 = arith.constant 2 : index
    %c0_93 = arith.constant 0 : index
    %c0_94 = arith.constant 0 : index
    %127 = vector.load %arg9[%c2_92, %c0_93, %c0_94] : memref<4x8x32xf32, #tpu.memory_space<vmem>>, vector<1x8x32xf32>
    %128 = vector.shape_cast %127 : vector<1x8x32xf32> to vector<8x32xf32>
    %cst_95 = arith.constant dense<0.000000e+00> : vector<8x32xf32>
    %129 = tpu.matmul %126, %128, %cst_95 {dimension_numbers = #tpu.dot_dimension_numbers<[1], [0], [0], [1], [0, 0, 1, 1], [], []>} : vector<8x8xf32>, vector<8x32xf32>, vector<8x32xf32> -> vector<8x32xf32>
    %130 = arith.addf %89, %129 : vector<8x32xf32>
    %c3 = arith.constant 3 : index
    %c0_96 = arith.constant 0 : index
    %c0_97 = arith.constant 0 : index
    %131 = vector.load %arg3[%c3, %c0_96, %c0_97] : memref<4x32x8xf32, #tpu.memory_space<vmem>>, vector<1x32x8xf32>
    %132 = vector.shape_cast %131 : vector<1x32x8xf32> to vector<32x8xf32>
    %cst_98 = arith.constant dense<0.000000e+00> : vector<8x8xf32>
    %133 = tpu.matmul %1, %132, %cst_98 {dimension_numbers = #tpu.dot_dimension_numbers<[1], [0], [0], [1], [0, 0, 1, 1], [], []>} : vector<8x32xf32>, vector<32x8xf32>, vector<8x8xf32> -> vector<8x8xf32>
    %c3_99 = arith.constant 3 : index
    %c0_100 = arith.constant 0 : index
    %c0_101 = arith.constant 0 : index
    %134 = vector.load %arg4[%c3_99, %c0_100, %c0_101] : memref<4x1x8xf32, #tpu.memory_space<vmem>>, vector<1x1x8xf32>
    %135 = vector.shape_cast %134 : vector<1x1x8xf32> to vector<1x8xf32>
    %136 = vector.broadcast %135 : vector<1x8xf32> to vector<8x8xf32>
    %137 = arith.addf %133, %136 : vector<8x8xf32>
    %c3_102 = arith.constant 3 : index
    %c0_103 = arith.constant 0 : index
    %c0_104 = arith.constant 0 : index
    %138 = vector.load %arg5[%c3_102, %c0_103, %c0_104] : memref<4x32x8xf32, #tpu.memory_space<vmem>>, vector<1x32x8xf32>
    %139 = vector.shape_cast %138 : vector<1x32x8xf32> to vector<32x8xf32>
    %cst_105 = arith.constant dense<0.000000e+00> : vector<8x8xf32>
    %140 = tpu.matmul %3, %139, %cst_105 {dimension_numbers = #tpu.dot_dimension_numbers<[1], [0], [0], [1], [0, 0, 1, 1], [], []>} : vector<8x32xf32>, vector<32x8xf32>, vector<8x8xf32> -> vector<8x8xf32>
    %c3_106 = arith.constant 3 : index
    %c0_107 = arith.constant 0 : index
    %c0_108 = arith.constant 0 : index
    %141 = vector.load %arg6[%c3_106, %c0_107, %c0_108] : memref<4x1x8xf32, #tpu.memory_space<vmem>>, vector<1x1x8xf32>
    %142 = vector.shape_cast %141 : vector<1x1x8xf32> to vector<1x8xf32>
    %143 = vector.broadcast %142 : vector<1x8xf32> to vector<8x8xf32>
    %144 = arith.addf %140, %143 : vector<8x8xf32>
    %c3_109 = arith.constant 3 : index
    %c0_110 = arith.constant 0 : index
    %c0_111 = arith.constant 0 : index
    %145 = vector.load %arg7[%c3_109, %c0_110, %c0_111] : memref<4x32x8xf32, #tpu.memory_space<vmem>>, vector<1x32x8xf32>
    %146 = vector.shape_cast %145 : vector<1x32x8xf32> to vector<32x8xf32>
    %cst_112 = arith.constant dense<0.000000e+00> : vector<8x8xf32>
    %147 = tpu.matmul %3, %146, %cst_112 {dimension_numbers = #tpu.dot_dimension_numbers<[1], [0], [0], [1], [0, 0, 1, 1], [], []>} : vector<8x32xf32>, vector<32x8xf32>, vector<8x8xf32> -> vector<8x8xf32>
    %c3_113 = arith.constant 3 : index
    %c0_114 = arith.constant 0 : index
    %c0_115 = arith.constant 0 : index
    %148 = vector.load %arg8[%c3_113, %c0_114, %c0_115] : memref<4x1x8xf32, #tpu.memory_space<vmem>>, vector<1x1x8xf32>
    %149 = vector.shape_cast %148 : vector<1x1x8xf32> to vector<1x8xf32>
    %150 = vector.broadcast %149 : vector<1x8xf32> to vector<8x8xf32>
    %151 = arith.addf %147, %150 : vector<8x8xf32>
    %cst_116 = arith.constant dense<0.000000e+00> : vector<8x8xf32>
    %152 = tpu.matmul %137, %144, %cst_116 {dimension_numbers = #tpu.dot_dimension_numbers<[1], [1], [0], [0], [0, 0, 1, 0], [], []>} : vector<8x8xf32>, vector<8x8xf32>, vector<8x8xf32> -> vector<8x8xf32>
    %cst_117 = arith.constant 0.353553385 : f32
    %153 = vector.broadcast %cst_117 : f32 to vector<8x8xf32>
    %154 = arith.mulf %152, %153 : vector<8x8xf32>
    %cst_118 = arith.constant -1.000000e+30 : f32
    %155 = vector.broadcast %cst_118 : f32 to vector<8x8xf32>
    %156 = arith.select %6, %154, %155 : vector<8x8xi1>, vector<8x8xf32>
    %cst_119 = arith.constant dense<0xFF800000> : vector<8xf32>
    %157 = vector.multi_reduction <maximumf>, %156, %cst_119 [1] : vector<8x8xf32> to vector<8xf32>
    %158 = vector.shape_cast %157 : vector<8xf32> to vector<8x1xf32>
    %159 = vector.broadcast %158 : vector<8x1xf32> to vector<8x8xf32>
    %160 = arith.subf %156, %159 : vector<8x8xf32>
    %161 = math.exp %160 : vector<8x8xf32>
    %cst_120 = arith.constant dense<0.000000e+00> : vector<8xf32>
    %162 = vector.multi_reduction <add>, %161, %cst_120 [1] : vector<8x8xf32> to vector<8xf32>
    %163 = vector.shape_cast %162 : vector<8xf32> to vector<8x1xf32>
    %164 = tpu.reciprocal %163 {approx = true} : vector<8x1xf32> -> vector<8x1xf32>
    %165 = vector.broadcast %164 : vector<8x1xf32> to vector<8x8xf32>
    %166 = arith.mulf %161, %165 : vector<8x8xf32>
    %cst_121 = arith.constant dense<0.000000e+00> : vector<8x8xf32>
    %167 = tpu.matmul %166, %151, %cst_121 {dimension_numbers = #tpu.dot_dimension_numbers<[1], [0], [0], [1], [0, 0, 1, 1], [], []>} : vector<8x8xf32>, vector<8x8xf32>, vector<8x8xf32> -> vector<8x8xf32>
    %c3_122 = arith.constant 3 : index
    %c0_123 = arith.constant 0 : index
    %c0_124 = arith.constant 0 : index
    %168 = vector.load %arg9[%c3_122, %c0_123, %c0_124] : memref<4x8x32xf32, #tpu.memory_space<vmem>>, vector<1x8x32xf32>
    %169 = vector.shape_cast %168 : vector<1x8x32xf32> to vector<8x32xf32>
    %cst_125 = arith.constant dense<0.000000e+00> : vector<8x32xf32>
    %170 = tpu.matmul %167, %169, %cst_125 {dimension_numbers = #tpu.dot_dimension_numbers<[1], [0], [0], [1], [0, 0, 1, 1], [], []>} : vector<8x8xf32>, vector<8x32xf32>, vector<8x32xf32> -> vector<8x32xf32>
    %171 = arith.addf %130, %170 : vector<8x32xf32>
    %c0_126 = arith.constant 0 : index
    %c0_127 = arith.constant 0 : index
    %172 = vector.load %arg10[%c0_126, %c0_127] : memref<1x32xf32, #tpu.memory_space<vmem>>, vector<1x32xf32>
    %173 = vector.broadcast %172 : vector<1x32xf32> to vector<8x32xf32>
    %174 = arith.addf %171, %173 : vector<8x32xf32>
    %175 = arith.addf %1, %174 : vector<8x32xf32>
    %c0_128 = arith.constant 0 : index
    %c0_129 = arith.constant 0 : index
    %176 = vector.load %arg11[%c0_128, %c0_129] : memref<1x32xf32, #tpu.memory_space<vmem>>, vector<1x32xf32>
    %c0_130 = arith.constant 0 : index
    %c0_131 = arith.constant 0 : index
    %177 = vector.load %arg12[%c0_130, %c0_131] : memref<1x32xf32, #tpu.memory_space<vmem>>, vector<1x32xf32>
    %cst_132 = arith.constant dense<0.000000e+00> : vector<8xf32>
    %178 = vector.multi_reduction <add>, %175, %cst_132 [1] : vector<8x32xf32> to vector<8xf32>
    %179 = vector.shape_cast %178 : vector<8xf32> to vector<8x1xf32>
    %cst_133 = arith.constant 3.200000e+01 : f32
    %180 = vector.broadcast %cst_133 : f32 to vector<8x1xf32>
    %181 = arith.divf %179, %180 : vector<8x1xf32>
    %182 = vector.broadcast %181 : vector<8x1xf32> to vector<8x32xf32>
    %183 = arith.subf %175, %182 : vector<8x32xf32>
    %184 = vector.broadcast %181 : vector<8x1xf32> to vector<8x32xf32>
    %185 = arith.subf %175, %184 : vector<8x32xf32>
    %186 = arith.mulf %183, %185 : vector<8x32xf32>
    %cst_134 = arith.constant dense<0.000000e+00> : vector<8xf32>
    %187 = vector.multi_reduction <add>, %186, %cst_134 [1] : vector<8x32xf32> to vector<8xf32>
    %188 = vector.shape_cast %187 : vector<8xf32> to vector<8x1xf32>
    %cst_135 = arith.constant 3.200000e+01 : f32
    %189 = vector.broadcast %cst_135 : f32 to vector<8x1xf32>
    %190 = arith.divf %188, %189 : vector<8x1xf32>
    %191 = vector.broadcast %181 : vector<8x1xf32> to vector<8x32xf32>
    %192 = arith.subf %175, %191 : vector<8x32xf32>
    %cst_136 = arith.constant 9.99999974E-6 : f32
    %193 = vector.broadcast %cst_136 : f32 to vector<8x1xf32>
    %194 = arith.addf %190, %193 : vector<8x1xf32>
    %195 = math.rsqrt %194 : vector<8x1xf32>
    %196 = vector.broadcast %195 : vector<8x1xf32> to vector<8x32xf32>
    %197 = arith.mulf %192, %196 : vector<8x32xf32>
    %198 = vector.broadcast %176 : vector<1x32xf32> to vector<8x32xf32>
    %199 = arith.mulf %197, %198 : vector<8x32xf32>
    %200 = vector.broadcast %177 : vector<1x32xf32> to vector<8x32xf32>
    %201 = arith.addf %199, %200 : vector<8x32xf32>
    %c0_137 = arith.constant 0 : index
    %c0_138 = arith.constant 0 : index
    %c0_139 = arith.constant 0 : index
    %202 = vector.load %arg13[%c0_137, %c0_138, %c0_139] : memref<1x8x32xf32, #tpu.memory_space<vmem>>, vector<1x8x32xf32>
    %203 = vector.shape_cast %202 : vector<1x8x32xf32> to vector<8x32xf32>
    %204 = vector.shape_cast %201 : vector<8x32xf32> to vector<1x8x32xf32>
    tpu.vector_store %arg13[%c0_137, %c0_138, %c0_139], %204 {strides = array<i32>} : memref<1x8x32xf32, #tpu.memory_space<vmem>>, vector<1x8x32xf32>,
    return
  }
  func.func @transform_0(%arg0: i32) -> (i32, i32, i32) {
    %c0_i32 = arith.constant 0 : i32
    %c0_i32_0 = arith.constant 0 : i32
    %c0_i32_1 = arith.constant 0 : i32
    return %arg0, %c0_i32, %c0_i32_0 : i32, i32, i32
  }
  func.func @transform_1(%arg0: i32) -> (i32, i32, i32) {
    %c0_i32 = arith.constant 0 : i32
    %c0_i32_0 = arith.constant 0 : i32
    %c0_i32_1 = arith.constant 0 : i32
    return %arg0, %c0_i32, %c0_i32_0 : i32, i32, i32
  }
  func.func @transform_2(%arg0: i32) -> (i32, i32, i32) {
    %c0_i32 = arith.constant 0 : i32
    %c0_i32_0 = arith.constant 0 : i32
    %c0_i32_1 = arith.constant 0 : i32
    %c0_i32_2 = arith.constant 0 : i32
    return %c0_i32, %c0_i32_0, %c0_i32_1 : i32, i32, i32
  }
  func.func @transform_3(%arg0: i32) -> (i32, i32, i32) {
    %c0_i32 = arith.constant 0 : i32
    %c0_i32_0 = arith.constant 0 : i32
    %c0_i32_1 = arith.constant 0 : i32
    %c0_i32_2 = arith.constant 0 : i32
    return %c0_i32, %c0_i32_0, %c0_i32_1 : i32, i32, i32
  }
  func.func @transform_4(%arg0: i32) -> (i32, i32, i32) {
    %c0_i32 = arith.constant 0 : i32
    %c0_i32_0 = arith.constant 0 : i32
    %c0_i32_1 = arith.constant 0 : i32
    %c0_i32_2 = arith.constant 0 : i32
    return %c0_i32, %c0_i32_0, %c0_i32_1 : i32, i32, i32
  }
  func.func @transform_5(%arg0: i32) -> (i32, i32, i32) {
    %c0_i32 = arith.constant 0 : i32
    %c0_i32_0 = arith.constant 0 : i32
    %c0_i32_1 = arith.constant 0 : i32
    %c0_i32_2 = arith.constant 0 : i32
    return %c0_i32, %c0_i32_0, %c0_i32_1 : i32, i32, i32
  }
  func.func @transform_6(%arg0: i32) -> (i32, i32, i32) {
    %c0_i32 = arith.constant 0 : i32
    %c0_i32_0 = arith.constant 0 : i32
    %c0_i32_1 = arith.constant 0 : i32
    %c0_i32_2 = arith.constant 0 : i32
    return %c0_i32, %c0_i32_0, %c0_i32_1 : i32, i32, i32
  }
  func.func @transform_7(%arg0: i32) -> (i32, i32, i32) {
    %c0_i32 = arith.constant 0 : i32
    %c0_i32_0 = arith.constant 0 : i32
    %c0_i32_1 = arith.constant 0 : i32
    %c0_i32_2 = arith.constant 0 : i32
    return %c0_i32, %c0_i32_0, %c0_i32_1 : i32, i32, i32
  }
  func.func @transform_8(%arg0: i32) -> (i32, i32, i32) {
    %c0_i32 = arith.constant 0 : i32
    %c0_i32_0 = arith.constant 0 : i32
    %c0_i32_1 = arith.constant 0 : i32
    %c0_i32_2 = arith.constant 0 : i32
    return %c0_i32, %c0_i32_0, %c0_i32_1 : i32, i32, i32
  }
  func.func @transform_9(%arg0: i32) -> (i32, i32) {
    %c0_i32 = arith.constant 0 : i32
    %c0_i32_0 = arith.constant 0 : i32
    %c0_i32_1 = arith.constant 0 : i32
    return %c0_i32, %c0_i32_0 : i32, i32
  }
  func.func @transform_10(%arg0: i32) -> (i32, i32) {
    %c0_i32 = arith.constant 0 : i32
    %c0_i32_0 = arith.constant 0 : i32
    %c0_i32_1 = arith.constant 0 : i32
    return %c0_i32, %c0_i32_0 : i32, i32
  }
  func.func @transform_11(%arg0: i32) -> (i32, i32) {
    %c0_i32 = arith.constant 0 : i32
    %c0_i32_0 = arith.constant 0 : i32
    %c0_i32_1 = arith.constant 0 : i32
    return %c0_i32, %c0_i32_0 : i32, i32
  }
  func.func @transform_12(%arg0: i32) -> (i32, i32, i32) {
    %c0_i32 = arith.constant 0 : i32
    %c0_i32_0 = arith.constant 0 : i32
    %c0_i32_1 = arith.constant 0 : i32
    return %arg0, %c0_i32, %c0_i32_0 : i32, i32, i32
  }
}

module attributes {stable_mosaic.version = 11 : i64} {
  func.func @_ffn_block_kernel(%arg0: i32, %arg1: memref<16x32xf32, #tpu.memory_space<vmem>>, %arg2: memref<32x2048xf32, #tpu.memory_space<vmem>>, %arg3: memref<1x2048xf32, #tpu.memory_space<vmem>>, %arg4: memref<2048x32xf32, #tpu.memory_space<vmem>>, %arg5: memref<1x32xf32, #tpu.memory_space<vmem>>, %arg6: memref<1x32xf32, #tpu.memory_space<vmem>>, %arg7: memref<1x32xf32, #tpu.memory_space<vmem>>, %arg8: memref<16x32xf32, #tpu.memory_space<vmem>>) attributes {dimension_semantics = [#tpu.dimension_semantics<parallel>], iteration_bounds = array<i64: 1>, scalar_prefetch = 0 : i64, scratch_operands = 0 : i64, tpu.core_type = #tpu.core_type<tc>, window_params = [{transform_indices = @transform_0, window_bounds = array<i64: 16, 32>}, {pipeline_mode = #tpu.pipeline_mode<synchronous>, transform_indices = @transform_1, window_bounds = array<i64: 32, 2048>}, {pipeline_mode = #tpu.pipeline_mode<synchronous>, transform_indices = @transform_2, window_bounds = array<i64: 1, 2048>}, {pipeline_mode = #tpu.pipeline_mode<synchronous>, transform_indices = @transform_3, window_bounds = array<i64: 2048, 32>}, {pipeline_mode = #tpu.pipeline_mode<synchronous>, transform_indices = @transform_4, window_bounds = array<i64: 1, 32>}, {pipeline_mode = #tpu.pipeline_mode<synchronous>, transform_indices = @transform_5, window_bounds = array<i64: 1, 32>}, {pipeline_mode = #tpu.pipeline_mode<synchronous>, transform_indices = @transform_6, window_bounds = array<i64: 1, 32>}, {transform_indices = @transform_7, window_bounds = array<i64: 16, 32>}]} {
    %c0 = arith.constant 0 : index
    %c0_0 = arith.constant 0 : index
    %0 = vector.load %arg1[%c0, %c0_0] : memref<16x32xf32, #tpu.memory_space<vmem>>, vector<16x32xf32>
    %c0_1 = arith.constant 0 : index
    %c0_2 = arith.constant 0 : index
    %1 = vector.load %arg2[%c0_1, %c0_2] : memref<32x2048xf32, #tpu.memory_space<vmem>>, vector<32x2048xf32>
    %cst = arith.constant dense<0.000000e+00> : vector<16x2048xf32>
    %2 = tpu.matmul %0, %1, %cst {dimension_numbers = #tpu.dot_dimension_numbers<[1], [0], [0], [1], [0, 0, 1, 1], [], []>} : vector<16x32xf32>, vector<32x2048xf32>, vector<16x2048xf32> -> vector<16x2048xf32>
    %c0_3 = arith.constant 0 : index
    %c0_4 = arith.constant 0 : index
    %3 = vector.load %arg3[%c0_3, %c0_4] : memref<1x2048xf32, #tpu.memory_space<vmem>>, vector<1x2048xf32>
    %4 = vector.broadcast %3 : vector<1x2048xf32> to vector<16x2048xf32>
    %5 = arith.addf %2, %4 : vector<16x2048xf32>
    %cst_5 = arith.constant 0.000000e+00 : f32
    %6 = vector.broadcast %cst_5 : f32 to vector<16x2048xf32>
    %7 = arith.maximumf %5, %6 : vector<16x2048xf32>
    %c0_6 = arith.constant 0 : index
    %c0_7 = arith.constant 0 : index
    %8 = vector.load %arg4[%c0_6, %c0_7] : memref<2048x32xf32, #tpu.memory_space<vmem>>, vector<2048x32xf32>
    %cst_8 = arith.constant dense<0.000000e+00> : vector<16x32xf32>
    %9 = tpu.matmul %7, %8, %cst_8 {dimension_numbers = #tpu.dot_dimension_numbers<[1], [0], [0], [1], [0, 0, 1, 1], [], []>} : vector<16x2048xf32>, vector<2048x32xf32>, vector<16x32xf32> -> vector<16x32xf32>
    %c0_9 = arith.constant 0 : index
    %c0_10 = arith.constant 0 : index
    %10 = vector.load %arg5[%c0_9, %c0_10] : memref<1x32xf32, #tpu.memory_space<vmem>>, vector<1x32xf32>
    %11 = vector.broadcast %10 : vector<1x32xf32> to vector<16x32xf32>
    %12 = arith.addf %9, %11 : vector<16x32xf32>
    %13 = arith.addf %0, %12 : vector<16x32xf32>
    %c0_11 = arith.constant 0 : index
    %c0_12 = arith.constant 0 : index
    %14 = vector.load %arg6[%c0_11, %c0_12] : memref<1x32xf32, #tpu.memory_space<vmem>>, vector<1x32xf32>
    %c0_13 = arith.constant 0 : index
    %c0_14 = arith.constant 0 : index
    %15 = vector.load %arg7[%c0_13, %c0_14] : memref<1x32xf32, #tpu.memory_space<vmem>>, vector<1x32xf32>
    %cst_15 = arith.constant dense<0.000000e+00> : vector<16xf32>
    %16 = vector.multi_reduction <add>, %13, %cst_15 [1] : vector<16x32xf32> to vector<16xf32>
    %17 = vector.shape_cast %16 : vector<16xf32> to vector<16x1xf32>
    %cst_16 = arith.constant 3.200000e+01 : f32
    %18 = vector.broadcast %cst_16 : f32 to vector<16x1xf32>
    %19 = arith.divf %17, %18 : vector<16x1xf32>
    %20 = vector.broadcast %19 : vector<16x1xf32> to vector<16x32xf32>
    %21 = arith.subf %13, %20 : vector<16x32xf32>
    %22 = vector.broadcast %19 : vector<16x1xf32> to vector<16x32xf32>
    %23 = arith.subf %13, %22 : vector<16x32xf32>
    %24 = arith.mulf %21, %23 : vector<16x32xf32>
    %cst_17 = arith.constant dense<0.000000e+00> : vector<16xf32>
    %25 = vector.multi_reduction <add>, %24, %cst_17 [1] : vector<16x32xf32> to vector<16xf32>
    %26 = vector.shape_cast %25 : vector<16xf32> to vector<16x1xf32>
    %cst_18 = arith.constant 3.200000e+01 : f32
    %27 = vector.broadcast %cst_18 : f32 to vector<16x1xf32>
    %28 = arith.divf %26, %27 : vector<16x1xf32>
    %29 = vector.broadcast %19 : vector<16x1xf32> to vector<16x32xf32>
    %30 = arith.subf %13, %29 : vector<16x32xf32>
    %cst_19 = arith.constant 9.99999974E-6 : f32
    %31 = vector.broadcast %cst_19 : f32 to vector<16x1xf32>
    %32 = arith.addf %28, %31 : vector<16x1xf32>
    %33 = math.rsqrt %32 : vector<16x1xf32>
    %34 = vector.broadcast %33 : vector<16x1xf32> to vector<16x32xf32>
    %35 = arith.mulf %30, %34 : vector<16x32xf32>
    %36 = vector.broadcast %14 : vector<1x32xf32> to vector<16x32xf32>
    %37 = arith.mulf %35, %36 : vector<16x32xf32>
    %38 = vector.broadcast %15 : vector<1x32xf32> to vector<16x32xf32>
    %39 = arith.addf %37, %38 : vector<16x32xf32>
    %c0_20 = arith.constant 0 : index
    %c0_21 = arith.constant 0 : index
    %40 = vector.load %arg8[%c0_20, %c0_21] : memref<16x32xf32, #tpu.memory_space<vmem>>, vector<16x32xf32>
    tpu.vector_store %arg8[%c0_20, %c0_21], %39 {strides = array<i32>} : memref<16x32xf32, #tpu.memory_space<vmem>>, vector<16x32xf32>,
    return
  }
  func.func @transform_0(%arg0: i32) -> (i32, i32) {
    %c0_i32 = arith.constant 0 : i32
    %c0_i32_0 = arith.constant 0 : i32
    return %arg0, %c0_i32 : i32, i32
  }
  func.func @transform_1(%arg0: i32) -> (i32, i32) {
    %c0_i32 = arith.constant 0 : i32
    %c0_i32_0 = arith.constant 0 : i32
    %c0_i32_1 = arith.constant 0 : i32
    return %c0_i32, %c0_i32_0 : i32, i32
  }
  func.func @transform_2(%arg0: i32) -> (i32, i32) {
    %c0_i32 = arith.constant 0 : i32
    %c0_i32_0 = arith.constant 0 : i32
    %c0_i32_1 = arith.constant 0 : i32
    return %c0_i32, %c0_i32_0 : i32, i32
  }
  func.func @transform_3(%arg0: i32) -> (i32, i32) {
    %c0_i32 = arith.constant 0 : i32
    %c0_i32_0 = arith.constant 0 : i32
    %c0_i32_1 = arith.constant 0 : i32
    return %c0_i32, %c0_i32_0 : i32, i32
  }
  func.func @transform_4(%arg0: i32) -> (i32, i32) {
    %c0_i32 = arith.constant 0 : i32
    %c0_i32_0 = arith.constant 0 : i32
    %c0_i32_1 = arith.constant 0 : i32
    return %c0_i32, %c0_i32_0 : i32, i32
  }
  func.func @transform_5(%arg0: i32) -> (i32, i32) {
    %c0_i32 = arith.constant 0 : i32
    %c0_i32_0 = arith.constant 0 : i32
    %c0_i32_1 = arith.constant 0 : i32
    return %c0_i32, %c0_i32_0 : i32, i32
  }
  func.func @transform_6(%arg0: i32) -> (i32, i32) {
    %c0_i32 = arith.constant 0 : i32
    %c0_i32_0 = arith.constant 0 : i32
    %c0_i32_1 = arith.constant 0 : i32
    return %c0_i32, %c0_i32_0 : i32, i32
  }
  func.func @transform_7(%arg0: i32) -> (i32, i32) {
    %c0_i32 = arith.constant 0 : i32
    %c0_i32_0 = arith.constant 0 : i32
    return %arg0, %c0_i32 : i32, i32
  }
}

module attributes {stable_mosaic.version = 11 : i64} {
  func.func @_linear_kernel(%arg0: i32, %arg1: i32, %arg2: memref<16x32xf32, #tpu.memory_space<vmem>>, %arg3: memref<32x16xf32, #tpu.memory_space<vmem>>, %arg4: memref<1x16xf32, #tpu.memory_space<vmem>>, %arg5: memref<16x16xf32, #tpu.memory_space<vmem>>) attributes {dimension_semantics = [#tpu.dimension_semantics<parallel>, #tpu.dimension_semantics<parallel>], iteration_bounds = array<i64: 1, 1>, scalar_prefetch = 0 : i64, scratch_operands = 0 : i64, tpu.core_type = #tpu.core_type<tc>, window_params = [{transform_indices = @transform_0, window_bounds = array<i64: 16, 32>}, {transform_indices = @transform_1, window_bounds = array<i64: 32, 16>}, {transform_indices = @transform_2, window_bounds = array<i64: 1, 16>}, {transform_indices = @transform_3, window_bounds = array<i64: 16, 16>}]} {
    %c0 = arith.constant 0 : index
    %c0_0 = arith.constant 0 : index
    %0 = vector.load %arg2[%c0, %c0_0] : memref<16x32xf32, #tpu.memory_space<vmem>>, vector<16x32xf32>
    %c0_1 = arith.constant 0 : index
    %c0_2 = arith.constant 0 : index
    %1 = vector.load %arg3[%c0_1, %c0_2] : memref<32x16xf32, #tpu.memory_space<vmem>>, vector<32x16xf32>
    %cst = arith.constant dense<0.000000e+00> : vector<16x16xf32>
    %2 = tpu.matmul %0, %1, %cst {dimension_numbers = #tpu.dot_dimension_numbers<[1], [0], [0], [1], [0, 0, 1, 1], [], []>} : vector<16x32xf32>, vector<32x16xf32>, vector<16x16xf32> -> vector<16x16xf32>
    %c0_3 = arith.constant 0 : index
    %c0_4 = arith.constant 0 : index
    %3 = vector.load %arg4[%c0_3, %c0_4] : memref<1x16xf32, #tpu.memory_space<vmem>>, vector<1x16xf32>
    %4 = vector.broadcast %3 : vector<1x16xf32> to vector<16x16xf32>
    %5 = arith.addf %2, %4 : vector<16x16xf32>
    %c0_5 = arith.constant 0 : index
    %c0_6 = arith.constant 0 : index
    %6 = vector.load %arg5[%c0_5, %c0_6] : memref<16x16xf32, #tpu.memory_space<vmem>>, vector<16x16xf32>
    tpu.vector_store %arg5[%c0_5, %c0_6], %5 {strides = array<i32>} : memref<16x16xf32, #tpu.memory_space<vmem>>, vector<16x16xf32>,
    return
  }
  func.func @transform_0(%arg0: i32, %arg1: i32) -> (i32, i32) {
    %c0_i32 = arith.constant 0 : i32
    %c0_i32_0 = arith.constant 0 : i32
    return %arg0, %c0_i32 : i32, i32
  }
  func.func @transform_1(%arg0: i32, %arg1: i32) -> (i32, i32) {
    %c0_i32 = arith.constant 0 : i32
    %c0_i32_0 = arith.constant 0 : i32
    return %c0_i32, %arg1 : i32, i32
  }
  func.func @transform_2(%arg0: i32, %arg1: i32) -> (i32, i32) {
    %c0_i32 = arith.constant 0 : i32
    %c0_i32_0 = arith.constant 0 : i32
    return %c0_i32, %arg1 : i32, i32
  }
  func.func @transform_3(%arg0: i32, %arg1: i32) -> (i32, i32) {
    %c0_i32 = arith.constant 0 : i32
    return %arg0, %arg1 : i32, i32
  }
}

</mosaic_0001>

<llo_original>
// kernel: captioning_transformer_forward.8
$region0: #{captioning_transformer_forward.8}
  #allocation0 [shape = 'u32[]', space=smem, size = 0x4, offset = 0x4, fixed_abs, tag = 'smem constant byte address 0x4 - core index']
  #allocation1 [shape = 'u32[144,128]{1,0:T(1,128)}', space=vmem, size = 0x12000, scoped, tag = 'internal scratch']
  %s0 = inlined_call_operand.vmem [shape: f32[2,16], index: 0, kind: input, shape index: {}]
  %s1 = inlined_call_operand.vmem [shape: f32[16,32], index: 1, kind: input, shape index: {}]
  %s2 = inlined_call_operand.vmem [shape: f32[1,32], index: 2, kind: input, shape index: {}]
  %s3 = inlined_call_operand.vmem [shape: f32[2,32], index: 3, kind: output, shape index: {}]
  %s4 = sld [smem:[#allocation0]]
  $region22: #{captioning_transformer_forward.8} parent=0
    _
  %s6 = ssub.s32 1, %s4
  %s7 = scalar_select 0, %s6, %s4
  // Predicated region
  $region2: #{captioning_transformer_forward.8} parent=0 // pred_check
    _
  $region3: #{captioning_transformer_forward.8} parent=0 // pred_check_branch
    %9 = sbr.rel (0) target = $region5
  $region4: #{captioning_transformer_forward.8} parent=0 // pred_region
    _
  $region5: #{captioning_transformer_forward.8} parent=0 // pred_fallthru
    _
  // Predicated region
  $region6: #{captioning_transformer_forward.8} parent=0 // pred_check
    _
  $region7: #{captioning_transformer_forward.8} parent=0 // pred_check_branch
    %11 = sbr.rel (0) target = $region9
  $region8: #{captioning_transformer_forward.8} parent=0 // pred_region
    _
  $region9: #{captioning_transformer_forward.8} parent=0 // pred_fallthru
    _
  // Predicated region
  $region10: #{captioning_transformer_forward.8} parent=0 // pred_check
    _
  $region11: #{captioning_transformer_forward.8} parent=0 // pred_check_branch
    %13 = sbr.rel (0) target = $region13
  $region12: #{captioning_transformer_forward.8} parent=0 // pred_region
    _
  $region13: #{captioning_transformer_forward.8} parent=0 // pred_fallthru
    _
  %v14 = vld [vmem:[%s0] sm:$0x3]
  %v15 = vld [vmem:[%s1] sm:$0xff]
  %v16 = vld [vmem:[%s1 + $0x8] sm:$0xff]
  %v17 = vld [vmem:[%s2] sm:$0x1]
  %v19 = vlaneseq
  %v20 = vshrl.u32 %v19, 7
  %v21 = vsub.s32 0, %v20
  %v22 = vrot.slane %v17, %v21
  %vm24 = vcmask 130048
  %v26 = vsel %vm24, %v14, 0
  %28 = vmatprep.subr.mxu0 0.0
  %29 = vmatpush1.msra.mxu0 %v15
  %30 = vmatprep.subr.mxu0 0.0
  %31 = vmatpush1.msra.mxu0 %v16
  %32 = vmatprep.subr.mxu0 0.0
  %33 = vmatpush1.msra.mxu0 0.0
  %34 = vmatprep.subr.mxu0 0.0
  %35 = vmatpush1.msra.mxu0 0.0
  %36 = vmatprep.subr.mxu0 0.0
  %37 = vmatpush1.msra.mxu0 0.0
  %38 = vmatprep.subr.mxu0 0.0
  %39 = vmatpush1.msra.mxu0 0.0
  %40 = vmatprep.subr.mxu0 0.0
  %41 = vmatpush1.msra.mxu0 0.0
  %42 = vmatprep.subr.mxu0 0.0
  %43 = vmatpush1.msra.mxu0 0.0
  %44 = vmatprep.subr.mxu0 0.0
  %45 = vmatpush1.msra.mxu0 0.0
  %46 = vmatprep.subr.mxu0 0.0
  %47 = vmatpush1.msra.mxu0 0.0
  %48 = vmatprep.subr.mxu0 0.0
  %49 = vmatpush1.msra.mxu0 0.0
  %50 = vmatprep.subr.mxu0 0.0
  %51 = vmatpush1.msra.mxu0 0.0
  %52 = vmatprep.subr.mxu0 0.0
  %53 = vmatpush1.msra.mxu0 0.0
  %54 = vmatprep.subr.mxu0 0.0
  %55 = vmatpush1.msra.mxu0 0.0
  %56 = vmatprep.subr.mxu0 0.0
  %57 = vmatpush1.msra.mxu0 0.0
  %58 = vmatprep.subr.mxu0 0.0
  %59 = vmatpush1.msra.mxu0 0.0
  %60 = vmatprep.subr.mxu0 0.0
  %61 = vmatpush1.msra.mxu0 0.0
  %62 = vmatprep.subr.mxu0 0.0
  %63 = vmatpush1.msra.mxu0 0.0
  %64 = vmatprep.subr.mxu0 0.0
  %65 = vmatpush1.msra.mxu0 0.0
  %66 = vmatprep.subr.mxu0 0.0
  %67 = vmatpush1.msra.mxu0 0.0
  %68 = vmatprep.subr.mxu0 0.0
  %69 = vmatpush1.msra.mxu0 0.0
  %70 = vmatprep.subr.mxu0 0.0
  %71 = vmatpush1.msra.mxu0 0.0
  %72 = vmatprep.subr.mxu0 0.0
  %73 = vmatpush1.msra.mxu0 0.0
  %74 = vmatprep.subr.mxu0 0.0
  %75 = vmatpush1.msra.mxu0 0.0
  %76 = vmatprep.subr.mxu0 0.0
  %77 = vmatpush1.msra.mxu0 0.0
  %78 = vmatprep.subr.mxu0 0.0
  %79 = vmatpush1.msra.mxu0 0.0
  %80 = vmatprep.subr.mxu0 0.0
  %81 = vmatpush1.msra.mxu0 0.0
  %82 = vmatprep.subr.mxu0 0.0
  %83 = vmatpush1.msra.mxu0 0.0
  %84 = vmatprep.subr.mxu0 0.0
  %85 = vmatpush1.msra.mxu0 0.0
  %86 = vmatprep.subr.mxu0 0.0
  %87 = vmatpush1.msra.mxu0 0.0
  %88 = vmatprep.subr.mxu0 0.0
  %89 = vmatpush1.msra.mxu0 0.0
  %90 = vmatprep.subr.mxu0 0.0
  %91 = vmatpush1.msra.mxu0 0.0
  %92 = vmatprep.mubr.f32.mxu0 0.0
  %93 = vmatmul.mubr.f32.gmra.mrb[0].mxu0 %v26
  %v94 = vpop.f32.mrb[0].mxu0
  %v95 = vadd.f32 %v22, %v94
  %v96 = vpop.f32.mrb[0].mxu0
  %97 = vdwg.mxu0
  %vm98 = vcmask 254976
  %99 = vst.msk [vmem:[%s3] sm:$0x3] %vm98, %v95
  // Predicated region
  $region14: #{captioning_transformer_forward.8} parent=0 // pred_check
    _
  $region15: #{captioning_transformer_forward.8} parent=0 // pred_check_branch
    %101 = sbr.rel (0) target = $region17
  $region16: #{captioning_transformer_forward.8} parent=0 // pred_region
    _
  $region17: #{captioning_transformer_forward.8} parent=0 // pred_fallthru
    _
  // Predicated region
  $region18: #{captioning_transformer_forward.8} parent=0 // pred_check
    _
  $region19: #{captioning_transformer_forward.8} parent=0 // pred_check_branch
    %103 = sbr.rel (0) target = $region21
  $region20: #{captioning_transformer_forward.8} parent=0 // pred_region
    _
  $region21: #{captioning_transformer_forward.8} parent=0 // pred_fallthru
    _

// kernel: captioning_transformer_forward.10
$region0: #{captioning_transformer_forward.10}
  #allocation0 [shape = 'u32[]', space=smem, size = 0x4, offset = 0x4, fixed_abs, tag = 'smem constant byte address 0x4 - core index']
  #allocation1 [shape = 'u32[144,128]{1,0:T(1,128)}', space=vmem, size = 0x12000, scoped, tag = 'internal scratch']
  %s0 = inlined_call_operand.vmem [shape: f32[2,8,32], index: 0, kind: input, shape index: {}]
  %s1 = inlined_call_operand.vmem [shape: f32[2,1,32], index: 1, kind: input, shape index: {}]
  %s2 = inlined_call_operand.vmem [shape: f32[4,32,8], index: 2, kind: input, shape index: {}]
  %s3 = inlined_call_operand.vmem [shape: f32[4,1,8], index: 3, kind: input, shape index: {}]
  %s4 = inlined_call_operand.vmem [shape: f32[4,32,8], index: 4, kind: input, shape index: {}]
  %s5 = inlined_call_operand.vmem [shape: f32[4,1,8], index: 5, kind: input, shape index: {}]
  %s6 = inlined_call_operand.vmem [shape: f32[4,32,8], index: 6, kind: input, shape index: {}]
  %s7 = inlined_call_operand.vmem [shape: f32[4,1,8], index: 7, kind: input, shape index: {}]
  %s8 = inlined_call_operand.vmem [shape: f32[4,8,32], index: 8, kind: input, shape index: {}]
  %s9 = inlined_call_operand.vmem [shape: f32[1,32], index: 9, kind: input, shape index: {}]
  %s10 = inlined_call_operand.vmem [shape: f32[1,32], index: 10, kind: input, shape index: {}]
  %s11 = inlined_call_operand.vmem [shape: f32[1,32], index: 11, kind: input, shape index: {}]
  %s12 = inlined_call_operand.vmem [shape: f32[2,8,32], index: 12, kind: output, shape index: {}]
  %s13 = sld [smem:[#allocation0]]
  $region81: #{captioning_transformer_forward.10} parent=0
    _
  %s15 = ssub.s32 1, %s13
  %s16 = scalar_select 0, %s15, %s13
  loop: start=0, step=1, limit=4
  $region2: #{captioning_transformer_forward.10} parent=0 // loop_pre_header
    _
  $region3: #{captioning_transformer_forward.10} parent=0 // loop_header
    %s18 = sphi 0, %s22
    %p19 = scmp.ge.s32.totalorder %s18, 4
    %s28 = sphi 0, %s30
    %s31 = sphi 0, %s28
    %s32 = sphi 0, %s31
    %s48 = sphi 0, %s32
    %s54 = sphi 0, %s56
    %s57 = sphi 0, %s54
    %s58 = sphi 0, %s57
    %s74 = sphi 0, %s58
    %s78 = sphi 0, %s78
    %s80 = sphi 0, %s78
    %s81 = sphi 0, %s80
    %s95 = sphi 0, %s81
    %s99 = sphi 0, %s99
    %s101 = sphi 0, %s99
    %s102 = sphi 0, %s101
    %s116 = sphi 0, %s102
    %s120 = sphi 0, %s120
    %s122 = sphi 0, %s120
    %s123 = sphi 0, %s122
    %s137 = sphi 0, %s123
    %s141 = sphi 0, %s141
    %s143 = sphi 0, %s141
    %s144 = sphi 0, %s143
    %s158 = sphi 0, %s144
    %s162 = sphi 0, %s162
    %s164 = sphi 0, %s162
    %s165 = sphi 0, %s164
    %s179 = sphi 0, %s165
    %s183 = sphi 0, %s183
    %s185 = sphi 0, %s183
    %s186 = sphi 0, %s185
    %s200 = sphi 0, %s186
    %s204 = sphi 0, %s204
    %s206 = sphi 0, %s204
    %s207 = sphi 0, %s206
    %s221 = sphi 0, %s207
    %s225 = sphi 0, %s225
    %s227 = sphi 0, %s225
    %s228 = sphi 0, %s227
    %s242 = sphi 0, %s228
    %s246 = sphi 0, %s246
    %s248 = sphi 0, %s246
    %s249 = sphi 0, %s248
    %s263 = sphi 0, %s249
    %s267 = sphi 0, %s267
    %s269 = sphi 0, %s267
    %s270 = sphi 0, %s269
    %s284 = sphi 0, %s270
    %s290 = sphi 0, %s292
    %s293 = sphi 0, %s290
    %s294 = sphi 0, %s293
    %s310 = sphi 0, %s294
  $region4: #{captioning_transformer_forward.10} parent=0 // loop_header_branch
    %21 = sbr.rel (%p19) target = $region8
  $region5: #{captioning_transformer_forward.10} parent=0 // loop_body
    %s23 = ssub.s32 %s18, 1
    %s24 = ssub.s32 %s18, 2
    %s25 = sadd.s32 %s18, 1
    %s26 = ssub.s32 %s18, %s25
    %p27 = scmp.eq.s32.totalorder %s26, 0
    %s29 = sadd.s32 %s28, 1
    %s30 = scalar_select %p27, %s28, %s29
    %p33 = pneg %p27
    %p34 = scmp.eq.s32.totalorder %s18, 1
    %p35 = por %p33, %p34
    %p36 = scmp.ne.s32.totalorder %s28, %s31
    %p37 = scmp.eq.s32.totalorder %s18, 0
    %p38 = por %p36, %p37
    %p39 = scmp.ne.s32.totalorder %s28, %s31
    %p40 = scmp.eq.s32.totalorder %s23, 1
    %p41 = por %p39, %p40
    %p42 = scmp.ne.s32.totalorder %s31, %s32
    %p43 = scmp.eq.s32.totalorder %s23, 0
    %p44 = por %p42, %p43
    %p45 = scmp.ne.s32.totalorder %s31, %s32
    %p46 = scmp.eq.s32.totalorder %s24, 1
    %p47 = por %p45, %p46
    %p49 = scmp.ne.s32.totalorder %s32, %s48
    %p50 = scmp.eq.s32.totalorder %s24, 0
    %p51 = por %p49, %p50
    %s52 = ssub.s32 %s18, %s25
    %p53 = scmp.eq.s32.totalorder %s52, 0
    %s55 = sadd.s32 %s54, 1
    %s56 = scalar_select %p53, %s54, %s55
    %p59 = pneg %p53
    %p60 = scmp.eq.s32.totalorder %s18, 1
    %p61 = por %p59, %p60
    %p62 = scmp.ne.s32.totalorder %s54, %s57
    %p63 = scmp.eq.s32.totalorder %s18, 0
    %p64 = por %p62, %p63
    %p65 = scmp.ne.s32.totalorder %s54, %s57
    %p66 = scmp.eq.s32.totalorder %s23, 1
    %p67 = por %p65, %p66
    %p68 = scmp.ne.s32.totalorder %s57, %s58
    %p69 = scmp.eq.s32.totalorder %s23, 0
    %p70 = por %p68, %p69
    %p71 = scmp.ne.s32.totalorder %s57, %s58
    %p72 = scmp.eq.s32.totalorder %s24, 1
    %p73 = por %p71, %p72
    %p75 = scmp.ne.s32.totalorder %s58, %s74
    %p76 = scmp.eq.s32.totalorder %s24, 0
    %p77 = por %p75, %p76
    %s79 = sadd.s32 %s78, 1
    %p82 = scmp.eq.s32.totalorder %s18, 1
    %p83 = scmp.ne.s32.totalorder %s78, %s80
    %p84 = scmp.eq.s32.totalorder %s18, 0
    %p85 = por %p83, %p84
    %p86 = scmp.ne.s32.totalorder %s78, %s80
    %p87 = scmp.eq.s32.totalorder %s23, 1
    %p88 = por %p86, %p87
    %p89 = scmp.ne.s32.totalorder %s80, %s81
    %p90 = scmp.eq.s32.totalorder %s23, 0
    %p91 = por %p89, %p90
    %p92 = scmp.ne.s32.totalorder %s80, %s81
    %p93 = scmp.eq.s32.totalorder %s24, 1
    %p94 = por %p92, %p93
    %p96 = scmp.ne.s32.totalorder %s81, %s95
    %p97 = scmp.eq.s32.totalorder %s24, 0
    %p98 = por %p96, %p97
    %s100 = sadd.s32 %s99, 1
    %p103 = scmp.eq.s32.totalorder %s18, 1
    %p104 = scmp.ne.s32.totalorder %s99, %s101
    %p105 = scmp.eq.s32.totalorder %s18, 0
    %p106 = por %p104, %p105
    %p107 = scmp.ne.s32.totalorder %s99, %s101
    %p108 = scmp.eq.s32.totalorder %s23, 1
    %p109 = por %p107, %p108
    %p110 = scmp.ne.s32.totalorder %s101, %s102
    %p111 = scmp.eq.s32.totalorder %s23, 0
    %p112 = por %p110, %p111
    %p113 = scmp.ne.s32.totalorder %s101, %s102
    %p114 = scmp.eq.s32.totalorder %s24, 1
    %p115 = por %p113, %p114
    %p117 = scmp.ne.s32.totalorder %s102, %s116
    %p118 = scmp.eq.s32.totalorder %s24, 0
    %p119 = por %p117, %p118
    %s121 = sadd.s32 %s120, 1
    %p124 = scmp.eq.s32.totalorder %s18, 1
    %p125 = scmp.ne.s32.totalorder %s120, %s122
    %p126 = scmp.eq.s32.totalorder %s18, 0
    %p127 = por %p125, %p126
    %p128 = scmp.ne.s32.totalorder %s120, %s122
    %p129 = scmp.eq.s32.totalorder %s23, 1
    %p130 = por %p128, %p129
    %p131 = scmp.ne.s32.totalorder %s122, %s123
    %p132 = scmp.eq.s32.totalorder %s23, 0
    %p133 = por %p131, %p132
    %p134 = scmp.ne.s32.totalorder %s122, %s123
    %p135 = scmp.eq.s32.totalorder %s24, 1
    %p136 = por %p134, %p135
    %p138 = scmp.ne.s32.totalorder %s123, %s137
    %p139 = scmp.eq.s32.totalorder %s24, 0
    %p140 = por %p138, %p139
    %s142 = sadd.s32 %s141, 1
    %p145 = scmp.eq.s32.totalorder %s18, 1
    %p146 = scmp.ne.s32.totalorder %s141, %s143
    %p147 = scmp.eq.s32.totalorder %s18, 0
    %p148 = por %p146, %p147
    %p149 = scmp.ne.s32.totalorder %s141, %s143
    %p150 = scmp.eq.s32.totalorder %s23, 1
    %p151 = por %p149, %p150
    %p152 = scmp.ne.s32.totalorder %s143, %s144
    %p153 = scmp.eq.s32.totalorder %s23, 0
    %p154 = por %p152, %p153
    %p155 = scmp.ne.s32.totalorder %s143, %s144
    %p156 = scmp.eq.s32.totalorder %s24, 1
    %p157 = por %p155, %p156
    %p159 = scmp.ne.s32.totalorder %s144, %s158
    %p160 = scmp.eq.s32.totalorder %s24, 0
    %p161 = por %p159, %p160
    %s163 = sadd.s32 %s162, 1
    %p166 = scmp.eq.s32.totalorder %s18, 1
    %p167 = scmp.ne.s32.totalorder %s162, %s164
    %p168 = scmp.eq.s32.totalorder %s18, 0
    %p169 = por %p167, %p168
    %p170 = scmp.ne.s32.totalorder %s162, %s164
    %p171 = scmp.eq.s32.totalorder %s23, 1
    %p172 = por %p170, %p171
    %p173 = scmp.ne.s32.totalorder %s164, %s165
    %p174 = scmp.eq.s32.totalorder %s23, 0
    %p175 = por %p173, %p174
    %p176 = scmp.ne.s32.totalorder %s164, %s165
    %p177 = scmp.eq.s32.totalorder %s24, 1
    %p178 = por %p176, %p177
    %p180 = scmp.ne.s32.totalorder %s165, %s179
    %p181 = scmp.eq.s32.totalorder %s24, 0
    %p182 = por %p180, %p181
    %s184 = sadd.s32 %s183, 1
    %p187 = scmp.eq.s32.totalorder %s18, 1
    %p188 = scmp.ne.s32.totalorder %s183, %s185
    %p189 = scmp.eq.s32.totalorder %s18, 0
    %p190 = por %p188, %p189
    %p191 = scmp.ne.s32.totalorder %s183, %s185
    %p192 = scmp.eq.s32.totalorder %s23, 1
    %p193 = por %p191, %p192
    %p194 = scmp.ne.s32.totalorder %s185, %s186
    %p195 = scmp.eq.s32.totalorder %s23, 0
    %p196 = por %p194, %p195
    %p197 = scmp.ne.s32.totalorder %s185, %s186
    %p198 = scmp.eq.s32.totalorder %s24, 1
    %p199 = por %p197, %p198
    %p201 = scmp.ne.s32.totalorder %s186, %s200
    %p202 = scmp.eq.s32.totalorder %s24, 0
    %p203 = por %p201, %p202
    %s205 = sadd.s32 %s204, 1
    %p208 = scmp.eq.s32.totalorder %s18, 1
    %p209 = scmp.ne.s32.totalorder %s204, %s206
    %p210 = scmp.eq.s32.totalorder %s18, 0
    %p211 = por %p209, %p210
    %p212 = scmp.ne.s32.totalorder %s204, %s206
    %p213 = scmp.eq.s32.totalorder %s23, 1
    %p214 = por %p212, %p213
    %p215 = scmp.ne.s32.totalorder %s206, %s207
    %p216 = scmp.eq.s32.totalorder %s23, 0
    %p217 = por %p215, %p216
    %p218 = scmp.ne.s32.totalorder %s206, %s207
    %p219 = scmp.eq.s32.totalorder %s24, 1
    %p220 = por %p218, %p219
    %p222 = scmp.ne.s32.totalorder %s207, %s221
    %p223 = scmp.eq.s32.totalorder %s24, 0
    %p224 = por %p222, %p223
    %s226 = sadd.s32 %s225, 1
    %p229 = scmp.eq.s32.totalorder %s18, 1
    %p230 = scmp.ne.s32.totalorder %s225, %s227
    %p231 = scmp.eq.s32.totalorder %s18, 0
    %p232 = por %p230, %p231
    %p233 = scmp.ne.s32.totalorder %s225, %s227
    %p234 = scmp.eq.s32.totalorder %s23, 1
    %p235 = por %p233, %p234
    %p236 = scmp.ne.s32.totalorder %s227, %s228
    %p237 = scmp.eq.s32.totalorder %s23, 0
    %p238 = por %p236, %p237
    %p239 = scmp.ne.s32.totalorder %s227, %s228
    %p240 = scmp.eq.s32.totalorder %s24, 1
    %p241 = por %p239, %p240
    %p243 = scmp.ne.s32.totalorder %s228, %s242
    %p244 = scmp.eq.s32.totalorder %s24, 0
    %p245 = por %p243, %p244
    %s247 = sadd.s32 %s246, 1
    %p250 = scmp.eq.s32.totalorder %s18, 1
    %p251 = scmp.ne.s32.totalorder %s246, %s248
    %p252 = scmp.eq.s32.totalorder %s18, 0
    %p253 = por %p251, %p252
    %p254 = scmp.ne.s32.totalorder %s246, %s248
    %p255 = scmp.eq.s32.totalorder %s23, 1
    %p256 = por %p254, %p255
    %p257 = scmp.ne.s32.totalorder %s248, %s249
    %p258 = scmp.eq.s32.totalorder %s23, 0
    %p259 = por %p257, %p258
    %p260 = scmp.ne.s32.totalorder %s248, %s249
    %p261 = scmp.eq.s32.totalorder %s24, 1
    %p262 = por %p260, %p261
    %p264 = scmp.ne.s32.totalorder %s249, %s263
    %p265 = scmp.eq.s32.totalorder %s24, 0
    %p266 = por %p264, %p265
    %s268 = sadd.s32 %s267, 1
    %p271 = scmp.eq.s32.totalorder %s18, 1
    %p272 = scmp.ne.s32.totalorder %s267, %s269
    %p273 = scmp.eq.s32.totalorder %s18, 0
    %p274 = por %p272, %p273
    %p275 = scmp.ne.s32.totalorder %s267, %s269
    %p276 = scmp.eq.s32.totalorder %s23, 1
    %p277 = por %p275, %p276
    %p278 = scmp.ne.s32.totalorder %s269, %s270
    %p279 = scmp.eq.s32.totalorder %s23, 0
    %p280 = por %p278, %p279
    %p281 = scmp.ne.s32.totalorder %s269, %s270
    %p282 = scmp.eq.s32.totalorder %s24, 1
    %p283 = por %p281, %p282
    %p285 = scmp.ne.s32.totalorder %s270, %s284
    %p286 = scmp.eq.s32.totalorder %s24, 0
    %p287 = por %p285, %p286
    %s288 = ssub.s32 %s18, %s25
    %p289 = scmp.eq.s32.totalorder %s288, 0
    %s291 = sadd.s32 %s290, 1
    %s292 = scalar_select %p289, %s290, %s291
    %p295 = pneg %p289
    %p296 = scmp.eq.s32.totalorder %s18, 1
    %p297 = por %p295, %p296
    %p298 = scmp.ne.s32.totalorder %s290, %s293
    %p299 = scmp.eq.s32.totalorder %s18, 0
    %p300 = por %p298, %p299
    %p301 = scmp.ne.s32.totalorder %s290, %s293
    %p302 = scmp.eq.s32.totalorder %s23, 1
    %p303 = por %p301, %p302
    %p304 = scmp.ne.s32.totalorder %s293, %s294
    %p305 = scmp.eq.s32.totalorder %s23, 0
    %p306 = por %p304, %p305
    %p307 = scmp.ne.s32.totalorder %s293, %s294
    %p308 = scmp.eq.s32.totalorder %s24, 1
    %p309 = por %p307, %p308
    %p311 = scmp.ne.s32.totalorder %s294, %s310
    %p312 = scmp.eq.s32.totalorder %s24, 0
    %p313 = por %p311, %p312
    %p314 = scmp.le.s32.totalorder 1, %s18
    %p315 = scmp.lt.s32.totalorder %s18, 3
    %p316 = pnand %p314, %p315
    %p317 = pneg %p316
    // Predicated region
    $region9: #{captioning_transformer_forward.10} parent=5 // pred_check
      _
    $region10: #{captioning_transformer_forward.10} parent=5 // pred_check_branch
      %319 = sbr.rel (%p316) target = $region12
    $region11: #{captioning_transformer_forward.10} parent=5 // pred_region
      %s320 = ssub.s32 %s18, 1
      // Predicated region
      $region13: #{captioning_transformer_forward.10} parent=11 // pred_check
        %p321 = pneg %p91
      $region14: #{captioning_transformer_forward.10} parent=11 // pred_check_branch
        %323 = sbr.rel (%p321) target = $region16
      $region15: #{captioning_transformer_forward.10} parent=11 // pred_region
        _
      $region16: #{captioning_transformer_forward.10} parent=11 // pred_fallthru
        _
      // Predicated region
      $region17: #{captioning_transformer_forward.10} parent=11 // pred_check
        %p324 = pneg %p112
      $region18: #{captioning_transformer_forward.10} parent=11 // pred_check_branch
        %326 = sbr.rel (%p324) target = $region20
      $region19: #{captioning_transformer_forward.10} parent=11 // pred_region
        _
      $region20: #{captioning_transformer_forward.10} parent=11 // pred_fallthru
        _
      // Predicated region
      $region21: #{captioning_transformer_forward.10} parent=11 // pred_check
        %p327 = pneg %p133
      $region22: #{captioning_transformer_forward.10} parent=11 // pred_check_branch
        %329 = sbr.rel (%p327) target = $region24
      $region23: #{captioning_transformer_forward.10} parent=11 // pred_region
        _
      $region24: #{captioning_transformer_forward.10} parent=11 // pred_fallthru
        _
      // Predicated region
      $region25: #{captioning_transformer_forward.10} parent=11 // pred_check
        %p330 = pneg %p154
      $region26: #{captioning_transformer_forward.10} parent=11 // pred_check_branch
        %332 = sbr.rel (%p330) target = $region28
      $region27: #{captioning_transformer_forward.10} parent=11 // pred_region
        _
      $region28: #{captioning_transformer_forward.10} parent=11 // pred_fallthru
        _
      // Predicated region
      $region29: #{captioning_transformer_forward.10} parent=11 // pred_check
        %p333 = pneg %p175
      $region30: #{captioning_transformer_forward.10} parent=11 // pred_check_branch
        %335 = sbr.rel (%p333) target = $region32
      $region31: #{captioning_transformer_forward.10} parent=11 // pred_region
        _
      $region32: #{captioning_transformer_forward.10} parent=11 // pred_fallthru
        _
      // Predicated region
      $region33: #{captioning_transformer_forward.10} parent=11 // pred_check
        %p336 = pneg %p196
      $region34: #{captioning_transformer_forward.10} parent=11 // pred_check_branch
        %338 = sbr.rel (%p336) target = $region36
      $region35: #{captioning_transformer_forward.10} parent=11 // pred_region
        _
      $region36: #{captioning_transformer_forward.10} parent=11 // pred_fallthru
        _
      // Predicated region
      $region37: #{captioning_transformer_forward.10} parent=11 // pred_check
        %p339 = pneg %p217
      $region38: #{captioning_transformer_forward.10} parent=11 // pred_check_branch
        %341 = sbr.rel (%p339) target = $region40
      $region39: #{captioning_transformer_forward.10} parent=11 // pred_region
        _
      $region40: #{captioning_transformer_forward.10} parent=11 // pred_fallthru
        _
      // Predicated region
      $region41: #{captioning_transformer_forward.10} parent=11 // pred_check
        %p342 = pneg %p238
      $region42: #{captioning_transformer_forward.10} parent=11 // pred_check_branch
        %344 = sbr.rel (%p342) target = $region44
      $region43: #{captioning_transformer_forward.10} parent=11 // pred_region
        _
      $region44: #{captioning_transformer_forward.10} parent=11 // pred_fallthru
        _
      // Predicated region
      $region45: #{captioning_transformer_forward.10} parent=11 // pred_check
        %p345 = pneg %p259
      $region46: #{captioning_transformer_forward.10} parent=11 // pred_check_branch
        %347 = sbr.rel (%p345) target = $region48
      $region47: #{captioning_transformer_forward.10} parent=11 // pred_region
        _
      $region48: #{captioning_transformer_forward.10} parent=11 // pred_fallthru
        _
      // Predicated region
      $region49: #{captioning_transformer_forward.10} parent=11 // pred_check
        %p348 = pneg %p280
      $region50: #{captioning_transformer_forward.10} parent=11 // pred_check_branch
        %350 = sbr.rel (%p348) target = $region52
      $region51: #{captioning_transformer_forward.10} parent=11 // pred_region
        _
      $region52: #{captioning_transformer_forward.10} parent=11 // pred_fallthru
        _
    $region12: #{captioning_transformer_forward.10} parent=5 // pred_fallthru
      _
    %p351 = scmp.lt.s32.totalorder %s18, 2
    // Predicated region
    $region53: #{captioning_transformer_forward.10} parent=5 // pred_check
      %p352 = pneg %p351
    $region54: #{captioning_transformer_forward.10} parent=5 // pred_check_branch
      %354 = sbr.rel (%p352) target = $region56
    $region55: #{captioning_transformer_forward.10} parent=5 // pred_region
      // Predicated region
      $region57: #{captioning_transformer_forward.10} parent=55 // pred_check
        %p355 = pneg %p38
      $region58: #{captioning_transformer_forward.10} parent=55 // pred_check_branch
        %357 = sbr.rel (%p355) target = $region60
      $region59: #{captioning_transformer_forward.10} parent=55 // pred_region
        %p358 = scmp.lt.s32.totalorder %s18, 1
        %s359 = scalar_select %p358, %s18, 1
        %s360 = smul.addr %s359, 8
        %s361 = scalar_lea.vmem %s0, %s360
      $region60: #{captioning_transformer_forward.10} parent=55 // pred_fallthru
        _
      // Predicated region
      $region61: #{captioning_transformer_forward.10} parent=55 // pred_check
        %p362 = pneg %p64
      $region62: #{captioning_transformer_forward.10} parent=55 // pred_check_branch
        %364 = sbr.rel (%p362) target = $region64
      $region63: #{captioning_transformer_forward.10} parent=55 // pred_region
        %p365 = scmp.lt.s32.totalorder %s18, 1
        %s366 = scalar_select %p365, %s18, 1
        %s367 = scalar_lea.vmem %s1, %s366
      $region64: #{captioning_transformer_forward.10} parent=55 // pred_fallthru
        _
    $region56: #{captioning_transformer_forward.10} parent=5 // pred_fallthru
      _
    %p368 = scmp.le.s32.totalorder 1, %s18
    %p369 = scmp.lt.s32.totalorder %s18, 3
    %p370 = pnand %p368, %p369
    %p371 = pneg %p370
    // Predicated region
    $region65: #{captioning_transformer_forward.10} parent=5 // pred_check
      _
    $region66: #{captioning_transformer_forward.10} parent=5 // pred_check_branch
      %373 = sbr.rel (%p370) target = $region68
    $region67: #{captioning_transformer_forward.10} parent=5 // pred_region
      %s374 = ssub.s32 %s18, 1
      %p375 = scmp.lt.s32.totalorder %s23, 1
      %s376 = scalar_select %p375, %s23, 1
      %s377 = smul.addr %s376, 8
      %s378 = scalar_lea.vmem %s0, %s377
      %p379 = pneg %p44
      %p380 = pneg %p41
      %p381 = scmp.lt.s32.totalorder %s23, 1
      %s382 = scalar_select %p381, %s23, 1
      %s383 = scalar_lea.vmem %s1, %s382
      %p384 = pneg %p70
      %p385 = pneg %p67
      %p386 = pneg %p91
      %p387 = pneg %p88
      %p388 = pneg %p112
      %p389 = pneg %p109
      %p390 = pneg %p133
      %p391 = pneg %p130
      %p392 = pneg %p154
      %p393 = pneg %p151
      %p394 = pneg %p175
      %p395 = pneg %p172
      %p396 = pneg %p196
      %p397 = pneg %p193
      %p398 = pneg %p217
      %p399 = pneg %p214
      %p400 = pneg %p238
      %p401 = pneg %p235
      %p402 = pneg %p259
      %p403 = pneg %p256
      %p404 = pneg %p280
      %p405 = pneg %p277
      %p406 = pneg %p306
      %p407 = pneg %p303
      %p408 = scmp.lt.s32.totalorder %s23, 1
      %s409 = scalar_select %p408, %s23, 1
      %s410 = smul.addr %s409, 8
      %s411 = scalar_lea.vmem %s12, %s410
      %p412 = scmp.lt.s32.totalorder %s23, 1
      %s413 = scalar_select %p412, %s23, 1
      %s414 = smul.addr %s413, 8
      %s415 = scalar_lea.vmem %s0, %s414
      %p416 = scmp.lt.s32.totalorder %s23, 1
      %s417 = scalar_select %p416, %s23, 1
      %s418 = scalar_lea.vmem %s1, %s417
      %p419 = scmp.lt.s32.totalorder %s23, 1
      %s420 = scalar_select %p419, %s23, 1
      %s421 = smul.addr %s420, 8
      %s422 = scalar_lea.vmem %s12, %s421
      %v423 = vld [vmem:[%s415] sm:$0xff]
      %v424 = vld [vmem:[%s418] sm:$0x1]
      %v425 = vld [vmem:[%s2] sm:$0xff]
      %v426 = vld [vmem:[%s2 + $0x8] sm:$0xff]
      %v427 = vld [vmem:[%s2 + $0x10] sm:$0xff]
      %v428 = vld [vmem:[%s2 + $0x18] sm:$0xff]
      %v429 = vld [vmem:[%s3] sm:$0x1]
      %v431 = vlaneseq
      %v432 = vshrl.u32 %v431, 7
      %v433 = vsub.s32 0, %v432
      %v434 = vrot.slane %v429, %v433
      %vm436 = vcmask 261120
      %v438 = vsel %vm436, %v423, 0
      %440 = vmatprep.subr.mxu0 0.0
      %441 = vmatpush1.msra.mxu0 %v425
      %442 = vmatprep.subr.mxu0 0.0
      %443 = vmatpush1.msra.mxu0 %v426
      %444 = vmatprep.subr.mxu0 0.0
      %445 = vmatpush1.msra.mxu0 %v427
      %446 = vmatprep.subr.mxu0 0.0
      %447 = vmatpush1.msra.mxu0 %v428
      %448 = vmatprep.subr.mxu0 0.0
      %449 = vmatpush1.msra.mxu0 0.0
      %450 = vmatprep.subr.mxu0 0.0
      %451 = vmatpush1.msra.mxu0 0.0
      %452 = vmatprep.subr.mxu0 0.0
      %453 = vmatpush1.msra.mxu0 0.0
      %454 = vmatprep.subr.mxu0 0.0
      %455 = vmatpush1.msra.mxu0 0.0
      %456 = vmatprep.subr.mxu0 0.0
      %457 = vmatpush1.msra.mxu0 0.0
      %458 = vmatprep.subr.mxu0 0.0
      %459 = vmatpush1.msra.mxu0 0.0
      %460 = vmatprep.subr.mxu0 0.0
      %461 = vmatpush1.msra.mxu0 0.0
      %462 = vmatprep.subr.mxu0 0.0
      %463 = vmatpush1.msra.mxu0 0.0
      %464 = vmatprep.subr.mxu0 0.0
      %465 = vmatpush1.msra.mxu0 0.0
      %466 = vmatprep.subr.mxu0 0.0
      %467 = vmatpush1.msra.mxu0 0.0
      %468 = vmatprep.subr.mxu0 0.0
      %469 = vmatpush1.msra.mxu0 0.0
      %470 = vmatprep.subr.mxu0 0.0
      %471 = vmatpush1.msra.mxu0 0.0
      %472 = vmatprep.subr.mxu0 0.0
      %473 = vmatpush1.msra.mxu0 0.0
      %474 = vmatprep.subr.mxu0 0.0
      %475 = vmatpush1.msra.mxu0 0.0
      %476 = vmatprep.subr.mxu0 0.0
      %477 = vmatpush1.msra.mxu0 0.0
      %478 = vmatprep.subr.mxu0 0.0
      %479 = vmatpush1.msra.mxu0 0.0
      %480 = vmatprep.subr.mxu0 0.0
      %481 = vmatpush1.msra.mxu0 0.0
      %482 = vmatprep.subr.mxu0 0.0
      %483 = vmatpush1.msra.mxu0 0.0
      %484 = vmatprep.subr.mxu0 0.0
      %485 = vmatpush1.msra.mxu0 0.0
      %486 = vmatprep.subr.mxu0 0.0
      %487 = vmatpush1.msra.mxu0 0.0
      %488 = vmatprep.subr.mxu0 0.0
      %489 = vmatpush1.msra.mxu0 0.0
      %490 = vmatprep.subr.mxu0 0.0
      %491 = vmatpush1.msra.mxu0 0.0
      %492 = vmatprep.subr.mxu0 0.0
      %493 = vmatpush1.msra.mxu0 0.0
      %494 = vmatprep.subr.mxu0 0.0
      %495 = vmatpush1.msra.mxu0 0.0
      %496 = vmatprep.subr.mxu0 0.0
      %497 = vmatpush1.msra.mxu0 0.0
      %498 = vmatprep.subr.mxu0 0.0
      %499 = vmatpush1.msra.mxu0 0.0
      %500 = vmatprep.subr.mxu0 0.0
      %501 = vmatpush1.msra.mxu0 0.0
      %502 = vmatprep.subr.mxu0 0.0
      %503 = vmatpush1.msra.mxu0 0.0
      %504 = vmatprep.mubr.f32.mxu0 0.0
      %505 = vmatmul.mubr.f32.gmra.mrb[0].mxu0 %v438
      %v506 = vpop.f32.mrb[0].mxu0
      %v507 = vadd.f32 %v434, %v506
      %v508 = vpop.f32.mrb[0].mxu0
      %509 = vdwg.mxu0
      %v510 = vld [vmem:[%s4] sm:$0xff]
      %v511 = vld [vmem:[%s4 + $0x8] sm:$0xff]
      %v512 = vld [vmem:[%s4 + $0x10] sm:$0xff]
      %v513 = vld [vmem:[%s4 + $0x18] sm:$0xff]
      %v514 = vld [vmem:[%s5] sm:$0x1]
      %v516 = vsel %vm436, %v424, 0
      %518 = vmatprep.subr.mxu0 0.0
      %519 = vmatpush1.msra.mxu0 %v510
      %520 = vmatprep.subr.mxu0 0.0
      %521 = vmatpush1.msra.mxu0 %v511
      %522 = vmatprep.subr.mxu0 0.0
      %523 = vmatpush1.msra.mxu0 %v512
      %524 = vmatprep.subr.mxu0 0.0
      %525 = vmatpush1.msra.mxu0 %v513
      %526 = vmatprep.subr.mxu0 0.0
      %527 = vmatpush1.msra.mxu0 0.0
      %528 = vmatprep.subr.mxu0 0.0
      %529 = vmatpush1.msra.mxu0 0.0
      %530 = vmatprep.subr.mxu0 0.0
      %531 = vmatpush1.msra.mxu0 0.0
      %532 = vmatprep.subr.mxu0 0.0
      %533 = vmatpush1.msra.mxu0 0.0
      %534 = vmatprep.subr.mxu0 0.0
      %535 = vmatpush1.msra.mxu0 0.0
      %536 = vmatprep.subr.mxu0 0.0
      %537 = vmatpush1.msra.mxu0 0.0
      %538 = vmatprep.subr.mxu0 0.0
      %539 = vmatpush1.msra.mxu0 0.0
      %540 = vmatprep.subr.mxu0 0.0
      %541 = vmatpush1.msra.mxu0 0.0
      %542 = vmatprep.subr.mxu0 0.0
      %543 = vmatpush1.msra.mxu0 0.0
      %544 = vmatprep.subr.mxu0 0.0
      %545 = vmatpush1.msra.mxu0 0.0
      %546 = vmatprep.subr.mxu0 0.0
      %547 = vmatpush1.msra.mxu0 0.0
      %548 = vmatprep.subr.mxu0 0.0
      %549 = vmatpush1.msra.mxu0 0.0
      %550 = vmatprep.subr.mxu0 0.0
      %551 = vmatpush1.msra.mxu0 0.0
      %552 = vmatprep.subr.mxu0 0.0
      %553 = vmatpush1.msra.mxu0 0.0
      %554 = vmatprep.subr.mxu0 0.0
      %555 = vmatpush1.msra.mxu0 0.0
      %556 = vmatprep.subr.mxu0 0.0
      %557 = vmatpush1.msra.mxu0 0.0
      %558 = vmatprep.subr.mxu0 0.0
      %559 = vmatpush1.msra.mxu0 0.0
      %560 = vmatprep.subr.mxu0 0.0
      %561 = vmatpush1.msra.mxu0 0.0
      %562 = vmatprep.subr.mxu0 0.0
      %563 = vmatpush1.msra.mxu0 0.0
      %564 = vmatprep.subr.mxu0 0.0
      %565 = vmatpush1.msra.mxu0 0.0
      %566 = vmatprep.subr.mxu0 0.0
      %567 = vmatpush1.msra.mxu0 0.0
      %568 = vmatprep.subr.mxu0 0.0
      %569 = vmatpush1.msra.mxu0 0.0
      %570 = vmatprep.subr.mxu0 0.0
      %571 = vmatpush1.msra.mxu0 0.0
      %572 = vmatprep.subr.mxu0 0.0
      %573 = vmatpush1.msra.mxu0 0.0
      %574 = vmatprep.subr.mxu0 0.0
      %575 = vmatpush1.msra.mxu0 0.0
      %576 = vmatprep.subr.mxu0 0.0
      %577 = vmatpush1.msra.mxu0 0.0
      %578 = vmatprep.subr.mxu0 0.0
      %579 = vmatpush1.msra.mxu0 0.0
      %580 = vmatprep.subr.mxu0 0.0
      %581 = vmatpush1.msra.mxu0 0.0
      %582 = vmatprep.mubr.f32.mxu0 0.0
      %583 = vmatmul.mubr.f32.gmra.mrb[0].mxu0 %v516
      %v584 = vpop.f32.mrb[0].mxu0
      %v585 = vadd.f32 %v514, %v584
      %v586 = vpop.f32.mrb[0].mxu0
      %587 = vdwg.mxu0
      %v588 = vld [vmem:[%s6] sm:$0xff]
      %v589 = vld [vmem:[%s6 + $0x8] sm:$0xff]
      %v590 = vld [vmem:[%s6 + $0x10] sm:$0xff]
      %v591 = vld [vmem:[%s6 + $0x18] sm:$0xff]
      %v592 = vld [vmem:[%s7] sm:$0x1]
      %593 = vmatprep.subr.mxu0 0.0
      %594 = vmatpush1.msra.mxu0 %v588
      %595 = vmatprep.subr.mxu0 0.0
      %596 = vmatpush1.msra.mxu0 %v589
      %597 = vmatprep.subr.mxu0 0.0
      %598 = vmatpush1.msra.mxu0 %v590
      %599 = vmatprep.subr.mxu0 0.0
      %600 = vmatpush1.msra.mxu0 %v591
      %601 = vmatprep.subr.mxu0 0.0
      %602 = vmatpush1.msra.mxu0 0.0
      %603 = vmatprep.subr.mxu0 0.0
      %604 = vmatpush1.msra.mxu0 0.0
      %605 = vmatprep.subr.mxu0 0.0
      %606 = vmatpush1.msra.mxu0 0.0
      %607 = vmatprep.subr.mxu0 0.0
      %608 = vmatpush1.msra.mxu0 0.0
      %609 = vmatprep.subr.mxu0 0.0
      %610 = vmatpush1.msra.mxu0 0.0
      %611 = vmatprep.subr.mxu0 0.0
      %612 = vmatpush1.msra.mxu0 0.0
      %613 = vmatprep.subr.mxu0 0.0
      %614 = vmatpush1.msra.mxu0 0.0
      %615 = vmatprep.subr.mxu0 0.0
      %616 = vmatpush1.msra.mxu0 0.0
      %617 = vmatprep.subr.mxu0 0.0
      %618 = vmatpush1.msra.mxu0 0.0
      %619 = vmatprep.subr.mxu0 0.0
      %620 = vmatpush1.msra.mxu0 0.0
      %621 = vmatprep.subr.mxu0 0.0
      %622 = vmatpush1.msra.mxu0 0.0
      %623 = vmatprep.subr.mxu0 0.0
      %624 = vmatpush1.msra.mxu0 0.0
      %625 = vmatprep.subr.mxu0 0.0
      %626 = vmatpush1.msra.mxu0 0.0
      %627 = vmatprep.subr.mxu0 0.0
      %628 = vmatpush1.msra.mxu0 0.0
      %629 = vmatprep.subr.mxu0 0.0
      %630 = vmatpush1.msra.mxu0 0.0
      %631 = vmatprep.subr.mxu0 0.0
      %632 = vmatpush1.msra.mxu0 0.0
      %633 = vmatprep.subr.mxu0 0.0
      %634 = vmatpush1.msra.mxu0 0.0
      %635 = vmatprep.subr.mxu0 0.0
      %636 = vmatpush1.msra.mxu0 0.0
      %637 = vmatprep.subr.mxu0 0.0
      %638 = vmatpush1.msra.mxu0 0.0
      %639 = vmatprep.subr.mxu0 0.0
      %640 = vmatpush1.msra.mxu0 0.0
      %641 = vmatprep.subr.mxu0 0.0
      %642 = vmatpush1.msra.mxu0 0.0
      %643 = vmatprep.subr.mxu0 0.0
      %644 = vmatpush1.msra.mxu0 0.0
      %645 = vmatprep.subr.mxu0 0.0
      %646 = vmatpush1.msra.mxu0 0.0
      %647 = vmatprep.subr.mxu0 0.0
      %648 = vmatpush1.msra.mxu0 0.0
      %649 = vmatprep.subr.mxu0 0.0
      %650 = vmatpush1.msra.mxu0 0.0
      %651 = vmatprep.subr.mxu0 0.0
      %652 = vmatpush1.msra.mxu0 0.0
      %653 = vmatprep.subr.mxu0 0.0
      %654 = vmatpush1.msra.mxu0 0.0
      %655 = vmatprep.subr.mxu0 0.0
      %656 = vmatpush1.msra.mxu0 0.0
      %657 = vmatprep.mubr.f32.mxu0 0.0
      %658 = vmatmul.mubr.f32.gmra.mrb[0].mxu0 %v516
      %v659 = vpop.f32.mrb[0].mxu0
      %v660 = vadd.f32 %v592, %v659
      %v661 = vpop.f32.mrb[0].mxu0
      %662 = vdwg.mxu0
      %v663 = vlaneseq
      %v664 = vshrl.u32 %v663, 7
      %v665 = vsub.s32 0, %v664
      %v666 = vrot.slane %v585, %v665
      %v667 = vmul.f32 %v507, %v666
      %vm668 = vcmask 64512
      %v669 = vsel %vm668, %v667, 0.0
      %670 = vadd.xlane.f32.xlu0 %v669
      %v671 = vpop.xlane.xlu0 %670
      %v672 = vmul.f32 %v671, 0.35355338
      %v673 = vsub.f32 %v672, %v672
      %v674 = vmul.f32 %v673, 1.442695
      %v675 = vpow.pop %v674
      %v676 = vadd.f32 %v675, 0.0
      %v677 = vrcp.pop %v676
      %v678 = vmul.f32 %v675, %v677
      %vm679 = vcmask 7168
      %v681 = vsel %vm679, %v678, 0
      %vm683 = vcmask 1040384
      %v685 = vsel %vm683, %v660, 0
      %687 = vmatprep.subr.mxu0 0.0
      %688 = vmatpush1.msra.mxu0 %v685
      %689 = vmatprep.subr.mxu0 0.0
      %690 = vmatpush1.msra.mxu0 0.0
      %691 = vmatprep.subr.mxu0 0.0
      %692 = vmatpush1.msra.mxu0 0.0
      %693 = vmatprep.subr.mxu0 0.0
      %694 = vmatpush1.msra.mxu0 0.0
      %695 = vmatprep.subr.mxu0 0.0
      %696 = vmatpush1.msra.mxu0 0.0
      %697 = vmatprep.subr.mxu0 0.0
      %698 = vmatpush1.msra.mxu0 0.0
      %699 = vmatprep.subr.mxu0 0.0
      %700 = vmatpush1.msra.mxu0 0.0
      %701 = vmatprep.subr.mxu0 0.0
      %702 = vmatpush1.msra.mxu0 0.0
      %703 = vmatprep.subr.mxu0 0.0
      %704 = vmatpush1.msra.mxu0 0.0
      %705 = vmatprep.subr.mxu0 0.0
      %706 = vmatpush1.msra.mxu0 0.0
      %707 = vmatprep.subr.mxu0 0.0
      %708 = vmatpush1.msra.mxu0 0.0
      %709 = vmatprep.subr.mxu0 0.0
      %710 = vmatpush1.msra.mxu0 0.0
      %711 = vmatprep.subr.mxu0 0.0
      %712 = vmatpush1.msra.mxu0 0.0
      %713 = vmatprep.subr.mxu0 0.0
      %714 = vmatpush1.msra.mxu0 0.0
      %715 = vmatprep.subr.mxu0 0.0
      %716 = vmatpush1.msra.mxu0 0.0
      %717 = vmatprep.subr.mxu0 0.0
      %718 = vmatpush1.msra.mxu0 0.0
      %719 = vmatprep.subr.mxu0 0.0
      %720 = vmatpush1.msra.mxu0 0.0
      %721 = vmatprep.subr.mxu0 0.0
      %722 = vmatpush1.msra.mxu0 0.0
      %723 = vmatprep.subr.mxu0 0.0
      %724 = vmatpush1.msra.mxu0 0.0
      %725 = vmatprep.subr.mxu0 0.0
      %726 = vmatpush1.msra.mxu0 0.0
      %727 = vmatprep.subr.mxu0 0.0
      %728 = vmatpush1.msra.mxu0 0.0
      %729 = vmatprep.subr.mxu0 0.0
      %730 = vmatpush1.msra.mxu0 0.0
      %731 = vmatprep.subr.mxu0 0.0
      %732 = vmatpush1.msra.mxu0 0.0
      %733 = vmatprep.subr.mxu0 0.0
      %734 = vmatpush1.msra.mxu0 0.0
      %735 = vmatprep.subr.mxu0 0.0
      %736 = vmatpush1.msra.mxu0 0.0
      %737 = vmatprep.subr.mxu0 0.0
      %738 = vmatpush1.msra.mxu0 0.0
      %739 = vmatprep.subr.mxu0 0.0
      %740 = vmatpush1.msra.mxu0 0.0
      %741 = vmatprep.subr.mxu0 0.0
      %742 = vmatpush1.msra.mxu0 0.0
      %743 = vmatprep.subr.mxu0 0.0
      %744 = vmatpush1.msra.mxu0 0.0
      %745 = vmatprep.subr.mxu0 0.0
      %746 = vmatpush1.msra.mxu0 0.0
      %747 = vmatprep.subr.mxu0 0.0
      %748 = vmatpush1.msra.mxu0 0.0
      %749 = vmatprep.subr.mxu0 0.0
      %750 = vmatpush1.msra.mxu0 0.0
      %751 = vmatprep.mubr.f32.mxu0 0.0
      %752 = vmatmul.mubr.f32.gmra.mrb[0].mxu0 %v681
      %v753 = vpop.f32.mrb[0].mxu0
      %v754 = vadd.f32 0.0, %v753
      %v755 = vpop.f32.mrb[0].mxu0
      %756 = vdwg.mxu0
      %v757 = vld [vmem:[%s8] sm:$0xff]
      %s758 = scalar_lea.vmem %s2, 32
      %v759 = vld [vmem:[%s758] sm:$0xff]
      %v760 = vld [vmem:[%s758 + $0x8] sm:$0xff]
      %v761 = vld [vmem:[%s758 + $0x10] sm:$0xff]
      %v762 = vld [vmem:[%s758 + $0x18] sm:$0xff]
      %s763 = scalar_lea.vmem %s3, 1
      %v764 = vld [vmem:[%s763] sm:$0x1]
      %v766 = vlaneseq
      %v767 = vshrl.u32 %v766, 7
      %v768 = vsub.s32 0, %v767
      %v769 = vrot.slane %v764, %v768
      %771 = vmatprep.subr.mxu0 0.0
      %772 = vmatpush1.msra.mxu0 %v759
      %773 = vmatprep.subr.mxu0 0.0
      %774 = vmatpush1.msra.mxu0 %v760
      %775 = vmatprep.subr.mxu0 0.0
      %776 = vmatpush1.msra.mxu0 %v761
      %777 = vmatprep.subr.mxu0 0.0
      %778 = vmatpush1.msra.mxu0 %v762
      %779 = vmatprep.subr.mxu0 0.0
      %780 = vmatpush1.msra.mxu0 0.0
      %781 = vmatprep.subr.mxu0 0.0
      %782 = vmatpush1.msra.mxu0 0.0
      %783 = vmatprep.subr.mxu0 0.0
      %784 = vmatpush1.msra.mxu0 0.0
      %785 = vmatprep.subr.mxu0 0.0
      %786 = vmatpush1.msra.mxu0 0.0
      %787 = vmatprep.subr.mxu0 0.0
      %788 = vmatpush1.msra.mxu0 0.0
      %789 = vmatprep.subr.mxu0 0.0
      %790 = vmatpush1.msra.mxu0 0.0
      %791 = vmatprep.subr.mxu0 0.0
      %792 = vmatpush1.msra.mxu0 0.0
      %793 = vmatprep.subr.mxu0 0.0
      %794 = vmatpush1.msra.mxu0 0.0
      %795 = vmatprep.subr.mxu0 0.0
      %796 = vmatpush1.msra.mxu0 0.0
      %797 = vmatprep.subr.mxu0 0.0
      %798 = vmatpush1.msra.mxu0 0.0
      %799 = vmatprep.subr.mxu0 0.0
      %800 = vmatpush1.msra.mxu0 0.0
      %801 = vmatprep.subr.mxu0 0.0
      %802 = vmatpush1.msra.mxu0 0.0
      %803 = vmatprep.subr.mxu0 0.0
      %804 = vmatpush1.msra.mxu0 0.0
      %805 = vmatprep.subr.mxu0 0.0
      %806 = vmatpush1.msra.mxu0 0.0
      %807 = vmatprep.subr.mxu0 0.0
      %808 = vmatpush1.msra.mxu0 0.0
      %809 = vmatprep.subr.mxu0 0.0
      %810 = vmatpush1.msra.mxu0 0.0
      %811 = vmatprep.subr.mxu0 0.0
      %812 = vmatpush1.msra.mxu0 0.0
      %813 = vmatprep.subr.mxu0 0.0
      %814 = vmatpush1.msra.mxu0 0.0
      %815 = vmatprep.subr.mxu0 0.0
      %816 = vmatpush1.msra.mxu0 0.0
      %817 = vmatprep.subr.mxu0 0.0
      %818 = vmatpush1.msra.mxu0 0.0
      %819 = vmatprep.subr.mxu0 0.0
      %820 = vmatpush1.msra.mxu0 0.0
      %821 = vmatprep.subr.mxu0 0.0
      %822 = vmatpush1.msra.mxu0 0.0
      %823 = vmatprep.subr.mxu0 0.0
      %824 = vmatpush1.msra.mxu0 0.0
      %825 = vmatprep.subr.mxu0 0.0
      %826 = vmatpush1.msra.mxu0 0.0
      %827 = vmatprep.subr.mxu0 0.0
      %828 = vmatpush1.msra.mxu0 0.0
      %829 = vmatprep.subr.mxu0 0.0
      %830 = vmatpush1.msra.mxu0 0.0
      %831 = vmatprep.subr.mxu0 0.0
      %832 = vmatpush1.msra.mxu0 0.0
      %833 = vmatprep.subr.mxu0 0.0
      %834 = vmatpush1.msra.mxu0 0.0
      %835 = vmatprep.mubr.f32.mxu0 0.0
      %836 = vmatmul.mubr.f32.gmra.mrb[0].mxu0 %v438
      %v837 = vpop.f32.mrb[0].mxu0
      %v838 = vadd.f32 %v769, %v837
      %v839 = vpop.f32.mrb[0].mxu0
      %840 = vdwg.mxu0
      %s841 = scalar_lea.vmem %s4, 32
      %v842 = vld [vmem:[%s841] sm:$0xff]
      %v843 = vld [vmem:[%s841 + $0x8] sm:$0xff]
      %v844 = vld [vmem:[%s841 + $0x10] sm:$0xff]
      %v845 = vld [vmem:[%s841 + $0x18] sm:$0xff]
      %s846 = scalar_lea.vmem %s5, 1
      %v847 = vld [vmem:[%s846] sm:$0x1]
      %848 = vmatprep.subr.mxu0 0.0
      %849 = vmatpush1.msra.mxu0 %v842
      %850 = vmatprep.subr.mxu0 0.0
      %851 = vmatpush1.msra.mxu0 %v843
      %852 = vmatprep.subr.mxu0 0.0
      %853 = vmatpush1.msra.mxu0 %v844
      %854 = vmatprep.subr.mxu0 0.0
      %855 = vmatpush1.msra.mxu0 %v845
      %856 = vmatprep.subr.mxu0 0.0
      %857 = vmatpush1.msra.mxu0 0.0
      %858 = vmatprep.subr.mxu0 0.0
      %859 = vmatpush1.msra.mxu0 0.0
      %860 = vmatprep.subr.mxu0 0.0
      %861 = vmatpush1.msra.mxu0 0.0
      %862 = vmatprep.subr.mxu0 0.0
      %863 = vmatpush1.msra.mxu0 0.0
      %864 = vmatprep.subr.mxu0 0.0
      %865 = vmatpush1.msra.mxu0 0.0
      %866 = vmatprep.subr.mxu0 0.0
      %867 = vmatpush1.msra.mxu0 0.0
      %868 = vmatprep.subr.mxu0 0.0
      %869 = vmatpush1.msra.mxu0 0.0
      %870 = vmatprep.subr.mxu0 0.0
      %871 = vmatpush1.msra.mxu0 0.0
      %872 = vmatprep.subr.mxu0 0.0
      %873 = vmatpush1.msra.mxu0 0.0
      %874 = vmatprep.subr.mxu0 0.0
      %875 = vmatpush1.msra.mxu0 0.0
      %876 = vmatprep.subr.mxu0 0.0
      %877 = vmatpush1.msra.mxu0 0.0
      %878 = vmatprep.subr.mxu0 0.0
      %879 = vmatpush1.msra.mxu0 0.0
      %880 = vmatprep.subr.mxu0 0.0
      %881 = vmatpush1.msra.mxu0 0.0
      %882 = vmatprep.subr.mxu0 0.0
      %883 = vmatpush1.msra.mxu0 0.0
      %884 = vmatprep.subr.mxu0 0.0
      %885 = vmatpush1.msra.mxu0 0.0
      %886 = vmatprep.subr.mxu0 0.0
      %887 = vmatpush1.msra.mxu0 0.0
      %888 = vmatprep.subr.mxu0 0.0
      %889 = vmatpush1.msra.mxu0 0.0
      %890 = vmatprep.subr.mxu0 0.0
      %891 = vmatpush1.msra.mxu0 0.0
      %892 = vmatprep.subr.mxu0 0.0
      %893 = vmatpush1.msra.mxu0 0.0
      %894 = vmatprep.subr.mxu0 0.0
      %895 = vmatpush1.msra.mxu0 0.0
      %896 = vmatprep.subr.mxu0 0.0
      %897 = vmatpush1.msra.mxu0 0.0
      %898 = vmatprep.subr.mxu0 0.0
      %899 = vmatpush1.msra.mxu0 0.0
      %900 = vmatprep.subr.mxu0 0.0
      %901 = vmatpush1.msra.mxu0 0.0
      %902 = vmatprep.subr.mxu0 0.0
      %903 = vmatpush1.msra.mxu0 0.0
      %904 = vmatprep.subr.mxu0 0.0
      %905 = vmatpush1.msra.mxu0 0.0
      %906 = vmatprep.subr.mxu0 0.0
      %907 = vmatpush1.msra.mxu0 0.0
      %908 = vmatprep.subr.mxu0 0.0
      %909 = vmatpush1.msra.mxu0 0.0
      %910 = vmatprep.subr.mxu0 0.0
      %911 = vmatpush1.msra.mxu0 0.0
      %912 = vmatprep.mubr.f32.mxu0 0.0
      %913 = vmatmul.mubr.f32.gmra.mrb[0].mxu0 %v516
      %v914 = vpop.f32.mrb[0].mxu0
      %v915 = vadd.f32 %v847, %v914
      %v916 = vpop.f32.mrb[0].mxu0
      %917 = vdwg.mxu0
      %s918 = scalar_lea.vmem %s6, 32
      %v919 = vld [vmem:[%s918] sm:$0xff]
      %v920 = vld [vmem:[%s918 + $0x8] sm:$0xff]
      %v921 = vld [vmem:[%s918 + $0x10] sm:$0xff]
      %v922 = vld [vmem:[%s918 + $0x18] sm:$0xff]
      %s923 = scalar_lea.vmem %s7, 1
      %v924 = vld [vmem:[%s923] sm:$0x1]
      %925 = vmatprep.subr.mxu0 0.0
      %926 = vmatpush1.msra.mxu0 %v919
      %927 = vmatprep.subr.mxu0 0.0
      %928 = vmatpush1.msra.mxu0 %v920
      %929 = vmatprep.subr.mxu0 0.0
      %930 = vmatpush1.msra.mxu0 %v921
      %931 = vmatprep.subr.mxu0 0.0
      %932 = vmatpush1.msra.mxu0 %v922
      %933 = vmatprep.subr.mxu0 0.0
      %934 = vmatpush1.msra.mxu0 0.0
      %935 = vmatprep.subr.mxu0 0.0
      %936 = vmatpush1.msra.mxu0 0.0
      %937 = vmatprep.subr.mxu0 0.0
      %938 = vmatpush1.msra.mxu0 0.0
      %939 = vmatprep.subr.mxu0 0.0
      %940 = vmatpush1.msra.mxu0 0.0
      %941 = vmatprep.subr.mxu0 0.0
      %942 = vmatpush1.msra.mxu0 0.0
      %943 = vmatprep.subr.mxu0 0.0
      %944 = vmatpush1.msra.mxu0 0.0
      %945 = vmatprep.subr.mxu0 0.0
      %946 = vmatpush1.msra.mxu0 0.0
      %947 = vmatprep.subr.mxu0 0.0
      %948 = vmatpush1.msra.mxu0 0.0
      %949 = vmatprep.subr.mxu0 0.0
      %950 = vmatpush1.msra.mxu0 0.0
      %951 = vmatprep.subr.mxu0 0.0
      %952 = vmatpush1.msra.mxu0 0.0
      %953 = vmatprep.subr.mxu0 0.0
      %954 = vmatpush1.msra.mxu0 0.0
      %955 = vmatprep.subr.mxu0 0.0
      %956 = vmatpush1.msra.mxu0 0.0
      %957 = vmatprep.subr.mxu0 0.0
      %958 = vmatpush1.msra.mxu0 0.0
      %959 = vmatprep.subr.mxu0 0.0
      %960 = vmatpush1.msra.mxu0 0.0
      %961 = vmatprep.subr.mxu0 0.0
      %962 = vmatpush1.msra.mxu0 0.0
      %963 = vmatprep.subr.mxu0 0.0
      %964 = vmatpush1.msra.mxu0 0.0
      %965 = vmatprep.subr.mxu0 0.0
      %966 = vmatpush1.msra.mxu0 0.0
      %967 = vmatprep.subr.mxu0 0.0
      %968 = vmatpush1.msra.mxu0 0.0
      %969 = vmatprep.subr.mxu0 0.0
      %970 = vmatpush1.msra.mxu0 0.0
      %971 = vmatprep.subr.mxu0 0.0
      %972 = vmatpush1.msra.mxu0 0.0
      %973 = vmatprep.subr.mxu0 0.0
      %974 = vmatpush1.msra.mxu0 0.0
      %975 = vmatprep.subr.mxu0 0.0
      %976 = vmatpush1.msra.mxu0 0.0
      %977 = vmatprep.subr.mxu0 0.0
      %978 = vmatpush1.msra.mxu0 0.0
      %979 = vmatprep.subr.mxu0 0.0
      %980 = vmatpush1.msra.mxu0 0.0
      %981 = vmatprep.subr.mxu0 0.0
      %982 = vmatpush1.msra.mxu0 0.0
      %983 = vmatprep.subr.mxu0 0.0
      %984 = vmatpush1.msra.mxu0 0.0
      %985 = vmatprep.subr.mxu0 0.0
      %986 = vmatpush1.msra.mxu0 0.0
      %987 = vmatprep.subr.mxu0 0.0
      %988 = vmatpush1.msra.mxu0 0.0
      %989 = vmatprep.mubr.f32.mxu0 0.0
      %990 = vmatmul.mubr.f32.gmra.mrb[0].mxu0 %v516
      %v991 = vpop.f32.mrb[0].mxu0
      %v992 = vadd.f32 %v924, %v991
      %v993 = vpop.f32.mrb[0].mxu0
      %994 = vdwg.mxu0
      %v995 = vlaneseq
      %v996 = vshrl.u32 %v995, 7
      %v997 = vsub.s32 0, %v996
      %v998 = vrot.slane %v915, %v997
      %v999 = vmul.f32 %v838, %v998
      %v1000 = vsel %vm668, %v999, 0.0
      %1001 = vadd.xlane.f32.xlu0 %v1000
      %v1002 = vpop.xlane.xlu0 %1001
      %v1003 = vmul.f32 %v1002, 0.35355338
      %v1004 = vsub.f32 %v1003, %v1003
      %v1005 = vmul.f32 %v1004, 1.442695
      %v1006 = vpow.pop %v1005
      %v1007 = vadd.f32 %v1006, 0.0
      %v1008 = vrcp.pop %v1007
      %v1009 = vmul.f32 %v1006, %v1008
      %v1011 = vsel %vm679, %v1009, 0
      %v1014 = vsel %vm683, %v992, 0
      %1016 = vmatprep.subr.mxu0 0.0
      %1017 = vmatpush1.msra.mxu0 %v1014
      %1018 = vmatprep.subr.mxu0 0.0
      %1019 = vmatpush1.msra.mxu0 0.0
      %1020 = vmatprep.subr.mxu0 0.0
      %1021 = vmatpush1.msra.mxu0 0.0
      %1022 = vmatprep.subr.mxu0 0.0
      %1023 = vmatpush1.msra.mxu0 0.0
      %1024 = vmatprep.subr.mxu0 0.0
      %1025 = vmatpush1.msra.mxu0 0.0
      %1026 = vmatprep.subr.mxu0 0.0
      %1027 = vmatpush1.msra.mxu0 0.0
      %1028 = vmatprep.subr.mxu0 0.0
      %1029 = vmatpush1.msra.mxu0 0.0
      %1030 = vmatprep.subr.mxu0 0.0
      %1031 = vmatpush1.msra.mxu0 0.0
      %1032 = vmatprep.subr.mxu0 0.0
      %1033 = vmatpush1.msra.mxu0 0.0
      %1034 = vmatprep.subr.mxu0 0.0
      %1035 = vmatpush1.msra.mxu0 0.0
      %1036 = vmatprep.subr.mxu0 0.0
      %1037 = vmatpush1.msra.mxu0 0.0
      %1038 = vmatprep.subr.mxu0 0.0
      %1039 = vmatpush1.msra.mxu0 0.0
      %1040 = vmatprep.subr.mxu0 0.0
      %1041 = vmatpush1.msra.mxu0 0.0
      %1042 = vmatprep.subr.mxu0 0.0
      %1043 = vmatpush1.msra.mxu0 0.0
      %1044 = vmatprep.subr.mxu0 0.0
      %1045 = vmatpush1.msra.mxu0 0.0
      %1046 = vmatprep.subr.mxu0 0.0
      %1047 = vmatpush1.msra.mxu0 0.0
      %1048 = vmatprep.subr.mxu0 0.0
      %1049 = vmatpush1.msra.mxu0 0.0
      %1050 = vmatprep.subr.mxu0 0.0
      %1051 = vmatpush1.msra.mxu0 0.0
      %1052 = vmatprep.subr.mxu0 0.0
      %1053 = vmatpush1.msra.mxu0 0.0
      %1054 = vmatprep.subr.mxu0 0.0
      %1055 = vmatpush1.msra.mxu0 0.0
      %1056 = vmatprep.subr.mxu0 0.0
      %1057 = vmatpush1.msra.mxu0 0.0
      %1058 = vmatprep.subr.mxu0 0.0
      %1059 = vmatpush1.msra.mxu0 0.0
      %1060 = vmatprep.subr.mxu0 0.0
      %1061 = vmatpush1.msra.mxu0 0.0
      %1062 = vmatprep.subr.mxu0 0.0
      %1063 = vmatpush1.msra.mxu0 0.0
      %1064 = vmatprep.subr.mxu0 0.0
      %1065 = vmatpush1.msra.mxu0 0.0
      %1066 = vmatprep.subr.mxu0 0.0
      %1067 = vmatpush1.msra.mxu0 0.0
      %1068 = vmatprep.subr.mxu0 0.0
      %1069 = vmatpush1.msra.mxu0 0.0
      %1070 = vmatprep.subr.mxu0 0.0
      %1071 = vmatpush1.msra.mxu0 0.0
      %1072 = vmatprep.subr.mxu0 0.0
      %1073 = vmatpush1.msra.mxu0 0.0
      %1074 = vmatprep.subr.mxu0 0.0
      %1075 = vmatpush1.msra.mxu0 0.0
      %1076 = vmatprep.subr.mxu0 0.0
      %1077 = vmatpush1.msra.mxu0 0.0
      %1078 = vmatprep.subr.mxu0 0.0
      %1079 = vmatpush1.msra.mxu0 0.0
      %1080 = vmatprep.mubr.f32.mxu0 0.0
      %1081 = vmatmul.mubr.f32.gmra.mrb[0].mxu0 %v1011
      %v1082 = vpop.f32.mrb[0].mxu0
      %v1083 = vadd.f32 0.0, %v1082
      %v1084 = vpop.f32.mrb[0].mxu0
      %1085 = vdwg.mxu0
      %s1086 = scalar_lea.vmem %s8, 8
      %v1087 = vld [vmem:[%s1086] sm:$0xff]
      %v1089 = vsel %vm668, %v1083, 0
      %1091 = vmatprep.subr.mxu0 0.0
      %1092 = vmatpush1.msra.mxu0 %v1087
      %1093 = vmatprep.subr.mxu0 0.0
      %1094 = vmatpush1.msra.mxu0 0.0
      %1095 = vmatprep.subr.mxu0 0.0
      %1096 = vmatpush1.msra.mxu0 0.0
      %1097 = vmatprep.subr.mxu0 0.0
      %1098 = vmatpush1.msra.mxu0 0.0
      %1099 = vmatprep.subr.mxu0 0.0
      %1100 = vmatpush1.msra.mxu0 0.0
      %1101 = vmatprep.subr.mxu0 0.0
      %1102 = vmatpush1.msra.mxu0 0.0
      %1103 = vmatprep.subr.mxu0 0.0
      %1104 = vmatpush1.msra.mxu0 0.0
      %1105 = vmatprep.subr.mxu0 0.0
      %1106 = vmatpush1.msra.mxu0 0.0
      %1107 = vmatprep.subr.mxu0 0.0
      %1108 = vmatpush1.msra.mxu0 0.0
      %1109 = vmatprep.subr.mxu0 0.0
      %1110 = vmatpush1.msra.mxu0 0.0
      %1111 = vmatprep.subr.mxu0 0.0
      %1112 = vmatpush1.msra.mxu0 0.0
      %1113 = vmatprep.subr.mxu0 0.0
      %1114 = vmatpush1.msra.mxu0 0.0
      %1115 = vmatprep.subr.mxu0 0.0
      %1116 = vmatpush1.msra.mxu0 0.0
      %1117 = vmatprep.subr.mxu0 0.0
      %1118 = vmatpush1.msra.mxu0 0.0
      %1119 = vmatprep.subr.mxu0 0.0
      %1120 = vmatpush1.msra.mxu0 0.0
      %1121 = vmatprep.subr.mxu0 0.0
      %1122 = vmatpush1.msra.mxu0 0.0
      %1123 = vmatprep.subr.mxu0 0.0
      %1124 = vmatpush1.msra.mxu0 0.0
      %1125 = vmatprep.subr.mxu0 0.0
      %1126 = vmatpush1.msra.mxu0 0.0
      %1127 = vmatprep.subr.mxu0 0.0
      %1128 = vmatpush1.msra.mxu0 0.0
      %1129 = vmatprep.subr.mxu0 0.0
      %1130 = vmatpush1.msra.mxu0 0.0
      %1131 = vmatprep.subr.mxu0 0.0
      %1132 = vmatpush1.msra.mxu0 0.0
      %1133 = vmatprep.subr.mxu0 0.0
      %1134 = vmatpush1.msra.mxu0 0.0
      %1135 = vmatprep.subr.mxu0 0.0
      %1136 = vmatpush1.msra.mxu0 0.0
      %1137 = vmatprep.subr.mxu0 0.0
      %1138 = vmatpush1.msra.mxu0 0.0
      %1139 = vmatprep.subr.mxu0 0.0
      %1140 = vmatpush1.msra.mxu0 0.0
      %1141 = vmatprep.subr.mxu0 0.0
      %1142 = vmatpush1.msra.mxu0 0.0
      %1143 = vmatprep.subr.mxu0 0.0
      %1144 = vmatpush1.msra.mxu0 0.0
      %1145 = vmatprep.subr.mxu0 0.0
      %1146 = vmatpush1.msra.mxu0 0.0
      %1147 = vmatprep.subr.mxu0 0.0
      %1148 = vmatpush1.msra.mxu0 0.0
      %1149 = vmatprep.subr.mxu0 0.0
      %1150 = vmatpush1.msra.mxu0 0.0
      %1151 = vmatprep.subr.mxu0 0.0
      %1152 = vmatpush1.msra.mxu0 0.0
      %1153 = vmatprep.subr.mxu0 0.0
      %1154 = vmatpush1.msra.mxu0 0.0
      %1155 = vmatprep.mubr.f32.mxu0 0.0
      %1156 = vmatmul.mubr.f32.gmra.mrb[0].mxu0 %v1089
      %v1157 = vpop.f32.mrb[0].mxu0
      %v1158 = vadd.f32 0.0, %v1157
      %v1159 = vpop.f32.mrb[0].mxu0
      %1160 = vdwg.mxu0
      %v1162 = vsel %vm668, %v754, 0
      %1164 = vmatprep.subr.mxu0 0.0
      %1165 = vmatpush1.msra.mxu0 %v757
      %1166 = vmatprep.subr.mxu0 0.0
      %1167 = vmatpush1.msra.mxu0 0.0
      %1168 = vmatprep.subr.mxu0 0.0
      %1169 = vmatpush1.msra.mxu0 0.0
      %1170 = vmatprep.subr.mxu0 0.0
      %1171 = vmatpush1.msra.mxu0 0.0
      %1172 = vmatprep.subr.mxu0 0.0
      %1173 = vmatpush1.msra.mxu0 0.0
      %1174 = vmatprep.subr.mxu0 0.0
      %1175 = vmatpush1.msra.mxu0 0.0
      %1176 = vmatprep.subr.mxu0 0.0
      %1177 = vmatpush1.msra.mxu0 0.0
      %1178 = vmatprep.subr.mxu0 0.0
      %1179 = vmatpush1.msra.mxu0 0.0
      %1180 = vmatprep.subr.mxu0 0.0
      %1181 = vmatpush1.msra.mxu0 0.0
      %1182 = vmatprep.subr.mxu0 0.0
      %1183 = vmatpush1.msra.mxu0 0.0
      %1184 = vmatprep.subr.mxu0 0.0
      %1185 = vmatpush1.msra.mxu0 0.0
      %1186 = vmatprep.subr.mxu0 0.0
      %1187 = vmatpush1.msra.mxu0 0.0
      %1188 = vmatprep.subr.mxu0 0.0
      %1189 = vmatpush1.msra.mxu0 0.0
      %1190 = vmatprep.subr.mxu0 0.0
      %1191 = vmatpush1.msra.mxu0 0.0
      %1192 = vmatprep.subr.mxu0 0.0
      %1193 = vmatpush1.msra.mxu0 0.0
      %1194 = vmatprep.subr.mxu0 0.0
      %1195 = vmatpush1.msra.mxu0 0.0
      %1196 = vmatprep.subr.mxu0 0.0
      %1197 = vmatpush1.msra.mxu0 0.0
      %1198 = vmatprep.subr.mxu0 0.0
      %1199 = vmatpush1.msra.mxu0 0.0
      %1200 = vmatprep.subr.mxu0 0.0
      %1201 = vmatpush1.msra.mxu0 0.0
      %1202 = vmatprep.subr.mxu0 0.0
      %1203 = vmatpush1.msra.mxu0 0.0
      %1204 = vmatprep.subr.mxu0 0.0
      %1205 = vmatpush1.msra.mxu0 0.0
      %1206 = vmatprep.subr.mxu0 0.0
      %1207 = vmatpush1.msra.mxu0 0.0
      %1208 = vmatprep.subr.mxu0 0.0
      %1209 = vmatpush1.msra.mxu0 0.0
      %1210 = vmatprep.subr.mxu0 0.0
      %1211 = vmatpush1.msra.mxu0 0.0
      %1212 = vmatprep.subr.mxu0 0.0
      %1213 = vmatpush1.msra.mxu0 0.0
      %1214 = vmatprep.subr.mxu0 0.0
      %1215 = vmatpush1.msra.mxu0 0.0
      %1216 = vmatprep.subr.mxu0 0.0
      %1217 = vmatpush1.msra.mxu0 0.0
      %1218 = vmatprep.subr.mxu0 0.0
      %1219 = vmatpush1.msra.mxu0 0.0
      %1220 = vmatprep.subr.mxu0 0.0
      %1221 = vmatpush1.msra.mxu0 0.0
      %1222 = vmatprep.subr.mxu0 0.0
      %1223 = vmatpush1.msra.mxu0 0.0
      %1224 = vmatprep.subr.mxu0 0.0
      %1225 = vmatpush1.msra.mxu0 0.0
      %1226 = vmatprep.subr.mxu0 0.0
      %1227 = vmatpush1.msra.mxu0 0.0
      %1228 = vmatprep.mubr.f32.mxu0 0.0
      %1229 = vmatmul.mubr.f32.gmra.mrb[0].mxu0 %v1162
      %v1230 = vpop.f32.mrb[0].mxu0
      %v1231 = vadd.f32 %v1158, %v1230
      %v1232 = vpop.f32.mrb[0].mxu0
      %1233 = vdwg.mxu0
      %s1234 = scalar_lea.vmem %s2, 64
      %v1235 = vld [vmem:[%s1234] sm:$0xff]
      %v1236 = vld [vmem:[%s1234 + $0x8] sm:$0xff]
      %v1237 = vld [vmem:[%s1234 + $0x10] sm:$0xff]
      %v1238 = vld [vmem:[%s1234 + $0x18] sm:$0xff]
      %s1239 = scalar_lea.vmem %s3, 2
      %v1240 = vld [vmem:[%s1239] sm:$0x1]
      %v1242 = vlaneseq
      %v1243 = vshrl.u32 %v1242, 7
      %v1244 = vsub.s32 0, %v1243
      %v1245 = vrot.slane %v1240, %v1244
      %1247 = vmatprep.subr.mxu0 0.0
      %1248 = vmatpush1.msra.mxu0 %v1235
      %1249 = vmatprep.subr.mxu0 0.0
      %1250 = vmatpush1.msra.mxu0 %v1236
      %1251 = vmatprep.subr.mxu0 0.0
      %1252 = vmatpush1.msra.mxu0 %v1237
      %1253 = vmatprep.subr.mxu0 0.0
      %1254 = vmatpush1.msra.mxu0 %v1238
      %1255 = vmatprep.subr.mxu0 0.0
      %1256 = vmatpush1.msra.mxu0 0.0
      %1257 = vmatprep.subr.mxu0 0.0
      %1258 = vmatpush1.msra.mxu0 0.0
      %1259 = vmatprep.subr.mxu0 0.0
      %1260 = vmatpush1.msra.mxu0 0.0
      %1261 = vmatprep.subr.mxu0 0.0
      %1262 = vmatpush1.msra.mxu0 0.0
      %1263 = vmatprep.subr.mxu0 0.0
      %1264 = vmatpush1.msra.mxu0 0.0
      %1265 = vmatprep.subr.mxu0 0.0
      %1266 = vmatpush1.msra.mxu0 0.0
      %1267 = vmatprep.subr.mxu0 0.0
      %1268 = vmatpush1.msra.mxu0 0.0
      %1269 = vmatprep.subr.mxu0 0.0
      %1270 = vmatpush1.msra.mxu0 0.0
      %1271 = vmatprep.subr.mxu0 0.0
      %1272 = vmatpush1.msra.mxu0 0.0
      %1273 = vmatprep.subr.mxu0 0.0
      %1274 = vmatpush1.msra.mxu0 0.0
      %1275 = vmatprep.subr.mxu0 0.0
      %1276 = vmatpush1.msra.mxu0 0.0
      %1277 = vmatprep.subr.mxu0 0.0
      %1278 = vmatpush1.msra.mxu0 0.0
      %1279 = vmatprep.subr.mxu0 0.0
      %1280 = vmatpush1.msra.mxu0 0.0
      %1281 = vmatprep.subr.mxu0 0.0
      %1282 = vmatpush1.msra.mxu0 0.0
      %1283 = vmatprep.subr.mxu0 0.0
      %1284 = vmatpush1.msra.mxu0 0.0
      %1285 = vmatprep.subr.mxu0 0.0
      %1286 = vmatpush1.msra.mxu0 0.0
      %1287 = vmatprep.subr.mxu0 0.0
      %1288 = vmatpush1.msra.mxu0 0.0
      %1289 = vmatprep.subr.mxu0 0.0
      %1290 = vmatpush1.msra.mxu0 0.0
      %1291 = vmatprep.subr.mxu0 0.0
      %1292 = vmatpush1.msra.mxu0 0.0
      %1293 = vmatprep.subr.mxu0 0.0
      %1294 = vmatpush1.msra.mxu0 0.0
      %1295 = vmatprep.subr.mxu0 0.0
      %1296 = vmatpush1.msra.mxu0 0.0
      %1297 = vmatprep.subr.mxu0 0.0
      %1298 = vmatpush1.msra.mxu0 0.0
      %1299 = vmatprep.subr.mxu0 0.0
      %1300 = vmatpush1.msra.mxu0 0.0
      %1301 = vmatprep.subr.mxu0 0.0
      %1302 = vmatpush1.msra.mxu0 0.0
      %1303 = vmatprep.subr.mxu0 0.0
      %1304 = vmatpush1.msra.mxu0 0.0
      %1305 = vmatprep.subr.mxu0 0.0
      %1306 = vmatpush1.msra.mxu0 0.0
      %1307 = vmatprep.subr.mxu0 0.0
      %1308 = vmatpush1.msra.mxu0 0.0
      %1309 = vmatprep.subr.mxu0 0.0
      %1310 = vmatpush1.msra.mxu0 0.0
      %1311 = vmatprep.mubr.f32.mxu0 0.0
      %1312 = vmatmul.mubr.f32.gmra.mrb[0].mxu0 %v438
      %v1313 = vpop.f32.mrb[0].mxu0
      %v1314 = vadd.f32 %v1245, %v1313
      %v1315 = vpop.f32.mrb[0].mxu0
      %1316 = vdwg.mxu0
      %s1317 = scalar_lea.vmem %s4, 64
      %v1318 = vld [vmem:[%s1317] sm:$0xff]
      %v1319 = vld [vmem:[%s1317 + $0x8] sm:$0xff]
      %v1320 = vld [vmem:[%s1317 + $0x10] sm:$0xff]
      %v1321 = vld [vmem:[%s1317 + $0x18] sm:$0xff]
      %s1322 = scalar_lea.vmem %s5, 2
      %v1323 = vld [vmem:[%s1322] sm:$0x1]
      %1324 = vmatprep.subr.mxu0 0.0
      %1325 = vmatpush1.msra.mxu0 %v1318
      %1326 = vmatprep.subr.mxu0 0.0
      %1327 = vmatpush1.msra.mxu0 %v1319
      %1328 = vmatprep.subr.mxu0 0.0
      %1329 = vmatpush1.msra.mxu0 %v1320
      %1330 = vmatprep.subr.mxu0 0.0
      %1331 = vmatpush1.msra.mxu0 %v1321
      %1332 = vmatprep.subr.mxu0 0.0
      %1333 = vmatpush1.msra.mxu0 0.0
      %1334 = vmatprep.subr.mxu0 0.0
      %1335 = vmatpush1.msra.mxu0 0.0
      %1336 = vmatprep.subr.mxu0 0.0
      %1337 = vmatpush1.msra.mxu0 0.0
      %1338 = vmatprep.subr.mxu0 0.0
      %1339 = vmatpush1.msra.mxu0 0.0
      %1340 = vmatprep.subr.mxu0 0.0
      %1341 = vmatpush1.msra.mxu0 0.0
      %1342 = vmatprep.subr.mxu0 0.0
      %1343 = vmatpush1.msra.mxu0 0.0
      %1344 = vmatprep.subr.mxu0 0.0
      %1345 = vmatpush1.msra.mxu0 0.0
      %1346 = vmatprep.subr.mxu0 0.0
      %1347 = vmatpush1.msra.mxu0 0.0
      %1348 = vmatprep.subr.mxu0 0.0
      %1349 = vmatpush1.msra.mxu0 0.0
      %1350 = vmatprep.subr.mxu0 0.0
      %1351 = vmatpush1.msra.mxu0 0.0
      %1352 = vmatprep.subr.mxu0 0.0
      %1353 = vmatpush1.msra.mxu0 0.0
      %1354 = vmatprep.subr.mxu0 0.0
      %1355 = vmatpush1.msra.mxu0 0.0
      %1356 = vmatprep.subr.mxu0 0.0
      %1357 = vmatpush1.msra.mxu0 0.0
      %1358 = vmatprep.subr.mxu0 0.0
      %1359 = vmatpush1.msra.mxu0 0.0
      %1360 = vmatprep.subr.mxu0 0.0
      %1361 = vmatpush1.msra.mxu0 0.0
      %1362 = vmatprep.subr.mxu0 0.0
      %1363 = vmatpush1.msra.mxu0 0.0
      %1364 = vmatprep.subr.mxu0 0.0
      %1365 = vmatpush1.msra.mxu0 0.0
      %1366 = vmatprep.subr.mxu0 0.0
      %1367 = vmatpush1.msra.mxu0 0.0
      %1368 = vmatprep.subr.mxu0 0.0
      %1369 = vmatpush1.msra.mxu0 0.0
      %1370 = vmatprep.subr.mxu0 0.0
      %1371 = vmatpush1.msra.mxu0 0.0
      %1372 = vmatprep.subr.mxu0 0.0
      %1373 = vmatpush1.msra.mxu0 0.0
      %1374 = vmatprep.subr.mxu0 0.0
      %1375 = vmatpush1.msra.mxu0 0.0
      %1376 = vmatprep.subr.mxu0 0.0
      %1377 = vmatpush1.msra.mxu0 0.0
      %1378 = vmatprep.subr.mxu0 0.0
      %1379 = vmatpush1.msra.mxu0 0.0
      %1380 = vmatprep.subr.mxu0 0.0
      %1381 = vmatpush1.msra.mxu0 0.0
      %1382 = vmatprep.subr.mxu0 0.0
      %1383 = vmatpush1.msra.mxu0 0.0
      %1384 = vmatprep.subr.mxu0 0.0
      %1385 = vmatpush1.msra.mxu0 0.0
      %1386 = vmatprep.subr.mxu0 0.0
      %1387 = vmatpush1.msra.mxu0 0.0
      %1388 = vmatprep.mubr.f32.mxu0 0.0
      %1389 = vmatmul.mubr.f32.gmra.mrb[0].mxu0 %v516
      %v1390 = vpop.f32.mrb[0].mxu0
      %v1391 = vadd.f32 %v1323, %v1390
      %v1392 = vpop.f32.mrb[0].mxu0
      %1393 = vdwg.mxu0
      %s1394 = scalar_lea.vmem %s6, 64
      %v1395 = vld [vmem:[%s1394] sm:$0xff]
      %v1396 = vld [vmem:[%s1394 + $0x8] sm:$0xff]
      %v1397 = vld [vmem:[%s1394 + $0x10] sm:$0xff]
      %v1398 = vld [vmem:[%s1394 + $0x18] sm:$0xff]
      %s1399 = scalar_lea.vmem %s7, 2
      %v1400 = vld [vmem:[%s1399] sm:$0x1]
      %1401 = vmatprep.subr.mxu0 0.0
      %1402 = vmatpush1.msra.mxu0 %v1395
      %1403 = vmatprep.subr.mxu0 0.0
      %1404 = vmatpush1.msra.mxu0 %v1396
      %1405 = vmatprep.subr.mxu0 0.0
      %1406 = vmatpush1.msra.mxu0 %v1397
      %1407 = vmatprep.subr.mxu0 0.0
      %1408 = vmatpush1.msra.mxu0 %v1398
      %1409 = vmatprep.subr.mxu0 0.0
      %1410 = vmatpush1.msra.mxu0 0.0
      %1411 = vmatprep.subr.mxu0 0.0
      %1412 = vmatpush1.msra.mxu0 0.0
      %1413 = vmatprep.subr.mxu0 0.0
      %1414 = vmatpush1.msra.mxu0 0.0
      %1415 = vmatprep.subr.mxu0 0.0
      %1416 = vmatpush1.msra.mxu0 0.0
      %1417 = vmatprep.subr.mxu0 0.0
      %1418 = vmatpush1.msra.mxu0 0.0
      %1419 = vmatprep.subr.mxu0 0.0
      %1420 = vmatpush1.msra.mxu0 0.0
      %1421 = vmatprep.subr.mxu0 0.0
      %1422 = vmatpush1.msra.mxu0 0.0
      %1423 = vmatprep.subr.mxu0 0.0
      %1424 = vmatpush1.msra.mxu0 0.0
      %1425 = vmatprep.subr.mxu0 0.0
      %1426 = vmatpush1.msra.mxu0 0.0
      %1427 = vmatprep.subr.mxu0 0.0
      %1428 = vmatpush1.msra.mxu0 0.0
      %1429 = vmatprep.subr.mxu0 0.0
      %1430 = vmatpush1.msra.mxu0 0.0
      %1431 = vmatprep.subr.mxu0 0.0
      %1432 = vmatpush1.msra.mxu0 0.0
      %1433 = vmatprep.subr.mxu0 0.0
      %1434 = vmatpush1.msra.mxu0 0.0
      %1435 = vmatprep.subr.mxu0 0.0
      %1436 = vmatpush1.msra.mxu0 0.0
      %1437 = vmatprep.subr.mxu0 0.0
      %1438 = vmatpush1.msra.mxu0 0.0
      %1439 = vmatprep.subr.mxu0 0.0
      %1440 = vmatpush1.msra.mxu0 0.0
      %1441 = vmatprep.subr.mxu0 0.0
      %1442 = vmatpush1.msra.mxu0 0.0
      %1443 = vmatprep.subr.mxu0 0.0
      %1444 = vmatpush1.msra.mxu0 0.0
      %1445 = vmatprep.subr.mxu0 0.0
      %1446 = vmatpush1.msra.mxu0 0.0
      %1447 = vmatprep.subr.mxu0 0.0
      %1448 = vmatpush1.msra.mxu0 0.0
      %1449 = vmatprep.subr.mxu0 0.0
      %1450 = vmatpush1.msra.mxu0 0.0
      %1451 = vmatprep.subr.mxu0 0.0
      %1452 = vmatpush1.msra.mxu0 0.0
      %1453 = vmatprep.subr.mxu0 0.0
      %1454 = vmatpush1.msra.mxu0 0.0
      %1455 = vmatprep.subr.mxu0 0.0
      %1456 = vmatpush1.msra.mxu0 0.0
      %1457 = vmatprep.subr.mxu0 0.0
      %1458 = vmatpush1.msra.mxu0 0.0
      %1459 = vmatprep.subr.mxu0 0.0
      %1460 = vmatpush1.msra.mxu0 0.0
      %1461 = vmatprep.subr.mxu0 0.0
      %1462 = vmatpush1.msra.mxu0 0.0
      %1463 = vmatprep.subr.mxu0 0.0
      %1464 = vmatpush1.msra.mxu0 0.0
      %1465 = vmatprep.mubr.f32.mxu0 0.0
      %1466 = vmatmul.mubr.f32.gmra.mrb[0].mxu0 %v516
      %v1467 = vpop.f32.mrb[0].mxu0
      %v1468 = vadd.f32 %v1400, %v1467
      %v1469 = vpop.f32.mrb[0].mxu0
      %1470 = vdwg.mxu0
      %v1471 = vlaneseq
      %v1472 = vshrl.u32 %v1471, 7
      %v1473 = vsub.s32 0, %v1472
      %v1474 = vrot.slane %v1391, %v1473
      %v1475 = vmul.f32 %v1314, %v1474
      %v1476 = vsel %vm668, %v1475, 0.0
      %1477 = vadd.xlane.f32.xlu0 %v1476
      %v1478 = vpop.xlane.xlu0 %1477
      %v1479 = vmul.f32 %v1478, 0.35355338
      %v1480 = vsub.f32 %v1479, %v1479
      %v1481 = vmul.f32 %v1480, 1.442695
      %v1482 = vpow.pop %v1481
      %v1483 = vadd.f32 %v1482, 0.0
      %v1484 = vrcp.pop %v1483
      %v1485 = vmul.f32 %v1482, %v1484
      %v1487 = vsel %vm679, %v1485, 0
      %v1490 = vsel %vm683, %v1468, 0
      %1492 = vmatprep.subr.mxu0 0.0
      %1493 = vmatpush1.msra.mxu0 %v1490
      %1494 = vmatprep.subr.mxu0 0.0
      %1495 = vmatpush1.msra.mxu0 0.0
      %1496 = vmatprep.subr.mxu0 0.0
      %1497 = vmatpush1.msra.mxu0 0.0
      %1498 = vmatprep.subr.mxu0 0.0
      %1499 = vmatpush1.msra.mxu0 0.0
      %1500 = vmatprep.subr.mxu0 0.0
      %1501 = vmatpush1.msra.mxu0 0.0
      %1502 = vmatprep.subr.mxu0 0.0
      %1503 = vmatpush1.msra.mxu0 0.0
      %1504 = vmatprep.subr.mxu0 0.0
      %1505 = vmatpush1.msra.mxu0 0.0
      %1506 = vmatprep.subr.mxu0 0.0
      %1507 = vmatpush1.msra.mxu0 0.0
      %1508 = vmatprep.subr.mxu0 0.0
      %1509 = vmatpush1.msra.mxu0 0.0
      %1510 = vmatprep.subr.mxu0 0.0
      %1511 = vmatpush1.msra.mxu0 0.0
      %1512 = vmatprep.subr.mxu0 0.0
      %1513 = vmatpush1.msra.mxu0 0.0
      %1514 = vmatprep.subr.mxu0 0.0
      %1515 = vmatpush1.msra.mxu0 0.0
      %1516 = vmatprep.subr.mxu0 0.0
      %1517 = vmatpush1.msra.mxu0 0.0
      %1518 = vmatprep.subr.mxu0 0.0
      %1519 = vmatpush1.msra.mxu0 0.0
      %1520 = vmatprep.subr.mxu0 0.0
      %1521 = vmatpush1.msra.mxu0 0.0
      %1522 = vmatprep.subr.mxu0 0.0
      %1523 = vmatpush1.msra.mxu0 0.0
      %1524 = vmatprep.subr.mxu0 0.0
      %1525 = vmatpush1.msra.mxu0 0.0
      %1526 = vmatprep.subr.mxu0 0.0
      %1527 = vmatpush1.msra.mxu0 0.0
      %1528 = vmatprep.subr.mxu0 0.0
      %1529 = vmatpush1.msra.mxu0 0.0
      %1530 = vmatprep.subr.mxu0 0.0
      %1531 = vmatpush1.msra.mxu0 0.0
      %1532 = vmatprep.subr.mxu0 0.0
      %1533 = vmatpush1.msra.mxu0 0.0
      %1534 = vmatprep.subr.mxu0 0.0
      %1535 = vmatpush1.msra.mxu0 0.0
      %1536 = vmatprep.subr.mxu0 0.0
      %1537 = vmatpush1.msra.mxu0 0.0
      %1538 = vmatprep.subr.mxu0 0.0
      %1539 = vmatpush1.msra.mxu0 0.0
      %1540 = vmatprep.subr.mxu0 0.0
      %1541 = vmatpush1.msra.mxu0 0.0
      %1542 = vmatprep.subr.mxu0 0.0
      %1543 = vmatpush1.msra.mxu0 0.0
      %1544 = vmatprep.subr.mxu0 0.0
      %1545 = vmatpush1.msra.mxu0 0.0
      %1546 = vmatprep.subr.mxu0 0.0
      %1547 = vmatpush1.msra.mxu0 0.0
      %1548 = vmatprep.subr.mxu0 0.0
      %1549 = vmatpush1.msra.mxu0 0.0
      %1550 = vmatprep.subr.mxu0 0.0
      %1551 = vmatpush1.msra.mxu0 0.0
      %1552 = vmatprep.subr.mxu0 0.0
      %1553 = vmatpush1.msra.mxu0 0.0
      %1554 = vmatprep.subr.mxu0 0.0
      %1555 = vmatpush1.msra.mxu0 0.0
      %1556 = vmatprep.mubr.f32.mxu0 0.0
      %1557 = vmatmul.mubr.f32.gmra.mrb[0].mxu0 %v1487
      %v1558 = vpop.f32.mrb[0].mxu0
      %v1559 = vadd.f32 0.0, %v1558
      %v1560 = vpop.f32.mrb[0].mxu0
      %1561 = vdwg.mxu0
      %s1562 = scalar_lea.vmem %s8, 16
      %v1563 = vld [vmem:[%s1562] sm:$0xff]
      %v1565 = vsel %vm668, %v1559, 0
      %1567 = vmatprep.subr.mxu0 0.0
      %1568 = vmatpush1.msra.mxu0 %v1563
      %1569 = vmatprep.subr.mxu0 0.0
      %1570 = vmatpush1.msra.mxu0 0.0
      %1571 = vmatprep.subr.mxu0 0.0
      %1572 = vmatpush1.msra.mxu0 0.0
      %1573 = vmatprep.subr.mxu0 0.0
      %1574 = vmatpush1.msra.mxu0 0.0
      %1575 = vmatprep.subr.mxu0 0.0
      %1576 = vmatpush1.msra.mxu0 0.0
      %1577 = vmatprep.subr.mxu0 0.0
      %1578 = vmatpush1.msra.mxu0 0.0
      %1579 = vmatprep.subr.mxu0 0.0
      %1580 = vmatpush1.msra.mxu0 0.0
      %1581 = vmatprep.subr.mxu0 0.0
      %1582 = vmatpush1.msra.mxu0 0.0
      %1583 = vmatprep.subr.mxu0 0.0
      %1584 = vmatpush1.msra.mxu0 0.0
      %1585 = vmatprep.subr.mxu0 0.0
      %1586 = vmatpush1.msra.mxu0 0.0
      %1587 = vmatprep.subr.mxu0 0.0
      %1588 = vmatpush1.msra.mxu0 0.0
      %1589 = vmatprep.subr.mxu0 0.0
      %1590 = vmatpush1.msra.mxu0 0.0
      %1591 = vmatprep.subr.mxu0 0.0
      %1592 = vmatpush1.msra.mxu0 0.0
      %1593 = vmatprep.subr.mxu0 0.0
      %1594 = vmatpush1.msra.mxu0 0.0
      %1595 = vmatprep.subr.mxu0 0.0
      %1596 = vmatpush1.msra.mxu0 0.0
      %1597 = vmatprep.subr.mxu0 0.0
      %1598 = vmatpush1.msra.mxu0 0.0
      %1599 = vmatprep.subr.mxu0 0.0
      %1600 = vmatpush1.msra.mxu0 0.0
      %1601 = vmatprep.subr.mxu0 0.0
      %1602 = vmatpush1.msra.mxu0 0.0
      %1603 = vmatprep.subr.mxu0 0.0
      %1604 = vmatpush1.msra.mxu0 0.0
      %1605 = vmatprep.subr.mxu0 0.0
      %1606 = vmatpush1.msra.mxu0 0.0
      %1607 = vmatprep.subr.mxu0 0.0
      %1608 = vmatpush1.msra.mxu0 0.0
      %1609 = vmatprep.subr.mxu0 0.0
      %1610 = vmatpush1.msra.mxu0 0.0
      %1611 = vmatprep.subr.mxu0 0.0
      %1612 = vmatpush1.msra.mxu0 0.0
      %1613 = vmatprep.subr.mxu0 0.0
      %1614 = vmatpush1.msra.mxu0 0.0
      %1615 = vmatprep.subr.mxu0 0.0
      %1616 = vmatpush1.msra.mxu0 0.0
      %1617 = vmatprep.subr.mxu0 0.0
      %1618 = vmatpush1.msra.mxu0 0.0
      %1619 = vmatprep.subr.mxu0 0.0
      %1620 = vmatpush1.msra.mxu0 0.0
      %1621 = vmatprep.subr.mxu0 0.0
      %1622 = vmatpush1.msra.mxu0 0.0
      %1623 = vmatprep.subr.mxu0 0.0
      %1624 = vmatpush1.msra.mxu0 0.0
      %1625 = vmatprep.subr.mxu0 0.0
      %1626 = vmatpush1.msra.mxu0 0.0
      %1627 = vmatprep.subr.mxu0 0.0
      %1628 = vmatpush1.msra.mxu0 0.0
      %1629 = vmatprep.subr.mxu0 0.0
      %1630 = vmatpush1.msra.mxu0 0.0
      %1631 = vmatprep.mubr.f32.mxu0 0.0
      %1632 = vmatmul.mubr.f32.gmra.mrb[0].mxu0 %v1565
      %v1633 = vpop.f32.mrb[0].mxu0
      %v1634 = vadd.f32 0.0, %v1633
      %v1635 = vpop.f32.mrb[0].mxu0
      %1636 = vdwg.mxu0
      %v1637 = vadd.f32 %v1231, %v1634
      %s1638 = scalar_lea.vmem %s2, 96
      %v1639 = vld [vmem:[%s1638] sm:$0xff]
      %v1640 = vld [vmem:[%s1638 + $0x8] sm:$0xff]
      %v1641 = vld [vmem:[%s1638 + $0x10] sm:$0xff]
      %v1642 = vld [vmem:[%s1638 + $0x18] sm:$0xff]
      %s1643 = scalar_lea.vmem %s3, 3
      %v1644 = vld [vmem:[%s1643] sm:$0x1]
      %v1646 = vlaneseq
      %v1647 = vshrl.u32 %v1646, 7
      %v1648 = vsub.s32 0, %v1647
      %v1649 = vrot.slane %v1644, %v1648
      %1651 = vmatprep.subr.mxu0 0.0
      %1652 = vmatpush1.msra.mxu0 %v1639
      %1653 = vmatprep.subr.mxu0 0.0
      %1654 = vmatpush1.msra.mxu0 %v1640
      %1655 = vmatprep.subr.mxu0 0.0
      %1656 = vmatpush1.msra.mxu0 %v1641
      %1657 = vmatprep.subr.mxu0 0.0
      %1658 = vmatpush1.msra.mxu0 %v1642
      %1659 = vmatprep.subr.mxu0 0.0
      %1660 = vmatpush1.msra.mxu0 0.0
      %1661 = vmatprep.subr.mxu0 0.0
      %1662 = vmatpush1.msra.mxu0 0.0
      %1663 = vmatprep.subr.mxu0 0.0
      %1664 = vmatpush1.msra.mxu0 0.0
      %1665 = vmatprep.subr.mxu0 0.0
      %1666 = vmatpush1.msra.mxu0 0.0
      %1667 = vmatprep.subr.mxu0 0.0
      %1668 = vmatpush1.msra.mxu0 0.0
      %1669 = vmatprep.subr.mxu0 0.0
      %1670 = vmatpush1.msra.mxu0 0.0
      %1671 = vmatprep.subr.mxu0 0.0
      %1672 = vmatpush1.msra.mxu0 0.0
      %1673 = vmatprep.subr.mxu0 0.0
      %1674 = vmatpush1.msra.mxu0 0.0
      %1675 = vmatprep.subr.mxu0 0.0
      %1676 = vmatpush1.msra.mxu0 0.0
      %1677 = vmatprep.subr.mxu0 0.0
      %1678 = vmatpush1.msra.mxu0 0.0
      %1679 = vmatprep.subr.mxu0 0.0
      %1680 = vmatpush1.msra.mxu0 0.0
      %1681 = vmatprep.subr.mxu0 0.0
      %1682 = vmatpush1.msra.mxu0 0.0
      %1683 = vmatprep.subr.mxu0 0.0
      %1684 = vmatpush1.msra.mxu0 0.0
      %1685 = vmatprep.subr.mxu0 0.0
      %1686 = vmatpush1.msra.mxu0 0.0
      %1687 = vmatprep.subr.mxu0 0.0
      %1688 = vmatpush1.msra.mxu0 0.0
      %1689 = vmatprep.subr.mxu0 0.0
      %1690 = vmatpush1.msra.mxu0 0.0
      %1691 = vmatprep.subr.mxu0 0.0
      %1692 = vmatpush1.msra.mxu0 0.0
      %1693 = vmatprep.subr.mxu0 0.0
      %1694 = vmatpush1.msra.mxu0 0.0
      %1695 = vmatprep.subr.mxu0 0.0
      %1696 = vmatpush1.msra.mxu0 0.0
      %1697 = vmatprep.subr.mxu0 0.0
      %1698 = vmatpush1.msra.mxu0 0.0
      %1699 = vmatprep.subr.mxu0 0.0
      %1700 = vmatpush1.msra.mxu0 0.0
      %1701 = vmatprep.subr.mxu0 0.0
      %1702 = vmatpush1.msra.mxu0 0.0
      %1703 = vmatprep.subr.mxu0 0.0
      %1704 = vmatpush1.msra.mxu0 0.0
      %1705 = vmatprep.subr.mxu0 0.0
      %1706 = vmatpush1.msra.mxu0 0.0
      %1707 = vmatprep.subr.mxu0 0.0
      %1708 = vmatpush1.msra.mxu0 0.0
      %1709 = vmatprep.subr.mxu0 0.0
      %1710 = vmatpush1.msra.mxu0 0.0
      %1711 = vmatprep.subr.mxu0 0.0
      %1712 = vmatpush1.msra.mxu0 0.0
      %1713 = vmatprep.subr.mxu0 0.0
      %1714 = vmatpush1.msra.mxu0 0.0
      %1715 = vmatprep.mubr.f32.mxu0 0.0
      %1716 = vmatmul.mubr.f32.gmra.mrb[0].mxu0 %v438
      %v1717 = vpop.f32.mrb[0].mxu0
      %v1718 = vadd.f32 %v1649, %v1717
      %v1719 = vpop.f32.mrb[0].mxu0
      %1720 = vdwg.mxu0
      %s1721 = scalar_lea.vmem %s4, 96
      %v1722 = vld [vmem:[%s1721] sm:$0xff]
      %v1723 = vld [vmem:[%s1721 + $0x8] sm:$0xff]
      %v1724 = vld [vmem:[%s1721 + $0x10] sm:$0xff]
      %v1725 = vld [vmem:[%s1721 + $0x18] sm:$0xff]
      %s1726 = scalar_lea.vmem %s5, 3
      %v1727 = vld [vmem:[%s1726] sm:$0x1]
      %1728 = vmatprep.subr.mxu0 0.0
      %1729 = vmatpush1.msra.mxu0 %v1722
      %1730 = vmatprep.subr.mxu0 0.0
      %1731 = vmatpush1.msra.mxu0 %v1723
      %1732 = vmatprep.subr.mxu0 0.0
      %1733 = vmatpush1.msra.mxu0 %v1724
      %1734 = vmatprep.subr.mxu0 0.0
      %1735 = vmatpush1.msra.mxu0 %v1725
      %1736 = vmatprep.subr.mxu0 0.0
      %1737 = vmatpush1.msra.mxu0 0.0
      %1738 = vmatprep.subr.mxu0 0.0
      %1739 = vmatpush1.msra.mxu0 0.0
      %1740 = vmatprep.subr.mxu0 0.0
      %1741 = vmatpush1.msra.mxu0 0.0
      %1742 = vmatprep.subr.mxu0 0.0
      %1743 = vmatpush1.msra.mxu0 0.0
      %1744 = vmatprep.subr.mxu0 0.0
      %1745 = vmatpush1.msra.mxu0 0.0
      %1746 = vmatprep.subr.mxu0 0.0
      %1747 = vmatpush1.msra.mxu0 0.0
      %1748 = vmatprep.subr.mxu0 0.0
      %1749 = vmatpush1.msra.mxu0 0.0
      %1750 = vmatprep.subr.mxu0 0.0
      %1751 = vmatpush1.msra.mxu0 0.0
      %1752 = vmatprep.subr.mxu0 0.0
      %1753 = vmatpush1.msra.mxu0 0.0
      %1754 = vmatprep.subr.mxu0 0.0
      %1755 = vmatpush1.msra.mxu0 0.0
      %1756 = vmatprep.subr.mxu0 0.0
      %1757 = vmatpush1.msra.mxu0 0.0
      %1758 = vmatprep.subr.mxu0 0.0
      %1759 = vmatpush1.msra.mxu0 0.0
      %1760 = vmatprep.subr.mxu0 0.0
      %1761 = vmatpush1.msra.mxu0 0.0
      %1762 = vmatprep.subr.mxu0 0.0
      %1763 = vmatpush1.msra.mxu0 0.0
      %1764 = vmatprep.subr.mxu0 0.0
      %1765 = vmatpush1.msra.mxu0 0.0
      %1766 = vmatprep.subr.mxu0 0.0
      %1767 = vmatpush1.msra.mxu0 0.0
      %1768 = vmatprep.subr.mxu0 0.0
      %1769 = vmatpush1.msra.mxu0 0.0
      %1770 = vmatprep.subr.mxu0 0.0
      %1771 = vmatpush1.msra.mxu0 0.0
      %1772 = vmatprep.subr.mxu0 0.0
      %1773 = vmatpush1.msra.mxu0 0.0
      %1774 = vmatprep.subr.mxu0 0.0
      %1775 = vmatpush1.msra.mxu0 0.0
      %1776 = vmatprep.subr.mxu0 0.0
      %1777 = vmatpush1.msra.mxu0 0.0
      %1778 = vmatprep.subr.mxu0 0.0
      %1779 = vmatpush1.msra.mxu0 0.0
      %1780 = vmatprep.subr.mxu0 0.0
      %1781 = vmatpush1.msra.mxu0 0.0
      %1782 = vmatprep.subr.mxu0 0.0
      %1783 = vmatpush1.msra.mxu0 0.0
      %1784 = vmatprep.subr.mxu0 0.0
      %1785 = vmatpush1.msra.mxu0 0.0
      %1786 = vmatprep.subr.mxu0 0.0
      %1787 = vmatpush1.msra.mxu0 0.0
      %1788 = vmatprep.subr.mxu0 0.0
      %1789 = vmatpush1.msra.mxu0 0.0
      %1790 = vmatprep.subr.mxu0 0.0
      %1791 = vmatpush1.msra.mxu0 0.0
      %1792 = vmatprep.mubr.f32.mxu0 0.0
      %1793 = vmatmul.mubr.f32.gmra.mrb[0].mxu0 %v516
      %v1794 = vpop.f32.mrb[0].mxu0
      %v1795 = vadd.f32 %v1727, %v1794
      %v1796 = vpop.f32.mrb[0].mxu0
      %1797 = vdwg.mxu0
      %s1798 = scalar_lea.vmem %s6, 96
      %v1799 = vld [vmem:[%s1798] sm:$0xff]
      %v1800 = vld [vmem:[%s1798 + $0x8] sm:$0xff]
      %v1801 = vld [vmem:[%s1798 + $0x10] sm:$0xff]
      %v1802 = vld [vmem:[%s1798 + $0x18] sm:$0xff]
      %s1803 = scalar_lea.vmem %s7, 3
      %v1804 = vld [vmem:[%s1803] sm:$0x1]
      %1805 = vmatprep.subr.mxu0 0.0
      %1806 = vmatpush1.msra.mxu0 %v1799
      %1807 = vmatprep.subr.mxu0 0.0
      %1808 = vmatpush1.msra.mxu0 %v1800
      %1809 = vmatprep.subr.mxu0 0.0
      %1810 = vmatpush1.msra.mxu0 %v1801
      %1811 = vmatprep.subr.mxu0 0.0
      %1812 = vmatpush1.msra.mxu0 %v1802
      %1813 = vmatprep.subr.mxu0 0.0
      %1814 = vmatpush1.msra.mxu0 0.0
      %1815 = vmatprep.subr.mxu0 0.0
      %1816 = vmatpush1.msra.mxu0 0.0
      %1817 = vmatprep.subr.mxu0 0.0
      %1818 = vmatpush1.msra.mxu0 0.0
      %1819 = vmatprep.subr.mxu0 0.0
      %1820 = vmatpush1.msra.mxu0 0.0
      %1821 = vmatprep.subr.mxu0 0.0
      %1822 = vmatpush1.msra.mxu0 0.0
      %1823 = vmatprep.subr.mxu0 0.0
      %1824 = vmatpush1.msra.mxu0 0.0
      %1825 = vmatprep.subr.mxu0 0.0
      %1826 = vmatpush1.msra.mxu0 0.0
      %1827 = vmatprep.subr.mxu0 0.0
      %1828 = vmatpush1.msra.mxu0 0.0
      %1829 = vmatprep.subr.mxu0 0.0
      %1830 = vmatpush1.msra.mxu0 0.0
      %1831 = vmatprep.subr.mxu0 0.0
      %1832 = vmatpush1.msra.mxu0 0.0
      %1833 = vmatprep.subr.mxu0 0.0
      %1834 = vmatpush1.msra.mxu0 0.0
      %1835 = vmatprep.subr.mxu0 0.0
      %1836 = vmatpush1.msra.mxu0 0.0
      %1837 = vmatprep.subr.mxu0 0.0
      %1838 = vmatpush1.msra.mxu0 0.0
      %1839 = vmatprep.subr.mxu0 0.0
      %1840 = vmatpush1.msra.mxu0 0.0
      %1841 = vmatprep.subr.mxu0 0.0
      %1842 = vmatpush1.msra.mxu0 0.0
      %1843 = vmatprep.subr.mxu0 0.0
      %1844 = vmatpush1.msra.mxu0 0.0
      %1845 = vmatprep.subr.mxu0 0.0
      %1846 = vmatpush1.msra.mxu0 0.0
      %1847 = vmatprep.subr.mxu0 0.0
      %1848 = vmatpush1.msra.mxu0 0.0
      %1849 = vmatprep.subr.mxu0 0.0
      %1850 = vmatpush1.msra.mxu0 0.0
      %1851 = vmatprep.subr.mxu0 0.0
      %1852 = vmatpush1.msra.mxu0 0.0
      %1853 = vmatprep.subr.mxu0 0.0
      %1854 = vmatpush1.msra.mxu0 0.0
      %1855 = vmatprep.subr.mxu0 0.0
      %1856 = vmatpush1.msra.mxu0 0.0
      %1857 = vmatprep.subr.mxu0 0.0
      %1858 = vmatpush1.msra.mxu0 0.0
      %1859 = vmatprep.subr.mxu0 0.0
      %1860 = vmatpush1.msra.mxu0 0.0
      %1861 = vmatprep.subr.mxu0 0.0
      %1862 = vmatpush1.msra.mxu0 0.0
      %1863 = vmatprep.subr.mxu0 0.0
      %1864 = vmatpush1.msra.mxu0 0.0
      %1865 = vmatprep.subr.mxu0 0.0
      %1866 = vmatpush1.msra.mxu0 0.0
      %1867 = vmatprep.subr.mxu0 0.0
      %1868 = vmatpush1.msra.mxu0 0.0
      %1869 = vmatprep.mubr.f32.mxu0 0.0
      %1870 = vmatmul.mubr.f32.gmra.mrb[0].mxu0 %v516
      %v1871 = vpop.f32.mrb[0].mxu0
      %v1872 = vadd.f32 %v1804, %v1871
      %v1873 = vpop.f32.mrb[0].mxu0
      %1874 = vdwg.mxu0
      %v1875 = vlaneseq
      %v1876 = vshrl.u32 %v1875, 7
      %v1877 = vsub.s32 0, %v1876
      %v1878 = vrot.slane %v1795, %v1877
      %v1879 = vmul.f32 %v1718, %v1878
      %v1880 = vsel %vm668, %v1879, 0.0
      %1881 = vadd.xlane.f32.xlu0 %v1880
      %v1882 = vpop.xlane.xlu0 %1881
      %v1883 = vmul.f32 %v1882, 0.35355338
      %v1884 = vsub.f32 %v1883, %v1883
      %v1885 = vmul.f32 %v1884, 1.442695
      %v1886 = vpow.pop %v1885
      %v1887 = vadd.f32 %v1886, 0.0
      %v1888 = vrcp.pop %v1887
      %v1889 = vmul.f32 %v1886, %v1888
      %v1891 = vsel %vm679, %v1889, 0
      %v1894 = vsel %vm683, %v1872, 0
      %1896 = vmatprep.subr.mxu0 0.0
      %1897 = vmatpush1.msra.mxu0 %v1894
      %1898 = vmatprep.subr.mxu0 0.0
      %1899 = vmatpush1.msra.mxu0 0.0
      %1900 = vmatprep.subr.mxu0 0.0
      %1901 = vmatpush1.msra.mxu0 0.0
      %1902 = vmatprep.subr.mxu0 0.0
      %1903 = vmatpush1.msra.mxu0 0.0
      %1904 = vmatprep.subr.mxu0 0.0
      %1905 = vmatpush1.msra.mxu0 0.0
      %1906 = vmatprep.subr.mxu0 0.0
      %1907 = vmatpush1.msra.mxu0 0.0
      %1908 = vmatprep.subr.mxu0 0.0
      %1909 = vmatpush1.msra.mxu0 0.0
      %1910 = vmatprep.subr.mxu0 0.0
      %1911 = vmatpush1.msra.mxu0 0.0
      %1912 = vmatprep.subr.mxu0 0.0
      %1913 = vmatpush1.msra.mxu0 0.0
      %1914 = vmatprep.subr.mxu0 0.0
      %1915 = vmatpush1.msra.mxu0 0.0
      %1916 = vmatprep.subr.mxu0 0.0
      %1917 = vmatpush1.msra.mxu0 0.0
      %1918 = vmatprep.subr.mxu0 0.0
      %1919 = vmatpush1.msra.mxu0 0.0
      %1920 = vmatprep.subr.mxu0 0.0
      %1921 = vmatpush1.msra.mxu0 0.0
      %1922 = vmatprep.subr.mxu0 0.0
      %1923 = vmatpush1.msra.mxu0 0.0
      %1924 = vmatprep.subr.mxu0 0.0
      %1925 = vmatpush1.msra.mxu0 0.0
      %1926 = vmatprep.subr.mxu0 0.0
      %1927 = vmatpush1.msra.mxu0 0.0
      %1928 = vmatprep.subr.mxu0 0.0
      %1929 = vmatpush1.msra.mxu0 0.0
      %1930 = vmatprep.subr.mxu0 0.0
      %1931 = vmatpush1.msra.mxu0 0.0
      %1932 = vmatprep.subr.mxu0 0.0
      %1933 = vmatpush1.msra.mxu0 0.0
      %1934 = vmatprep.subr.mxu0 0.0
      %1935 = vmatpush1.msra.mxu0 0.0
      %1936 = vmatprep.subr.mxu0 0.0
      %1937 = vmatpush1.msra.mxu0 0.0
      %1938 = vmatprep.subr.mxu0 0.0
      %1939 = vmatpush1.msra.mxu0 0.0
      %1940 = vmatprep.subr.mxu0 0.0
      %1941 = vmatpush1.msra.mxu0 0.0
      %1942 = vmatprep.subr.mxu0 0.0
      %1943 = vmatpush1.msra.mxu0 0.0
      %1944 = vmatprep.subr.mxu0 0.0
      %1945 = vmatpush1.msra.mxu0 0.0
      %1946 = vmatprep.subr.mxu0 0.0
      %1947 = vmatpush1.msra.mxu0 0.0
      %1948 = vmatprep.subr.mxu0 0.0
      %1949 = vmatpush1.msra.mxu0 0.0
      %1950 = vmatprep.subr.mxu0 0.0
      %1951 = vmatpush1.msra.mxu0 0.0
      %1952 = vmatprep.subr.mxu0 0.0
      %1953 = vmatpush1.msra.mxu0 0.0
      %1954 = vmatprep.subr.mxu0 0.0
      %1955 = vmatpush1.msra.mxu0 0.0
      %1956 = vmatprep.subr.mxu0 0.0
      %1957 = vmatpush1.msra.mxu0 0.0
      %1958 = vmatprep.subr.mxu0 0.0
      %1959 = vmatpush1.msra.mxu0 0.0
      %1960 = vmatprep.mubr.f32.mxu0 0.0
      %1961 = vmatmul.mubr.f32.gmra.mrb[0].mxu0 %v1891
      %v1962 = vpop.f32.mrb[0].mxu0
      %v1963 = vadd.f32 0.0, %v1962
      %v1964 = vpop.f32.mrb[0].mxu0
      %1965 = vdwg.mxu0
      %s1966 = scalar_lea.vmem %s8, 24
      %v1967 = vld [vmem:[%s1966] sm:$0xff]
      %v1969 = vsel %vm668, %v1963, 0
      %1971 = vmatprep.subr.mxu0 0.0
      %1972 = vmatpush1.msra.mxu0 %v1967
      %1973 = vmatprep.subr.mxu0 0.0
      %1974 = vmatpush1.msra.mxu0 0.0
      %1975 = vmatprep.subr.mxu0 0.0
      %1976 = vmatpush1.msra.mxu0 0.0
      %1977 = vmatprep.subr.mxu0 0.0
      %1978 = vmatpush1.msra.mxu0 0.0
      %1979 = vmatprep.subr.mxu0 0.0
      %1980 = vmatpush1.msra.mxu0 0.0
      %1981 = vmatprep.subr.mxu0 0.0
      %1982 = vmatpush1.msra.mxu0 0.0
      %1983 = vmatprep.subr.mxu0 0.0
      %1984 = vmatpush1.msra.mxu0 0.0
      %1985 = vmatprep.subr.mxu0 0.0
      %1986 = vmatpush1.msra.mxu0 0.0
      %1987 = vmatprep.subr.mxu0 0.0
      %1988 = vmatpush1.msra.mxu0 0.0
      %1989 = vmatprep.subr.mxu0 0.0
      %1990 = vmatpush1.msra.mxu0 0.0
      %1991 = vmatprep.subr.mxu0 0.0
      %1992 = vmatpush1.msra.mxu0 0.0
      %1993 = vmatprep.subr.mxu0 0.0
      %1994 = vmatpush1.msra.mxu0 0.0
      %1995 = vmatprep.subr.mxu0 0.0
      %1996 = vmatpush1.msra.mxu0 0.0
      %1997 = vmatprep.subr.mxu0 0.0
      %1998 = vmatpush1.msra.mxu0 0.0
      %1999 = vmatprep.subr.mxu0 0.0
      %2000 = vmatpush1.msra.mxu0 0.0
      %2001 = vmatprep.subr.mxu0 0.0
      %2002 = vmatpush1.msra.mxu0 0.0
      %2003 = vmatprep.subr.mxu0 0.0
      %2004 = vmatpush1.msra.mxu0 0.0
      %2005 = vmatprep.subr.mxu0 0.0
      %2006 = vmatpush1.msra.mxu0 0.0
      %2007 = vmatprep.subr.mxu0 0.0
      %2008 = vmatpush1.msra.mxu0 0.0
      %2009 = vmatprep.subr.mxu0 0.0
      %2010 = vmatpush1.msra.mxu0 0.0
      %2011 = vmatprep.subr.mxu0 0.0
      %2012 = vmatpush1.msra.mxu0 0.0
      %2013 = vmatprep.subr.mxu0 0.0
      %2014 = vmatpush1.msra.mxu0 0.0
      %2015 = vmatprep.subr.mxu0 0.0
      %2016 = vmatpush1.msra.mxu0 0.0
      %2017 = vmatprep.subr.mxu0 0.0
      %2018 = vmatpush1.msra.mxu0 0.0
      %2019 = vmatprep.subr.mxu0 0.0
      %2020 = vmatpush1.msra.mxu0 0.0
      %2021 = vmatprep.subr.mxu0 0.0
      %2022 = vmatpush1.msra.mxu0 0.0
      %2023 = vmatprep.subr.mxu0 0.0
      %2024 = vmatpush1.msra.mxu0 0.0
      %2025 = vmatprep.subr.mxu0 0.0
      %2026 = vmatpush1.msra.mxu0 0.0
      %2027 = vmatprep.subr.mxu0 0.0
      %2028 = vmatpush1.msra.mxu0 0.0
      %2029 = vmatprep.subr.mxu0 0.0
      %2030 = vmatpush1.msra.mxu0 0.0
      %2031 = vmatprep.subr.mxu0 0.0
      %2032 = vmatpush1.msra.mxu0 0.0
      %2033 = vmatprep.subr.mxu0 0.0
      %2034 = vmatpush1.msra.mxu0 0.0
      %2035 = vmatprep.mubr.f32.mxu0 0.0
      %2036 = vmatmul.mubr.f32.gmra.mrb[0].mxu0 %v1969
      %v2037 = vpop.f32.mrb[0].mxu0
      %v2038 = vadd.f32 0.0, %v2037
      %v2039 = vpop.f32.mrb[0].mxu0
      %2040 = vdwg.mxu0
      %v2041 = vadd.f32 %v1637, %v2038
      %v2042 = vld [vmem:[%s9] sm:$0x1]
      %v2044 = vlaneseq
      %v2045 = vshrl.u32 %v2044, 7
      %v2046 = vsub.s32 0, %v2045
      %v2047 = vrot.slane %v2042, %v2046
      %v2049 = vadd.f32 %v2041, %v2047
      %v2050 = vadd.f32 %v423, %v2049
      %v2051 = vld [vmem:[%s10] sm:$0x1]
      %v2052 = vld [vmem:[%s11] sm:$0x1]
      %v2053 = vsel %vm436, %v2050, 0.0
      %2054 = vadd.xlane.f32.xlu0 %v2053
      %v2055 = vpop.xlane.xlu0 %2054
      %v2056 = vrcp.pop 32.0
      %v2057 = vmul.f32 %v2055, %v2056
      %v2058 = vsub.f32 %v2050, %v2057
      %v2059 = vmul.f32 %v2058, %v2058
      %v2060 = vsel %vm436, %v2059, 0.0
      %2061 = vadd.xlane.f32.xlu0 %v2060
      %v2062 = vpop.xlane.xlu0 %2061
      %v2063 = vmul.f32 %v2062, %v2056
      %v2064 = vadd.f32 %v2063, 1e-05
      %v2065 = vrsqrt.pop %v2064
      %v2066 = vmul.f32 %v2058, %v2065
      %v2068 = vlaneseq
      %v2069 = vshrl.u32 %v2068, 7
      %v2070 = vsub.s32 0, %v2069
      %v2071 = vrot.slane %v2051, %v2070
      %v2073 = vmul.f32 %v2066, %v2071
      %v2075 = vlaneseq
      %v2076 = vshrl.u32 %v2075, 7
      %v2077 = vsub.s32 0, %v2076
      %v2078 = vrot.slane %v2052, %v2077
      %v2080 = vadd.f32 %v2073, %v2078
      %2081 = vst.msk [vmem:[%s422] sm:$0xff] %vm436, %v2080
      %p2082 = scmp.lt.s32.totalorder %s23, 1
      %s2083 = scalar_select %p2082, %s23, 1
      %s2084 = smul.addr %s2083, 8
      %s2085 = scalar_lea.vmem %s12, %s2084
      // Predicated region
      $region69: #{captioning_transformer_forward.10} parent=67 // pred_check
        %p2086 = pneg %p303
      $region70: #{captioning_transformer_forward.10} parent=67 // pred_check_branch
        %2088 = sbr.rel (%p2086) target = $region72
      $region71: #{captioning_transformer_forward.10} parent=67 // pred_region
        _
      $region72: #{captioning_transformer_forward.10} parent=67 // pred_fallthru
        _
    $region68: #{captioning_transformer_forward.10} parent=5 // pred_fallthru
      _
    %p2089 = scmp.le.s32.totalorder 2, %s18
    // Predicated region
    $region73: #{captioning_transformer_forward.10} parent=5 // pred_check
      %p2090 = pneg %p2089
    $region74: #{captioning_transformer_forward.10} parent=5 // pred_check_branch
      %2092 = sbr.rel (%p2090) target = $region76
    $region75: #{captioning_transformer_forward.10} parent=5 // pred_region
      %s2093 = ssub.s32 %s18, 2
      // Predicated region
      $region77: #{captioning_transformer_forward.10} parent=75 // pred_check
        %p2094 = pneg %p309
      $region78: #{captioning_transformer_forward.10} parent=75 // pred_check_branch
        %2096 = sbr.rel (%p2094) target = $region80
      $region79: #{captioning_transformer_forward.10} parent=75 // pred_region
        %p2097 = scmp.lt.s32.totalorder %s24, 1
        %s2098 = scalar_select %p2097, %s24, 1
        %s2099 = smul.addr %s2098, 8
        %s2100 = scalar_lea.vmem %s12, %s2099
      $region80: #{captioning_transformer_forward.10} parent=75 // pred_fallthru
        _
    $region76: #{captioning_transformer_forward.10} parent=5 // pred_fallthru
      _
  $region6: #{captioning_transformer_forward.10} parent=0 // loop_footer
    %s22 = sadd.s32 1, %s18
  $region7: #{captioning_transformer_forward.10} parent=0 // loop_footer_branch
    %17 = sbr.rel target = $region3
  $region8: #{captioning_transformer_forward.10} parent=0 // loop_exit
    _

// kernel: captioning_transformer_forward.9
$region0: #{captioning_transformer_forward.9}
  #allocation0 [shape = 'u32[]', space=smem, size = 0x4, offset = 0x4, fixed_abs, tag = 'smem constant byte address 0x4 - core index']
  #allocation1 [shape = 'u32[144,128]{1,0:T(1,128)}', space=vmem, size = 0x12000, scoped, tag = 'internal scratch']
  %s0 = inlined_call_operand.vmem [shape: f32[2,8,32], index: 0, kind: input, shape index: {}, may-alias: {0,1}]
  %s1 = inlined_call_operand.vmem [shape: f32[2,8,32], index: 1, kind: input, shape index: {}, may-alias: {0,1}]
  %s2 = inlined_call_operand.vmem [shape: f32[4,32,8], index: 2, kind: input, shape index: {}]
  %s3 = inlined_call_operand.vmem [shape: f32[4,1,8], index: 3, kind: input, shape index: {}]
  %s4 = inlined_call_operand.vmem [shape: f32[4,32,8], index: 4, kind: input, shape index: {}]
  %s5 = inlined_call_operand.vmem [shape: f32[4,1,8], index: 5, kind: input, shape index: {}]
  %s6 = inlined_call_operand.vmem [shape: f32[4,32,8], index: 6, kind: input, shape index: {}]
  %s7 = inlined_call_operand.vmem [shape: f32[4,1,8], index: 7, kind: input, shape index: {}]
  %s8 = inlined_call_operand.vmem [shape: f32[4,8,32], index: 8, kind: input, shape index: {}]
  %s9 = inlined_call_operand.vmem [shape: f32[1,32], index: 9, kind: input, shape index: {}]
  %s10 = inlined_call_operand.vmem [shape: f32[1,32], index: 10, kind: input, shape index: {}]
  %s11 = inlined_call_operand.vmem [shape: f32[1,32], index: 11, kind: input, shape index: {}]
  %s12 = inlined_call_operand.vmem [shape: f32[2,8,32], index: 12, kind: output, shape index: {}]
  %s13 = sld [smem:[#allocation0]]
  $region81: #{captioning_transformer_forward.9} parent=0
    _
  %s15 = ssub.s32 1, %s13
  %s16 = scalar_select 0, %s15, %s13
  loop: start=0, step=1, limit=4
  $region2: #{captioning_transformer_forward.9} parent=0 // loop_pre_header
    _
  $region3: #{captioning_transformer_forward.9} parent=0 // loop_header
    %s18 = sphi 0, %s22
    %p19 = scmp.ge.s32.totalorder %s18, 4
    %s28 = sphi 0, %s30
    %s31 = sphi 0, %s28
    %s32 = sphi 0, %s31
    %s48 = sphi 0, %s32
    %s54 = sphi 0, %s56
    %s57 = sphi 0, %s54
    %s58 = sphi 0, %s57
    %s74 = sphi 0, %s58
    %s78 = sphi 0, %s78
    %s80 = sphi 0, %s78
    %s81 = sphi 0, %s80
    %s95 = sphi 0, %s81
    %s99 = sphi 0, %s99
    %s101 = sphi 0, %s99
    %s102 = sphi 0, %s101
    %s116 = sphi 0, %s102
    %s120 = sphi 0, %s120
    %s122 = sphi 0, %s120
    %s123 = sphi 0, %s122
    %s137 = sphi 0, %s123
    %s141 = sphi 0, %s141
    %s143 = sphi 0, %s141
    %s144 = sphi 0, %s143
    %s158 = sphi 0, %s144
    %s162 = sphi 0, %s162
    %s164 = sphi 0, %s162
    %s165 = sphi 0, %s164
    %s179 = sphi 0, %s165
    %s183 = sphi 0, %s183
    %s185 = sphi 0, %s183
    %s186 = sphi 0, %s185
    %s200 = sphi 0, %s186
    %s204 = sphi 0, %s204
    %s206 = sphi 0, %s204
    %s207 = sphi 0, %s206
    %s221 = sphi 0, %s207
    %s225 = sphi 0, %s225
    %s227 = sphi 0, %s225
    %s228 = sphi 0, %s227
    %s242 = sphi 0, %s228
    %s246 = sphi 0, %s246
    %s248 = sphi 0, %s246
    %s249 = sphi 0, %s248
    %s263 = sphi 0, %s249
    %s267 = sphi 0, %s267
    %s269 = sphi 0, %s267
    %s270 = sphi 0, %s269
    %s284 = sphi 0, %s270
    %s290 = sphi 0, %s292
    %s293 = sphi 0, %s290
    %s294 = sphi 0, %s293
    %s310 = sphi 0, %s294
  $region4: #{captioning_transformer_forward.9} parent=0 // loop_header_branch
    %21 = sbr.rel (%p19) target = $region8
  $region5: #{captioning_transformer_forward.9} parent=0 // loop_body
    %s23 = ssub.s32 %s18, 1
    %s24 = ssub.s32 %s18, 2
    %s25 = sadd.s32 %s18, 1
    %s26 = ssub.s32 %s18, %s25
    %p27 = scmp.eq.s32.totalorder %s26, 0
    %s29 = sadd.s32 %s28, 1
    %s30 = scalar_select %p27, %s28, %s29
    %p33 = pneg %p27
    %p34 = scmp.eq.s32.totalorder %s18, 1
    %p35 = por %p33, %p34
    %p36 = scmp.ne.s32.totalorder %s28, %s31
    %p37 = scmp.eq.s32.totalorder %s18, 0
    %p38 = por %p36, %p37
    %p39 = scmp.ne.s32.totalorder %s28, %s31
    %p40 = scmp.eq.s32.totalorder %s23, 1
    %p41 = por %p39, %p40
    %p42 = scmp.ne.s32.totalorder %s31, %s32
    %p43 = scmp.eq.s32.totalorder %s23, 0
    %p44 = por %p42, %p43
    %p45 = scmp.ne.s32.totalorder %s31, %s32
    %p46 = scmp.eq.s32.totalorder %s24, 1
    %p47 = por %p45, %p46
    %p49 = scmp.ne.s32.totalorder %s32, %s48
    %p50 = scmp.eq.s32.totalorder %s24, 0
    %p51 = por %p49, %p50
    %s52 = ssub.s32 %s18, %s25
    %p53 = scmp.eq.s32.totalorder %s52, 0
    %s55 = sadd.s32 %s54, 1
    %s56 = scalar_select %p53, %s54, %s55
    %p59 = pneg %p53
    %p60 = scmp.eq.s32.totalorder %s18, 1
    %p61 = por %p59, %p60
    %p62 = scmp.ne.s32.totalorder %s54, %s57
    %p63 = scmp.eq.s32.totalorder %s18, 0
    %p64 = por %p62, %p63
    %p65 = scmp.ne.s32.totalorder %s54, %s57
    %p66 = scmp.eq.s32.totalorder %s23, 1
    %p67 = por %p65, %p66
    %p68 = scmp.ne.s32.totalorder %s57, %s58
    %p69 = scmp.eq.s32.totalorder %s23, 0
    %p70 = por %p68, %p69
    %p71 = scmp.ne.s32.totalorder %s57, %s58
    %p72 = scmp.eq.s32.totalorder %s24, 1
    %p73 = por %p71, %p72
    %p75 = scmp.ne.s32.totalorder %s58, %s74
    %p76 = scmp.eq.s32.totalorder %s24, 0
    %p77 = por %p75, %p76
    %s79 = sadd.s32 %s78, 1
    %p82 = scmp.eq.s32.totalorder %s18, 1
    %p83 = scmp.ne.s32.totalorder %s78, %s80
    %p84 = scmp.eq.s32.totalorder %s18, 0
    %p85 = por %p83, %p84
    %p86 = scmp.ne.s32.totalorder %s78, %s80
    %p87 = scmp.eq.s32.totalorder %s23, 1
    %p88 = por %p86, %p87
    %p89 = scmp.ne.s32.totalorder %s80, %s81
    %p90 = scmp.eq.s32.totalorder %s23, 0
    %p91 = por %p89, %p90
    %p92 = scmp.ne.s32.totalorder %s80, %s81
    %p93 = scmp.eq.s32.totalorder %s24, 1
    %p94 = por %p92, %p93
    %p96 = scmp.ne.s32.totalorder %s81, %s95
    %p97 = scmp.eq.s32.totalorder %s24, 0
    %p98 = por %p96, %p97
    %s100 = sadd.s32 %s99, 1
    %p103 = scmp.eq.s32.totalorder %s18, 1
    %p104 = scmp.ne.s32.totalorder %s99, %s101
    %p105 = scmp.eq.s32.totalorder %s18, 0
    %p106 = por %p104, %p105
    %p107 = scmp.ne.s32.totalorder %s99, %s101
    %p108 = scmp.eq.s32.totalorder %s23, 1
    %p109 = por %p107, %p108
    %p110 = scmp.ne.s32.totalorder %s101, %s102
    %p111 = scmp.eq.s32.totalorder %s23, 0
    %p112 = por %p110, %p111
    %p113 = scmp.ne.s32.totalorder %s101, %s102
    %p114 = scmp.eq.s32.totalorder %s24, 1
    %p115 = por %p113, %p114
    %p117 = scmp.ne.s32.totalorder %s102, %s116
    %p118 = scmp.eq.s32.totalorder %s24, 0
    %p119 = por %p117, %p118
    %s121 = sadd.s32 %s120, 1
    %p124 = scmp.eq.s32.totalorder %s18, 1
    %p125 = scmp.ne.s32.totalorder %s120, %s122
    %p126 = scmp.eq.s32.totalorder %s18, 0
    %p127 = por %p125, %p126
    %p128 = scmp.ne.s32.totalorder %s120, %s122
    %p129 = scmp.eq.s32.totalorder %s23, 1
    %p130 = por %p128, %p129
    %p131 = scmp.ne.s32.totalorder %s122, %s123
    %p132 = scmp.eq.s32.totalorder %s23, 0
    %p133 = por %p131, %p132
    %p134 = scmp.ne.s32.totalorder %s122, %s123
    %p135 = scmp.eq.s32.totalorder %s24, 1
    %p136 = por %p134, %p135
    %p138 = scmp.ne.s32.totalorder %s123, %s137
    %p139 = scmp.eq.s32.totalorder %s24, 0
    %p140 = por %p138, %p139
    %s142 = sadd.s32 %s141, 1
    %p145 = scmp.eq.s32.totalorder %s18, 1
    %p146 = scmp.ne.s32.totalorder %s141, %s143
    %p147 = scmp.eq.s32.totalorder %s18, 0
    %p148 = por %p146, %p147
    %p149 = scmp.ne.s32.totalorder %s141, %s143
    %p150 = scmp.eq.s32.totalorder %s23, 1
    %p151 = por %p149, %p150
    %p152 = scmp.ne.s32.totalorder %s143, %s144
    %p153 = scmp.eq.s32.totalorder %s23, 0
    %p154 = por %p152, %p153
    %p155 = scmp.ne.s32.totalorder %s143, %s144
    %p156 = scmp.eq.s32.totalorder %s24, 1
    %p157 = por %p155, %p156
    %p159 = scmp.ne.s32.totalorder %s144, %s158
    %p160 = scmp.eq.s32.totalorder %s24, 0
    %p161 = por %p159, %p160
    %s163 = sadd.s32 %s162, 1
    %p166 = scmp.eq.s32.totalorder %s18, 1
    %p167 = scmp.ne.s32.totalorder %s162, %s164
    %p168 = scmp.eq.s32.totalorder %s18, 0
    %p169 = por %p167, %p168
    %p170 = scmp.ne.s32.totalorder %s162, %s164
    %p171 = scmp.eq.s32.totalorder %s23, 1
    %p172 = por %p170, %p171
    %p173 = scmp.ne.s32.totalorder %s164, %s165
    %p174 = scmp.eq.s32.totalorder %s23, 0
    %p175 = por %p173, %p174
    %p176 = scmp.ne.s32.totalorder %s164, %s165
    %p177 = scmp.eq.s32.totalorder %s24, 1
    %p178 = por %p176, %p177
    %p180 = scmp.ne.s32.totalorder %s165, %s179
    %p181 = scmp.eq.s32.totalorder %s24, 0
    %p182 = por %p180, %p181
    %s184 = sadd.s32 %s183, 1
    %p187 = scmp.eq.s32.totalorder %s18, 1
    %p188 = scmp.ne.s32.totalorder %s183, %s185
    %p189 = scmp.eq.s32.totalorder %s18, 0
    %p190 = por %p188, %p189
    %p191 = scmp.ne.s32.totalorder %s183, %s185
    %p192 = scmp.eq.s32.totalorder %s23, 1
    %p193 = por %p191, %p192
    %p194 = scmp.ne.s32.totalorder %s185, %s186
    %p195 = scmp.eq.s32.totalorder %s23, 0
    %p196 = por %p194, %p195
    %p197 = scmp.ne.s32.totalorder %s185, %s186
    %p198 = scmp.eq.s32.totalorder %s24, 1
    %p199 = por %p197, %p198
    %p201 = scmp.ne.s32.totalorder %s186, %s200
    %p202 = scmp.eq.s32.totalorder %s24, 0
    %p203 = por %p201, %p202
    %s205 = sadd.s32 %s204, 1
    %p208 = scmp.eq.s32.totalorder %s18, 1
    %p209 = scmp.ne.s32.totalorder %s204, %s206
    %p210 = scmp.eq.s32.totalorder %s18, 0
    %p211 = por %p209, %p210
    %p212 = scmp.ne.s32.totalorder %s204, %s206
    %p213 = scmp.eq.s32.totalorder %s23, 1
    %p214 = por %p212, %p213
    %p215 = scmp.ne.s32.totalorder %s206, %s207
    %p216 = scmp.eq.s32.totalorder %s23, 0
    %p217 = por %p215, %p216
    %p218 = scmp.ne.s32.totalorder %s206, %s207
    %p219 = scmp.eq.s32.totalorder %s24, 1
    %p220 = por %p218, %p219
    %p222 = scmp.ne.s32.totalorder %s207, %s221
    %p223 = scmp.eq.s32.totalorder %s24, 0
    %p224 = por %p222, %p223
    %s226 = sadd.s32 %s225, 1
    %p229 = scmp.eq.s32.totalorder %s18, 1
    %p230 = scmp.ne.s32.totalorder %s225, %s227
    %p231 = scmp.eq.s32.totalorder %s18, 0
    %p232 = por %p230, %p231
    %p233 = scmp.ne.s32.totalorder %s225, %s227
    %p234 = scmp.eq.s32.totalorder %s23, 1
    %p235 = por %p233, %p234
    %p236 = scmp.ne.s32.totalorder %s227, %s228
    %p237 = scmp.eq.s32.totalorder %s23, 0
    %p238 = por %p236, %p237
    %p239 = scmp.ne.s32.totalorder %s227, %s228
    %p240 = scmp.eq.s32.totalorder %s24, 1
    %p241 = por %p239, %p240
    %p243 = scmp.ne.s32.totalorder %s228, %s242
    %p244 = scmp.eq.s32.totalorder %s24, 0
    %p245 = por %p243, %p244
    %s247 = sadd.s32 %s246, 1
    %p250 = scmp.eq.s32.totalorder %s18, 1
    %p251 = scmp.ne.s32.totalorder %s246, %s248
    %p252 = scmp.eq.s32.totalorder %s18, 0
    %p253 = por %p251, %p252
    %p254 = scmp.ne.s32.totalorder %s246, %s248
    %p255 = scmp.eq.s32.totalorder %s23, 1
    %p256 = por %p254, %p255
    %p257 = scmp.ne.s32.totalorder %s248, %s249
    %p258 = scmp.eq.s32.totalorder %s23, 0
    %p259 = por %p257, %p258
    %p260 = scmp.ne.s32.totalorder %s248, %s249
    %p261 = scmp.eq.s32.totalorder %s24, 1
    %p262 = por %p260, %p261
    %p264 = scmp.ne.s32.totalorder %s249, %s263
    %p265 = scmp.eq.s32.totalorder %s24, 0
    %p266 = por %p264, %p265
    %s268 = sadd.s32 %s267, 1
    %p271 = scmp.eq.s32.totalorder %s18, 1
    %p272 = scmp.ne.s32.totalorder %s267, %s269
    %p273 = scmp.eq.s32.totalorder %s18, 0
    %p274 = por %p272, %p273
    %p275 = scmp.ne.s32.totalorder %s267, %s269
    %p276 = scmp.eq.s32.totalorder %s23, 1
    %p277 = por %p275, %p276
    %p278 = scmp.ne.s32.totalorder %s269, %s270
    %p279 = scmp.eq.s32.totalorder %s23, 0
    %p280 = por %p278, %p279
    %p281 = scmp.ne.s32.totalorder %s269, %s270
    %p282 = scmp.eq.s32.totalorder %s24, 1
    %p283 = por %p281, %p282
    %p285 = scmp.ne.s32.totalorder %s270, %s284
    %p286 = scmp.eq.s32.totalorder %s24, 0
    %p287 = por %p285, %p286
    %s288 = ssub.s32 %s18, %s25
    %p289 = scmp.eq.s32.totalorder %s288, 0
    %s291 = sadd.s32 %s290, 1
    %s292 = scalar_select %p289, %s290, %s291
    %p295 = pneg %p289
    %p296 = scmp.eq.s32.totalorder %s18, 1
    %p297 = por %p295, %p296
    %p298 = scmp.ne.s32.totalorder %s290, %s293
    %p299 = scmp.eq.s32.totalorder %s18, 0
    %p300 = por %p298, %p299
    %p301 = scmp.ne.s32.totalorder %s290, %s293
    %p302 = scmp.eq.s32.totalorder %s23, 1
    %p303 = por %p301, %p302
    %p304 = scmp.ne.s32.totalorder %s293, %s294
    %p305 = scmp.eq.s32.totalorder %s23, 0
    %p306 = por %p304, %p305
    %p307 = scmp.ne.s32.totalorder %s293, %s294
    %p308 = scmp.eq.s32.totalorder %s24, 1
    %p309 = por %p307, %p308
    %p311 = scmp.ne.s32.totalorder %s294, %s310
    %p312 = scmp.eq.s32.totalorder %s24, 0
    %p313 = por %p311, %p312
    %p314 = scmp.le.s32.totalorder 1, %s18
    %p315 = scmp.lt.s32.totalorder %s18, 3
    %p316 = pnand %p314, %p315
    %p317 = pneg %p316
    // Predicated region
    $region9: #{captioning_transformer_forward.9} parent=5 // pred_check
      _
    $region10: #{captioning_transformer_forward.9} parent=5 // pred_check_branch
      %319 = sbr.rel (%p316) target = $region12
    $region11: #{captioning_transformer_forward.9} parent=5 // pred_region
      %s320 = ssub.s32 %s18, 1
      // Predicated region
      $region13: #{captioning_transformer_forward.9} parent=11 // pred_check
        %p321 = pneg %p91
      $region14: #{captioning_transformer_forward.9} parent=11 // pred_check_branch
        %323 = sbr.rel (%p321) target = $region16
      $region15: #{captioning_transformer_forward.9} parent=11 // pred_region
        _
      $region16: #{captioning_transformer_forward.9} parent=11 // pred_fallthru
        _
      // Predicated region
      $region17: #{captioning_transformer_forward.9} parent=11 // pred_check
        %p324 = pneg %p112
      $region18: #{captioning_transformer_forward.9} parent=11 // pred_check_branch
        %326 = sbr.rel (%p324) target = $region20
      $region19: #{captioning_transformer_forward.9} parent=11 // pred_region
        _
      $region20: #{captioning_transformer_forward.9} parent=11 // pred_fallthru
        _
      // Predicated region
      $region21: #{captioning_transformer_forward.9} parent=11 // pred_check
        %p327 = pneg %p133
      $region22: #{captioning_transformer_forward.9} parent=11 // pred_check_branch
        %329 = sbr.rel (%p327) target = $region24
      $region23: #{captioning_transformer_forward.9} parent=11 // pred_region
        _
      $region24: #{captioning_transformer_forward.9} parent=11 // pred_fallthru
        _
      // Predicated region
      $region25: #{captioning_transformer_forward.9} parent=11 // pred_check
        %p330 = pneg %p154
      $region26: #{captioning_transformer_forward.9} parent=11 // pred_check_branch
        %332 = sbr.rel (%p330) target = $region28
      $region27: #{captioning_transformer_forward.9} parent=11 // pred_region
        _
      $region28: #{captioning_transformer_forward.9} parent=11 // pred_fallthru
        _
      // Predicated region
      $region29: #{captioning_transformer_forward.9} parent=11 // pred_check
        %p333 = pneg %p175
      $region30: #{captioning_transformer_forward.9} parent=11 // pred_check_branch
        %335 = sbr.rel (%p333) target = $region32
      $region31: #{captioning_transformer_forward.9} parent=11 // pred_region
        _
      $region32: #{captioning_transformer_forward.9} parent=11 // pred_fallthru
        _
      // Predicated region
      $region33: #{captioning_transformer_forward.9} parent=11 // pred_check
        %p336 = pneg %p196
      $region34: #{captioning_transformer_forward.9} parent=11 // pred_check_branch
        %338 = sbr.rel (%p336) target = $region36
      $region35: #{captioning_transformer_forward.9} parent=11 // pred_region
        _
      $region36: #{captioning_transformer_forward.9} parent=11 // pred_fallthru
        _
      // Predicated region
      $region37: #{captioning_transformer_forward.9} parent=11 // pred_check
        %p339 = pneg %p217
      $region38: #{captioning_transformer_forward.9} parent=11 // pred_check_branch
        %341 = sbr.rel (%p339) target = $region40
      $region39: #{captioning_transformer_forward.9} parent=11 // pred_region
        _
      $region40: #{captioning_transformer_forward.9} parent=11 // pred_fallthru
        _
      // Predicated region
      $region41: #{captioning_transformer_forward.9} parent=11 // pred_check
        %p342 = pneg %p238
      $region42: #{captioning_transformer_forward.9} parent=11 // pred_check_branch
        %344 = sbr.rel (%p342) target = $region44
      $region43: #{captioning_transformer_forward.9} parent=11 // pred_region
        _
      $region44: #{captioning_transformer_forward.9} parent=11 // pred_fallthru
        _
      // Predicated region
      $region45: #{captioning_transformer_forward.9} parent=11 // pred_check
        %p345 = pneg %p259
      $region46: #{captioning_transformer_forward.9} parent=11 // pred_check_branch
        %347 = sbr.rel (%p345) target = $region48
      $region47: #{captioning_transformer_forward.9} parent=11 // pred_region
        _
      $region48: #{captioning_transformer_forward.9} parent=11 // pred_fallthru
        _
      // Predicated region
      $region49: #{captioning_transformer_forward.9} parent=11 // pred_check
        %p348 = pneg %p280
      $region50: #{captioning_transformer_forward.9} parent=11 // pred_check_branch
        %350 = sbr.rel (%p348) target = $region52
      $region51: #{captioning_transformer_forward.9} parent=11 // pred_region
        _
      $region52: #{captioning_transformer_forward.9} parent=11 // pred_fallthru
        _
    $region12: #{captioning_transformer_forward.9} parent=5 // pred_fallthru
      _
    %p351 = scmp.lt.s32.totalorder %s18, 2
    // Predicated region
    $region53: #{captioning_transformer_forward.9} parent=5 // pred_check
      %p352 = pneg %p351
    $region54: #{captioning_transformer_forward.9} parent=5 // pred_check_branch
      %354 = sbr.rel (%p352) target = $region56
    $region55: #{captioning_transformer_forward.9} parent=5 // pred_region
      // Predicated region
      $region57: #{captioning_transformer_forward.9} parent=55 // pred_check
        %p355 = pneg %p38
      $region58: #{captioning_transformer_forward.9} parent=55 // pred_check_branch
        %357 = sbr.rel (%p355) target = $region60
      $region59: #{captioning_transformer_forward.9} parent=55 // pred_region
        %p358 = scmp.lt.s32.totalorder %s18, 1
        %s359 = scalar_select %p358, %s18, 1
        %s360 = smul.addr %s359, 8
        %s361 = scalar_lea.vmem %s0, %s360
      $region60: #{captioning_transformer_forward.9} parent=55 // pred_fallthru
        _
      // Predicated region
      $region61: #{captioning_transformer_forward.9} parent=55 // pred_check
        %p362 = pneg %p64
      $region62: #{captioning_transformer_forward.9} parent=55 // pred_check_branch
        %364 = sbr.rel (%p362) target = $region64
      $region63: #{captioning_transformer_forward.9} parent=55 // pred_region
        %p365 = scmp.lt.s32.totalorder %s18, 1
        %s366 = scalar_select %p365, %s18, 1
        %s367 = smul.addr %s366, 8
        %s368 = scalar_lea.vmem %s1, %s367
      $region64: #{captioning_transformer_forward.9} parent=55 // pred_fallthru
        _
    $region56: #{captioning_transformer_forward.9} parent=5 // pred_fallthru
      _
    %p369 = scmp.le.s32.totalorder 1, %s18
    %p370 = scmp.lt.s32.totalorder %s18, 3
    %p371 = pnand %p369, %p370
    %p372 = pneg %p371
    // Predicated region
    $region65: #{captioning_transformer_forward.9} parent=5 // pred_check
      _
    $region66: #{captioning_transformer_forward.9} parent=5 // pred_check_branch
      %374 = sbr.rel (%p371) target = $region68
    $region67: #{captioning_transformer_forward.9} parent=5 // pred_region
      %s375 = ssub.s32 %s18, 1
      %p376 = scmp.lt.s32.totalorder %s23, 1
      %s377 = scalar_select %p376, %s23, 1
      %s378 = smul.addr %s377, 8
      %s379 = scalar_lea.vmem %s0, %s378
      %p380 = pneg %p44
      %p381 = pneg %p41
      %p382 = scmp.lt.s32.totalorder %s23, 1
      %s383 = scalar_select %p382, %s23, 1
      %s384 = smul.addr %s383, 8
      %s385 = scalar_lea.vmem %s1, %s384
      %p386 = pneg %p70
      %p387 = pneg %p67
      %p388 = pneg %p91
      %p389 = pneg %p88
      %p390 = pneg %p112
      %p391 = pneg %p109
      %p392 = pneg %p133
      %p393 = pneg %p130
      %p394 = pneg %p154
      %p395 = pneg %p151
      %p396 = pneg %p175
      %p397 = pneg %p172
      %p398 = pneg %p196
      %p399 = pneg %p193
      %p400 = pneg %p217
      %p401 = pneg %p214
      %p402 = pneg %p238
      %p403 = pneg %p235
      %p404 = pneg %p259
      %p405 = pneg %p256
      %p406 = pneg %p280
      %p407 = pneg %p277
      %p408 = pneg %p306
      %p409 = pneg %p303
      %p410 = scmp.lt.s32.totalorder %s23, 1
      %s411 = scalar_select %p410, %s23, 1
      %s412 = smul.addr %s411, 8
      %s413 = scalar_lea.vmem %s12, %s412
      %p414 = scmp.lt.s32.totalorder %s23, 1
      %s415 = scalar_select %p414, %s23, 1
      %s416 = smul.addr %s415, 8
      %s417 = scalar_lea.vmem %s0, %s416
      %p418 = scmp.lt.s32.totalorder %s23, 1
      %s419 = scalar_select %p418, %s23, 1
      %s420 = smul.addr %s419, 8
      %s421 = scalar_lea.vmem %s1, %s420
      %p422 = scmp.lt.s32.totalorder %s23, 1
      %s423 = scalar_select %p422, %s23, 1
      %s424 = smul.addr %s423, 8
      %s425 = scalar_lea.vmem %s12, %s424
      %v426 = vld [vmem:[%s417] sm:$0xff]
      %v427 = vld [vmem:[%s421] sm:$0xff]
      %v428 = vlaneseq
      %v429 = vshrl.u32 %v428, 7
      %v430 = vlaneseq
      %v431 = vand.u32 %v430, 127
      %vm432 = vcmp.ge.s32.totalorder %v429, %v431
      %v433 = vld [vmem:[%s2] sm:$0xff]
      %v434 = vld [vmem:[%s2 + $0x8] sm:$0xff]
      %v435 = vld [vmem:[%s2 + $0x10] sm:$0xff]
      %v436 = vld [vmem:[%s2 + $0x18] sm:$0xff]
      %v437 = vld [vmem:[%s3] sm:$0x1]
      %v439 = vlaneseq
      %v440 = vshrl.u32 %v439, 7
      %v441 = vsub.s32 0, %v440
      %v442 = vrot.slane %v437, %v441
      %vm444 = vcmask 261120
      %v446 = vsel %vm444, %v426, 0
      %448 = vmatprep.subr.mxu0 0.0
      %449 = vmatpush1.msra.mxu0 %v433
      %450 = vmatprep.subr.mxu0 0.0
      %451 = vmatpush1.msra.mxu0 %v434
      %452 = vmatprep.subr.mxu0 0.0
      %453 = vmatpush1.msra.mxu0 %v435
      %454 = vmatprep.subr.mxu0 0.0
      %455 = vmatpush1.msra.mxu0 %v436
      %456 = vmatprep.subr.mxu0 0.0
      %457 = vmatpush1.msra.mxu0 0.0
      %458 = vmatprep.subr.mxu0 0.0
      %459 = vmatpush1.msra.mxu0 0.0
      %460 = vmatprep.subr.mxu0 0.0
      %461 = vmatpush1.msra.mxu0 0.0
      %462 = vmatprep.subr.mxu0 0.0
      %463 = vmatpush1.msra.mxu0 0.0
      %464 = vmatprep.subr.mxu0 0.0
      %465 = vmatpush1.msra.mxu0 0.0
      %466 = vmatprep.subr.mxu0 0.0
      %467 = vmatpush1.msra.mxu0 0.0
      %468 = vmatprep.subr.mxu0 0.0
      %469 = vmatpush1.msra.mxu0 0.0
      %470 = vmatprep.subr.mxu0 0.0
      %471 = vmatpush1.msra.mxu0 0.0
      %472 = vmatprep.subr.mxu0 0.0
      %473 = vmatpush1.msra.mxu0 0.0
      %474 = vmatprep.subr.mxu0 0.0
      %475 = vmatpush1.msra.mxu0 0.0
      %476 = vmatprep.subr.mxu0 0.0
      %477 = vmatpush1.msra.mxu0 0.0
      %478 = vmatprep.subr.mxu0 0.0
      %479 = vmatpush1.msra.mxu0 0.0
      %480 = vmatprep.subr.mxu0 0.0
      %481 = vmatpush1.msra.mxu0 0.0
      %482 = vmatprep.subr.mxu0 0.0
      %483 = vmatpush1.msra.mxu0 0.0
      %484 = vmatprep.subr.mxu0 0.0
      %485 = vmatpush1.msra.mxu0 0.0
      %486 = vmatprep.subr.mxu0 0.0
      %487 = vmatpush1.msra.mxu0 0.0
      %488 = vmatprep.subr.mxu0 0.0
      %489 = vmatpush1.msra.mxu0 0.0
      %490 = vmatprep.subr.mxu0 0.0
      %491 = vmatpush1.msra.mxu0 0.0
      %492 = vmatprep.subr.mxu0 0.0
      %493 = vmatpush1.msra.mxu0 0.0
      %494 = vmatprep.subr.mxu0 0.0
      %495 = vmatpush1.msra.mxu0 0.0
      %496 = vmatprep.subr.mxu0 0.0
      %497 = vmatpush1.msra.mxu0 0.0
      %498 = vmatprep.subr.mxu0 0.0
      %499 = vmatpush1.msra.mxu0 0.0
      %500 = vmatprep.subr.mxu0 0.0
      %501 = vmatpush1.msra.mxu0 0.0
      %502 = vmatprep.subr.mxu0 0.0
      %503 = vmatpush1.msra.mxu0 0.0
      %504 = vmatprep.subr.mxu0 0.0
      %505 = vmatpush1.msra.mxu0 0.0
      %506 = vmatprep.subr.mxu0 0.0
      %507 = vmatpush1.msra.mxu0 0.0
      %508 = vmatprep.subr.mxu0 0.0
      %509 = vmatpush1.msra.mxu0 0.0
      %510 = vmatprep.subr.mxu0 0.0
      %511 = vmatpush1.msra.mxu0 0.0
      %512 = vmatprep.mubr.f32.mxu0 0.0
      %513 = vmatmul.mubr.f32.gmra.mrb[0].mxu0 %v446
      %v514 = vpop.f32.mrb[0].mxu0
      %v515 = vadd.f32 %v442, %v514
      %v516 = vpop.f32.mrb[0].mxu0
      %517 = vdwg.mxu0
      %v518 = vld [vmem:[%s4] sm:$0xff]
      %v519 = vld [vmem:[%s4 + $0x8] sm:$0xff]
      %v520 = vld [vmem:[%s4 + $0x10] sm:$0xff]
      %v521 = vld [vmem:[%s4 + $0x18] sm:$0xff]
      %v522 = vld [vmem:[%s5] sm:$0x1]
      %v524 = vlaneseq
      %v525 = vshrl.u32 %v524, 7
      %v526 = vsub.s32 0, %v525
      %v527 = vrot.slane %v522, %v526
      %v530 = vsel %vm444, %v427, 0
      %532 = vmatprep.subr.mxu0 0.0
      %533 = vmatpush1.msra.mxu0 %v518
      %534 = vmatprep.subr.mxu0 0.0
      %535 = vmatpush1.msra.mxu0 %v519
      %536 = vmatprep.subr.mxu0 0.0
      %537 = vmatpush1.msra.mxu0 %v520
      %538 = vmatprep.subr.mxu0 0.0
      %539 = vmatpush1.msra.mxu0 %v521
      %540 = vmatprep.subr.mxu0 0.0
      %541 = vmatpush1.msra.mxu0 0.0
      %542 = vmatprep.subr.mxu0 0.0
      %543 = vmatpush1.msra.mxu0 0.0
      %544 = vmatprep.subr.mxu0 0.0
      %545 = vmatpush1.msra.mxu0 0.0
      %546 = vmatprep.subr.mxu0 0.0
      %547 = vmatpush1.msra.mxu0 0.0
      %548 = vmatprep.subr.mxu0 0.0
      %549 = vmatpush1.msra.mxu0 0.0
      %550 = vmatprep.subr.mxu0 0.0
      %551 = vmatpush1.msra.mxu0 0.0
      %552 = vmatprep.subr.mxu0 0.0
      %553 = vmatpush1.msra.mxu0 0.0
      %554 = vmatprep.subr.mxu0 0.0
      %555 = vmatpush1.msra.mxu0 0.0
      %556 = vmatprep.subr.mxu0 0.0
      %557 = vmatpush1.msra.mxu0 0.0
      %558 = vmatprep.subr.mxu0 0.0
      %559 = vmatpush1.msra.mxu0 0.0
      %560 = vmatprep.subr.mxu0 0.0
      %561 = vmatpush1.msra.mxu0 0.0
      %562 = vmatprep.subr.mxu0 0.0
      %563 = vmatpush1.msra.mxu0 0.0
      %564 = vmatprep.subr.mxu0 0.0
      %565 = vmatpush1.msra.mxu0 0.0
      %566 = vmatprep.subr.mxu0 0.0
      %567 = vmatpush1.msra.mxu0 0.0
      %568 = vmatprep.subr.mxu0 0.0
      %569 = vmatpush1.msra.mxu0 0.0
      %570 = vmatprep.subr.mxu0 0.0
      %571 = vmatpush1.msra.mxu0 0.0
      %572 = vmatprep.subr.mxu0 0.0
      %573 = vmatpush1.msra.mxu0 0.0
      %574 = vmatprep.subr.mxu0 0.0
      %575 = vmatpush1.msra.mxu0 0.0
      %576 = vmatprep.subr.mxu0 0.0
      %577 = vmatpush1.msra.mxu0 0.0
      %578 = vmatprep.subr.mxu0 0.0
      %579 = vmatpush1.msra.mxu0 0.0
      %580 = vmatprep.subr.mxu0 0.0
      %581 = vmatpush1.msra.mxu0 0.0
      %582 = vmatprep.subr.mxu0 0.0
      %583 = vmatpush1.msra.mxu0 0.0
      %584 = vmatprep.subr.mxu0 0.0
      %585 = vmatpush1.msra.mxu0 0.0
      %586 = vmatprep.subr.mxu0 0.0
      %587 = vmatpush1.msra.mxu0 0.0
      %588 = vmatprep.subr.mxu0 0.0
      %589 = vmatpush1.msra.mxu0 0.0
      %590 = vmatprep.subr.mxu0 0.0
      %591 = vmatpush1.msra.mxu0 0.0
      %592 = vmatprep.subr.mxu0 0.0
      %593 = vmatpush1.msra.mxu0 0.0
      %594 = vmatprep.subr.mxu0 0.0
      %595 = vmatpush1.msra.mxu0 0.0
      %596 = vmatprep.mubr.f32.mxu0 0.0
      %597 = vmatmul.mubr.f32.gmra.mrb[0].mxu0 %v530
      %v598 = vpop.f32.mrb[0].mxu0
      %v599 = vadd.f32 %v527, %v598
      %v600 = vpop.f32.mrb[0].mxu0
      %601 = vdwg.mxu0
      %v602 = vld [vmem:[%s6] sm:$0xff]
      %v603 = vld [vmem:[%s6 + $0x8] sm:$0xff]
      %v604 = vld [vmem:[%s6 + $0x10] sm:$0xff]
      %v605 = vld [vmem:[%s6 + $0x18] sm:$0xff]
      %v606 = vld [vmem:[%s7] sm:$0x1]
      %v608 = vlaneseq
      %v609 = vshrl.u32 %v608, 7
      %v610 = vsub.s32 0, %v609
      %v611 = vrot.slane %v606, %v610
      %613 = vmatprep.subr.mxu0 0.0
      %614 = vmatpush1.msra.mxu0 %v602
      %615 = vmatprep.subr.mxu0 0.0
      %616 = vmatpush1.msra.mxu0 %v603
      %617 = vmatprep.subr.mxu0 0.0
      %618 = vmatpush1.msra.mxu0 %v604
      %619 = vmatprep.subr.mxu0 0.0
      %620 = vmatpush1.msra.mxu0 %v605
      %621 = vmatprep.subr.mxu0 0.0
      %622 = vmatpush1.msra.mxu0 0.0
      %623 = vmatprep.subr.mxu0 0.0
      %624 = vmatpush1.msra.mxu0 0.0
      %625 = vmatprep.subr.mxu0 0.0
      %626 = vmatpush1.msra.mxu0 0.0
      %627 = vmatprep.subr.mxu0 0.0
      %628 = vmatpush1.msra.mxu0 0.0
      %629 = vmatprep.subr.mxu0 0.0
      %630 = vmatpush1.msra.mxu0 0.0
      %631 = vmatprep.subr.mxu0 0.0
      %632 = vmatpush1.msra.mxu0 0.0
      %633 = vmatprep.subr.mxu0 0.0
      %634 = vmatpush1.msra.mxu0 0.0
      %635 = vmatprep.subr.mxu0 0.0
      %636 = vmatpush1.msra.mxu0 0.0
      %637 = vmatprep.subr.mxu0 0.0
      %638 = vmatpush1.msra.mxu0 0.0
      %639 = vmatprep.subr.mxu0 0.0
      %640 = vmatpush1.msra.mxu0 0.0
      %641 = vmatprep.subr.mxu0 0.0
      %642 = vmatpush1.msra.mxu0 0.0
      %643 = vmatprep.subr.mxu0 0.0
      %644 = vmatpush1.msra.mxu0 0.0
      %645 = vmatprep.subr.mxu0 0.0
      %646 = vmatpush1.msra.mxu0 0.0
      %647 = vmatprep.subr.mxu0 0.0
      %648 = vmatpush1.msra.mxu0 0.0
      %649 = vmatprep.subr.mxu0 0.0
      %650 = vmatpush1.msra.mxu0 0.0
      %651 = vmatprep.subr.mxu0 0.0
      %652 = vmatpush1.msra.mxu0 0.0
      %653 = vmatprep.subr.mxu0 0.0
      %654 = vmatpush1.msra.mxu0 0.0
      %655 = vmatprep.subr.mxu0 0.0
      %656 = vmatpush1.msra.mxu0 0.0
      %657 = vmatprep.subr.mxu0 0.0
      %658 = vmatpush1.msra.mxu0 0.0
      %659 = vmatprep.subr.mxu0 0.0
      %660 = vmatpush1.msra.mxu0 0.0
      %661 = vmatprep.subr.mxu0 0.0
      %662 = vmatpush1.msra.mxu0 0.0
      %663 = vmatprep.subr.mxu0 0.0
      %664 = vmatpush1.msra.mxu0 0.0
      %665 = vmatprep.subr.mxu0 0.0
      %666 = vmatpush1.msra.mxu0 0.0
      %667 = vmatprep.subr.mxu0 0.0
      %668 = vmatpush1.msra.mxu0 0.0
      %669 = vmatprep.subr.mxu0 0.0
      %670 = vmatpush1.msra.mxu0 0.0
      %671 = vmatprep.subr.mxu0 0.0
      %672 = vmatpush1.msra.mxu0 0.0
      %673 = vmatprep.subr.mxu0 0.0
      %674 = vmatpush1.msra.mxu0 0.0
      %675 = vmatprep.subr.mxu0 0.0
      %676 = vmatpush1.msra.mxu0 0.0
      %677 = vmatprep.mubr.f32.mxu0 0.0
      %678 = vmatmul.mubr.f32.gmra.mrb[0].mxu0 %v530
      %v679 = vpop.f32.mrb[0].mxu0
      %v680 = vadd.f32 %v611, %v679
      %v681 = vpop.f32.mrb[0].mxu0
      %682 = vdwg.mxu0
      %vm683 = vcmask 64512
      %v685 = vsel %vm683, %v515, 0
      %v688 = vsel %vm683, %v599, 0
      %690 = vmatprep.subr.mxu0 0.0
      %691 = vmatpush1.xpose.msra.mxu0 %v688
      %692 = vmatprep.subr.mxu0 0.0
      %693 = vmatpush1.xpose.msra.mxu0 0.0
      %694 = vmatprep.subr.mxu0 0.0
      %695 = vmatpush1.xpose.msra.mxu0 0.0
      %696 = vmatprep.subr.mxu0 0.0
      %697 = vmatpush1.xpose.msra.mxu0 0.0
      %698 = vmatprep.subr.mxu0 0.0
      %699 = vmatpush1.xpose.msra.mxu0 0.0
      %700 = vmatprep.subr.mxu0 0.0
      %701 = vmatpush1.xpose.msra.mxu0 0.0
      %702 = vmatprep.subr.mxu0 0.0
      %703 = vmatpush1.xpose.msra.mxu0 0.0
      %704 = vmatprep.subr.mxu0 0.0
      %705 = vmatpush1.xpose.msra.mxu0 0.0
      %706 = vmatprep.subr.mxu0 0.0
      %707 = vmatpush1.xpose.msra.mxu0 0.0
      %708 = vmatprep.subr.mxu0 0.0
      %709 = vmatpush1.xpose.msra.mxu0 0.0
      %710 = vmatprep.subr.mxu0 0.0
      %711 = vmatpush1.xpose.msra.mxu0 0.0
      %712 = vmatprep.subr.mxu0 0.0
      %713 = vmatpush1.xpose.msra.mxu0 0.0
      %714 = vmatprep.subr.mxu0 0.0
      %715 = vmatpush1.xpose.msra.mxu0 0.0
      %716 = vmatprep.subr.mxu0 0.0
      %717 = vmatpush1.xpose.msra.mxu0 0.0
      %718 = vmatprep.subr.mxu0 0.0
      %719 = vmatpush1.xpose.msra.mxu0 0.0
      %720 = vmatprep.subr.mxu0 0.0
      %721 = vmatpush1.xpose.msra.mxu0 0.0
      %722 = vmatprep.subr.mxu0 0.0
      %723 = vmatpush1.xpose.msra.mxu0 0.0
      %724 = vmatprep.subr.mxu0 0.0
      %725 = vmatpush1.xpose.msra.mxu0 0.0
      %726 = vmatprep.subr.mxu0 0.0
      %727 = vmatpush1.xpose.msra.mxu0 0.0
      %728 = vmatprep.subr.mxu0 0.0
      %729 = vmatpush1.xpose.msra.mxu0 0.0
      %730 = vmatprep.subr.mxu0 0.0
      %731 = vmatpush1.xpose.msra.mxu0 0.0
      %732 = vmatprep.subr.mxu0 0.0
      %733 = vmatpush1.xpose.msra.mxu0 0.0
      %734 = vmatprep.subr.mxu0 0.0
      %735 = vmatpush1.xpose.msra.mxu0 0.0
      %736 = vmatprep.subr.mxu0 0.0
      %737 = vmatpush1.xpose.msra.mxu0 0.0
      %738 = vmatprep.subr.mxu0 0.0
      %739 = vmatpush1.xpose.msra.mxu0 0.0
      %740 = vmatprep.subr.mxu0 0.0
      %741 = vmatpush1.xpose.msra.mxu0 0.0
      %742 = vmatprep.subr.mxu0 0.0
      %743 = vmatpush1.xpose.msra.mxu0 0.0
      %744 = vmatprep.subr.mxu0 0.0
      %745 = vmatpush1.xpose.msra.mxu0 0.0
      %746 = vmatprep.subr.mxu0 0.0
      %747 = vmatpush1.xpose.msra.mxu0 0.0
      %748 = vmatprep.subr.mxu0 0.0
      %749 = vmatpush1.xpose.msra.mxu0 0.0
      %750 = vmatprep.subr.mxu0 0.0
      %751 = vmatpush1.xpose.msra.mxu0 0.0
      %752 = vmatprep.subr.mxu0 0.0
      %753 = vmatpush1.xpose.msra.mxu0 0.0
      %754 = vmatprep.mubr.f32.mxu0 0.0
      %755 = vmatmul.mubr.f32.gmra.mrb[0].mxu0 %v685
      %v756 = vpop.f32.mrb[0].mxu0
      %v757 = vadd.f32 0.0, %v756
      %v758 = vpop.f32.mrb[0].mxu0
      %759 = vdwg.mxu0
      %v760 = vmul.f32 %v757, 0.35355338
      %v761 = vsel %vm432, %v760, -1e+30
      %v762 = vsel %vm683, %v761, -inf
      %763 = vmax.xlane.f32.xlu0 %v762
      %v764 = vpop.xlane.xlu0 %763
      %v765 = vsub.f32 %v761, %v764
      %v766 = vmul.f32 %v765, 1.442695
      %v767 = vpow.pop %v766
      %v768 = vsel %vm683, %v767, 0.0
      %769 = vadd.xlane.f32.xlu0 %v768
      %v770 = vpop.xlane.xlu0 %769
      %v771 = vrcp.pop %v770
      %v772 = vmul.f32 %v767, %v771
      %v774 = vsel %vm683, %v772, 0
      %776 = vmatprep.subr.mxu0 0.0
      %777 = vmatpush1.msra.mxu0 %v680
      %778 = vmatprep.subr.mxu0 0.0
      %779 = vmatpush1.msra.mxu0 0.0
      %780 = vmatprep.subr.mxu0 0.0
      %781 = vmatpush1.msra.mxu0 0.0
      %782 = vmatprep.subr.mxu0 0.0
      %783 = vmatpush1.msra.mxu0 0.0
      %784 = vmatprep.subr.mxu0 0.0
      %785 = vmatpush1.msra.mxu0 0.0
      %786 = vmatprep.subr.mxu0 0.0
      %787 = vmatpush1.msra.mxu0 0.0
      %788 = vmatprep.subr.mxu0 0.0
      %789 = vmatpush1.msra.mxu0 0.0
      %790 = vmatprep.subr.mxu0 0.0
      %791 = vmatpush1.msra.mxu0 0.0
      %792 = vmatprep.subr.mxu0 0.0
      %793 = vmatpush1.msra.mxu0 0.0
      %794 = vmatprep.subr.mxu0 0.0
      %795 = vmatpush1.msra.mxu0 0.0
      %796 = vmatprep.subr.mxu0 0.0
      %797 = vmatpush1.msra.mxu0 0.0
      %798 = vmatprep.subr.mxu0 0.0
      %799 = vmatpush1.msra.mxu0 0.0
      %800 = vmatprep.subr.mxu0 0.0
      %801 = vmatpush1.msra.mxu0 0.0
      %802 = vmatprep.subr.mxu0 0.0
      %803 = vmatpush1.msra.mxu0 0.0
      %804 = vmatprep.subr.mxu0 0.0
      %805 = vmatpush1.msra.mxu0 0.0
      %806 = vmatprep.subr.mxu0 0.0
      %807 = vmatpush1.msra.mxu0 0.0
      %808 = vmatprep.subr.mxu0 0.0
      %809 = vmatpush1.msra.mxu0 0.0
      %810 = vmatprep.subr.mxu0 0.0
      %811 = vmatpush1.msra.mxu0 0.0
      %812 = vmatprep.subr.mxu0 0.0
      %813 = vmatpush1.msra.mxu0 0.0
      %814 = vmatprep.subr.mxu0 0.0
      %815 = vmatpush1.msra.mxu0 0.0
      %816 = vmatprep.subr.mxu0 0.0
      %817 = vmatpush1.msra.mxu0 0.0
      %818 = vmatprep.subr.mxu0 0.0
      %819 = vmatpush1.msra.mxu0 0.0
      %820 = vmatprep.subr.mxu0 0.0
      %821 = vmatpush1.msra.mxu0 0.0
      %822 = vmatprep.subr.mxu0 0.0
      %823 = vmatpush1.msra.mxu0 0.0
      %824 = vmatprep.subr.mxu0 0.0
      %825 = vmatpush1.msra.mxu0 0.0
      %826 = vmatprep.subr.mxu0 0.0
      %827 = vmatpush1.msra.mxu0 0.0
      %828 = vmatprep.subr.mxu0 0.0
      %829 = vmatpush1.msra.mxu0 0.0
      %830 = vmatprep.subr.mxu0 0.0
      %831 = vmatpush1.msra.mxu0 0.0
      %832 = vmatprep.subr.mxu0 0.0
      %833 = vmatpush1.msra.mxu0 0.0
      %834 = vmatprep.subr.mxu0 0.0
      %835 = vmatpush1.msra.mxu0 0.0
      %836 = vmatprep.subr.mxu0 0.0
      %837 = vmatpush1.msra.mxu0 0.0
      %838 = vmatprep.subr.mxu0 0.0
      %839 = vmatpush1.msra.mxu0 0.0
      %840 = vmatprep.mubr.f32.mxu0 0.0
      %841 = vmatmul.mubr.f32.gmra.mrb[0].mxu0 %v774
      %v842 = vpop.f32.mrb[0].mxu0
      %v843 = vadd.f32 0.0, %v842
      %v844 = vpop.f32.mrb[0].mxu0
      %845 = vdwg.mxu0
      %v846 = vld [vmem:[%s8] sm:$0xff]
      %s847 = scalar_lea.vmem %s2, 32
      %v848 = vld [vmem:[%s847] sm:$0xff]
      %v849 = vld [vmem:[%s847 + $0x8] sm:$0xff]
      %v850 = vld [vmem:[%s847 + $0x10] sm:$0xff]
      %v851 = vld [vmem:[%s847 + $0x18] sm:$0xff]
      %s852 = scalar_lea.vmem %s3, 1
      %v853 = vld [vmem:[%s852] sm:$0x1]
      %v855 = vlaneseq
      %v856 = vshrl.u32 %v855, 7
      %v857 = vsub.s32 0, %v856
      %v858 = vrot.slane %v853, %v857
      %860 = vmatprep.subr.mxu0 0.0
      %861 = vmatpush1.msra.mxu0 %v848
      %862 = vmatprep.subr.mxu0 0.0
      %863 = vmatpush1.msra.mxu0 %v849
      %864 = vmatprep.subr.mxu0 0.0
      %865 = vmatpush1.msra.mxu0 %v850
      %866 = vmatprep.subr.mxu0 0.0
      %867 = vmatpush1.msra.mxu0 %v851
      %868 = vmatprep.subr.mxu0 0.0
      %869 = vmatpush1.msra.mxu0 0.0
      %870 = vmatprep.subr.mxu0 0.0
      %871 = vmatpush1.msra.mxu0 0.0
      %872 = vmatprep.subr.mxu0 0.0
      %873 = vmatpush1.msra.mxu0 0.0
      %874 = vmatprep.subr.mxu0 0.0
      %875 = vmatpush1.msra.mxu0 0.0
      %876 = vmatprep.subr.mxu0 0.0
      %877 = vmatpush1.msra.mxu0 0.0
      %878 = vmatprep.subr.mxu0 0.0
      %879 = vmatpush1.msra.mxu0 0.0
      %880 = vmatprep.subr.mxu0 0.0
      %881 = vmatpush1.msra.mxu0 0.0
      %882 = vmatprep.subr.mxu0 0.0
      %883 = vmatpush1.msra.mxu0 0.0
      %884 = vmatprep.subr.mxu0 0.0
      %885 = vmatpush1.msra.mxu0 0.0
      %886 = vmatprep.subr.mxu0 0.0
      %887 = vmatpush1.msra.mxu0 0.0
      %888 = vmatprep.subr.mxu0 0.0
      %889 = vmatpush1.msra.mxu0 0.0
      %890 = vmatprep.subr.mxu0 0.0
      %891 = vmatpush1.msra.mxu0 0.0
      %892 = vmatprep.subr.mxu0 0.0
      %893 = vmatpush1.msra.mxu0 0.0
      %894 = vmatprep.subr.mxu0 0.0
      %895 = vmatpush1.msra.mxu0 0.0
      %896 = vmatprep.subr.mxu0 0.0
      %897 = vmatpush1.msra.mxu0 0.0
      %898 = vmatprep.subr.mxu0 0.0
      %899 = vmatpush1.msra.mxu0 0.0
      %900 = vmatprep.subr.mxu0 0.0
      %901 = vmatpush1.msra.mxu0 0.0
      %902 = vmatprep.subr.mxu0 0.0
      %903 = vmatpush1.msra.mxu0 0.0
      %904 = vmatprep.subr.mxu0 0.0
      %905 = vmatpush1.msra.mxu0 0.0
      %906 = vmatprep.subr.mxu0 0.0
      %907 = vmatpush1.msra.mxu0 0.0
      %908 = vmatprep.subr.mxu0 0.0
      %909 = vmatpush1.msra.mxu0 0.0
      %910 = vmatprep.subr.mxu0 0.0
      %911 = vmatpush1.msra.mxu0 0.0
      %912 = vmatprep.subr.mxu0 0.0
      %913 = vmatpush1.msra.mxu0 0.0
      %914 = vmatprep.subr.mxu0 0.0
      %915 = vmatpush1.msra.mxu0 0.0
      %916 = vmatprep.subr.mxu0 0.0
      %917 = vmatpush1.msra.mxu0 0.0
      %918 = vmatprep.subr.mxu0 0.0
      %919 = vmatpush1.msra.mxu0 0.0
      %920 = vmatprep.subr.mxu0 0.0
      %921 = vmatpush1.msra.mxu0 0.0
      %922 = vmatprep.subr.mxu0 0.0
      %923 = vmatpush1.msra.mxu0 0.0
      %924 = vmatprep.mubr.f32.mxu0 0.0
      %925 = vmatmul.mubr.f32.gmra.mrb[0].mxu0 %v446
      %v926 = vpop.f32.mrb[0].mxu0
      %v927 = vadd.f32 %v858, %v926
      %v928 = vpop.f32.mrb[0].mxu0
      %929 = vdwg.mxu0
      %s930 = scalar_lea.vmem %s4, 32
      %v931 = vld [vmem:[%s930] sm:$0xff]
      %v932 = vld [vmem:[%s930 + $0x8] sm:$0xff]
      %v933 = vld [vmem:[%s930 + $0x10] sm:$0xff]
      %v934 = vld [vmem:[%s930 + $0x18] sm:$0xff]
      %s935 = scalar_lea.vmem %s5, 1
      %v936 = vld [vmem:[%s935] sm:$0x1]
      %v938 = vlaneseq
      %v939 = vshrl.u32 %v938, 7
      %v940 = vsub.s32 0, %v939
      %v941 = vrot.slane %v936, %v940
      %943 = vmatprep.subr.mxu0 0.0
      %944 = vmatpush1.msra.mxu0 %v931
      %945 = vmatprep.subr.mxu0 0.0
      %946 = vmatpush1.msra.mxu0 %v932
      %947 = vmatprep.subr.mxu0 0.0
      %948 = vmatpush1.msra.mxu0 %v933
      %949 = vmatprep.subr.mxu0 0.0
      %950 = vmatpush1.msra.mxu0 %v934
      %951 = vmatprep.subr.mxu0 0.0
      %952 = vmatpush1.msra.mxu0 0.0
      %953 = vmatprep.subr.mxu0 0.0
      %954 = vmatpush1.msra.mxu0 0.0
      %955 = vmatprep.subr.mxu0 0.0
      %956 = vmatpush1.msra.mxu0 0.0
      %957 = vmatprep.subr.mxu0 0.0
      %958 = vmatpush1.msra.mxu0 0.0
      %959 = vmatprep.subr.mxu0 0.0
      %960 = vmatpush1.msra.mxu0 0.0
      %961 = vmatprep.subr.mxu0 0.0
      %962 = vmatpush1.msra.mxu0 0.0
      %963 = vmatprep.subr.mxu0 0.0
      %964 = vmatpush1.msra.mxu0 0.0
      %965 = vmatprep.subr.mxu0 0.0
      %966 = vmatpush1.msra.mxu0 0.0
      %967 = vmatprep.subr.mxu0 0.0
      %968 = vmatpush1.msra.mxu0 0.0
      %969 = vmatprep.subr.mxu0 0.0
      %970 = vmatpush1.msra.mxu0 0.0
      %971 = vmatprep.subr.mxu0 0.0
      %972 = vmatpush1.msra.mxu0 0.0
      %973 = vmatprep.subr.mxu0 0.0
      %974 = vmatpush1.msra.mxu0 0.0
      %975 = vmatprep.subr.mxu0 0.0
      %976 = vmatpush1.msra.mxu0 0.0
      %977 = vmatprep.subr.mxu0 0.0
      %978 = vmatpush1.msra.mxu0 0.0
      %979 = vmatprep.subr.mxu0 0.0
      %980 = vmatpush1.msra.mxu0 0.0
      %981 = vmatprep.subr.mxu0 0.0
      %982 = vmatpush1.msra.mxu0 0.0
      %983 = vmatprep.subr.mxu0 0.0
      %984 = vmatpush1.msra.mxu0 0.0
      %985 = vmatprep.subr.mxu0 0.0
      %986 = vmatpush1.msra.mxu0 0.0
      %987 = vmatprep.subr.mxu0 0.0
      %988 = vmatpush1.msra.mxu0 0.0
      %989 = vmatprep.subr.mxu0 0.0
      %990 = vmatpush1.msra.mxu0 0.0
      %991 = vmatprep.subr.mxu0 0.0
      %992 = vmatpush1.msra.mxu0 0.0
      %993 = vmatprep.subr.mxu0 0.0
      %994 = vmatpush1.msra.mxu0 0.0
      %995 = vmatprep.subr.mxu0 0.0
      %996 = vmatpush1.msra.mxu0 0.0
      %997 = vmatprep.subr.mxu0 0.0
      %998 = vmatpush1.msra.mxu0 0.0
      %999 = vmatprep.subr.mxu0 0.0
      %1000 = vmatpush1.msra.mxu0 0.0
      %1001 = vmatprep.subr.mxu0 0.0
      %1002 = vmatpush1.msra.mxu0 0.0
      %1003 = vmatprep.subr.mxu0 0.0
      %1004 = vmatpush1.msra.mxu0 0.0
      %1005 = vmatprep.subr.mxu0 0.0
      %1006 = vmatpush1.msra.mxu0 0.0
      %1007 = vmatprep.mubr.f32.mxu0 0.0
      %1008 = vmatmul.mubr.f32.gmra.mrb[0].mxu0 %v530
      %v1009 = vpop.f32.mrb[0].mxu0
      %v1010 = vadd.f32 %v941, %v1009
      %v1011 = vpop.f32.mrb[0].mxu0
      %1012 = vdwg.mxu0
      %s1013 = scalar_lea.vmem %s6, 32
      %v1014 = vld [vmem:[%s1013] sm:$0xff]
      %v1015 = vld [vmem:[%s1013 + $0x8] sm:$0xff]
      %v1016 = vld [vmem:[%s1013 + $0x10] sm:$0xff]
      %v1017 = vld [vmem:[%s1013 + $0x18] sm:$0xff]
      %s1018 = scalar_lea.vmem %s7, 1
      %v1019 = vld [vmem:[%s1018] sm:$0x1]
      %v1021 = vlaneseq
      %v1022 = vshrl.u32 %v1021, 7
      %v1023 = vsub.s32 0, %v1022
      %v1024 = vrot.slane %v1019, %v1023
      %1026 = vmatprep.subr.mxu0 0.0
      %1027 = vmatpush1.msra.mxu0 %v1014
      %1028 = vmatprep.subr.mxu0 0.0
      %1029 = vmatpush1.msra.mxu0 %v1015
      %1030 = vmatprep.subr.mxu0 0.0
      %1031 = vmatpush1.msra.mxu0 %v1016
      %1032 = vmatprep.subr.mxu0 0.0
      %1033 = vmatpush1.msra.mxu0 %v1017
      %1034 = vmatprep.subr.mxu0 0.0
      %1035 = vmatpush1.msra.mxu0 0.0
      %1036 = vmatprep.subr.mxu0 0.0
      %1037 = vmatpush1.msra.mxu0 0.0
      %1038 = vmatprep.subr.mxu0 0.0
      %1039 = vmatpush1.msra.mxu0 0.0
      %1040 = vmatprep.subr.mxu0 0.0
      %1041 = vmatpush1.msra.mxu0 0.0
      %1042 = vmatprep.subr.mxu0 0.0
      %1043 = vmatpush1.msra.mxu0 0.0
      %1044 = vmatprep.subr.mxu0 0.0
      %1045 = vmatpush1.msra.mxu0 0.0
      %1046 = vmatprep.subr.mxu0 0.0
      %1047 = vmatpush1.msra.mxu0 0.0
      %1048 = vmatprep.subr.mxu0 0.0
      %1049 = vmatpush1.msra.mxu0 0.0
      %1050 = vmatprep.subr.mxu0 0.0
      %1051 = vmatpush1.msra.mxu0 0.0
      %1052 = vmatprep.subr.mxu0 0.0
      %1053 = vmatpush1.msra.mxu0 0.0
      %1054 = vmatprep.subr.mxu0 0.0
      %1055 = vmatpush1.msra.mxu0 0.0
      %1056 = vmatprep.subr.mxu0 0.0
      %1057 = vmatpush1.msra.mxu0 0.0
      %1058 = vmatprep.subr.mxu0 0.0
      %1059 = vmatpush1.msra.mxu0 0.0
      %1060 = vmatprep.subr.mxu0 0.0
      %1061 = vmatpush1.msra.mxu0 0.0
      %1062 = vmatprep.subr.mxu0 0.0
      %1063 = vmatpush1.msra.mxu0 0.0
      %1064 = vmatprep.subr.mxu0 0.0
      %1065 = vmatpush1.msra.mxu0 0.0
      %1066 = vmatprep.subr.mxu0 0.0
      %1067 = vmatpush1.msra.mxu0 0.0
      %1068 = vmatprep.subr.mxu0 0.0
      %1069 = vmatpush1.msra.mxu0 0.0
      %1070 = vmatprep.subr.mxu0 0.0
      %1071 = vmatpush1.msra.mxu0 0.0
      %1072 = vmatprep.subr.mxu0 0.0
      %1073 = vmatpush1.msra.mxu0 0.0
      %1074 = vmatprep.subr.mxu0 0.0
      %1075 = vmatpush1.msra.mxu0 0.0
      %1076 = vmatprep.subr.mxu0 0.0
      %1077 = vmatpush1.msra.mxu0 0.0
      %1078 = vmatprep.subr.mxu0 0.0
      %1079 = vmatpush1.msra.mxu0 0.0
      %1080 = vmatprep.subr.mxu0 0.0
      %1081 = vmatpush1.msra.mxu0 0.0
      %1082 = vmatprep.subr.mxu0 0.0
      %1083 = vmatpush1.msra.mxu0 0.0
      %1084 = vmatprep.subr.mxu0 0.0
      %1085 = vmatpush1.msra.mxu0 0.0
      %1086 = vmatprep.subr.mxu0 0.0
      %1087 = vmatpush1.msra.mxu0 0.0
      %1088 = vmatprep.subr.mxu0 0.0
      %1089 = vmatpush1.msra.mxu0 0.0
      %1090 = vmatprep.mubr.f32.mxu0 0.0
      %1091 = vmatmul.mubr.f32.gmra.mrb[0].mxu0 %v530
      %v1092 = vpop.f32.mrb[0].mxu0
      %v1093 = vadd.f32 %v1024, %v1092
      %v1094 = vpop.f32.mrb[0].mxu0
      %1095 = vdwg.mxu0
      %v1097 = vsel %vm683, %v927, 0
      %v1100 = vsel %vm683, %v1010, 0
      %1102 = vmatprep.subr.mxu0 0.0
      %1103 = vmatpush1.xpose.msra.mxu0 %v1100
      %1104 = vmatprep.subr.mxu0 0.0
      %1105 = vmatpush1.xpose.msra.mxu0 0.0
      %1106 = vmatprep.subr.mxu0 0.0
      %1107 = vmatpush1.xpose.msra.mxu0 0.0
      %1108 = vmatprep.subr.mxu0 0.0
      %1109 = vmatpush1.xpose.msra.mxu0 0.0
      %1110 = vmatprep.subr.mxu0 0.0
      %1111 = vmatpush1.xpose.msra.mxu0 0.0
      %1112 = vmatprep.subr.mxu0 0.0
      %1113 = vmatpush1.xpose.msra.mxu0 0.0
      %1114 = vmatprep.subr.mxu0 0.0
      %1115 = vmatpush1.xpose.msra.mxu0 0.0
      %1116 = vmatprep.subr.mxu0 0.0
      %1117 = vmatpush1.xpose.msra.mxu0 0.0
      %1118 = vmatprep.subr.mxu0 0.0
      %1119 = vmatpush1.xpose.msra.mxu0 0.0
      %1120 = vmatprep.subr.mxu0 0.0
      %1121 = vmatpush1.xpose.msra.mxu0 0.0
      %1122 = vmatprep.subr.mxu0 0.0
      %1123 = vmatpush1.xpose.msra.mxu0 0.0
      %1124 = vmatprep.subr.mxu0 0.0
      %1125 = vmatpush1.xpose.msra.mxu0 0.0
      %1126 = vmatprep.subr.mxu0 0.0
      %1127 = vmatpush1.xpose.msra.mxu0 0.0
      %1128 = vmatprep.subr.mxu0 0.0
      %1129 = vmatpush1.xpose.msra.mxu0 0.0
      %1130 = vmatprep.subr.mxu0 0.0
      %1131 = vmatpush1.xpose.msra.mxu0 0.0
      %1132 = vmatprep.subr.mxu0 0.0
      %1133 = vmatpush1.xpose.msra.mxu0 0.0
      %1134 = vmatprep.subr.mxu0 0.0
      %1135 = vmatpush1.xpose.msra.mxu0 0.0
      %1136 = vmatprep.subr.mxu0 0.0
      %1137 = vmatpush1.xpose.msra.mxu0 0.0
      %1138 = vmatprep.subr.mxu0 0.0
      %1139 = vmatpush1.xpose.msra.mxu0 0.0
      %1140 = vmatprep.subr.mxu0 0.0
      %1141 = vmatpush1.xpose.msra.mxu0 0.0
      %1142 = vmatprep.subr.mxu0 0.0
      %1143 = vmatpush1.xpose.msra.mxu0 0.0
      %1144 = vmatprep.subr.mxu0 0.0
      %1145 = vmatpush1.xpose.msra.mxu0 0.0
      %1146 = vmatprep.subr.mxu0 0.0
      %1147 = vmatpush1.xpose.msra.mxu0 0.0
      %1148 = vmatprep.subr.mxu0 0.0
      %1149 = vmatpush1.xpose.msra.mxu0 0.0
      %1150 = vmatprep.subr.mxu0 0.0
      %1151 = vmatpush1.xpose.msra.mxu0 0.0
      %1152 = vmatprep.subr.mxu0 0.0
      %1153 = vmatpush1.xpose.msra.mxu0 0.0
      %1154 = vmatprep.subr.mxu0 0.0
      %1155 = vmatpush1.xpose.msra.mxu0 0.0
      %1156 = vmatprep.subr.mxu0 0.0
      %1157 = vmatpush1.xpose.msra.mxu0 0.0
      %1158 = vmatprep.subr.mxu0 0.0
      %1159 = vmatpush1.xpose.msra.mxu0 0.0
      %1160 = vmatprep.subr.mxu0 0.0
      %1161 = vmatpush1.xpose.msra.mxu0 0.0
      %1162 = vmatprep.subr.mxu0 0.0
      %1163 = vmatpush1.xpose.msra.mxu0 0.0
      %1164 = vmatprep.subr.mxu0 0.0
      %1165 = vmatpush1.xpose.msra.mxu0 0.0
      %1166 = vmatprep.mubr.f32.mxu0 0.0
      %1167 = vmatmul.mubr.f32.gmra.mrb[0].mxu0 %v1097
      %v1168 = vpop.f32.mrb[0].mxu0
      %v1169 = vadd.f32 0.0, %v1168
      %v1170 = vpop.f32.mrb[0].mxu0
      %1171 = vdwg.mxu0
      %v1172 = vmul.f32 %v1169, 0.35355338
      %v1173 = vsel %vm432, %v1172, -1e+30
      %v1174 = vsel %vm683, %v1173, -inf
      %1175 = vmax.xlane.f32.xlu0 %v1174
      %v1176 = vpop.xlane.xlu0 %1175
      %v1177 = vsub.f32 %v1173, %v1176
      %v1178 = vmul.f32 %v1177, 1.442695
      %v1179 = vpow.pop %v1178
      %v1180 = vsel %vm683, %v1179, 0.0
      %1181 = vadd.xlane.f32.xlu0 %v1180
      %v1182 = vpop.xlane.xlu0 %1181
      %v1183 = vrcp.pop %v1182
      %v1184 = vmul.f32 %v1179, %v1183
      %v1186 = vsel %vm683, %v1184, 0
      %1188 = vmatprep.subr.mxu0 0.0
      %1189 = vmatpush1.msra.mxu0 %v1093
      %1190 = vmatprep.subr.mxu0 0.0
      %1191 = vmatpush1.msra.mxu0 0.0
      %1192 = vmatprep.subr.mxu0 0.0
      %1193 = vmatpush1.msra.mxu0 0.0
      %1194 = vmatprep.subr.mxu0 0.0
      %1195 = vmatpush1.msra.mxu0 0.0
      %1196 = vmatprep.subr.mxu0 0.0
      %1197 = vmatpush1.msra.mxu0 0.0
      %1198 = vmatprep.subr.mxu0 0.0
      %1199 = vmatpush1.msra.mxu0 0.0
      %1200 = vmatprep.subr.mxu0 0.0
      %1201 = vmatpush1.msra.mxu0 0.0
      %1202 = vmatprep.subr.mxu0 0.0
      %1203 = vmatpush1.msra.mxu0 0.0
      %1204 = vmatprep.subr.mxu0 0.0
      %1205 = vmatpush1.msra.mxu0 0.0
      %1206 = vmatprep.subr.mxu0 0.0
      %1207 = vmatpush1.msra.mxu0 0.0
      %1208 = vmatprep.subr.mxu0 0.0
      %1209 = vmatpush1.msra.mxu0 0.0
      %1210 = vmatprep.subr.mxu0 0.0
      %1211 = vmatpush1.msra.mxu0 0.0
      %1212 = vmatprep.subr.mxu0 0.0
      %1213 = vmatpush1.msra.mxu0 0.0
      %1214 = vmatprep.subr.mxu0 0.0
      %1215 = vmatpush1.msra.mxu0 0.0
      %1216 = vmatprep.subr.mxu0 0.0
      %1217 = vmatpush1.msra.mxu0 0.0
      %1218 = vmatprep.subr.mxu0 0.0
      %1219 = vmatpush1.msra.mxu0 0.0
      %1220 = vmatprep.subr.mxu0 0.0
      %1221 = vmatpush1.msra.mxu0 0.0
      %1222 = vmatprep.subr.mxu0 0.0
      %1223 = vmatpush1.msra.mxu0 0.0
      %1224 = vmatprep.subr.mxu0 0.0
      %1225 = vmatpush1.msra.mxu0 0.0
      %1226 = vmatprep.subr.mxu0 0.0
      %1227 = vmatpush1.msra.mxu0 0.0
      %1228 = vmatprep.subr.mxu0 0.0
      %1229 = vmatpush1.msra.mxu0 0.0
      %1230 = vmatprep.subr.mxu0 0.0
      %1231 = vmatpush1.msra.mxu0 0.0
      %1232 = vmatprep.subr.mxu0 0.0
      %1233 = vmatpush1.msra.mxu0 0.0
      %1234 = vmatprep.subr.mxu0 0.0
      %1235 = vmatpush1.msra.mxu0 0.0
      %1236 = vmatprep.subr.mxu0 0.0
      %1237 = vmatpush1.msra.mxu0 0.0
      %1238 = vmatprep.subr.mxu0 0.0
      %1239 = vmatpush1.msra.mxu0 0.0
      %1240 = vmatprep.subr.mxu0 0.0
      %1241 = vmatpush1.msra.mxu0 0.0
      %1242 = vmatprep.subr.mxu0 0.0
      %1243 = vmatpush1.msra.mxu0 0.0
      %1244 = vmatprep.subr.mxu0 0.0
      %1245 = vmatpush1.msra.mxu0 0.0
      %1246 = vmatprep.subr.mxu0 0.0
      %1247 = vmatpush1.msra.mxu0 0.0
      %1248 = vmatprep.subr.mxu0 0.0
      %1249 = vmatpush1.msra.mxu0 0.0
      %1250 = vmatprep.subr.mxu0 0.0
      %1251 = vmatpush1.msra.mxu0 0.0
      %1252 = vmatprep.mubr.f32.mxu0 0.0
      %1253 = vmatmul.mubr.f32.gmra.mrb[0].mxu0 %v1186
      %v1254 = vpop.f32.mrb[0].mxu0
      %v1255 = vadd.f32 0.0, %v1254
      %v1256 = vpop.f32.mrb[0].mxu0
      %1257 = vdwg.mxu0
      %s1258 = scalar_lea.vmem %s8, 8
      %v1259 = vld [vmem:[%s1258] sm:$0xff]
      %v1261 = vsel %vm683, %v1255, 0
      %1263 = vmatprep.subr.mxu0 0.0
      %1264 = vmatpush1.msra.mxu0 %v1259
      %1265 = vmatprep.subr.mxu0 0.0
      %1266 = vmatpush1.msra.mxu0 0.0
      %1267 = vmatprep.subr.mxu0 0.0
      %1268 = vmatpush1.msra.mxu0 0.0
      %1269 = vmatprep.subr.mxu0 0.0
      %1270 = vmatpush1.msra.mxu0 0.0
      %1271 = vmatprep.subr.mxu0 0.0
      %1272 = vmatpush1.msra.mxu0 0.0
      %1273 = vmatprep.subr.mxu0 0.0
      %1274 = vmatpush1.msra.mxu0 0.0
      %1275 = vmatprep.subr.mxu0 0.0
      %1276 = vmatpush1.msra.mxu0 0.0
      %1277 = vmatprep.subr.mxu0 0.0
      %1278 = vmatpush1.msra.mxu0 0.0
      %1279 = vmatprep.subr.mxu0 0.0
      %1280 = vmatpush1.msra.mxu0 0.0
      %1281 = vmatprep.subr.mxu0 0.0
      %1282 = vmatpush1.msra.mxu0 0.0
      %1283 = vmatprep.subr.mxu0 0.0
      %1284 = vmatpush1.msra.mxu0 0.0
      %1285 = vmatprep.subr.mxu0 0.0
      %1286 = vmatpush1.msra.mxu0 0.0
      %1287 = vmatprep.subr.mxu0 0.0
      %1288 = vmatpush1.msra.mxu0 0.0
      %1289 = vmatprep.subr.mxu0 0.0
      %1290 = vmatpush1.msra.mxu0 0.0
      %1291 = vmatprep.subr.mxu0 0.0
      %1292 = vmatpush1.msra.mxu0 0.0
      %1293 = vmatprep.subr.mxu0 0.0
      %1294 = vmatpush1.msra.mxu0 0.0
      %1295 = vmatprep.subr.mxu0 0.0
      %1296 = vmatpush1.msra.mxu0 0.0
      %1297 = vmatprep.subr.mxu0 0.0
      %1298 = vmatpush1.msra.mxu0 0.0
      %1299 = vmatprep.subr.mxu0 0.0
      %1300 = vmatpush1.msra.mxu0 0.0
      %1301 = vmatprep.subr.mxu0 0.0
      %1302 = vmatpush1.msra.mxu0 0.0
      %1303 = vmatprep.subr.mxu0 0.0
      %1304 = vmatpush1.msra.mxu0 0.0
      %1305 = vmatprep.subr.mxu0 0.0
      %1306 = vmatpush1.msra.mxu0 0.0
      %1307 = vmatprep.subr.mxu0 0.0
      %1308 = vmatpush1.msra.mxu0 0.0
      %1309 = vmatprep.subr.mxu0 0.0
      %1310 = vmatpush1.msra.mxu0 0.0
      %1311 = vmatprep.subr.mxu0 0.0
      %1312 = vmatpush1.msra.mxu0 0.0
      %1313 = vmatprep.subr.mxu0 0.0
      %1314 = vmatpush1.msra.mxu0 0.0
      %1315 = vmatprep.subr.mxu0 0.0
      %1316 = vmatpush1.msra.mxu0 0.0
      %1317 = vmatprep.subr.mxu0 0.0
      %1318 = vmatpush1.msra.mxu0 0.0
      %1319 = vmatprep.subr.mxu0 0.0
      %1320 = vmatpush1.msra.mxu0 0.0
      %1321 = vmatprep.subr.mxu0 0.0
      %1322 = vmatpush1.msra.mxu0 0.0
      %1323 = vmatprep.subr.mxu0 0.0
      %1324 = vmatpush1.msra.mxu0 0.0
      %1325 = vmatprep.subr.mxu0 0.0
      %1326 = vmatpush1.msra.mxu0 0.0
      %1327 = vmatprep.mubr.f32.mxu0 0.0
      %1328 = vmatmul.mubr.f32.gmra.mrb[0].mxu0 %v1261
      %v1329 = vpop.f32.mrb[0].mxu0
      %v1330 = vadd.f32 0.0, %v1329
      %v1331 = vpop.f32.mrb[0].mxu0
      %1332 = vdwg.mxu0
      %v1334 = vsel %vm683, %v843, 0
      %1336 = vmatprep.subr.mxu0 0.0
      %1337 = vmatpush1.msra.mxu0 %v846
      %1338 = vmatprep.subr.mxu0 0.0
      %1339 = vmatpush1.msra.mxu0 0.0
      %1340 = vmatprep.subr.mxu0 0.0
      %1341 = vmatpush1.msra.mxu0 0.0
      %1342 = vmatprep.subr.mxu0 0.0
      %1343 = vmatpush1.msra.mxu0 0.0
      %1344 = vmatprep.subr.mxu0 0.0
      %1345 = vmatpush1.msra.mxu0 0.0
      %1346 = vmatprep.subr.mxu0 0.0
      %1347 = vmatpush1.msra.mxu0 0.0
      %1348 = vmatprep.subr.mxu0 0.0
      %1349 = vmatpush1.msra.mxu0 0.0
      %1350 = vmatprep.subr.mxu0 0.0
      %1351 = vmatpush1.msra.mxu0 0.0
      %1352 = vmatprep.subr.mxu0 0.0
      %1353 = vmatpush1.msra.mxu0 0.0
      %1354 = vmatprep.subr.mxu0 0.0
      %1355 = vmatpush1.msra.mxu0 0.0
      %1356 = vmatprep.subr.mxu0 0.0
      %1357 = vmatpush1.msra.mxu0 0.0
      %1358 = vmatprep.subr.mxu0 0.0
      %1359 = vmatpush1.msra.mxu0 0.0
      %1360 = vmatprep.subr.mxu0 0.0
      %1361 = vmatpush1.msra.mxu0 0.0
      %1362 = vmatprep.subr.mxu0 0.0
      %1363 = vmatpush1.msra.mxu0 0.0
      %1364 = vmatprep.subr.mxu0 0.0
      %1365 = vmatpush1.msra.mxu0 0.0
      %1366 = vmatprep.subr.mxu0 0.0
      %1367 = vmatpush1.msra.mxu0 0.0
      %1368 = vmatprep.subr.mxu0 0.0
      %1369 = vmatpush1.msra.mxu0 0.0
      %1370 = vmatprep.subr.mxu0 0.0
      %1371 = vmatpush1.msra.mxu0 0.0
      %1372 = vmatprep.subr.mxu0 0.0
      %1373 = vmatpush1.msra.mxu0 0.0
      %1374 = vmatprep.subr.mxu0 0.0
      %1375 = vmatpush1.msra.mxu0 0.0
      %1376 = vmatprep.subr.mxu0 0.0
      %1377 = vmatpush1.msra.mxu0 0.0
      %1378 = vmatprep.subr.mxu0 0.0
      %1379 = vmatpush1.msra.mxu0 0.0
      %1380 = vmatprep.subr.mxu0 0.0
      %1381 = vmatpush1.msra.mxu0 0.0
      %1382 = vmatprep.subr.mxu0 0.0
      %1383 = vmatpush1.msra.mxu0 0.0
      %1384 = vmatprep.subr.mxu0 0.0
      %1385 = vmatpush1.msra.mxu0 0.0
      %1386 = vmatprep.subr.mxu0 0.0
      %1387 = vmatpush1.msra.mxu0 0.0
      %1388 = vmatprep.subr.mxu0 0.0
      %1389 = vmatpush1.msra.mxu0 0.0
      %1390 = vmatprep.subr.mxu0 0.0
      %1391 = vmatpush1.msra.mxu0 0.0
      %1392 = vmatprep.subr.mxu0 0.0
      %1393 = vmatpush1.msra.mxu0 0.0
      %1394 = vmatprep.subr.mxu0 0.0
      %1395 = vmatpush1.msra.mxu0 0.0
      %1396 = vmatprep.subr.mxu0 0.0
      %1397 = vmatpush1.msra.mxu0 0.0
      %1398 = vmatprep.subr.mxu0 0.0
      %1399 = vmatpush1.msra.mxu0 0.0
      %1400 = vmatprep.mubr.f32.mxu0 0.0
      %1401 = vmatmul.mubr.f32.gmra.mrb[0].mxu0 %v1334
      %v1402 = vpop.f32.mrb[0].mxu0
      %v1403 = vadd.f32 %v1330, %v1402
      %v1404 = vpop.f32.mrb[0].mxu0
      %1405 = vdwg.mxu0
      %s1406 = scalar_lea.vmem %s2, 64
      %v1407 = vld [vmem:[%s1406] sm:$0xff]
      %v1408 = vld [vmem:[%s1406 + $0x8] sm:$0xff]
      %v1409 = vld [vmem:[%s1406 + $0x10] sm:$0xff]
      %v1410 = vld [vmem:[%s1406 + $0x18] sm:$0xff]
      %s1411 = scalar_lea.vmem %s3, 2
      %v1412 = vld [vmem:[%s1411] sm:$0x1]
      %v1414 = vlaneseq
      %v1415 = vshrl.u32 %v1414, 7
      %v1416 = vsub.s32 0, %v1415
      %v1417 = vrot.slane %v1412, %v1416
      %1419 = vmatprep.subr.mxu0 0.0
      %1420 = vmatpush1.msra.mxu0 %v1407
      %1421 = vmatprep.subr.mxu0 0.0
      %1422 = vmatpush1.msra.mxu0 %v1408
      %1423 = vmatprep.subr.mxu0 0.0
      %1424 = vmatpush1.msra.mxu0 %v1409
      %1425 = vmatprep.subr.mxu0 0.0
      %1426 = vmatpush1.msra.mxu0 %v1410
      %1427 = vmatprep.subr.mxu0 0.0
      %1428 = vmatpush1.msra.mxu0 0.0
      %1429 = vmatprep.subr.mxu0 0.0
      %1430 = vmatpush1.msra.mxu0 0.0
      %1431 = vmatprep.subr.mxu0 0.0
      %1432 = vmatpush1.msra.mxu0 0.0
      %1433 = vmatprep.subr.mxu0 0.0
      %1434 = vmatpush1.msra.mxu0 0.0
      %1435 = vmatprep.subr.mxu0 0.0
      %1436 = vmatpush1.msra.mxu0 0.0
      %1437 = vmatprep.subr.mxu0 0.0
      %1438 = vmatpush1.msra.mxu0 0.0
      %1439 = vmatprep.subr.mxu0 0.0
      %1440 = vmatpush1.msra.mxu0 0.0
      %1441 = vmatprep.subr.mxu0 0.0
      %1442 = vmatpush1.msra.mxu0 0.0
      %1443 = vmatprep.subr.mxu0 0.0
      %1444 = vmatpush1.msra.mxu0 0.0
      %1445 = vmatprep.subr.mxu0 0.0
      %1446 = vmatpush1.msra.mxu0 0.0
      %1447 = vmatprep.subr.mxu0 0.0
      %1448 = vmatpush1.msra.mxu0 0.0
      %1449 = vmatprep.subr.mxu0 0.0
      %1450 = vmatpush1.msra.mxu0 0.0
      %1451 = vmatprep.subr.mxu0 0.0
      %1452 = vmatpush1.msra.mxu0 0.0
      %1453 = vmatprep.subr.mxu0 0.0
      %1454 = vmatpush1.msra.mxu0 0.0
      %1455 = vmatprep.subr.mxu0 0.0
      %1456 = vmatpush1.msra.mxu0 0.0
      %1457 = vmatprep.subr.mxu0 0.0
      %1458 = vmatpush1.msra.mxu0 0.0
      %1459 = vmatprep.subr.mxu0 0.0
      %1460 = vmatpush1.msra.mxu0 0.0
      %1461 = vmatprep.subr.mxu0 0.0
      %1462 = vmatpush1.msra.mxu0 0.0
      %1463 = vmatprep.subr.mxu0 0.0
      %1464 = vmatpush1.msra.mxu0 0.0
      %1465 = vmatprep.subr.mxu0 0.0
      %1466 = vmatpush1.msra.mxu0 0.0
      %1467 = vmatprep.subr.mxu0 0.0
      %1468 = vmatpush1.msra.mxu0 0.0
      %1469 = vmatprep.subr.mxu0 0.0
      %1470 = vmatpush1.msra.mxu0 0.0
      %1471 = vmatprep.subr.mxu0 0.0
      %1472 = vmatpush1.msra.mxu0 0.0
      %1473 = vmatprep.subr.mxu0 0.0
      %1474 = vmatpush1.msra.mxu0 0.0
      %1475 = vmatprep.subr.mxu0 0.0
      %1476 = vmatpush1.msra.mxu0 0.0
      %1477 = vmatprep.subr.mxu0 0.0
      %1478 = vmatpush1.msra.mxu0 0.0
      %1479 = vmatprep.subr.mxu0 0.0
      %1480 = vmatpush1.msra.mxu0 0.0
      %1481 = vmatprep.subr.mxu0 0.0
      %1482 = vmatpush1.msra.mxu0 0.0
      %1483 = vmatprep.mubr.f32.mxu0 0.0
      %1484 = vmatmul.mubr.f32.gmra.mrb[0].mxu0 %v446
      %v1485 = vpop.f32.mrb[0].mxu0
      %v1486 = vadd.f32 %v1417, %v1485
      %v1487 = vpop.f32.mrb[0].mxu0
      %1488 = vdwg.mxu0
      %s1489 = scalar_lea.vmem %s4, 64
      %v1490 = vld [vmem:[%s1489] sm:$0xff]
      %v1491 = vld [vmem:[%s1489 + $0x8] sm:$0xff]
      %v1492 = vld [vmem:[%s1489 + $0x10] sm:$0xff]
      %v1493 = vld [vmem:[%s1489 + $0x18] sm:$0xff]
      %s1494 = scalar_lea.vmem %s5, 2
      %v1495 = vld [vmem:[%s1494] sm:$0x1]
      %v1497 = vlaneseq
      %v1498 = vshrl.u32 %v1497, 7
      %v1499 = vsub.s32 0, %v1498
      %v1500 = vrot.slane %v1495, %v1499
      %1502 = vmatprep.subr.mxu0 0.0
      %1503 = vmatpush1.msra.mxu0 %v1490
      %1504 = vmatprep.subr.mxu0 0.0
      %1505 = vmatpush1.msra.mxu0 %v1491
      %1506 = vmatprep.subr.mxu0 0.0
      %1507 = vmatpush1.msra.mxu0 %v1492
      %1508 = vmatprep.subr.mxu0 0.0
      %1509 = vmatpush1.msra.mxu0 %v1493
      %1510 = vmatprep.subr.mxu0 0.0
      %1511 = vmatpush1.msra.mxu0 0.0
      %1512 = vmatprep.subr.mxu0 0.0
      %1513 = vmatpush1.msra.mxu0 0.0
      %1514 = vmatprep.subr.mxu0 0.0
      %1515 = vmatpush1.msra.mxu0 0.0
      %1516 = vmatprep.subr.mxu0 0.0
      %1517 = vmatpush1.msra.mxu0 0.0
      %1518 = vmatprep.subr.mxu0 0.0
      %1519 = vmatpush1.msra.mxu0 0.0
      %1520 = vmatprep.subr.mxu0 0.0
      %1521 = vmatpush1.msra.mxu0 0.0
      %1522 = vmatprep.subr.mxu0 0.0
      %1523 = vmatpush1.msra.mxu0 0.0
      %1524 = vmatprep.subr.mxu0 0.0
      %1525 = vmatpush1.msra.mxu0 0.0
      %1526 = vmatprep.subr.mxu0 0.0
      %1527 = vmatpush1.msra.mxu0 0.0
      %1528 = vmatprep.subr.mxu0 0.0
      %1529 = vmatpush1.msra.mxu0 0.0
      %1530 = vmatprep.subr.mxu0 0.0
      %1531 = vmatpush1.msra.mxu0 0.0
      %1532 = vmatprep.subr.mxu0 0.0
      %1533 = vmatpush1.msra.mxu0 0.0
      %1534 = vmatprep.subr.mxu0 0.0
      %1535 = vmatpush1.msra.mxu0 0.0
      %1536 = vmatprep.subr.mxu0 0.0
      %1537 = vmatpush1.msra.mxu0 0.0
      %1538 = vmatprep.subr.mxu0 0.0
      %1539 = vmatpush1.msra.mxu0 0.0
      %1540 = vmatprep.subr.mxu0 0.0
      %1541 = vmatpush1.msra.mxu0 0.0
      %1542 = vmatprep.subr.mxu0 0.0
      %1543 = vmatpush1.msra.mxu0 0.0
      %1544 = vmatprep.subr.mxu0 0.0
      %1545 = vmatpush1.msra.mxu0 0.0
      %1546 = vmatprep.subr.mxu0 0.0
      %1547 = vmatpush1.msra.mxu0 0.0
      %1548 = vmatprep.subr.mxu0 0.0
      %1549 = vmatpush1.msra.mxu0 0.0
      %1550 = vmatprep.subr.mxu0 0.0
      %1551 = vmatpush1.msra.mxu0 0.0
      %1552 = vmatprep.subr.mxu0 0.0
      %1553 = vmatpush1.msra.mxu0 0.0
      %1554 = vmatprep.subr.mxu0 0.0
      %1555 = vmatpush1.msra.mxu0 0.0
      %1556 = vmatprep.subr.mxu0 0.0
      %1557 = vmatpush1.msra.mxu0 0.0
      %1558 = vmatprep.subr.mxu0 0.0
      %1559 = vmatpush1.msra.mxu0 0.0
      %1560 = vmatprep.subr.mxu0 0.0
      %1561 = vmatpush1.msra.mxu0 0.0
      %1562 = vmatprep.subr.mxu0 0.0
      %1563 = vmatpush1.msra.mxu0 0.0
      %1564 = vmatprep.subr.mxu0 0.0
      %1565 = vmatpush1.msra.mxu0 0.0
      %1566 = vmatprep.mubr.f32.mxu0 0.0
      %1567 = vmatmul.mubr.f32.gmra.mrb[0].mxu0 %v530
      %v1568 = vpop.f32.mrb[0].mxu0
      %v1569 = vadd.f32 %v1500, %v1568
      %v1570 = vpop.f32.mrb[0].mxu0
      %1571 = vdwg.mxu0
      %s1572 = scalar_lea.vmem %s6, 64
      %v1573 = vld [vmem:[%s1572] sm:$0xff]
      %v1574 = vld [vmem:[%s1572 + $0x8] sm:$0xff]
      %v1575 = vld [vmem:[%s1572 + $0x10] sm:$0xff]
      %v1576 = vld [vmem:[%s1572 + $0x18] sm:$0xff]
      %s1577 = scalar_lea.vmem %s7, 2
      %v1578 = vld [vmem:[%s1577] sm:$0x1]
      %v1580 = vlaneseq
      %v1581 = vshrl.u32 %v1580, 7
      %v1582 = vsub.s32 0, %v1581
      %v1583 = vrot.slane %v1578, %v1582
      %1585 = vmatprep.subr.mxu0 0.0
      %1586 = vmatpush1.msra.mxu0 %v1573
      %1587 = vmatprep.subr.mxu0 0.0
      %1588 = vmatpush1.msra.mxu0 %v1574
      %1589 = vmatprep.subr.mxu0 0.0
      %1590 = vmatpush1.msra.mxu0 %v1575
      %1591 = vmatprep.subr.mxu0 0.0
      %1592 = vmatpush1.msra.mxu0 %v1576
      %1593 = vmatprep.subr.mxu0 0.0
      %1594 = vmatpush1.msra.mxu0 0.0
      %1595 = vmatprep.subr.mxu0 0.0
      %1596 = vmatpush1.msra.mxu0 0.0
      %1597 = vmatprep.subr.mxu0 0.0
      %1598 = vmatpush1.msra.mxu0 0.0
      %1599 = vmatprep.subr.mxu0 0.0
      %1600 = vmatpush1.msra.mxu0 0.0
      %1601 = vmatprep.subr.mxu0 0.0
      %1602 = vmatpush1.msra.mxu0 0.0
      %1603 = vmatprep.subr.mxu0 0.0
      %1604 = vmatpush1.msra.mxu0 0.0
      %1605 = vmatprep.subr.mxu0 0.0
      %1606 = vmatpush1.msra.mxu0 0.0
      %1607 = vmatprep.subr.mxu0 0.0
      %1608 = vmatpush1.msra.mxu0 0.0
      %1609 = vmatprep.subr.mxu0 0.0
      %1610 = vmatpush1.msra.mxu0 0.0
      %1611 = vmatprep.subr.mxu0 0.0
      %1612 = vmatpush1.msra.mxu0 0.0
      %1613 = vmatprep.subr.mxu0 0.0
      %1614 = vmatpush1.msra.mxu0 0.0
      %1615 = vmatprep.subr.mxu0 0.0
      %1616 = vmatpush1.msra.mxu0 0.0
      %1617 = vmatprep.subr.mxu0 0.0
      %1618 = vmatpush1.msra.mxu0 0.0
      %1619 = vmatprep.subr.mxu0 0.0
      %1620 = vmatpush1.msra.mxu0 0.0
      %1621 = vmatprep.subr.mxu0 0.0
      %1622 = vmatpush1.msra.mxu0 0.0
      %1623 = vmatprep.subr.mxu0 0.0
      %1624 = vmatpush1.msra.mxu0 0.0
      %1625 = vmatprep.subr.mxu0 0.0
      %1626 = vmatpush1.msra.mxu0 0.0
      %1627 = vmatprep.subr.mxu0 0.0
      %1628 = vmatpush1.msra.mxu0 0.0
      %1629 = vmatprep.subr.mxu0 0.0
      %1630 = vmatpush1.msra.mxu0 0.0
      %1631 = vmatprep.subr.mxu0 0.0
      %1632 = vmatpush1.msra.mxu0 0.0
      %1633 = vmatprep.subr.mxu0 0.0
      %1634 = vmatpush1.msra.mxu0 0.0
      %1635 = vmatprep.subr.mxu0 0.0
      %1636 = vmatpush1.msra.mxu0 0.0
      %1637 = vmatprep.subr.mxu0 0.0
      %1638 = vmatpush1.msra.mxu0 0.0
      %1639 = vmatprep.subr.mxu0 0.0
      %1640 = vmatpush1.msra.mxu0 0.0
      %1641 = vmatprep.subr.mxu0 0.0
      %1642 = vmatpush1.msra.mxu0 0.0
      %1643 = vmatprep.subr.mxu0 0.0
      %1644 = vmatpush1.msra.mxu0 0.0
      %1645 = vmatprep.subr.mxu0 0.0
      %1646 = vmatpush1.msra.mxu0 0.0
      %1647 = vmatprep.subr.mxu0 0.0
      %1648 = vmatpush1.msra.mxu0 0.0
      %1649 = vmatprep.mubr.f32.mxu0 0.0
      %1650 = vmatmul.mubr.f32.gmra.mrb[0].mxu0 %v530
      %v1651 = vpop.f32.mrb[0].mxu0
      %v1652 = vadd.f32 %v1583, %v1651
      %v1653 = vpop.f32.mrb[0].mxu0
      %1654 = vdwg.mxu0
      %v1656 = vsel %vm683, %v1486, 0
      %v1659 = vsel %vm683, %v1569, 0
      %1661 = vmatprep.subr.mxu0 0.0
      %1662 = vmatpush1.xpose.msra.mxu0 %v1659
      %1663 = vmatprep.subr.mxu0 0.0
      %1664 = vmatpush1.xpose.msra.mxu0 0.0
      %1665 = vmatprep.subr.mxu0 0.0
      %1666 = vmatpush1.xpose.msra.mxu0 0.0
      %1667 = vmatprep.subr.mxu0 0.0
      %1668 = vmatpush1.xpose.msra.mxu0 0.0
      %1669 = vmatprep.subr.mxu0 0.0
      %1670 = vmatpush1.xpose.msra.mxu0 0.0
      %1671 = vmatprep.subr.mxu0 0.0
      %1672 = vmatpush1.xpose.msra.mxu0 0.0
      %1673 = vmatprep.subr.mxu0 0.0
      %1674 = vmatpush1.xpose.msra.mxu0 0.0
      %1675 = vmatprep.subr.mxu0 0.0
      %1676 = vmatpush1.xpose.msra.mxu0 0.0
      %1677 = vmatprep.subr.mxu0 0.0
      %1678 = vmatpush1.xpose.msra.mxu0 0.0
      %1679 = vmatprep.subr.mxu0 0.0
      %1680 = vmatpush1.xpose.msra.mxu0 0.0
      %1681 = vmatprep.subr.mxu0 0.0
      %1682 = vmatpush1.xpose.msra.mxu0 0.0
      %1683 = vmatprep.subr.mxu0 0.0
      %1684 = vmatpush1.xpose.msra.mxu0 0.0
      %1685 = vmatprep.subr.mxu0 0.0
      %1686 = vmatpush1.xpose.msra.mxu0 0.0
      %1687 = vmatprep.subr.mxu0 0.0
      %1688 = vmatpush1.xpose.msra.mxu0 0.0
      %1689 = vmatprep.subr.mxu0 0.0
      %1690 = vmatpush1.xpose.msra.mxu0 0.0
      %1691 = vmatprep.subr.mxu0 0.0
      %1692 = vmatpush1.xpose.msra.mxu0 0.0
      %1693 = vmatprep.subr.mxu0 0.0
      %1694 = vmatpush1.xpose.msra.mxu0 0.0
      %1695 = vmatprep.subr.mxu0 0.0
      %1696 = vmatpush1.xpose.msra.mxu0 0.0
      %1697 = vmatprep.subr.mxu0 0.0
      %1698 = vmatpush1.xpose.msra.mxu0 0.0
      %1699 = vmatprep.subr.mxu0 0.0
      %1700 = vmatpush1.xpose.msra.mxu0 0.0
      %1701 = vmatprep.subr.mxu0 0.0
      %1702 = vmatpush1.xpose.msra.mxu0 0.0
      %1703 = vmatprep.subr.mxu0 0.0
      %1704 = vmatpush1.xpose.msra.mxu0 0.0
      %1705 = vmatprep.subr.mxu0 0.0
      %1706 = vmatpush1.xpose.msra.mxu0 0.0
      %1707 = vmatprep.subr.mxu0 0.0
      %1708 = vmatpush1.xpose.msra.mxu0 0.0
      %1709 = vmatprep.subr.mxu0 0.0
      %1710 = vmatpush1.xpose.msra.mxu0 0.0
      %1711 = vmatprep.subr.mxu0 0.0
      %1712 = vmatpush1.xpose.msra.mxu0 0.0
      %1713 = vmatprep.subr.mxu0 0.0
      %1714 = vmatpush1.xpose.msra.mxu0 0.0
      %1715 = vmatprep.subr.mxu0 0.0
      %1716 = vmatpush1.xpose.msra.mxu0 0.0
      %1717 = vmatprep.subr.mxu0 0.0
      %1718 = vmatpush1.xpose.msra.mxu0 0.0
      %1719 = vmatprep.subr.mxu0 0.0
      %1720 = vmatpush1.xpose.msra.mxu0 0.0
      %1721 = vmatprep.subr.mxu0 0.0
      %1722 = vmatpush1.xpose.msra.mxu0 0.0
      %1723 = vmatprep.subr.mxu0 0.0
      %1724 = vmatpush1.xpose.msra.mxu0 0.0
      %1725 = vmatprep.mubr.f32.mxu0 0.0
      %1726 = vmatmul.mubr.f32.gmra.mrb[0].mxu0 %v1656
      %v1727 = vpop.f32.mrb[0].mxu0
      %v1728 = vadd.f32 0.0, %v1727
      %v1729 = vpop.f32.mrb[0].mxu0
      %1730 = vdwg.mxu0
      %v1731 = vmul.f32 %v1728, 0.35355338
      %v1732 = vsel %vm432, %v1731, -1e+30
      %v1733 = vsel %vm683, %v1732, -inf
      %1734 = vmax.xlane.f32.xlu0 %v1733
      %v1735 = vpop.xlane.xlu0 %1734
      %v1736 = vsub.f32 %v1732, %v1735
      %v1737 = vmul.f32 %v1736, 1.442695
      %v1738 = vpow.pop %v1737
      %v1739 = vsel %vm683, %v1738, 0.0
      %1740 = vadd.xlane.f32.xlu0 %v1739
      %v1741 = vpop.xlane.xlu0 %1740
      %v1742 = vrcp.pop %v1741
      %v1743 = vmul.f32 %v1738, %v1742
      %v1745 = vsel %vm683, %v1743, 0
      %1747 = vmatprep.subr.mxu0 0.0
      %1748 = vmatpush1.msra.mxu0 %v1652
      %1749 = vmatprep.subr.mxu0 0.0
      %1750 = vmatpush1.msra.mxu0 0.0
      %1751 = vmatprep.subr.mxu0 0.0
      %1752 = vmatpush1.msra.mxu0 0.0
      %1753 = vmatprep.subr.mxu0 0.0
      %1754 = vmatpush1.msra.mxu0 0.0
      %1755 = vmatprep.subr.mxu0 0.0
      %1756 = vmatpush1.msra.mxu0 0.0
      %1757 = vmatprep.subr.mxu0 0.0
      %1758 = vmatpush1.msra.mxu0 0.0
      %1759 = vmatprep.subr.mxu0 0.0
      %1760 = vmatpush1.msra.mxu0 0.0
      %1761 = vmatprep.subr.mxu0 0.0
      %1762 = vmatpush1.msra.mxu0 0.0
      %1763 = vmatprep.subr.mxu0 0.0
      %1764 = vmatpush1.msra.mxu0 0.0
      %1765 = vmatprep.subr.mxu0 0.0
      %1766 = vmatpush1.msra.mxu0 0.0
      %1767 = vmatprep.subr.mxu0 0.0
      %1768 = vmatpush1.msra.mxu0 0.0
      %1769 = vmatprep.subr.mxu0 0.0
      %1770 = vmatpush1.msra.mxu0 0.0
      %1771 = vmatprep.subr.mxu0 0.0
      %1772 = vmatpush1.msra.mxu0 0.0
      %1773 = vmatprep.subr.mxu0 0.0
      %1774 = vmatpush1.msra.mxu0 0.0
      %1775 = vmatprep.subr.mxu0 0.0
      %1776 = vmatpush1.msra.mxu0 0.0
      %1777 = vmatprep.subr.mxu0 0.0
      %1778 = vmatpush1.msra.mxu0 0.0
      %1779 = vmatprep.subr.mxu0 0.0
      %1780 = vmatpush1.msra.mxu0 0.0
      %1781 = vmatprep.subr.mxu0 0.0
      %1782 = vmatpush1.msra.mxu0 0.0
      %1783 = vmatprep.subr.mxu0 0.0
      %1784 = vmatpush1.msra.mxu0 0.0
      %1785 = vmatprep.subr.mxu0 0.0
      %1786 = vmatpush1.msra.mxu0 0.0
      %1787 = vmatprep.subr.mxu0 0.0
      %1788 = vmatpush1.msra.mxu0 0.0
      %1789 = vmatprep.subr.mxu0 0.0
      %1790 = vmatpush1.msra.mxu0 0.0
      %1791 = vmatprep.subr.mxu0 0.0
      %1792 = vmatpush1.msra.mxu0 0.0
      %1793 = vmatprep.subr.mxu0 0.0
      %1794 = vmatpush1.msra.mxu0 0.0
      %1795 = vmatprep.subr.mxu0 0.0
      %1796 = vmatpush1.msra.mxu0 0.0
      %1797 = vmatprep.subr.mxu0 0.0
      %1798 = vmatpush1.msra.mxu0 0.0
      %1799 = vmatprep.subr.mxu0 0.0
      %1800 = vmatpush1.msra.mxu0 0.0
      %1801 = vmatprep.subr.mxu0 0.0
      %1802 = vmatpush1.msra.mxu0 0.0
      %1803 = vmatprep.subr.mxu0 0.0
      %1804 = vmatpush1.msra.mxu0 0.0
      %1805 = vmatprep.subr.mxu0 0.0
      %1806 = vmatpush1.msra.mxu0 0.0
      %1807 = vmatprep.subr.mxu0 0.0
      %1808 = vmatpush1.msra.mxu0 0.0
      %1809 = vmatprep.subr.mxu0 0.0
      %1810 = vmatpush1.msra.mxu0 0.0
      %1811 = vmatprep.mubr.f32.mxu0 0.0
      %1812 = vmatmul.mubr.f32.gmra.mrb[0].mxu0 %v1745
      %v1813 = vpop.f32.mrb[0].mxu0
      %v1814 = vadd.f32 0.0, %v1813
      %v1815 = vpop.f32.mrb[0].mxu0
      %1816 = vdwg.mxu0
      %s1817 = scalar_lea.vmem %s8, 16
      %v1818 = vld [vmem:[%s1817] sm:$0xff]
      %v1820 = vsel %vm683, %v1814, 0
      %1822 = vmatprep.subr.mxu0 0.0
      %1823 = vmatpush1.msra.mxu0 %v1818
      %1824 = vmatprep.subr.mxu0 0.0
      %1825 = vmatpush1.msra.mxu0 0.0
      %1826 = vmatprep.subr.mxu0 0.0
      %1827 = vmatpush1.msra.mxu0 0.0
      %1828 = vmatprep.subr.mxu0 0.0
      %1829 = vmatpush1.msra.mxu0 0.0
      %1830 = vmatprep.subr.mxu0 0.0
      %1831 = vmatpush1.msra.mxu0 0.0
      %1832 = vmatprep.subr.mxu0 0.0
      %1833 = vmatpush1.msra.mxu0 0.0
      %1834 = vmatprep.subr.mxu0 0.0
      %1835 = vmatpush1.msra.mxu0 0.0
      %1836 = vmatprep.subr.mxu0 0.0
      %1837 = vmatpush1.msra.mxu0 0.0
      %1838 = vmatprep.subr.mxu0 0.0
      %1839 = vmatpush1.msra.mxu0 0.0
      %1840 = vmatprep.subr.mxu0 0.0
      %1841 = vmatpush1.msra.mxu0 0.0
      %1842 = vmatprep.subr.mxu0 0.0
      %1843 = vmatpush1.msra.mxu0 0.0
      %1844 = vmatprep.subr.mxu0 0.0
      %1845 = vmatpush1.msra.mxu0 0.0
      %1846 = vmatprep.subr.mxu0 0.0
      %1847 = vmatpush1.msra.mxu0 0.0
      %1848 = vmatprep.subr.mxu0 0.0
      %1849 = vmatpush1.msra.mxu0 0.0
      %1850 = vmatprep.subr.mxu0 0.0
      %1851 = vmatpush1.msra.mxu0 0.0
      %1852 = vmatprep.subr.mxu0 0.0
      %1853 = vmatpush1.msra.mxu0 0.0
      %1854 = vmatprep.subr.mxu0 0.0
      %1855 = vmatpush1.msra.mxu0 0.0
      %1856 = vmatprep.subr.mxu0 0.0
      %1857 = vmatpush1.msra.mxu0 0.0
      %1858 = vmatprep.subr.mxu0 0.0
      %1859 = vmatpush1.msra.mxu0 0.0
      %1860 = vmatprep.subr.mxu0 0.0
      %1861 = vmatpush1.msra.mxu0 0.0
      %1862 = vmatprep.subr.mxu0 0.0
      %1863 = vmatpush1.msra.mxu0 0.0
      %1864 = vmatprep.subr.mxu0 0.0
      %1865 = vmatpush1.msra.mxu0 0.0
      %1866 = vmatprep.subr.mxu0 0.0
      %1867 = vmatpush1.msra.mxu0 0.0
      %1868 = vmatprep.subr.mxu0 0.0
      %1869 = vmatpush1.msra.mxu0 0.0
      %1870 = vmatprep.subr.mxu0 0.0
      %1871 = vmatpush1.msra.mxu0 0.0
      %1872 = vmatprep.subr.mxu0 0.0
      %1873 = vmatpush1.msra.mxu0 0.0
      %1874 = vmatprep.subr.mxu0 0.0
      %1875 = vmatpush1.msra.mxu0 0.0
      %1876 = vmatprep.subr.mxu0 0.0
      %1877 = vmatpush1.msra.mxu0 0.0
      %1878 = vmatprep.subr.mxu0 0.0
      %1879 = vmatpush1.msra.mxu0 0.0
      %1880 = vmatprep.subr.mxu0 0.0
      %1881 = vmatpush1.msra.mxu0 0.0
      %1882 = vmatprep.subr.mxu0 0.0
      %1883 = vmatpush1.msra.mxu0 0.0
      %1884 = vmatprep.subr.mxu0 0.0
      %1885 = vmatpush1.msra.mxu0 0.0
      %1886 = vmatprep.mubr.f32.mxu0 0.0
      %1887 = vmatmul.mubr.f32.gmra.mrb[0].mxu0 %v1820
      %v1888 = vpop.f32.mrb[0].mxu0
      %v1889 = vadd.f32 0.0, %v1888
      %v1890 = vpop.f32.mrb[0].mxu0
      %1891 = vdwg.mxu0
      %v1892 = vadd.f32 %v1403, %v1889
      %s1893 = scalar_lea.vmem %s2, 96
      %v1894 = vld [vmem:[%s1893] sm:$0xff]
      %v1895 = vld [vmem:[%s1893 + $0x8] sm:$0xff]
      %v1896 = vld [vmem:[%s1893 + $0x10] sm:$0xff]
      %v1897 = vld [vmem:[%s1893 + $0x18] sm:$0xff]
      %s1898 = scalar_lea.vmem %s3, 3
      %v1899 = vld [vmem:[%s1898] sm:$0x1]
      %v1901 = vlaneseq
      %v1902 = vshrl.u32 %v1901, 7
      %v1903 = vsub.s32 0, %v1902
      %v1904 = vrot.slane %v1899, %v1903
      %1906 = vmatprep.subr.mxu0 0.0
      %1907 = vmatpush1.msra.mxu0 %v1894
      %1908 = vmatprep.subr.mxu0 0.0
      %1909 = vmatpush1.msra.mxu0 %v1895
      %1910 = vmatprep.subr.mxu0 0.0
      %1911 = vmatpush1.msra.mxu0 %v1896
      %1912 = vmatprep.subr.mxu0 0.0
      %1913 = vmatpush1.msra.mxu0 %v1897
      %1914 = vmatprep.subr.mxu0 0.0
      %1915 = vmatpush1.msra.mxu0 0.0
      %1916 = vmatprep.subr.mxu0 0.0
      %1917 = vmatpush1.msra.mxu0 0.0
      %1918 = vmatprep.subr.mxu0 0.0
      %1919 = vmatpush1.msra.mxu0 0.0
      %1920 = vmatprep.subr.mxu0 0.0
      %1921 = vmatpush1.msra.mxu0 0.0
      %1922 = vmatprep.subr.mxu0 0.0
      %1923 = vmatpush1.msra.mxu0 0.0
      %1924 = vmatprep.subr.mxu0 0.0
      %1925 = vmatpush1.msra.mxu0 0.0
      %1926 = vmatprep.subr.mxu0 0.0
      %1927 = vmatpush1.msra.mxu0 0.0
      %1928 = vmatprep.subr.mxu0 0.0
      %1929 = vmatpush1.msra.mxu0 0.0
      %1930 = vmatprep.subr.mxu0 0.0
      %1931 = vmatpush1.msra.mxu0 0.0
      %1932 = vmatprep.subr.mxu0 0.0
      %1933 = vmatpush1.msra.mxu0 0.0
      %1934 = vmatprep.subr.mxu0 0.0
      %1935 = vmatpush1.msra.mxu0 0.0
      %1936 = vmatprep.subr.mxu0 0.0
      %1937 = vmatpush1.msra.mxu0 0.0
      %1938 = vmatprep.subr.mxu0 0.0
      %1939 = vmatpush1.msra.mxu0 0.0
      %1940 = vmatprep.subr.mxu0 0.0
      %1941 = vmatpush1.msra.mxu0 0.0
      %1942 = vmatprep.subr.mxu0 0.0
      %1943 = vmatpush1.msra.mxu0 0.0
      %1944 = vmatprep.subr.mxu0 0.0
      %1945 = vmatpush1.msra.mxu0 0.0
      %1946 = vmatprep.subr.mxu0 0.0
      %1947 = vmatpush1.msra.mxu0 0.0
      %1948 = vmatprep.subr.mxu0 0.0
      %1949 = vmatpush1.msra.mxu0 0.0
      %1950 = vmatprep.subr.mxu0 0.0
      %1951 = vmatpush1.msra.mxu0 0.0
      %1952 = vmatprep.subr.mxu0 0.0
      %1953 = vmatpush1.msra.mxu0 0.0
      %1954 = vmatprep.subr.mxu0 0.0
      %1955 = vmatpush1.msra.mxu0 0.0
      %1956 = vmatprep.subr.mxu0 0.0
      %1957 = vmatpush1.msra.mxu0 0.0
      %1958 = vmatprep.subr.mxu0 0.0
      %1959 = vmatpush1.msra.mxu0 0.0
      %1960 = vmatprep.subr.mxu0 0.0
      %1961 = vmatpush1.msra.mxu0 0.0
      %1962 = vmatprep.subr.mxu0 0.0
      %1963 = vmatpush1.msra.mxu0 0.0
      %1964 = vmatprep.subr.mxu0 0.0
      %1965 = vmatpush1.msra.mxu0 0.0
      %1966 = vmatprep.subr.mxu0 0.0
      %1967 = vmatpush1.msra.mxu0 0.0
      %1968 = vmatprep.subr.mxu0 0.0
      %1969 = vmatpush1.msra.mxu0 0.0
      %1970 = vmatprep.mubr.f32.mxu0 0.0
      %1971 = vmatmul.mubr.f32.gmra.mrb[0].mxu0 %v446
      %v1972 = vpop.f32.mrb[0].mxu0
      %v1973 = vadd.f32 %v1904, %v1972
      %v1974 = vpop.f32.mrb[0].mxu0
      %1975 = vdwg.mxu0
      %s1976 = scalar_lea.vmem %s4, 96
      %v1977 = vld [vmem:[%s1976] sm:$0xff]
      %v1978 = vld [vmem:[%s1976 + $0x8] sm:$0xff]
      %v1979 = vld [vmem:[%s1976 + $0x10] sm:$0xff]
      %v1980 = vld [vmem:[%s1976 + $0x18] sm:$0xff]
      %s1981 = scalar_lea.vmem %s5, 3
      %v1982 = vld [vmem:[%s1981] sm:$0x1]
      %v1984 = vlaneseq
      %v1985 = vshrl.u32 %v1984, 7
      %v1986 = vsub.s32 0, %v1985
      %v1987 = vrot.slane %v1982, %v1986
      %1989 = vmatprep.subr.mxu0 0.0
      %1990 = vmatpush1.msra.mxu0 %v1977
      %1991 = vmatprep.subr.mxu0 0.0
      %1992 = vmatpush1.msra.mxu0 %v1978
      %1993 = vmatprep.subr.mxu0 0.0
      %1994 = vmatpush1.msra.mxu0 %v1979
      %1995 = vmatprep.subr.mxu0 0.0
      %1996 = vmatpush1.msra.mxu0 %v1980
      %1997 = vmatprep.subr.mxu0 0.0
      %1998 = vmatpush1.msra.mxu0 0.0
      %1999 = vmatprep.subr.mxu0 0.0
      %2000 = vmatpush1.msra.mxu0 0.0
      %2001 = vmatprep.subr.mxu0 0.0
      %2002 = vmatpush1.msra.mxu0 0.0
      %2003 = vmatprep.subr.mxu0 0.0
      %2004 = vmatpush1.msra.mxu0 0.0
      %2005 = vmatprep.subr.mxu0 0.0
      %2006 = vmatpush1.msra.mxu0 0.0
      %2007 = vmatprep.subr.mxu0 0.0
      %2008 = vmatpush1.msra.mxu0 0.0
      %2009 = vmatprep.subr.mxu0 0.0
      %2010 = vmatpush1.msra.mxu0 0.0
      %2011 = vmatprep.subr.mxu0 0.0
      %2012 = vmatpush1.msra.mxu0 0.0
      %2013 = vmatprep.subr.mxu0 0.0
      %2014 = vmatpush1.msra.mxu0 0.0
      %2015 = vmatprep.subr.mxu0 0.0
      %2016 = vmatpush1.msra.mxu0 0.0
      %2017 = vmatprep.subr.mxu0 0.0
      %2018 = vmatpush1.msra.mxu0 0.0
      %2019 = vmatprep.subr.mxu0 0.0
      %2020 = vmatpush1.msra.mxu0 0.0
      %2021 = vmatprep.subr.mxu0 0.0
      %2022 = vmatpush1.msra.mxu0 0.0
      %2023 = vmatprep.subr.mxu0 0.0
      %2024 = vmatpush1.msra.mxu0 0.0
      %2025 = vmatprep.subr.mxu0 0.0
      %2026 = vmatpush1.msra.mxu0 0.0
      %2027 = vmatprep.subr.mxu0 0.0
      %2028 = vmatpush1.msra.mxu0 0.0
      %2029 = vmatprep.subr.mxu0 0.0
      %2030 = vmatpush1.msra.mxu0 0.0
      %2031 = vmatprep.subr.mxu0 0.0
      %2032 = vmatpush1.msra.mxu0 0.0
      %2033 = vmatprep.subr.mxu0 0.0
      %2034 = vmatpush1.msra.mxu0 0.0
      %2035 = vmatprep.subr.mxu0 0.0
      %2036 = vmatpush1.msra.mxu0 0.0
      %2037 = vmatprep.subr.mxu0 0.0
      %2038 = vmatpush1.msra.mxu0 0.0
      %2039 = vmatprep.subr.mxu0 0.0
      %2040 = vmatpush1.msra.mxu0 0.0
      %2041 = vmatprep.subr.mxu0 0.0
      %2042 = vmatpush1.msra.mxu0 0.0
      %2043 = vmatprep.subr.mxu0 0.0
      %2044 = vmatpush1.msra.mxu0 0.0
      %2045 = vmatprep.subr.mxu0 0.0
      %2046 = vmatpush1.msra.mxu0 0.0
      %2047 = vmatprep.subr.mxu0 0.0
      %2048 = vmatpush1.msra.mxu0 0.0
      %2049 = vmatprep.subr.mxu0 0.0
      %2050 = vmatpush1.msra.mxu0 0.0
      %2051 = vmatprep.subr.mxu0 0.0
      %2052 = vmatpush1.msra.mxu0 0.0
      %2053 = vmatprep.mubr.f32.mxu0 0.0
      %2054 = vmatmul.mubr.f32.gmra.mrb[0].mxu0 %v530
      %v2055 = vpop.f32.mrb[0].mxu0
      %v2056 = vadd.f32 %v1987, %v2055
      %v2057 = vpop.f32.mrb[0].mxu0
      %2058 = vdwg.mxu0
      %s2059 = scalar_lea.vmem %s6, 96
      %v2060 = vld [vmem:[%s2059] sm:$0xff]
      %v2061 = vld [vmem:[%s2059 + $0x8] sm:$0xff]
      %v2062 = vld [vmem:[%s2059 + $0x10] sm:$0xff]
      %v2063 = vld [vmem:[%s2059 + $0x18] sm:$0xff]
      %s2064 = scalar_lea.vmem %s7, 3
      %v2065 = vld [vmem:[%s2064] sm:$0x1]
      %v2067 = vlaneseq
      %v2068 = vshrl.u32 %v2067, 7
      %v2069 = vsub.s32 0, %v2068
      %v2070 = vrot.slane %v2065, %v2069
      %2072 = vmatprep.subr.mxu0 0.0
      %2073 = vmatpush1.msra.mxu0 %v2060
      %2074 = vmatprep.subr.mxu0 0.0
      %2075 = vmatpush1.msra.mxu0 %v2061
      %2076 = vmatprep.subr.mxu0 0.0
      %2077 = vmatpush1.msra.mxu0 %v2062
      %2078 = vmatprep.subr.mxu0 0.0
      %2079 = vmatpush1.msra.mxu0 %v2063
      %2080 = vmatprep.subr.mxu0 0.0
      %2081 = vmatpush1.msra.mxu0 0.0
      %2082 = vmatprep.subr.mxu0 0.0
      %2083 = vmatpush1.msra.mxu0 0.0
      %2084 = vmatprep.subr.mxu0 0.0
      %2085 = vmatpush1.msra.mxu0 0.0
      %2086 = vmatprep.subr.mxu0 0.0
      %2087 = vmatpush1.msra.mxu0 0.0
      %2088 = vmatprep.subr.mxu0 0.0
      %2089 = vmatpush1.msra.mxu0 0.0
      %2090 = vmatprep.subr.mxu0 0.0
      %2091 = vmatpush1.msra.mxu0 0.0
      %2092 = vmatprep.subr.mxu0 0.0
      %2093 = vmatpush1.msra.mxu0 0.0
      %2094 = vmatprep.subr.mxu0 0.0
      %2095 = vmatpush1.msra.mxu0 0.0
      %2096 = vmatprep.subr.mxu0 0.0
      %2097 = vmatpush1.msra.mxu0 0.0
      %2098 = vmatprep.subr.mxu0 0.0
      %2099 = vmatpush1.msra.mxu0 0.0
      %2100 = vmatprep.subr.mxu0 0.0
      %2101 = vmatpush1.msra.mxu0 0.0
      %2102 = vmatprep.subr.mxu0 0.0
      %2103 = vmatpush1.msra.mxu0 0.0
      %2104 = vmatprep.subr.mxu0 0.0
      %2105 = vmatpush1.msra.mxu0 0.0
      %2106 = vmatprep.subr.mxu0 0.0
      %2107 = vmatpush1.msra.mxu0 0.0
      %2108 = vmatprep.subr.mxu0 0.0
      %2109 = vmatpush1.msra.mxu0 0.0
      %2110 = vmatprep.subr.mxu0 0.0
      %2111 = vmatpush1.msra.mxu0 0.0
      %2112 = vmatprep.subr.mxu0 0.0
      %2113 = vmatpush1.msra.mxu0 0.0
      %2114 = vmatprep.subr.mxu0 0.0
      %2115 = vmatpush1.msra.mxu0 0.0
      %2116 = vmatprep.subr.mxu0 0.0
      %2117 = vmatpush1.msra.mxu0 0.0
      %2118 = vmatprep.subr.mxu0 0.0
      %2119 = vmatpush1.msra.mxu0 0.0
      %2120 = vmatprep.subr.mxu0 0.0
      %2121 = vmatpush1.msra.mxu0 0.0
      %2122 = vmatprep.subr.mxu0 0.0
      %2123 = vmatpush1.msra.mxu0 0.0
      %2124 = vmatprep.subr.mxu0 0.0
      %2125 = vmatpush1.msra.mxu0 0.0
      %2126 = vmatprep.subr.mxu0 0.0
      %2127 = vmatpush1.msra.mxu0 0.0
      %2128 = vmatprep.subr.mxu0 0.0
      %2129 = vmatpush1.msra.mxu0 0.0
      %2130 = vmatprep.subr.mxu0 0.0
      %2131 = vmatpush1.msra.mxu0 0.0
      %2132 = vmatprep.subr.mxu0 0.0
      %2133 = vmatpush1.msra.mxu0 0.0
      %2134 = vmatprep.subr.mxu0 0.0
      %2135 = vmatpush1.msra.mxu0 0.0
      %2136 = vmatprep.mubr.f32.mxu0 0.0
      %2137 = vmatmul.mubr.f32.gmra.mrb[0].mxu0 %v530
      %v2138 = vpop.f32.mrb[0].mxu0
      %v2139 = vadd.f32 %v2070, %v2138
      %v2140 = vpop.f32.mrb[0].mxu0
      %2141 = vdwg.mxu0
      %v2143 = vsel %vm683, %v1973, 0
      %v2146 = vsel %vm683, %v2056, 0
      %2148 = vmatprep.subr.mxu0 0.0
      %2149 = vmatpush1.xpose.msra.mxu0 %v2146
      %2150 = vmatprep.subr.mxu0 0.0
      %2151 = vmatpush1.xpose.msra.mxu0 0.0
      %2152 = vmatprep.subr.mxu0 0.0
      %2153 = vmatpush1.xpose.msra.mxu0 0.0
      %2154 = vmatprep.subr.mxu0 0.0
      %2155 = vmatpush1.xpose.msra.mxu0 0.0
      %2156 = vmatprep.subr.mxu0 0.0
      %2157 = vmatpush1.xpose.msra.mxu0 0.0
      %2158 = vmatprep.subr.mxu0 0.0
      %2159 = vmatpush1.xpose.msra.mxu0 0.0
      %2160 = vmatprep.subr.mxu0 0.0
      %2161 = vmatpush1.xpose.msra.mxu0 0.0
      %2162 = vmatprep.subr.mxu0 0.0
      %2163 = vmatpush1.xpose.msra.mxu0 0.0
      %2164 = vmatprep.subr.mxu0 0.0
      %2165 = vmatpush1.xpose.msra.mxu0 0.0
      %2166 = vmatprep.subr.mxu0 0.0
      %2167 = vmatpush1.xpose.msra.mxu0 0.0
      %2168 = vmatprep.subr.mxu0 0.0
      %2169 = vmatpush1.xpose.msra.mxu0 0.0
      %2170 = vmatprep.subr.mxu0 0.0
      %2171 = vmatpush1.xpose.msra.mxu0 0.0
      %2172 = vmatprep.subr.mxu0 0.0
      %2173 = vmatpush1.xpose.msra.mxu0 0.0
      %2174 = vmatprep.subr.mxu0 0.0
      %2175 = vmatpush1.xpose.msra.mxu0 0.0
      %2176 = vmatprep.subr.mxu0 0.0
      %2177 = vmatpush1.xpose.msra.mxu0 0.0
      %2178 = vmatprep.subr.mxu0 0.0
      %2179 = vmatpush1.xpose.msra.mxu0 0.0
      %2180 = vmatprep.subr.mxu0 0.0
      %2181 = vmatpush1.xpose.msra.mxu0 0.0
      %2182 = vmatprep.subr.mxu0 0.0
      %2183 = vmatpush1.xpose.msra.mxu0 0.0
      %2184 = vmatprep.subr.mxu0 0.0
      %2185 = vmatpush1.xpose.msra.mxu0 0.0
      %2186 = vmatprep.subr.mxu0 0.0
      %2187 = vmatpush1.xpose.msra.mxu0 0.0
      %2188 = vmatprep.subr.mxu0 0.0
      %2189 = vmatpush1.xpose.msra.mxu0 0.0
      %2190 = vmatprep.subr.mxu0 0.0
      %2191 = vmatpush1.xpose.msra.mxu0 0.0
      %2192 = vmatprep.subr.mxu0 0.0
      %2193 = vmatpush1.xpose.msra.mxu0 0.0
      %2194 = vmatprep.subr.mxu0 0.0
      %2195 = vmatpush1.xpose.msra.mxu0 0.0
      %2196 = vmatprep.subr.mxu0 0.0
      %2197 = vmatpush1.xpose.msra.mxu0 0.0
      %2198 = vmatprep.subr.mxu0 0.0
      %2199 = vmatpush1.xpose.msra.mxu0 0.0
      %2200 = vmatprep.subr.mxu0 0.0
      %2201 = vmatpush1.xpose.msra.mxu0 0.0
      %2202 = vmatprep.subr.mxu0 0.0
      %2203 = vmatpush1.xpose.msra.mxu0 0.0
      %2204 = vmatprep.subr.mxu0 0.0
      %2205 = vmatpush1.xpose.msra.mxu0 0.0
      %2206 = vmatprep.subr.mxu0 0.0
      %2207 = vmatpush1.xpose.msra.mxu0 0.0
      %2208 = vmatprep.subr.mxu0 0.0
      %2209 = vmatpush1.xpose.msra.mxu0 0.0
      %2210 = vmatprep.subr.mxu0 0.0
      %2211 = vmatpush1.xpose.msra.mxu0 0.0
      %2212 = vmatprep.mubr.f32.mxu0 0.0
      %2213 = vmatmul.mubr.f32.gmra.mrb[0].mxu0 %v2143
      %v2214 = vpop.f32.mrb[0].mxu0
      %v2215 = vadd.f32 0.0, %v2214
      %v2216 = vpop.f32.mrb[0].mxu0
      %2217 = vdwg.mxu0
      %v2218 = vmul.f32 %v2215, 0.35355338
      %v2219 = vsel %vm432, %v2218, -1e+30
      %v2220 = vsel %vm683, %v2219, -inf
      %2221 = vmax.xlane.f32.xlu0 %v2220
      %v2222 = vpop.xlane.xlu0 %2221
      %v2223 = vsub.f32 %v2219, %v2222
      %v2224 = vmul.f32 %v2223, 1.442695
      %v2225 = vpow.pop %v2224
      %v2226 = vsel %vm683, %v2225, 0.0
      %2227 = vadd.xlane.f32.xlu0 %v2226
      %v2228 = vpop.xlane.xlu0 %2227
      %v2229 = vrcp.pop %v2228
      %v2230 = vmul.f32 %v2225, %v2229
      %v2232 = vsel %vm683, %v2230, 0
      %2234 = vmatprep.subr.mxu0 0.0
      %2235 = vmatpush1.msra.mxu0 %v2139
      %2236 = vmatprep.subr.mxu0 0.0
      %2237 = vmatpush1.msra.mxu0 0.0
      %2238 = vmatprep.subr.mxu0 0.0
      %2239 = vmatpush1.msra.mxu0 0.0
      %2240 = vmatprep.subr.mxu0 0.0
      %2241 = vmatpush1.msra.mxu0 0.0
      %2242 = vmatprep.subr.mxu0 0.0
      %2243 = vmatpush1.msra.mxu0 0.0
      %2244 = vmatprep.subr.mxu0 0.0
      %2245 = vmatpush1.msra.mxu0 0.0
      %2246 = vmatprep.subr.mxu0 0.0
      %2247 = vmatpush1.msra.mxu0 0.0
      %2248 = vmatprep.subr.mxu0 0.0
      %2249 = vmatpush1.msra.mxu0 0.0
      %2250 = vmatprep.subr.mxu0 0.0
      %2251 = vmatpush1.msra.mxu0 0.0
      %2252 = vmatprep.subr.mxu0 0.0
      %2253 = vmatpush1.msra.mxu0 0.0
      %2254 = vmatprep.subr.mxu0 0.0
      %2255 = vmatpush1.msra.mxu0 0.0
      %2256 = vmatprep.subr.mxu0 0.0
      %2257 = vmatpush1.msra.mxu0 0.0
      %2258 = vmatprep.subr.mxu0 0.0
      %2259 = vmatpush1.msra.mxu0 0.0
      %2260 = vmatprep.subr.mxu0 0.0
      %2261 = vmatpush1.msra.mxu0 0.0
      %2262 = vmatprep.subr.mxu0 0.0
      %2263 = vmatpush1.msra.mxu0 0.0
      %2264 = vmatprep.subr.mxu0 0.0
      %2265 = vmatpush1.msra.mxu0 0.0
      %2266 = vmatprep.subr.mxu0 0.0
      %2267 = vmatpush1.msra.mxu0 0.0
      %2268 = vmatprep.subr.mxu0 0.0
      %2269 = vmatpush1.msra.mxu0 0.0
      %2270 = vmatprep.subr.mxu0 0.0
      %2271 = vmatpush1.msra.mxu0 0.0
      %2272 = vmatprep.subr.mxu0 0.0
      %2273 = vmatpush1.msra.mxu0 0.0
      %2274 = vmatprep.subr.mxu0 0.0
      %2275 = vmatpush1.msra.mxu0 0.0
      %2276 = vmatprep.subr.mxu0 0.0
      %2277 = vmatpush1.msra.mxu0 0.0
      %2278 = vmatprep.subr.mxu0 0.0
      %2279 = vmatpush1.msra.mxu0 0.0
      %2280 = vmatprep.subr.mxu0 0.0
      %2281 = vmatpush1.msra.mxu0 0.0
      %2282 = vmatprep.subr.mxu0 0.0
      %2283 = vmatpush1.msra.mxu0 0.0
      %2284 = vmatprep.subr.mxu0 0.0
      %2285 = vmatpush1.msra.mxu0 0.0
      %2286 = vmatprep.subr.mxu0 0.0
      %2287 = vmatpush1.msra.mxu0 0.0
      %2288 = vmatprep.subr.mxu0 0.0
      %2289 = vmatpush1.msra.mxu0 0.0
      %2290 = vmatprep.subr.mxu0 0.0
      %2291 = vmatpush1.msra.mxu0 0.0
      %2292 = vmatprep.subr.mxu0 0.0
      %2293 = vmatpush1.msra.mxu0 0.0
      %2294 = vmatprep.subr.mxu0 0.0
      %2295 = vmatpush1.msra.mxu0 0.0
      %2296 = vmatprep.subr.mxu0 0.0
      %2297 = vmatpush1.msra.mxu0 0.0
      %2298 = vmatprep.mubr.f32.mxu0 0.0
      %2299 = vmatmul.mubr.f32.gmra.mrb[0].mxu0 %v2232
      %v2300 = vpop.f32.mrb[0].mxu0
      %v2301 = vadd.f32 0.0, %v2300
      %v2302 = vpop.f32.mrb[0].mxu0
      %2303 = vdwg.mxu0
      %s2304 = scalar_lea.vmem %s8, 24
      %v2305 = vld [vmem:[%s2304] sm:$0xff]
      %v2307 = vsel %vm683, %v2301, 0
      %2309 = vmatprep.subr.mxu0 0.0
      %2310 = vmatpush1.msra.mxu0 %v2305
      %2311 = vmatprep.subr.mxu0 0.0
      %2312 = vmatpush1.msra.mxu0 0.0
      %2313 = vmatprep.subr.mxu0 0.0
      %2314 = vmatpush1.msra.mxu0 0.0
      %2315 = vmatprep.subr.mxu0 0.0
      %2316 = vmatpush1.msra.mxu0 0.0
      %2317 = vmatprep.subr.mxu0 0.0
      %2318 = vmatpush1.msra.mxu0 0.0
      %2319 = vmatprep.subr.mxu0 0.0
      %2320 = vmatpush1.msra.mxu0 0.0
      %2321 = vmatprep.subr.mxu0 0.0
      %2322 = vmatpush1.msra.mxu0 0.0
      %2323 = vmatprep.subr.mxu0 0.0
      %2324 = vmatpush1.msra.mxu0 0.0
      %2325 = vmatprep.subr.mxu0 0.0
      %2326 = vmatpush1.msra.mxu0 0.0
      %2327 = vmatprep.subr.mxu0 0.0
      %2328 = vmatpush1.msra.mxu0 0.0
      %2329 = vmatprep.subr.mxu0 0.0
      %2330 = vmatpush1.msra.mxu0 0.0
      %2331 = vmatprep.subr.mxu0 0.0
      %2332 = vmatpush1.msra.mxu0 0.0
      %2333 = vmatprep.subr.mxu0 0.0
      %2334 = vmatpush1.msra.mxu0 0.0
      %2335 = vmatprep.subr.mxu0 0.0
      %2336 = vmatpush1.msra.mxu0 0.0
      %2337 = vmatprep.subr.mxu0 0.0
      %2338 = vmatpush1.msra.mxu0 0.0
      %2339 = vmatprep.subr.mxu0 0.0
      %2340 = vmatpush1.msra.mxu0 0.0
      %2341 = vmatprep.subr.mxu0 0.0
      %2342 = vmatpush1.msra.mxu0 0.0
      %2343 = vmatprep.subr.mxu0 0.0
      %2344 = vmatpush1.msra.mxu0 0.0
      %2345 = vmatprep.subr.mxu0 0.0
      %2346 = vmatpush1.msra.mxu0 0.0
      %2347 = vmatprep.subr.mxu0 0.0
      %2348 = vmatpush1.msra.mxu0 0.0
      %2349 = vmatprep.subr.mxu0 0.0
      %2350 = vmatpush1.msra.mxu0 0.0
      %2351 = vmatprep.subr.mxu0 0.0
      %2352 = vmatpush1.msra.mxu0 0.0
      %2353 = vmatprep.subr.mxu0 0.0
      %2354 = vmatpush1.msra.mxu0 0.0
      %2355 = vmatprep.subr.mxu0 0.0
      %2356 = vmatpush1.msra.mxu0 0.0
      %2357 = vmatprep.subr.mxu0 0.0
      %2358 = vmatpush1.msra.mxu0 0.0
      %2359 = vmatprep.subr.mxu0 0.0
      %2360 = vmatpush1.msra.mxu0 0.0
      %2361 = vmatprep.subr.mxu0 0.0
      %2362 = vmatpush1.msra.mxu0 0.0
      %2363 = vmatprep.subr.mxu0 0.0
      %2364 = vmatpush1.msra.mxu0 0.0
      %2365 = vmatprep.subr.mxu0 0.0
      %2366 = vmatpush1.msra.mxu0 0.0
      %2367 = vmatprep.subr.mxu0 0.0
      %2368 = vmatpush1.msra.mxu0 0.0
      %2369 = vmatprep.subr.mxu0 0.0
      %2370 = vmatpush1.msra.mxu0 0.0
      %2371 = vmatprep.subr.mxu0 0.0
      %2372 = vmatpush1.msra.mxu0 0.0
      %2373 = vmatprep.mubr.f32.mxu0 0.0
      %2374 = vmatmul.mubr.f32.gmra.mrb[0].mxu0 %v2307
      %v2375 = vpop.f32.mrb[0].mxu0
      %v2376 = vadd.f32 0.0, %v2375
      %v2377 = vpop.f32.mrb[0].mxu0
      %2378 = vdwg.mxu0
      %v2379 = vadd.f32 %v1892, %v2376
      %v2380 = vld [vmem:[%s9] sm:$0x1]
      %v2382 = vlaneseq
      %v2383 = vshrl.u32 %v2382, 7
      %v2384 = vsub.s32 0, %v2383
      %v2385 = vrot.slane %v2380, %v2384
      %v2387 = vadd.f32 %v2379, %v2385
      %v2388 = vadd.f32 %v426, %v2387
      %v2389 = vld [vmem:[%s10] sm:$0x1]
      %v2390 = vld [vmem:[%s11] sm:$0x1]
      %v2391 = vsel %vm444, %v2388, 0.0
      %2392 = vadd.xlane.f32.xlu0 %v2391
      %v2393 = vpop.xlane.xlu0 %2392
      %v2394 = vrcp.pop 32.0
      %v2395 = vmul.f32 %v2393, %v2394
      %v2396 = vsub.f32 %v2388, %v2395
      %v2397 = vmul.f32 %v2396, %v2396
      %v2398 = vsel %vm444, %v2397, 0.0
      %2399 = vadd.xlane.f32.xlu0 %v2398
      %v2400 = vpop.xlane.xlu0 %2399
      %v2401 = vmul.f32 %v2400, %v2394
      %v2402 = vadd.f32 %v2401, 1e-05
      %v2403 = vrsqrt.pop %v2402
      %v2404 = vmul.f32 %v2396, %v2403
      %v2406 = vlaneseq
      %v2407 = vshrl.u32 %v2406, 7
      %v2408 = vsub.s32 0, %v2407
      %v2409 = vrot.slane %v2389, %v2408
      %v2411 = vmul.f32 %v2404, %v2409
      %v2413 = vlaneseq
      %v2414 = vshrl.u32 %v2413, 7
      %v2415 = vsub.s32 0, %v2414
      %v2416 = vrot.slane %v2390, %v2415
      %v2418 = vadd.f32 %v2411, %v2416
      %2419 = vst.msk [vmem:[%s425] sm:$0xff] %vm444, %v2418
      %p2420 = scmp.lt.s32.totalorder %s23, 1
      %s2421 = scalar_select %p2420, %s23, 1
      %s2422 = smul.addr %s2421, 8
      %s2423 = scalar_lea.vmem %s12, %s2422
      // Predicated region
      $region69: #{captioning_transformer_forward.9} parent=67 // pred_check
        %p2424 = pneg %p303
      $region70: #{captioning_transformer_forward.9} parent=67 // pred_check_branch
        %2426 = sbr.rel (%p2424) target = $region72
      $region71: #{captioning_transformer_forward.9} parent=67 // pred_region
        _
      $region72: #{captioning_transformer_forward.9} parent=67 // pred_fallthru
        _
    $region68: #{captioning_transformer_forward.9} parent=5 // pred_fallthru
      _
    %p2427 = scmp.le.s32.totalorder 2, %s18
    // Predicated region
    $region73: #{captioning_transformer_forward.9} parent=5 // pred_check
      %p2428 = pneg %p2427
    $region74: #{captioning_transformer_forward.9} parent=5 // pred_check_branch
      %2430 = sbr.rel (%p2428) target = $region76
    $region75: #{captioning_transformer_forward.9} parent=5 // pred_region
      %s2431 = ssub.s32 %s18, 2
      // Predicated region
      $region77: #{captioning_transformer_forward.9} parent=75 // pred_check
        %p2432 = pneg %p309
      $region78: #{captioning_transformer_forward.9} parent=75 // pred_check_branch
        %2434 = sbr.rel (%p2432) target = $region80
      $region79: #{captioning_transformer_forward.9} parent=75 // pred_region
        %p2435 = scmp.lt.s32.totalorder %s24, 1
        %s2436 = scalar_select %p2435, %s24, 1
        %s2437 = smul.addr %s2436, 8
        %s2438 = scalar_lea.vmem %s12, %s2437
      $region80: #{captioning_transformer_forward.9} parent=75 // pred_fallthru
        _
    $region76: #{captioning_transformer_forward.9} parent=5 // pred_fallthru
      _
  $region6: #{captioning_transformer_forward.9} parent=0 // loop_footer
    %s22 = sadd.s32 1, %s18
  $region7: #{captioning_transformer_forward.9} parent=0 // loop_footer_branch
    %17 = sbr.rel target = $region3
  $region8: #{captioning_transformer_forward.9} parent=0 // loop_exit
    _

// kernel: captioning_transformer_forward.15
$region0: #{captioning_transformer_forward.15}
  #allocation0 [shape = 'u32[]', space=smem, size = 0x4, offset = 0x4, fixed_abs, tag = 'smem constant byte address 0x4 - core index']
  #allocation1 [shape = 'u32[144,128]{1,0:T(1,128)}', space=vmem, size = 0x12000, scoped, tag = 'internal scratch']
  %s0 = inlined_call_operand.vmem [shape: f32[16,32], index: 0, kind: input, shape index: {}]
  %s1 = inlined_call_operand.vmem [shape: f32[32,16], index: 1, kind: input, shape index: {}]
  %s2 = inlined_call_operand.vmem [shape: f32[1,16], index: 2, kind: input, shape index: {}]
  %s3 = inlined_call_operand.hbm [shape: f32[16,16], index: 3, kind: output, shape index: {}]
  %s4 = sld [smem:[#allocation0]]
  $region22: #{captioning_transformer_forward.15} parent=0
    _
  %s6 = ssub.s32 1, %s4
  %s7 = scalar_select 0, %s6, %s4
  $region1: #{captioning_transformer_forward.15} parent=0
    #allocation2 [shape = 'u8[8192]{0}', space=vmem, size = 0x2000, scoped, tag = 'output window, operand 0, single buffered']
    #allocation3 [shape = 's32[1]{0}', space=sflag, size = 0x4, scoped, tag = 'scoped memory for captioning_transformer_forward.15']
    %8 = vsyncpa [#allocation3], 0
    // Predicated region
    $region2: #{captioning_transformer_forward.15} parent=1 // pred_check
      _
    $region3: #{captioning_transformer_forward.15} parent=1 // pred_check_branch
      %10 = sbr.rel (0) target = $region5
    $region4: #{captioning_transformer_forward.15} parent=1 // pred_region
      _
    $region5: #{captioning_transformer_forward.15} parent=1 // pred_fallthru
      _
    // Predicated region
    $region6: #{captioning_transformer_forward.15} parent=1 // pred_check
      _
    $region7: #{captioning_transformer_forward.15} parent=1 // pred_check_branch
      %12 = sbr.rel (0) target = $region9
    $region8: #{captioning_transformer_forward.15} parent=1 // pred_region
      _
    $region9: #{captioning_transformer_forward.15} parent=1 // pred_fallthru
      _
    // Predicated region
    $region10: #{captioning_transformer_forward.15} parent=1 // pred_check
      _
    $region11: #{captioning_transformer_forward.15} parent=1 // pred_check_branch
      %14 = sbr.rel (0) target = $region13
    $region12: #{captioning_transformer_forward.15} parent=1 // pred_region
      _
    $region13: #{captioning_transformer_forward.15} parent=1 // pred_fallthru
      _
    %v15 = vld [vmem:[%s0] sm:$0xff]
    %v16 = vld [vmem:[%s0 + $0x8] sm:$0xff]
    %v17 = vld [vmem:[%s1] sm:$0xff]
    %v18 = vld [vmem:[%s1 + $0x8] sm:$0xff]
    %v19 = vld [vmem:[%s1 + $0x10] sm:$0xff]
    %v20 = vld [vmem:[%s1 + $0x18] sm:$0xff]
    %v21 = vld [vmem:[%s2] sm:$0x1]
    %v23 = vlaneseq
    %v24 = vshrl.u32 %v23, 7
    %v25 = vsub.s32 0, %v24
    %v26 = vrot.slane %v21, %v25
    %vm28 = vcmask 261120
    %v30 = vsel %vm28, %v15, 0
    %v33 = vsel %vm28, %v16, 0
    %35 = vmatprep.subr.mxu0 0.0
    %36 = vmatpush1.msra.mxu0 %v17
    %37 = vmatprep.subr.mxu0 0.0
    %38 = vmatpush1.msra.mxu0 %v18
    %39 = vmatprep.subr.mxu0 0.0
    %40 = vmatpush1.msra.mxu0 %v19
    %41 = vmatprep.subr.mxu0 0.0
    %42 = vmatpush1.msra.mxu0 %v20
    %43 = vmatprep.subr.mxu0 0.0
    %44 = vmatpush1.msra.mxu0 0.0
    %45 = vmatprep.subr.mxu0 0.0
    %46 = vmatpush1.msra.mxu0 0.0
    %47 = vmatprep.subr.mxu0 0.0
    %48 = vmatpush1.msra.mxu0 0.0
    %49 = vmatprep.subr.mxu0 0.0
    %50 = vmatpush1.msra.mxu0 0.0
    %51 = vmatprep.subr.mxu0 0.0
    %52 = vmatpush1.msra.mxu0 0.0
    %53 = vmatprep.subr.mxu0 0.0
    %54 = vmatpush1.msra.mxu0 0.0
    %55 = vmatprep.subr.mxu0 0.0
    %56 = vmatpush1.msra.mxu0 0.0
    %57 = vmatprep.subr.mxu0 0.0
    %58 = vmatpush1.msra.mxu0 0.0
    %59 = vmatprep.subr.mxu0 0.0
    %60 = vmatpush1.msra.mxu0 0.0
    %61 = vmatprep.subr.mxu0 0.0
    %62 = vmatpush1.msra.mxu0 0.0
    %63 = vmatprep.subr.mxu0 0.0
    %64 = vmatpush1.msra.mxu0 0.0
    %65 = vmatprep.subr.mxu0 0.0
    %66 = vmatpush1.msra.mxu0 0.0
    %67 = vmatprep.subr.mxu0 0.0
    %68 = vmatpush1.msra.mxu0 0.0
    %69 = vmatprep.subr.mxu0 0.0
    %70 = vmatpush1.msra.mxu0 0.0
    %71 = vmatprep.subr.mxu0 0.0
    %72 = vmatpush1.msra.mxu0 0.0
    %73 = vmatprep.subr.mxu0 0.0
    %74 = vmatpush1.msra.mxu0 0.0
    %75 = vmatprep.subr.mxu0 0.0
    %76 = vmatpush1.msra.mxu0 0.0
    %77 = vmatprep.subr.mxu0 0.0
    %78 = vmatpush1.msra.mxu0 0.0
    %79 = vmatprep.subr.mxu0 0.0
    %80 = vmatpush1.msra.mxu0 0.0
    %81 = vmatprep.subr.mxu0 0.0
    %82 = vmatpush1.msra.mxu0 0.0
    %83 = vmatprep.subr.mxu0 0.0
    %84 = vmatpush1.msra.mxu0 0.0
    %85 = vmatprep.subr.mxu0 0.0
    %86 = vmatpush1.msra.mxu0 0.0
    %87 = vmatprep.subr.mxu0 0.0
    %88 = vmatpush1.msra.mxu0 0.0
    %89 = vmatprep.subr.mxu0 0.0
    %90 = vmatpush1.msra.mxu0 0.0
    %91 = vmatprep.subr.mxu0 0.0
    %92 = vmatpush1.msra.mxu0 0.0
    %93 = vmatprep.subr.mxu0 0.0
    %94 = vmatpush1.msra.mxu0 0.0
    %95 = vmatprep.subr.mxu0 0.0
    %96 = vmatpush1.msra.mxu0 0.0
    %97 = vmatprep.subr.mxu0 0.0
    %98 = vmatpush1.msra.mxu0 0.0
    %99 = vmatprep.mubr.f32.mxu0 0.0
    %100 = vmatmul.mubr.f32.gmra.mrb[0].mxu0 %v30
    %v101 = vpop.f32.mrb[0].mxu0
    %v102 = vadd.f32 %v26, %v101
    %v103 = vpop.f32.mrb[0].mxu0
    %104 = vmatprep.mubr.f32.mxu0 0.0
    %105 = vmatmul.mubr.f32.gmra.mrb[0].mxu0 %v33
    %v106 = vpop.f32.mrb[0].mxu0
    %v107 = vadd.f32 %v26, %v106
    %v108 = vpop.f32.mrb[0].mxu0
    %109 = vdwg.mxu0
    %vm110 = vcmask 130048
    %111 = vst.msk [vmem:[#allocation2] sm:$0xff] %vm110, %v102
    %112 = vst.msk [vmem:[#allocation2 + $0x8] sm:$0xff] %vm110, %v107
    // Predicated region
    $region14: #{captioning_transformer_forward.15} parent=1 // pred_check
      _
    $region15: #{captioning_transformer_forward.15} parent=1 // pred_check_branch
      %114 = sbr.rel (0) target = $region17
    $region16: #{captioning_transformer_forward.15} parent=1 // pred_region
      %s116 = ssub.s32 256, 256
      %117 = vsyncadd [#allocation3], %s116
      %s118 = sshll.u32 [#allocation2], 4
      %s119 = int_to_ptr.vmem [resolvable:$true] %s118
      %124 = dma.vmem_to_hbm [thread:$0]  %s119, 256, %s3, [#allocation3], 128, 128, 8
    $region17: #{captioning_transformer_forward.15} parent=1 // pred_fallthru
      _
    // Predicated region
    $region18: #{captioning_transformer_forward.15} parent=1 // pred_check
      _
    $region19: #{captioning_transformer_forward.15} parent=1 // pred_check_branch
      %126 = sbr.rel (0) target = $region21
    $region20: #{captioning_transformer_forward.15} parent=1 // pred_region
      %127 = dma.done [#allocation3], 256
    $region21: #{captioning_transformer_forward.15} parent=1 // pred_fallthru
      _
    %128 = vsyncpa [#allocation3], 1

// kernel: captioning_transformer_forward.11
$region0: #{captioning_transformer_forward.11}
  #allocation0 [shape = 'u32[]', space=smem, size = 0x4, offset = 0x4, fixed_abs, tag = 'smem constant byte address 0x4 - core index']
  #allocation1 [shape = 'u32[144,128]{1,0:T(1,128)}', space=vmem, size = 0x12000, scoped, tag = 'internal scratch']
  %s0 = inlined_call_operand.vmem [shape: f32[16,32], index: 0, kind: input, shape index: {}]
  %s1 = inlined_call_operand.vmem [shape: f32[32,2048], index: 1, kind: input, shape index: {}]
  %s2 = inlined_call_operand.vmem [shape: f32[1,2048], index: 2, kind: input, shape index: {}]
  %s3 = inlined_call_operand.vmem [shape: f32[2048,32], index: 3, kind: input, shape index: {}]
  %s4 = inlined_call_operand.vmem [shape: f32[1,32], index: 4, kind: input, shape index: {}]
  %s5 = inlined_call_operand.vmem [shape: f32[1,32], index: 5, kind: input, shape index: {}]
  %s6 = inlined_call_operand.vmem [shape: f32[1,32], index: 6, kind: input, shape index: {}]
  %s7 = inlined_call_operand.vmem [shape: f32[16,32], index: 7, kind: output, shape index: {}]
  %s8 = sld [smem:[#allocation0]]
  $region38: #{captioning_transformer_forward.11} parent=0
    _
  %s10 = ssub.s32 1, %s8
  %s11 = scalar_select 0, %s10, %s8
  // Predicated region
  $region2: #{captioning_transformer_forward.11} parent=0 // pred_check
    _
  $region3: #{captioning_transformer_forward.11} parent=0 // pred_check_branch
    %13 = sbr.rel (0) target = $region5
  $region4: #{captioning_transformer_forward.11} parent=0 // pred_region
    _
  $region5: #{captioning_transformer_forward.11} parent=0 // pred_fallthru
    _
  // Predicated region
  $region6: #{captioning_transformer_forward.11} parent=0 // pred_check
    _
  $region7: #{captioning_transformer_forward.11} parent=0 // pred_check_branch
    %15 = sbr.rel (0) target = $region9
  $region8: #{captioning_transformer_forward.11} parent=0 // pred_region
    _
  $region9: #{captioning_transformer_forward.11} parent=0 // pred_fallthru
    _
  // Predicated region
  $region10: #{captioning_transformer_forward.11} parent=0 // pred_check
    _
  $region11: #{captioning_transformer_forward.11} parent=0 // pred_check_branch
    %17 = sbr.rel (0) target = $region13
  $region12: #{captioning_transformer_forward.11} parent=0 // pred_region
    _
  $region13: #{captioning_transformer_forward.11} parent=0 // pred_fallthru
    _
  // Predicated region
  $region14: #{captioning_transformer_forward.11} parent=0 // pred_check
    _
  $region15: #{captioning_transformer_forward.11} parent=0 // pred_check_branch
    %19 = sbr.rel (0) target = $region17
  $region16: #{captioning_transformer_forward.11} parent=0 // pred_region
    _
  $region17: #{captioning_transformer_forward.11} parent=0 // pred_fallthru
    _
  // Predicated region
  $region18: #{captioning_transformer_forward.11} parent=0 // pred_check
    _
  $region19: #{captioning_transformer_forward.11} parent=0 // pred_check_branch
    %21 = sbr.rel (0) target = $region21
  $region20: #{captioning_transformer_forward.11} parent=0 // pred_region
    _
  $region21: #{captioning_transformer_forward.11} parent=0 // pred_fallthru
    _
  // Predicated region
  $region22: #{captioning_transformer_forward.11} parent=0 // pred_check
    _
  $region23: #{captioning_transformer_forward.11} parent=0 // pred_check_branch
    %23 = sbr.rel (0) target = $region25
  $region24: #{captioning_transformer_forward.11} parent=0 // pred_region
    _
  $region25: #{captioning_transformer_forward.11} parent=0 // pred_fallthru
    _
  // Predicated region
  $region26: #{captioning_transformer_forward.11} parent=0 // pred_check
    _
  $region27: #{captioning_transformer_forward.11} parent=0 // pred_check_branch
    %25 = sbr.rel (0) target = $region29
  $region28: #{captioning_transformer_forward.11} parent=0 // pred_region
    _
  $region29: #{captioning_transformer_forward.11} parent=0 // pred_fallthru
    _
  %v26 = vld [vmem:[%s0] sm:$0xff]
  %v27 = vld [vmem:[%s0 + $0x8] sm:$0xff]
  %v28 = vld [vmem:[%s1] sm:$0xff]
  %v29 = vld [vmem:[%s1 + $0x8] sm:$0xff]
  %v30 = vld [vmem:[%s1 + $0x10] sm:$0xff]
  %v31 = vld [vmem:[%s1 + $0x18] sm:$0xff]
  %v32 = vld [vmem:[%s1 + $0x20] sm:$0xff]
  %v33 = vld [vmem:[%s1 + $0x28] sm:$0xff]
  %v34 = vld [vmem:[%s1 + $0x30] sm:$0xff]
  %v35 = vld [vmem:[%s1 + $0x38] sm:$0xff]
  %v36 = vld [vmem:[%s1 + $0x40] sm:$0xff]
  %v37 = vld [vmem:[%s1 + $0x48] sm:$0xff]
  %v38 = vld [vmem:[%s1 + $0x50] sm:$0xff]
  %v39 = vld [vmem:[%s1 + $0x58] sm:$0xff]
  %v40 = vld [vmem:[%s1 + $0x60] sm:$0xff]
  %v41 = vld [vmem:[%s1 + $0x68] sm:$0xff]
  %v42 = vld [vmem:[%s1 + $0x70] sm:$0xff]
  %v43 = vld [vmem:[%s1 + $0x78] sm:$0xff]
  %v44 = vld [vmem:[%s1 + $0x80] sm:$0xff]
  %v45 = vld [vmem:[%s1 + $0x88] sm:$0xff]
  %v46 = vld [vmem:[%s1 + $0x90] sm:$0xff]
  %v47 = vld [vmem:[%s1 + $0x98] sm:$0xff]
  %v48 = vld [vmem:[%s1 + $0xa0] sm:$0xff]
  %v49 = vld [vmem:[%s1 + $0xa8] sm:$0xff]
  %v50 = vld [vmem:[%s1 + $0xb0] sm:$0xff]
  %v51 = vld [vmem:[%s1 + $0xb8] sm:$0xff]
  %v52 = vld [vmem:[%s1 + $0xc0] sm:$0xff]
  %v53 = vld [vmem:[%s1 + $0xc8] sm:$0xff]
  %v54 = vld [vmem:[%s1 + $0xd0] sm:$0xff]
  %v55 = vld [vmem:[%s1 + $0xd8] sm:$0xff]
  %v56 = vld [vmem:[%s1 + $0xe0] sm:$0xff]
  %v57 = vld [vmem:[%s1 + $0xe8] sm:$0xff]
  %v58 = vld [vmem:[%s1 + $0xf0] sm:$0xff]
  %v59 = vld [vmem:[%s1 + $0xf8] sm:$0xff]
  %v60 = vld [vmem:[%s1 + $0x100] sm:$0xff]
  %v61 = vld [vmem:[%s1 + $0x108] sm:$0xff]
  %v62 = vld [vmem:[%s1 + $0x110] sm:$0xff]
  %v63 = vld [vmem:[%s1 + $0x118] sm:$0xff]
  %v64 = vld [vmem:[%s1 + $0x120] sm:$0xff]
  %v65 = vld [vmem:[%s1 + $0x128] sm:$0xff]
  %v66 = vld [vmem:[%s1 + $0x130] sm:$0xff]
  %v67 = vld [vmem:[%s1 + $0x138] sm:$0xff]
  %v68 = vld [vmem:[%s1 + $0x140] sm:$0xff]
  %v69 = vld [vmem:[%s1 + $0x148] sm:$0xff]
  %v70 = vld [vmem:[%s1 + $0x150] sm:$0xff]
  %v71 = vld [vmem:[%s1 + $0x158] sm:$0xff]
  %v72 = vld [vmem:[%s1 + $0x160] sm:$0xff]
  %v73 = vld [vmem:[%s1 + $0x168] sm:$0xff]
  %v74 = vld [vmem:[%s1 + $0x170] sm:$0xff]
  %v75 = vld [vmem:[%s1 + $0x178] sm:$0xff]
  %v76 = vld [vmem:[%s1 + $0x180] sm:$0xff]
  %v77 = vld [vmem:[%s1 + $0x188] sm:$0xff]
  %v78 = vld [vmem:[%s1 + $0x190] sm:$0xff]
  %v79 = vld [vmem:[%s1 + $0x198] sm:$0xff]
  %v80 = vld [vmem:[%s1 + $0x1a0] sm:$0xff]
  %v81 = vld [vmem:[%s1 + $0x1a8] sm:$0xff]
  %v82 = vld [vmem:[%s1 + $0x1b0] sm:$0xff]
  %v83 = vld [vmem:[%s1 + $0x1b8] sm:$0xff]
  %v84 = vld [vmem:[%s1 + $0x1c0] sm:$0xff]
  %v85 = vld [vmem:[%s1 + $0x1c8] sm:$0xff]
  %v86 = vld [vmem:[%s1 + $0x1d0] sm:$0xff]
  %v87 = vld [vmem:[%s1 + $0x1d8] sm:$0xff]
  %v88 = vld [vmem:[%s1 + $0x1e0] sm:$0xff]
  %v89 = vld [vmem:[%s1 + $0x1e8] sm:$0xff]
  %v90 = vld [vmem:[%s1 + $0x1f0] sm:$0xff]
  %v91 = vld [vmem:[%s1 + $0x1f8] sm:$0xff]
  %v92 = vld [vmem:[%s2] sm:$0xff]
  %v93 = vld [vmem:[%s2 + $0x8] sm:$0xff]
  %v96 = vlaneseq
  %v97 = vshrl.u32 %v96, 7
  %v98 = vsub.s32 0, %v97
  %v99 = vrot.slane %v92, %v98
  %v100 = vlaneseq
  %v101 = vshrl.u32 %v100, 7
  %v102 = vsub.s32 1, %v101
  %v103 = vrot.slane %v92, %v102
  %v104 = vlaneseq
  %v105 = vshrl.u32 %v104, 7
  %v106 = vsub.s32 2, %v105
  %v107 = vrot.slane %v92, %v106
  %v108 = vlaneseq
  %v109 = vshrl.u32 %v108, 7
  %v110 = vsub.s32 3, %v109
  %v111 = vrot.slane %v92, %v110
  %v112 = vlaneseq
  %v113 = vshrl.u32 %v112, 7
  %v114 = vsub.s32 4, %v113
  %v115 = vrot.slane %v92, %v114
  %v116 = vlaneseq
  %v117 = vshrl.u32 %v116, 7
  %v118 = vsub.s32 5, %v117
  %v119 = vrot.slane %v92, %v118
  %v120 = vlaneseq
  %v121 = vshrl.u32 %v120, 7
  %v122 = vsub.s32 6, %v121
  %v123 = vrot.slane %v92, %v122
  %v124 = vlaneseq
  %v125 = vshrl.u32 %v124, 7
  %v126 = vsub.s32 7, %v125
  %v127 = vrot.slane %v92, %v126
  %v128 = vlaneseq
  %v129 = vshrl.u32 %v128, 7
  %v130 = vsub.s32 0, %v129
  %v131 = vrot.slane %v93, %v130
  %v132 = vlaneseq
  %v133 = vshrl.u32 %v132, 7
  %v134 = vsub.s32 1, %v133
  %v135 = vrot.slane %v93, %v134
  %v136 = vlaneseq
  %v137 = vshrl.u32 %v136, 7
  %v138 = vsub.s32 2, %v137
  %v139 = vrot.slane %v93, %v138
  %v140 = vlaneseq
  %v141 = vshrl.u32 %v140, 7
  %v142 = vsub.s32 3, %v141
  %v143 = vrot.slane %v93, %v142
  %v144 = vlaneseq
  %v145 = vshrl.u32 %v144, 7
  %v146 = vsub.s32 4, %v145
  %v147 = vrot.slane %v93, %v146
  %v148 = vlaneseq
  %v149 = vshrl.u32 %v148, 7
  %v150 = vsub.s32 5, %v149
  %v151 = vrot.slane %v93, %v150
  %v152 = vlaneseq
  %v153 = vshrl.u32 %v152, 7
  %v154 = vsub.s32 6, %v153
  %v155 = vrot.slane %v93, %v154
  %v156 = vlaneseq
  %v157 = vshrl.u32 %v156, 7
  %v158 = vsub.s32 7, %v157
  %v159 = vrot.slane %v93, %v158
  %vm176 = vcmask 261120
  %v178 = vsel %vm176, %v26, 0
  %v181 = vsel %vm176, %v27, 0
  %183 = vmatprep.subr.mxu0 %v29
  %184 = vmatpush1.msra.mxu0 %v28
  %185 = vmatprep.subr.mxu0 %v45
  %186 = vmatpush1.msra.mxu0 %v44
  %187 = vmatprep.subr.mxu0 %v61
  %188 = vmatpush1.msra.mxu0 %v60
  %189 = vmatprep.subr.mxu0 %v77
  %190 = vmatpush1.msra.mxu0 %v76
  %191 = vmatprep.subr.mxu0 0.0
  %192 = vmatpush1.msra.mxu0 0.0
  %193 = vmatprep.subr.mxu0 0.0
  %194 = vmatpush1.msra.mxu0 0.0
  %195 = vmatprep.subr.mxu0 0.0
  %196 = vmatpush1.msra.mxu0 0.0
  %197 = vmatprep.subr.mxu0 0.0
  %198 = vmatpush1.msra.mxu0 0.0
  %199 = vmatprep.subr.mxu0 0.0
  %200 = vmatpush1.msra.mxu0 0.0
  %201 = vmatprep.subr.mxu0 0.0
  %202 = vmatpush1.msra.mxu0 0.0
  %203 = vmatprep.subr.mxu0 0.0
  %204 = vmatpush1.msra.mxu0 0.0
  %205 = vmatprep.subr.mxu0 0.0
  %206 = vmatpush1.msra.mxu0 0.0
  %207 = vmatprep.subr.mxu0 0.0
  %208 = vmatpush1.msra.mxu0 0.0
  %209 = vmatprep.subr.mxu0 0.0
  %210 = vmatpush1.msra.mxu0 0.0
  %211 = vmatprep.subr.mxu0 0.0
  %212 = vmatpush1.msra.mxu0 0.0
  %213 = vmatprep.subr.mxu0 0.0
  %214 = vmatpush1.msra.mxu0 0.0
  %215 = vmatprep.subr.mxu0 0.0
  %216 = vmatpush1.msra.mxu0 0.0
  %217 = vmatprep.subr.mxu0 0.0
  %218 = vmatpush1.msra.mxu0 0.0
  %219 = vmatprep.subr.mxu0 0.0
  %220 = vmatpush1.msra.mxu0 0.0
  %221 = vmatprep.subr.mxu0 0.0
  %222 = vmatpush1.msra.mxu0 0.0
  %223 = vmatprep.subr.mxu0 0.0
  %224 = vmatpush1.msra.mxu0 0.0
  %225 = vmatprep.subr.mxu0 0.0
  %226 = vmatpush1.msra.mxu0 0.0
  %227 = vmatprep.subr.mxu0 0.0
  %228 = vmatpush1.msra.mxu0 0.0
  %229 = vmatprep.subr.mxu0 0.0
  %230 = vmatpush1.msra.mxu0 0.0
  %231 = vmatprep.subr.mxu0 0.0
  %232 = vmatpush1.msra.mxu0 0.0
  %233 = vmatprep.subr.mxu0 0.0
  %234 = vmatpush1.msra.mxu0 0.0
  %235 = vmatprep.subr.mxu0 0.0
  %236 = vmatpush1.msra.mxu0 0.0
  %237 = vmatprep.subr.mxu0 0.0
  %238 = vmatpush1.msra.mxu0 0.0
  %239 = vmatprep.subr.mxu0 0.0
  %240 = vmatpush1.msra.mxu0 0.0
  %241 = vmatprep.subr.mxu0 0.0
  %242 = vmatpush1.msra.mxu0 0.0
  %243 = vmatprep.subr.mxu0 0.0
  %244 = vmatpush1.msra.mxu0 0.0
  %245 = vmatprep.subr.mxu0 0.0
  %246 = vmatpush1.msra.mxu0 0.0
  %247 = vmatprep.mubr.f32.mxu0 0.0
  %248 = vmatmul.mubr.f32.gmra.mrb[0].mxu0 %v178
  %v249 = vpop.f32.mrb[0].mxu0
  %v250 = vadd.f32 %v99, %v249
  %v251 = vpop.f32.mrb[0].mxu0
  %v252 = vadd.f32 %v103, %v251
  %253 = vmatprep.mubr.f32.mxu0 0.0
  %254 = vmatmul.mubr.f32.gmra.mrb[0].mxu0 %v181
  %v255 = vpop.f32.mrb[0].mxu0
  %v256 = vadd.f32 %v99, %v255
  %v257 = vpop.f32.mrb[0].mxu0
  %v258 = vadd.f32 %v103, %v257
  %259 = vdwg.mxu0
  %260 = vmatprep.subr.mxu0 %v31
  %261 = vmatpush1.msra.mxu0 %v30
  %262 = vmatprep.subr.mxu0 %v47
  %263 = vmatpush1.msra.mxu0 %v46
  %264 = vmatprep.subr.mxu0 %v63
  %265 = vmatpush1.msra.mxu0 %v62
  %266 = vmatprep.subr.mxu0 %v79
  %267 = vmatpush1.msra.mxu0 %v78
  %268 = vmatprep.subr.mxu0 0.0
  %269 = vmatpush1.msra.mxu0 0.0
  %270 = vmatprep.subr.mxu0 0.0
  %271 = vmatpush1.msra.mxu0 0.0
  %272 = vmatprep.subr.mxu0 0.0
  %273 = vmatpush1.msra.mxu0 0.0
  %274 = vmatprep.subr.mxu0 0.0
  %275 = vmatpush1.msra.mxu0 0.0
  %276 = vmatprep.subr.mxu0 0.0
  %277 = vmatpush1.msra.mxu0 0.0
  %278 = vmatprep.subr.mxu0 0.0
  %279 = vmatpush1.msra.mxu0 0.0
  %280 = vmatprep.subr.mxu0 0.0
  %281 = vmatpush1.msra.mxu0 0.0
  %282 = vmatprep.subr.mxu0 0.0
  %283 = vmatpush1.msra.mxu0 0.0
  %284 = vmatprep.subr.mxu0 0.0
  %285 = vmatpush1.msra.mxu0 0.0
  %286 = vmatprep.subr.mxu0 0.0
  %287 = vmatpush1.msra.mxu0 0.0
  %288 = vmatprep.subr.mxu0 0.0
  %289 = vmatpush1.msra.mxu0 0.0
  %290 = vmatprep.subr.mxu0 0.0
  %291 = vmatpush1.msra.mxu0 0.0
  %292 = vmatprep.subr.mxu0 0.0
  %293 = vmatpush1.msra.mxu0 0.0
  %294 = vmatprep.subr.mxu0 0.0
  %295 = vmatpush1.msra.mxu0 0.0
  %296 = vmatprep.subr.mxu0 0.0
  %297 = vmatpush1.msra.mxu0 0.0
  %298 = vmatprep.subr.mxu0 0.0
  %299 = vmatpush1.msra.mxu0 0.0
  %300 = vmatprep.subr.mxu0 0.0
  %301 = vmatpush1.msra.mxu0 0.0
  %302 = vmatprep.subr.mxu0 0.0
  %303 = vmatpush1.msra.mxu0 0.0
  %304 = vmatprep.subr.mxu0 0.0
  %305 = vmatpush1.msra.mxu0 0.0
  %306 = vmatprep.subr.mxu0 0.0
  %307 = vmatpush1.msra.mxu0 0.0
  %308 = vmatprep.subr.mxu0 0.0
  %309 = vmatpush1.msra.mxu0 0.0
  %310 = vmatprep.subr.mxu0 0.0
  %311 = vmatpush1.msra.mxu0 0.0
  %312 = vmatprep.subr.mxu0 0.0
  %313 = vmatpush1.msra.mxu0 0.0
  %314 = vmatprep.subr.mxu0 0.0
  %315 = vmatpush1.msra.mxu0 0.0
  %316 = vmatprep.subr.mxu0 0.0
  %317 = vmatpush1.msra.mxu0 0.0
  %318 = vmatprep.subr.mxu0 0.0
  %319 = vmatpush1.msra.mxu0 0.0
  %320 = vmatprep.subr.mxu0 0.0
  %321 = vmatpush1.msra.mxu0 0.0
  %322 = vmatprep.subr.mxu0 0.0
  %323 = vmatpush1.msra.mxu0 0.0
  %324 = vmatprep.mubr.f32.mxu0 0.0
  %325 = vmatmul.mubr.f32.gmra.mrb[0].mxu0 %v178
  %v326 = vpop.f32.mrb[0].mxu0
  %v327 = vadd.f32 %v107, %v326
  %v328 = vpop.f32.mrb[0].mxu0
  %v329 = vadd.f32 %v111, %v328
  %330 = vmatprep.mubr.f32.mxu0 0.0
  %331 = vmatmul.mubr.f32.gmra.mrb[0].mxu0 %v181
  %v332 = vpop.f32.mrb[0].mxu0
  %v333 = vadd.f32 %v107, %v332
  %v334 = vpop.f32.mrb[0].mxu0
  %v335 = vadd.f32 %v111, %v334
  %336 = vdwg.mxu0
  %337 = vmatprep.subr.mxu0 %v33
  %338 = vmatpush1.msra.mxu0 %v32
  %339 = vmatprep.subr.mxu0 %v49
  %340 = vmatpush1.msra.mxu0 %v48
  %341 = vmatprep.subr.mxu0 %v65
  %342 = vmatpush1.msra.mxu0 %v64
  %343 = vmatprep.subr.mxu0 %v81
  %344 = vmatpush1.msra.mxu0 %v80
  %345 = vmatprep.subr.mxu0 0.0
  %346 = vmatpush1.msra.mxu0 0.0
  %347 = vmatprep.subr.mxu0 0.0
  %348 = vmatpush1.msra.mxu0 0.0
  %349 = vmatprep.subr.mxu0 0.0
  %350 = vmatpush1.msra.mxu0 0.0
  %351 = vmatprep.subr.mxu0 0.0
  %352 = vmatpush1.msra.mxu0 0.0
  %353 = vmatprep.subr.mxu0 0.0
  %354 = vmatpush1.msra.mxu0 0.0
  %355 = vmatprep.subr.mxu0 0.0
  %356 = vmatpush1.msra.mxu0 0.0
  %357 = vmatprep.subr.mxu0 0.0
  %358 = vmatpush1.msra.mxu0 0.0
  %359 = vmatprep.subr.mxu0 0.0
  %360 = vmatpush1.msra.mxu0 0.0
  %361 = vmatprep.subr.mxu0 0.0
  %362 = vmatpush1.msra.mxu0 0.0
  %363 = vmatprep.subr.mxu0 0.0
  %364 = vmatpush1.msra.mxu0 0.0
  %365 = vmatprep.subr.mxu0 0.0
  %366 = vmatpush1.msra.mxu0 0.0
  %367 = vmatprep.subr.mxu0 0.0
  %368 = vmatpush1.msra.mxu0 0.0
  %369 = vmatprep.subr.mxu0 0.0
  %370 = vmatpush1.msra.mxu0 0.0
  %371 = vmatprep.subr.mxu0 0.0
  %372 = vmatpush1.msra.mxu0 0.0
  %373 = vmatprep.subr.mxu0 0.0
  %374 = vmatpush1.msra.mxu0 0.0
  %375 = vmatprep.subr.mxu0 0.0
  %376 = vmatpush1.msra.mxu0 0.0
  %377 = vmatprep.subr.mxu0 0.0
  %378 = vmatpush1.msra.mxu0 0.0
  %379 = vmatprep.subr.mxu0 0.0
  %380 = vmatpush1.msra.mxu0 0.0
  %381 = vmatprep.subr.mxu0 0.0
  %382 = vmatpush1.msra.mxu0 0.0
  %383 = vmatprep.subr.mxu0 0.0
  %384 = vmatpush1.msra.mxu0 0.0
  %385 = vmatprep.subr.mxu0 0.0
  %386 = vmatpush1.msra.mxu0 0.0
  %387 = vmatprep.subr.mxu0 0.0
  %388 = vmatpush1.msra.mxu0 0.0
  %389 = vmatprep.subr.mxu0 0.0
  %390 = vmatpush1.msra.mxu0 0.0
  %391 = vmatprep.subr.mxu0 0.0
  %392 = vmatpush1.msra.mxu0 0.0
  %393 = vmatprep.subr.mxu0 0.0
  %394 = vmatpush1.msra.mxu0 0.0
  %395 = vmatprep.subr.mxu0 0.0
  %396 = vmatpush1.msra.mxu0 0.0
  %397 = vmatprep.subr.mxu0 0.0
  %398 = vmatpush1.msra.mxu0 0.0
  %399 = vmatprep.subr.mxu0 0.0
  %400 = vmatpush1.msra.mxu0 0.0
  %401 = vmatprep.mubr.f32.mxu0 0.0
  %402 = vmatmul.mubr.f32.gmra.mrb[0].mxu0 %v178
  %v403 = vpop.f32.mrb[0].mxu0
  %v404 = vadd.f32 %v115, %v403
  %v405 = vpop.f32.mrb[0].mxu0
  %v406 = vadd.f32 %v119, %v405
  %407 = vmatprep.mubr.f32.mxu0 0.0
  %408 = vmatmul.mubr.f32.gmra.mrb[0].mxu0 %v181
  %v409 = vpop.f32.mrb[0].mxu0
  %v410 = vadd.f32 %v115, %v409
  %v411 = vpop.f32.mrb[0].mxu0
  %v412 = vadd.f32 %v119, %v411
  %413 = vdwg.mxu0
  %414 = vmatprep.subr.mxu0 %v35
  %415 = vmatpush1.msra.mxu0 %v34
  %416 = vmatprep.subr.mxu0 %v51
  %417 = vmatpush1.msra.mxu0 %v50
  %418 = vmatprep.subr.mxu0 %v67
  %419 = vmatpush1.msra.mxu0 %v66
  %420 = vmatprep.subr.mxu0 %v83
  %421 = vmatpush1.msra.mxu0 %v82
  %422 = vmatprep.subr.mxu0 0.0
  %423 = vmatpush1.msra.mxu0 0.0
  %424 = vmatprep.subr.mxu0 0.0
  %425 = vmatpush1.msra.mxu0 0.0
  %426 = vmatprep.subr.mxu0 0.0
  %427 = vmatpush1.msra.mxu0 0.0
  %428 = vmatprep.subr.mxu0 0.0
  %429 = vmatpush1.msra.mxu0 0.0
  %430 = vmatprep.subr.mxu0 0.0
  %431 = vmatpush1.msra.mxu0 0.0
  %432 = vmatprep.subr.mxu0 0.0
  %433 = vmatpush1.msra.mxu0 0.0
  %434 = vmatprep.subr.mxu0 0.0
  %435 = vmatpush1.msra.mxu0 0.0
  %436 = vmatprep.subr.mxu0 0.0
  %437 = vmatpush1.msra.mxu0 0.0
  %438 = vmatprep.subr.mxu0 0.0
  %439 = vmatpush1.msra.mxu0 0.0
  %440 = vmatprep.subr.mxu0 0.0
  %441 = vmatpush1.msra.mxu0 0.0
  %442 = vmatprep.subr.mxu0 0.0
  %443 = vmatpush1.msra.mxu0 0.0
  %444 = vmatprep.subr.mxu0 0.0
  %445 = vmatpush1.msra.mxu0 0.0
  %446 = vmatprep.subr.mxu0 0.0
  %447 = vmatpush1.msra.mxu0 0.0
  %448 = vmatprep.subr.mxu0 0.0
  %449 = vmatpush1.msra.mxu0 0.0
  %450 = vmatprep.subr.mxu0 0.0
  %451 = vmatpush1.msra.mxu0 0.0
  %452 = vmatprep.subr.mxu0 0.0
  %453 = vmatpush1.msra.mxu0 0.0
  %454 = vmatprep.subr.mxu0 0.0
  %455 = vmatpush1.msra.mxu0 0.0
  %456 = vmatprep.subr.mxu0 0.0
  %457 = vmatpush1.msra.mxu0 0.0
  %458 = vmatprep.subr.mxu0 0.0
  %459 = vmatpush1.msra.mxu0 0.0
  %460 = vmatprep.subr.mxu0 0.0
  %461 = vmatpush1.msra.mxu0 0.0
  %462 = vmatprep.subr.mxu0 0.0
  %463 = vmatpush1.msra.mxu0 0.0
  %464 = vmatprep.subr.mxu0 0.0
  %465 = vmatpush1.msra.mxu0 0.0
  %466 = vmatprep.subr.mxu0 0.0
  %467 = vmatpush1.msra.mxu0 0.0
  %468 = vmatprep.subr.mxu0 0.0
  %469 = vmatpush1.msra.mxu0 0.0
  %470 = vmatprep.subr.mxu0 0.0
  %471 = vmatpush1.msra.mxu0 0.0
  %472 = vmatprep.subr.mxu0 0.0
  %473 = vmatpush1.msra.mxu0 0.0
  %474 = vmatprep.subr.mxu0 0.0
  %475 = vmatpush1.msra.mxu0 0.0
  %476 = vmatprep.subr.mxu0 0.0
  %477 = vmatpush1.msra.mxu0 0.0
  %478 = vmatprep.mubr.f32.mxu0 0.0
  %479 = vmatmul.mubr.f32.gmra.mrb[0].mxu0 %v178
  %v480 = vpop.f32.mrb[0].mxu0
  %v481 = vadd.f32 %v123, %v480
  %v482 = vpop.f32.mrb[0].mxu0
  %v483 = vadd.f32 %v127, %v482
  %484 = vmatprep.mubr.f32.mxu0 0.0
  %485 = vmatmul.mubr.f32.gmra.mrb[0].mxu0 %v181
  %v486 = vpop.f32.mrb[0].mxu0
  %v487 = vadd.f32 %v123, %v486
  %v488 = vpop.f32.mrb[0].mxu0
  %v489 = vadd.f32 %v127, %v488
  %490 = vdwg.mxu0
  %491 = vmatprep.subr.mxu0 %v37
  %492 = vmatpush1.msra.mxu0 %v36
  %493 = vmatprep.subr.mxu0 %v53
  %494 = vmatpush1.msra.mxu0 %v52
  %495 = vmatprep.subr.mxu0 %v69
  %496 = vmatpush1.msra.mxu0 %v68
  %497 = vmatprep.subr.mxu0 %v85
  %498 = vmatpush1.msra.mxu0 %v84
  %499 = vmatprep.subr.mxu0 0.0
  %500 = vmatpush1.msra.mxu0 0.0
  %501 = vmatprep.subr.mxu0 0.0
  %502 = vmatpush1.msra.mxu0 0.0
  %503 = vmatprep.subr.mxu0 0.0
  %504 = vmatpush1.msra.mxu0 0.0
  %505 = vmatprep.subr.mxu0 0.0
  %506 = vmatpush1.msra.mxu0 0.0
  %507 = vmatprep.subr.mxu0 0.0
  %508 = vmatpush1.msra.mxu0 0.0
  %509 = vmatprep.subr.mxu0 0.0
  %510 = vmatpush1.msra.mxu0 0.0
  %511 = vmatprep.subr.mxu0 0.0
  %512 = vmatpush1.msra.mxu0 0.0
  %513 = vmatprep.subr.mxu0 0.0
  %514 = vmatpush1.msra.mxu0 0.0
  %515 = vmatprep.subr.mxu0 0.0
  %516 = vmatpush1.msra.mxu0 0.0
  %517 = vmatprep.subr.mxu0 0.0
  %518 = vmatpush1.msra.mxu0 0.0
  %519 = vmatprep.subr.mxu0 0.0
  %520 = vmatpush1.msra.mxu0 0.0
  %521 = vmatprep.subr.mxu0 0.0
  %522 = vmatpush1.msra.mxu0 0.0
  %523 = vmatprep.subr.mxu0 0.0
  %524 = vmatpush1.msra.mxu0 0.0
  %525 = vmatprep.subr.mxu0 0.0
  %526 = vmatpush1.msra.mxu0 0.0
  %527 = vmatprep.subr.mxu0 0.0
  %528 = vmatpush1.msra.mxu0 0.0
  %529 = vmatprep.subr.mxu0 0.0
  %530 = vmatpush1.msra.mxu0 0.0
  %531 = vmatprep.subr.mxu0 0.0
  %532 = vmatpush1.msra.mxu0 0.0
  %533 = vmatprep.subr.mxu0 0.0
  %534 = vmatpush1.msra.mxu0 0.0
  %535 = vmatprep.subr.mxu0 0.0
  %536 = vmatpush1.msra.mxu0 0.0
  %537 = vmatprep.subr.mxu0 0.0
  %538 = vmatpush1.msra.mxu0 0.0
  %539 = vmatprep.subr.mxu0 0.0
  %540 = vmatpush1.msra.mxu0 0.0
  %541 = vmatprep.subr.mxu0 0.0
  %542 = vmatpush1.msra.mxu0 0.0
  %543 = vmatprep.subr.mxu0 0.0
  %544 = vmatpush1.msra.mxu0 0.0
  %545 = vmatprep.subr.mxu0 0.0
  %546 = vmatpush1.msra.mxu0 0.0
  %547 = vmatprep.subr.mxu0 0.0
  %548 = vmatpush1.msra.mxu0 0.0
  %549 = vmatprep.subr.mxu0 0.0
  %550 = vmatpush1.msra.mxu0 0.0
  %551 = vmatprep.subr.mxu0 0.0
  %552 = vmatpush1.msra.mxu0 0.0
  %553 = vmatprep.subr.mxu0 0.0
  %554 = vmatpush1.msra.mxu0 0.0
  %555 = vmatprep.mubr.f32.mxu0 0.0
  %556 = vmatmul.mubr.f32.gmra.mrb[0].mxu0 %v178
  %v557 = vpop.f32.mrb[0].mxu0
  %v558 = vadd.f32 %v131, %v557
  %v559 = vpop.f32.mrb[0].mxu0
  %v560 = vadd.f32 %v135, %v559
  %561 = vmatprep.mubr.f32.mxu0 0.0
  %562 = vmatmul.mubr.f32.gmra.mrb[0].mxu0 %v181
  %v563 = vpop.f32.mrb[0].mxu0
  %v564 = vadd.f32 %v131, %v563
  %v565 = vpop.f32.mrb[0].mxu0
  %v566 = vadd.f32 %v135, %v565
  %567 = vdwg.mxu0
  %568 = vmatprep.subr.mxu0 %v39
  %569 = vmatpush1.msra.mxu0 %v38
  %570 = vmatprep.subr.mxu0 %v55
  %571 = vmatpush1.msra.mxu0 %v54
  %572 = vmatprep.subr.mxu0 %v71
  %573 = vmatpush1.msra.mxu0 %v70
  %574 = vmatprep.subr.mxu0 %v87
  %575 = vmatpush1.msra.mxu0 %v86
  %576 = vmatprep.subr.mxu0 0.0
  %577 = vmatpush1.msra.mxu0 0.0
  %578 = vmatprep.subr.mxu0 0.0
  %579 = vmatpush1.msra.mxu0 0.0
  %580 = vmatprep.subr.mxu0 0.0
  %581 = vmatpush1.msra.mxu0 0.0
  %582 = vmatprep.subr.mxu0 0.0
  %583 = vmatpush1.msra.mxu0 0.0
  %584 = vmatprep.subr.mxu0 0.0
  %585 = vmatpush1.msra.mxu0 0.0
  %586 = vmatprep.subr.mxu0 0.0
  %587 = vmatpush1.msra.mxu0 0.0
  %588 = vmatprep.subr.mxu0 0.0
  %589 = vmatpush1.msra.mxu0 0.0
  %590 = vmatprep.subr.mxu0 0.0
  %591 = vmatpush1.msra.mxu0 0.0
  %592 = vmatprep.subr.mxu0 0.0
  %593 = vmatpush1.msra.mxu0 0.0
  %594 = vmatprep.subr.mxu0 0.0
  %595 = vmatpush1.msra.mxu0 0.0
  %596 = vmatprep.subr.mxu0 0.0
  %597 = vmatpush1.msra.mxu0 0.0
  %598 = vmatprep.subr.mxu0 0.0
  %599 = vmatpush1.msra.mxu0 0.0
  %600 = vmatprep.subr.mxu0 0.0
  %601 = vmatpush1.msra.mxu0 0.0
  %602 = vmatprep.subr.mxu0 0.0
  %603 = vmatpush1.msra.mxu0 0.0
  %604 = vmatprep.subr.mxu0 0.0
  %605 = vmatpush1.msra.mxu0 0.0
  %606 = vmatprep.subr.mxu0 0.0
  %607 = vmatpush1.msra.mxu0 0.0
  %608 = vmatprep.subr.mxu0 0.0
  %609 = vmatpush1.msra.mxu0 0.0
  %610 = vmatprep.subr.mxu0 0.0
  %611 = vmatpush1.msra.mxu0 0.0
  %612 = vmatprep.subr.mxu0 0.0
  %613 = vmatpush1.msra.mxu0 0.0
  %614 = vmatprep.subr.mxu0 0.0
  %615 = vmatpush1.msra.mxu0 0.0
  %616 = vmatprep.subr.mxu0 0.0
  %617 = vmatpush1.msra.mxu0 0.0
  %618 = vmatprep.subr.mxu0 0.0
  %619 = vmatpush1.msra.mxu0 0.0
  %620 = vmatprep.subr.mxu0 0.0
  %621 = vmatpush1.msra.mxu0 0.0
  %622 = vmatprep.subr.mxu0 0.0
  %623 = vmatpush1.msra.mxu0 0.0
  %624 = vmatprep.subr.mxu0 0.0
  %625 = vmatpush1.msra.mxu0 0.0
  %626 = vmatprep.subr.mxu0 0.0
  %627 = vmatpush1.msra.mxu0 0.0
  %628 = vmatprep.subr.mxu0 0.0
  %629 = vmatpush1.msra.mxu0 0.0
  %630 = vmatprep.subr.mxu0 0.0
  %631 = vmatpush1.msra.mxu0 0.0
  %632 = vmatprep.mubr.f32.mxu0 0.0
  %633 = vmatmul.mubr.f32.gmra.mrb[0].mxu0 %v178
  %v634 = vpop.f32.mrb[0].mxu0
  %v635 = vadd.f32 %v139, %v634
  %v636 = vpop.f32.mrb[0].mxu0
  %v637 = vadd.f32 %v143, %v636
  %638 = vmatprep.mubr.f32.mxu0 0.0
  %639 = vmatmul.mubr.f32.gmra.mrb[0].mxu0 %v181
  %v640 = vpop.f32.mrb[0].mxu0
  %v641 = vadd.f32 %v139, %v640
  %v642 = vpop.f32.mrb[0].mxu0
  %v643 = vadd.f32 %v143, %v642
  %644 = vdwg.mxu0
  %645 = vmatprep.subr.mxu0 %v41
  %646 = vmatpush1.msra.mxu0 %v40
  %647 = vmatprep.subr.mxu0 %v57
  %648 = vmatpush1.msra.mxu0 %v56
  %649 = vmatprep.subr.mxu0 %v73
  %650 = vmatpush1.msra.mxu0 %v72
  %651 = vmatprep.subr.mxu0 %v89
  %652 = vmatpush1.msra.mxu0 %v88
  %653 = vmatprep.subr.mxu0 0.0
  %654 = vmatpush1.msra.mxu0 0.0
  %655 = vmatprep.subr.mxu0 0.0
  %656 = vmatpush1.msra.mxu0 0.0
  %657 = vmatprep.subr.mxu0 0.0
  %658 = vmatpush1.msra.mxu0 0.0
  %659 = vmatprep.subr.mxu0 0.0
  %660 = vmatpush1.msra.mxu0 0.0
  %661 = vmatprep.subr.mxu0 0.0
  %662 = vmatpush1.msra.mxu0 0.0
  %663 = vmatprep.subr.mxu0 0.0
  %664 = vmatpush1.msra.mxu0 0.0
  %665 = vmatprep.subr.mxu0 0.0
  %666 = vmatpush1.msra.mxu0 0.0
  %667 = vmatprep.subr.mxu0 0.0
  %668 = vmatpush1.msra.mxu0 0.0
  %669 = vmatprep.subr.mxu0 0.0
  %670 = vmatpush1.msra.mxu0 0.0
  %671 = vmatprep.subr.mxu0 0.0
  %672 = vmatpush1.msra.mxu0 0.0
  %673 = vmatprep.subr.mxu0 0.0
  %674 = vmatpush1.msra.mxu0 0.0
  %675 = vmatprep.subr.mxu0 0.0
  %676 = vmatpush1.msra.mxu0 0.0
  %677 = vmatprep.subr.mxu0 0.0
  %678 = vmatpush1.msra.mxu0 0.0
  %679 = vmatprep.subr.mxu0 0.0
  %680 = vmatpush1.msra.mxu0 0.0
  %681 = vmatprep.subr.mxu0 0.0
  %682 = vmatpush1.msra.mxu0 0.0
  %683 = vmatprep.subr.mxu0 0.0
  %684 = vmatpush1.msra.mxu0 0.0
  %685 = vmatprep.subr.mxu0 0.0
  %686 = vmatpush1.msra.mxu0 0.0
  %687 = vmatprep.subr.mxu0 0.0
  %688 = vmatpush1.msra.mxu0 0.0
  %689 = vmatprep.subr.mxu0 0.0
  %690 = vmatpush1.msra.mxu0 0.0
  %691 = vmatprep.subr.mxu0 0.0
  %692 = vmatpush1.msra.mxu0 0.0
  %693 = vmatprep.subr.mxu0 0.0
  %694 = vmatpush1.msra.mxu0 0.0
  %695 = vmatprep.subr.mxu0 0.0
  %696 = vmatpush1.msra.mxu0 0.0
  %697 = vmatprep.subr.mxu0 0.0
  %698 = vmatpush1.msra.mxu0 0.0
  %699 = vmatprep.subr.mxu0 0.0
  %700 = vmatpush1.msra.mxu0 0.0
  %701 = vmatprep.subr.mxu0 0.0
  %702 = vmatpush1.msra.mxu0 0.0
  %703 = vmatprep.subr.mxu0 0.0
  %704 = vmatpush1.msra.mxu0 0.0
  %705 = vmatprep.subr.mxu0 0.0
  %706 = vmatpush1.msra.mxu0 0.0
  %707 = vmatprep.subr.mxu0 0.0
  %708 = vmatpush1.msra.mxu0 0.0
  %709 = vmatprep.mubr.f32.mxu0 0.0
  %710 = vmatmul.mubr.f32.gmra.mrb[0].mxu0 %v178
  %v711 = vpop.f32.mrb[0].mxu0
  %v712 = vadd.f32 %v147, %v711
  %v713 = vpop.f32.mrb[0].mxu0
  %v714 = vadd.f32 %v151, %v713
  %715 = vmatprep.mubr.f32.mxu0 0.0
  %716 = vmatmul.mubr.f32.gmra.mrb[0].mxu0 %v181
  %v717 = vpop.f32.mrb[0].mxu0
  %v718 = vadd.f32 %v147, %v717
  %v719 = vpop.f32.mrb[0].mxu0
  %v720 = vadd.f32 %v151, %v719
  %721 = vdwg.mxu0
  %722 = vmatprep.subr.mxu0 %v43
  %723 = vmatpush1.msra.mxu0 %v42
  %724 = vmatprep.subr.mxu0 %v59
  %725 = vmatpush1.msra.mxu0 %v58
  %726 = vmatprep.subr.mxu0 %v75
  %727 = vmatpush1.msra.mxu0 %v74
  %728 = vmatprep.subr.mxu0 %v91
  %729 = vmatpush1.msra.mxu0 %v90
  %730 = vmatprep.subr.mxu0 0.0
  %731 = vmatpush1.msra.mxu0 0.0
  %732 = vmatprep.subr.mxu0 0.0
  %733 = vmatpush1.msra.mxu0 0.0
  %734 = vmatprep.subr.mxu0 0.0
  %735 = vmatpush1.msra.mxu0 0.0
  %736 = vmatprep.subr.mxu0 0.0
  %737 = vmatpush1.msra.mxu0 0.0
  %738 = vmatprep.subr.mxu0 0.0
  %739 = vmatpush1.msra.mxu0 0.0
  %740 = vmatprep.subr.mxu0 0.0
  %741 = vmatpush1.msra.mxu0 0.0
  %742 = vmatprep.subr.mxu0 0.0
  %743 = vmatpush1.msra.mxu0 0.0
  %744 = vmatprep.subr.mxu0 0.0
  %745 = vmatpush1.msra.mxu0 0.0
  %746 = vmatprep.subr.mxu0 0.0
  %747 = vmatpush1.msra.mxu0 0.0
  %748 = vmatprep.subr.mxu0 0.0
  %749 = vmatpush1.msra.mxu0 0.0
  %750 = vmatprep.subr.mxu0 0.0
  %751 = vmatpush1.msra.mxu0 0.0
  %752 = vmatprep.subr.mxu0 0.0
  %753 = vmatpush1.msra.mxu0 0.0
  %754 = vmatprep.subr.mxu0 0.0
  %755 = vmatpush1.msra.mxu0 0.0
  %756 = vmatprep.subr.mxu0 0.0
  %757 = vmatpush1.msra.mxu0 0.0
  %758 = vmatprep.subr.mxu0 0.0
  %759 = vmatpush1.msra.mxu0 0.0
  %760 = vmatprep.subr.mxu0 0.0
  %761 = vmatpush1.msra.mxu0 0.0
  %762 = vmatprep.subr.mxu0 0.0
  %763 = vmatpush1.msra.mxu0 0.0
  %764 = vmatprep.subr.mxu0 0.0
  %765 = vmatpush1.msra.mxu0 0.0
  %766 = vmatprep.subr.mxu0 0.0
  %767 = vmatpush1.msra.mxu0 0.0
  %768 = vmatprep.subr.mxu0 0.0
  %769 = vmatpush1.msra.mxu0 0.0
  %770 = vmatprep.subr.mxu0 0.0
  %771 = vmatpush1.msra.mxu0 0.0
  %772 = vmatprep.subr.mxu0 0.0
  %773 = vmatpush1.msra.mxu0 0.0
  %774 = vmatprep.subr.mxu0 0.0
  %775 = vmatpush1.msra.mxu0 0.0
  %776 = vmatprep.subr.mxu0 0.0
  %777 = vmatpush1.msra.mxu0 0.0
  %778 = vmatprep.subr.mxu0 0.0
  %779 = vmatpush1.msra.mxu0 0.0
  %780 = vmatprep.subr.mxu0 0.0
  %781 = vmatpush1.msra.mxu0 0.0
  %782 = vmatprep.subr.mxu0 0.0
  %783 = vmatpush1.msra.mxu0 0.0
  %784 = vmatprep.subr.mxu0 0.0
  %785 = vmatpush1.msra.mxu0 0.0
  %786 = vmatprep.mubr.f32.mxu0 0.0
  %787 = vmatmul.mubr.f32.gmra.mrb[0].mxu0 %v178
  %v788 = vpop.f32.mrb[0].mxu0
  %v789 = vadd.f32 %v155, %v788
  %v790 = vpop.f32.mrb[0].mxu0
  %v791 = vadd.f32 %v159, %v790
  %792 = vmatprep.mubr.f32.mxu0 0.0
  %793 = vmatmul.mubr.f32.gmra.mrb[0].mxu0 %v181
  %v794 = vpop.f32.mrb[0].mxu0
  %v795 = vadd.f32 %v155, %v794
  %v796 = vpop.f32.mrb[0].mxu0
  %v797 = vadd.f32 %v159, %v796
  %798 = vdwg.mxu0
  %v799 = vmax.f32 %v250, 0.0
  %v800 = vmax.f32 %v252, 0.0
  %v801 = vmax.f32 %v327, 0.0
  %v802 = vmax.f32 %v329, 0.0
  %v803 = vmax.f32 %v404, 0.0
  %v804 = vmax.f32 %v406, 0.0
  %v805 = vmax.f32 %v481, 0.0
  %v806 = vmax.f32 %v483, 0.0
  %v807 = vmax.f32 %v558, 0.0
  %v808 = vmax.f32 %v560, 0.0
  %v809 = vmax.f32 %v635, 0.0
  %v810 = vmax.f32 %v637, 0.0
  %v811 = vmax.f32 %v712, 0.0
  %v812 = vmax.f32 %v714, 0.0
  %v813 = vmax.f32 %v789, 0.0
  %v814 = vmax.f32 %v791, 0.0
  %v815 = vmax.f32 %v256, 0.0
  %v816 = vmax.f32 %v258, 0.0
  %v817 = vmax.f32 %v333, 0.0
  %v818 = vmax.f32 %v335, 0.0
  %v819 = vmax.f32 %v410, 0.0
  %v820 = vmax.f32 %v412, 0.0
  %v821 = vmax.f32 %v487, 0.0
  %v822 = vmax.f32 %v489, 0.0
  %v823 = vmax.f32 %v564, 0.0
  %v824 = vmax.f32 %v566, 0.0
  %v825 = vmax.f32 %v641, 0.0
  %v826 = vmax.f32 %v643, 0.0
  %v827 = vmax.f32 %v718, 0.0
  %v828 = vmax.f32 %v720, 0.0
  %v829 = vmax.f32 %v795, 0.0
  %v830 = vmax.f32 %v797, 0.0
  %v831 = vld [vmem:[%s3] sm:$0xff]
  %v832 = vld [vmem:[%s3 + $0x8] sm:$0xff]
  %v833 = vld [vmem:[%s3 + $0x10] sm:$0xff]
  %v834 = vld [vmem:[%s3 + $0x18] sm:$0xff]
  %v835 = vld [vmem:[%s3 + $0x20] sm:$0xff]
  %v836 = vld [vmem:[%s3 + $0x28] sm:$0xff]
  %v837 = vld [vmem:[%s3 + $0x30] sm:$0xff]
  %v838 = vld [vmem:[%s3 + $0x38] sm:$0xff]
  %v839 = vld [vmem:[%s3 + $0x40] sm:$0xff]
  %v840 = vld [vmem:[%s3 + $0x48] sm:$0xff]
  %v841 = vld [vmem:[%s3 + $0x50] sm:$0xff]
  %v842 = vld [vmem:[%s3 + $0x58] sm:$0xff]
  %v843 = vld [vmem:[%s3 + $0x60] sm:$0xff]
  %v844 = vld [vmem:[%s3 + $0x68] sm:$0xff]
  %v845 = vld [vmem:[%s3 + $0x70] sm:$0xff]
  %v846 = vld [vmem:[%s3 + $0x78] sm:$0xff]
  %v847 = vld [vmem:[%s3 + $0x80] sm:$0xff]
  %v848 = vld [vmem:[%s3 + $0x88] sm:$0xff]
  %v849 = vld [vmem:[%s3 + $0x90] sm:$0xff]
  %v850 = vld [vmem:[%s3 + $0x98] sm:$0xff]
  %v851 = vld [vmem:[%s3 + $0xa0] sm:$0xff]
  %v852 = vld [vmem:[%s3 + $0xa8] sm:$0xff]
  %v853 = vld [vmem:[%s3 + $0xb0] sm:$0xff]
  %v854 = vld [vmem:[%s3 + $0xb8] sm:$0xff]
  %v855 = vld [vmem:[%s3 + $0xc0] sm:$0xff]
  %v856 = vld [vmem:[%s3 + $0xc8] sm:$0xff]
  %v857 = vld [vmem:[%s3 + $0xd0] sm:$0xff]
  %v858 = vld [vmem:[%s3 + $0xd8] sm:$0xff]
  %v859 = vld [vmem:[%s3 + $0xe0] sm:$0xff]
  %v860 = vld [vmem:[%s3 + $0xe8] sm:$0xff]
  %v861 = vld [vmem:[%s3 + $0xf0] sm:$0xff]
  %v862 = vld [vmem:[%s3 + $0xf8] sm:$0xff]
  %v863 = vld [vmem:[%s3 + $0x100] sm:$0xff]
  %v864 = vld [vmem:[%s3 + $0x108] sm:$0xff]
  %v865 = vld [vmem:[%s3 + $0x110] sm:$0xff]
  %v866 = vld [vmem:[%s3 + $0x118] sm:$0xff]
  %v867 = vld [vmem:[%s3 + $0x120] sm:$0xff]
  %v868 = vld [vmem:[%s3 + $0x128] sm:$0xff]
  %v869 = vld [vmem:[%s3 + $0x130] sm:$0xff]
  %v870 = vld [vmem:[%s3 + $0x138] sm:$0xff]
  %v871 = vld [vmem:[%s3 + $0x140] sm:$0xff]
  %v872 = vld [vmem:[%s3 + $0x148] sm:$0xff]
  %v873 = vld [vmem:[%s3 + $0x150] sm:$0xff]
  %v874 = vld [vmem:[%s3 + $0x158] sm:$0xff]
  %v875 = vld [vmem:[%s3 + $0x160] sm:$0xff]
  %v876 = vld [vmem:[%s3 + $0x168] sm:$0xff]
  %v877 = vld [vmem:[%s3 + $0x170] sm:$0xff]
  %v878 = vld [vmem:[%s3 + $0x178] sm:$0xff]
  %v879 = vld [vmem:[%s3 + $0x180] sm:$0xff]
  %v880 = vld [vmem:[%s3 + $0x188] sm:$0xff]
  %v881 = vld [vmem:[%s3 + $0x190] sm:$0xff]
  %v882 = vld [vmem:[%s3 + $0x198] sm:$0xff]
  %v883 = vld [vmem:[%s3 + $0x1a0] sm:$0xff]
  %v884 = vld [vmem:[%s3 + $0x1a8] sm:$0xff]
  %v885 = vld [vmem:[%s3 + $0x1b0] sm:$0xff]
  %v886 = vld [vmem:[%s3 + $0x1b8] sm:$0xff]
  %v887 = vld [vmem:[%s3 + $0x1c0] sm:$0xff]
  %v888 = vld [vmem:[%s3 + $0x1c8] sm:$0xff]
  %v889 = vld [vmem:[%s3 + $0x1d0] sm:$0xff]
  %v890 = vld [vmem:[%s3 + $0x1d8] sm:$0xff]
  %v891 = vld [vmem:[%s3 + $0x1e0] sm:$0xff]
  %v892 = vld [vmem:[%s3 + $0x1e8] sm:$0xff]
  %v893 = vld [vmem:[%s3 + $0x1f0] sm:$0xff]
  %v894 = vld [vmem:[%s3 + $0x1f8] sm:$0xff]
  %v895 = vld [vmem:[%s3 + $0x200] sm:$0xff]
  %v896 = vld [vmem:[%s3 + $0x208] sm:$0xff]
  %v897 = vld [vmem:[%s3 + $0x210] sm:$0xff]
  %v898 = vld [vmem:[%s3 + $0x218] sm:$0xff]
  %v899 = vld [vmem:[%s3 + $0x220] sm:$0xff]
  %v900 = vld [vmem:[%s3 + $0x228] sm:$0xff]
  %v901 = vld [vmem:[%s3 + $0x230] sm:$0xff]
  %v902 = vld [vmem:[%s3 + $0x238] sm:$0xff]
  %v903 = vld [vmem:[%s3 + $0x240] sm:$0xff]
  %v904 = vld [vmem:[%s3 + $0x248] sm:$0xff]
  %v905 = vld [vmem:[%s3 + $0x250] sm:$0xff]
  %v906 = vld [vmem:[%s3 + $0x258] sm:$0xff]
  %v907 = vld [vmem:[%s3 + $0x260] sm:$0xff]
  %v908 = vld [vmem:[%s3 + $0x268] sm:$0xff]
  %v909 = vld [vmem:[%s3 + $0x270] sm:$0xff]
  %v910 = vld [vmem:[%s3 + $0x278] sm:$0xff]
  %v911 = vld [vmem:[%s3 + $0x280] sm:$0xff]
  %v912 = vld [vmem:[%s3 + $0x288] sm:$0xff]
  %v913 = vld [vmem:[%s3 + $0x290] sm:$0xff]
  %v914 = vld [vmem:[%s3 + $0x298] sm:$0xff]
  %v915 = vld [vmem:[%s3 + $0x2a0] sm:$0xff]
  %v916 = vld [vmem:[%s3 + $0x2a8] sm:$0xff]
  %v917 = vld [vmem:[%s3 + $0x2b0] sm:$0xff]
  %v918 = vld [vmem:[%s3 + $0x2b8] sm:$0xff]
  %v919 = vld [vmem:[%s3 + $0x2c0] sm:$0xff]
  %v920 = vld [vmem:[%s3 + $0x2c8] sm:$0xff]
  %v921 = vld [vmem:[%s3 + $0x2d0] sm:$0xff]
  %v922 = vld [vmem:[%s3 + $0x2d8] sm:$0xff]
  %v923 = vld [vmem:[%s3 + $0x2e0] sm:$0xff]
  %v924 = vld [vmem:[%s3 + $0x2e8] sm:$0xff]
  %v925 = vld [vmem:[%s3 + $0x2f0] sm:$0xff]
  %v926 = vld [vmem:[%s3 + $0x2f8] sm:$0xff]
  %v927 = vld [vmem:[%s3 + $0x300] sm:$0xff]
  %v928 = vld [vmem:[%s3 + $0x308] sm:$0xff]
  %v929 = vld [vmem:[%s3 + $0x310] sm:$0xff]
  %v930 = vld [vmem:[%s3 + $0x318] sm:$0xff]
  %v931 = vld [vmem:[%s3 + $0x320] sm:$0xff]
  %v932 = vld [vmem:[%s3 + $0x328] sm:$0xff]
  %v933 = vld [vmem:[%s3 + $0x330] sm:$0xff]
  %v934 = vld [vmem:[%s3 + $0x338] sm:$0xff]
  %v935 = vld [vmem:[%s3 + $0x340] sm:$0xff]
  %v936 = vld [vmem:[%s3 + $0x348] sm:$0xff]
  %v937 = vld [vmem:[%s3 + $0x350] sm:$0xff]
  %v938 = vld [vmem:[%s3 + $0x358] sm:$0xff]
  %v939 = vld [vmem:[%s3 + $0x360] sm:$0xff]
  %v940 = vld [vmem:[%s3 + $0x368] sm:$0xff]
  %v941 = vld [vmem:[%s3 + $0x370] sm:$0xff]
  %v942 = vld [vmem:[%s3 + $0x378] sm:$0xff]
  %v943 = vld [vmem:[%s3 + $0x380] sm:$0xff]
  %v944 = vld [vmem:[%s3 + $0x388] sm:$0xff]
  %v945 = vld [vmem:[%s3 + $0x390] sm:$0xff]
  %v946 = vld [vmem:[%s3 + $0x398] sm:$0xff]
  %v947 = vld [vmem:[%s3 + $0x3a0] sm:$0xff]
  %v948 = vld [vmem:[%s3 + $0x3a8] sm:$0xff]
  %v949 = vld [vmem:[%s3 + $0x3b0] sm:$0xff]
  %v950 = vld [vmem:[%s3 + $0x3b8] sm:$0xff]
  %v951 = vld [vmem:[%s3 + $0x3c0] sm:$0xff]
  %v952 = vld [vmem:[%s3 + $0x3c8] sm:$0xff]
  %v953 = vld [vmem:[%s3 + $0x3d0] sm:$0xff]
  %v954 = vld [vmem:[%s3 + $0x3d8] sm:$0xff]
  %v955 = vld [vmem:[%s3 + $0x3e0] sm:$0xff]
  %v956 = vld [vmem:[%s3 + $0x3e8] sm:$0xff]
  %v957 = vld [vmem:[%s3 + $0x3f0] sm:$0xff]
  %v958 = vld [vmem:[%s3 + $0x3f8] sm:$0xff]
  %v959 = vld [vmem:[%s3 + $0x400] sm:$0xff]
  %v960 = vld [vmem:[%s3 + $0x408] sm:$0xff]
  %v961 = vld [vmem:[%s3 + $0x410] sm:$0xff]
  %v962 = vld [vmem:[%s3 + $0x418] sm:$0xff]
  %v963 = vld [vmem:[%s3 + $0x420] sm:$0xff]
  %v964 = vld [vmem:[%s3 + $0x428] sm:$0xff]
  %v965 = vld [vmem:[%s3 + $0x430] sm:$0xff]
  %v966 = vld [vmem:[%s3 + $0x438] sm:$0xff]
  %v967 = vld [vmem:[%s3 + $0x440] sm:$0xff]
  %v968 = vld [vmem:[%s3 + $0x448] sm:$0xff]
  %v969 = vld [vmem:[%s3 + $0x450] sm:$0xff]
  %v970 = vld [vmem:[%s3 + $0x458] sm:$0xff]
  %v971 = vld [vmem:[%s3 + $0x460] sm:$0xff]
  %v972 = vld [vmem:[%s3 + $0x468] sm:$0xff]
  %v973 = vld [vmem:[%s3 + $0x470] sm:$0xff]
  %v974 = vld [vmem:[%s3 + $0x478] sm:$0xff]
  %v975 = vld [vmem:[%s3 + $0x480] sm:$0xff]
  %v976 = vld [vmem:[%s3 + $0x488] sm:$0xff]
  %v977 = vld [vmem:[%s3 + $0x490] sm:$0xff]
  %v978 = vld [vmem:[%s3 + $0x498] sm:$0xff]
  %v979 = vld [vmem:[%s3 + $0x4a0] sm:$0xff]
  %v980 = vld [vmem:[%s3 + $0x4a8] sm:$0xff]
  %v981 = vld [vmem:[%s3 + $0x4b0] sm:$0xff]
  %v982 = vld [vmem:[%s3 + $0x4b8] sm:$0xff]
  %v983 = vld [vmem:[%s3 + $0x4c0] sm:$0xff]
  %v984 = vld [vmem:[%s3 + $0x4c8] sm:$0xff]
  %v985 = vld [vmem:[%s3 + $0x4d0] sm:$0xff]
  %v986 = vld [vmem:[%s3 + $0x4d8] sm:$0xff]
  %v987 = vld [vmem:[%s3 + $0x4e0] sm:$0xff]
  %v988 = vld [vmem:[%s3 + $0x4e8] sm:$0xff]
  %v989 = vld [vmem:[%s3 + $0x4f0] sm:$0xff]
  %v990 = vld [vmem:[%s3 + $0x4f8] sm:$0xff]
  %v991 = vld [vmem:[%s3 + $0x500] sm:$0xff]
  %v992 = vld [vmem:[%s3 + $0x508] sm:$0xff]
  %v993 = vld [vmem:[%s3 + $0x510] sm:$0xff]
  %v994 = vld [vmem:[%s3 + $0x518] sm:$0xff]
  %v995 = vld [vmem:[%s3 + $0x520] sm:$0xff]
  %v996 = vld [vmem:[%s3 + $0x528] sm:$0xff]
  %v997 = vld [vmem:[%s3 + $0x530] sm:$0xff]
  %v998 = vld [vmem:[%s3 + $0x538] sm:$0xff]
  %v999 = vld [vmem:[%s3 + $0x540] sm:$0xff]
  %v1000 = vld [vmem:[%s3 + $0x548] sm:$0xff]
  %v1001 = vld [vmem:[%s3 + $0x550] sm:$0xff]
  %v1002 = vld [vmem:[%s3 + $0x558] sm:$0xff]
  %v1003 = vld [vmem:[%s3 + $0x560] sm:$0xff]
  %v1004 = vld [vmem:[%s3 + $0x568] sm:$0xff]
  %v1005 = vld [vmem:[%s3 + $0x570] sm:$0xff]
  %v1006 = vld [vmem:[%s3 + $0x578] sm:$0xff]
  %v1007 = vld [vmem:[%s3 + $0x580] sm:$0xff]
  %v1008 = vld [vmem:[%s3 + $0x588] sm:$0xff]
  %v1009 = vld [vmem:[%s3 + $0x590] sm:$0xff]
  %v1010 = vld [vmem:[%s3 + $0x598] sm:$0xff]
  %v1011 = vld [vmem:[%s3 + $0x5a0] sm:$0xff]
  %v1012 = vld [vmem:[%s3 + $0x5a8] sm:$0xff]
  %v1013 = vld [vmem:[%s3 + $0x5b0] sm:$0xff]
  %v1014 = vld [vmem:[%s3 + $0x5b8] sm:$0xff]
  %v1015 = vld [vmem:[%s3 + $0x5c0] sm:$0xff]
  %v1016 = vld [vmem:[%s3 + $0x5c8] sm:$0xff]
  %v1017 = vld [vmem:[%s3 + $0x5d0] sm:$0xff]
  %v1018 = vld [vmem:[%s3 + $0x5d8] sm:$0xff]
  %v1019 = vld [vmem:[%s3 + $0x5e0] sm:$0xff]
  %v1020 = vld [vmem:[%s3 + $0x5e8] sm:$0xff]
  %v1021 = vld [vmem:[%s3 + $0x5f0] sm:$0xff]
  %v1022 = vld [vmem:[%s3 + $0x5f8] sm:$0xff]
  %v1023 = vld [vmem:[%s3 + $0x600] sm:$0xff]
  %v1024 = vld [vmem:[%s3 + $0x608] sm:$0xff]
  %v1025 = vld [vmem:[%s3 + $0x610] sm:$0xff]
  %v1026 = vld [vmem:[%s3 + $0x618] sm:$0xff]
  %v1027 = vld [vmem:[%s3 + $0x620] sm:$0xff]
  %v1028 = vld [vmem:[%s3 + $0x628] sm:$0xff]
  %v1029 = vld [vmem:[%s3 + $0x630] sm:$0xff]
  %v1030 = vld [vmem:[%s3 + $0x638] sm:$0xff]
  %v1031 = vld [vmem:[%s3 + $0x640] sm:$0xff]
  %v1032 = vld [vmem:[%s3 + $0x648] sm:$0xff]
  %v1033 = vld [vmem:[%s3 + $0x650] sm:$0xff]
  %v1034 = vld [vmem:[%s3 + $0x658] sm:$0xff]
  %v1035 = vld [vmem:[%s3 + $0x660] sm:$0xff]
  %v1036 = vld [vmem:[%s3 + $0x668] sm:$0xff]
  %v1037 = vld [vmem:[%s3 + $0x670] sm:$0xff]
  %v1038 = vld [vmem:[%s3 + $0x678] sm:$0xff]
  %v1039 = vld [vmem:[%s3 + $0x680] sm:$0xff]
  %v1040 = vld [vmem:[%s3 + $0x688] sm:$0xff]
  %v1041 = vld [vmem:[%s3 + $0x690] sm:$0xff]
  %v1042 = vld [vmem:[%s3 + $0x698] sm:$0xff]
  %v1043 = vld [vmem:[%s3 + $0x6a0] sm:$0xff]
  %v1044 = vld [vmem:[%s3 + $0x6a8] sm:$0xff]
  %v1045 = vld [vmem:[%s3 + $0x6b0] sm:$0xff]
  %v1046 = vld [vmem:[%s3 + $0x6b8] sm:$0xff]
  %v1047 = vld [vmem:[%s3 + $0x6c0] sm:$0xff]
  %v1048 = vld [vmem:[%s3 + $0x6c8] sm:$0xff]
  %v1049 = vld [vmem:[%s3 + $0x6d0] sm:$0xff]
  %v1050 = vld [vmem:[%s3 + $0x6d8] sm:$0xff]
  %v1051 = vld [vmem:[%s3 + $0x6e0] sm:$0xff]
  %v1052 = vld [vmem:[%s3 + $0x6e8] sm:$0xff]
  %v1053 = vld [vmem:[%s3 + $0x6f0] sm:$0xff]
  %v1054 = vld [vmem:[%s3 + $0x6f8] sm:$0xff]
  %v1055 = vld [vmem:[%s3 + $0x700] sm:$0xff]
  %v1056 = vld [vmem:[%s3 + $0x708] sm:$0xff]
  %v1057 = vld [vmem:[%s3 + $0x710] sm:$0xff]
  %v1058 = vld [vmem:[%s3 + $0x718] sm:$0xff]
  %v1059 = vld [vmem:[%s3 + $0x720] sm:$0xff]
  %v1060 = vld [vmem:[%s3 + $0x728] sm:$0xff]
  %v1061 = vld [vmem:[%s3 + $0x730] sm:$0xff]
  %v1062 = vld [vmem:[%s3 + $0x738] sm:$0xff]
  %v1063 = vld [vmem:[%s3 + $0x740] sm:$0xff]
  %v1064 = vld [vmem:[%s3 + $0x748] sm:$0xff]
  %v1065 = vld [vmem:[%s3 + $0x750] sm:$0xff]
  %v1066 = vld [vmem:[%s3 + $0x758] sm:$0xff]
  %v1067 = vld [vmem:[%s3 + $0x760] sm:$0xff]
  %v1068 = vld [vmem:[%s3 + $0x768] sm:$0xff]
  %v1069 = vld [vmem:[%s3 + $0x770] sm:$0xff]
  %v1070 = vld [vmem:[%s3 + $0x778] sm:$0xff]
  %v1071 = vld [vmem:[%s3 + $0x780] sm:$0xff]
  %v1072 = vld [vmem:[%s3 + $0x788] sm:$0xff]
  %v1073 = vld [vmem:[%s3 + $0x790] sm:$0xff]
  %v1074 = vld [vmem:[%s3 + $0x798] sm:$0xff]
  %v1075 = vld [vmem:[%s3 + $0x7a0] sm:$0xff]
  %v1076 = vld [vmem:[%s3 + $0x7a8] sm:$0xff]
  %v1077 = vld [vmem:[%s3 + $0x7b0] sm:$0xff]
  %v1078 = vld [vmem:[%s3 + $0x7b8] sm:$0xff]
  %v1079 = vld [vmem:[%s3 + $0x7c0] sm:$0xff]
  %v1080 = vld [vmem:[%s3 + $0x7c8] sm:$0xff]
  %v1081 = vld [vmem:[%s3 + $0x7d0] sm:$0xff]
  %v1082 = vld [vmem:[%s3 + $0x7d8] sm:$0xff]
  %v1083 = vld [vmem:[%s3 + $0x7e0] sm:$0xff]
  %v1084 = vld [vmem:[%s3 + $0x7e8] sm:$0xff]
  %v1085 = vld [vmem:[%s3 + $0x7f0] sm:$0xff]
  %v1086 = vld [vmem:[%s3 + $0x7f8] sm:$0xff]
  %v1087 = vld [vmem:[%s4] sm:$0x1]
  %v1089 = vlaneseq
  %v1090 = vshrl.u32 %v1089, 7
  %v1091 = vsub.s32 0, %v1090
  %v1092 = vrot.slane %v1087, %v1091
  %1094 = vmatprep.subr.mxu0 0.0
  %1095 = vmatpush1.msra.mxu0 %v831
  %1096 = vmatprep.subr.mxu0 0.0
  %1097 = vmatpush1.msra.mxu0 %v832
  %1098 = vmatprep.subr.mxu0 0.0
  %1099 = vmatpush1.msra.mxu0 %v833
  %1100 = vmatprep.subr.mxu0 0.0
  %1101 = vmatpush1.msra.mxu0 %v834
  %1102 = vmatprep.subr.mxu0 0.0
  %1103 = vmatpush1.msra.mxu0 %v835
  %1104 = vmatprep.subr.mxu0 0.0
  %1105 = vmatpush1.msra.mxu0 %v836
  %1106 = vmatprep.subr.mxu0 0.0
  %1107 = vmatpush1.msra.mxu0 %v837
  %1108 = vmatprep.subr.mxu0 0.0
  %1109 = vmatpush1.msra.mxu0 %v838
  %1110 = vmatprep.subr.mxu0 0.0
  %1111 = vmatpush1.msra.mxu0 %v839
  %1112 = vmatprep.subr.mxu0 0.0
  %1113 = vmatpush1.msra.mxu0 %v840
  %1114 = vmatprep.subr.mxu0 0.0
  %1115 = vmatpush1.msra.mxu0 %v841
  %1116 = vmatprep.subr.mxu0 0.0
  %1117 = vmatpush1.msra.mxu0 %v842
  %1118 = vmatprep.subr.mxu0 0.0
  %1119 = vmatpush1.msra.mxu0 %v843
  %1120 = vmatprep.subr.mxu0 0.0
  %1121 = vmatpush1.msra.mxu0 %v844
  %1122 = vmatprep.subr.mxu0 0.0
  %1123 = vmatpush1.msra.mxu0 %v845
  %1124 = vmatprep.subr.mxu0 0.0
  %1125 = vmatpush1.msra.mxu0 %v846
  %1126 = vmatprep.subr.mxu0 0.0
  %1127 = vmatpush1.msra.mxu0 %v847
  %1128 = vmatprep.subr.mxu0 0.0
  %1129 = vmatpush1.msra.mxu0 %v848
  %1130 = vmatprep.subr.mxu0 0.0
  %1131 = vmatpush1.msra.mxu0 %v849
  %1132 = vmatprep.subr.mxu0 0.0
  %1133 = vmatpush1.msra.mxu0 %v850
  %1134 = vmatprep.subr.mxu0 0.0
  %1135 = vmatpush1.msra.mxu0 %v851
  %1136 = vmatprep.subr.mxu0 0.0
  %1137 = vmatpush1.msra.mxu0 %v852
  %1138 = vmatprep.subr.mxu0 0.0
  %1139 = vmatpush1.msra.mxu0 %v853
  %1140 = vmatprep.subr.mxu0 0.0
  %1141 = vmatpush1.msra.mxu0 %v854
  %1142 = vmatprep.subr.mxu0 0.0
  %1143 = vmatpush1.msra.mxu0 %v855
  %1144 = vmatprep.subr.mxu0 0.0
  %1145 = vmatpush1.msra.mxu0 %v856
  %1146 = vmatprep.subr.mxu0 0.0
  %1147 = vmatpush1.msra.mxu0 %v857
  %1148 = vmatprep.subr.mxu0 0.0
  %1149 = vmatpush1.msra.mxu0 %v858
  %1150 = vmatprep.subr.mxu0 0.0
  %1151 = vmatpush1.msra.mxu0 %v859
  %1152 = vmatprep.subr.mxu0 0.0
  %1153 = vmatpush1.msra.mxu0 %v860
  %1154 = vmatprep.subr.mxu0 0.0
  %1155 = vmatpush1.msra.mxu0 %v861
  %1156 = vmatprep.subr.mxu0 0.0
  %1157 = vmatpush1.msra.mxu0 %v862
  %1158 = vmatprep.mubr.f32.mxu0 %v800
  %1159 = vmatmul.mubr.f32.gmra.mrb[0].mxu0 %v799
  %v1160 = vpop.f32.mrb[0].mxu0
  %v1161 = vadd.f32 %v1092, %v1160
  %v1162 = vpop.f32.mrb[0].mxu0
  %1163 = vmatprep.mubr.f32.mxu0 %v816
  %1164 = vmatmul.mubr.f32.gmra.mrb[0].mxu0 %v815
  %v1165 = vpop.f32.mrb[0].mxu0
  %v1166 = vadd.f32 %v1092, %v1165
  %v1167 = vpop.f32.mrb[0].mxu0
  %1168 = vdwg.mxu0
  %1169 = vmatprep.subr.mxu0 0.0
  %1170 = vmatpush1.msra.mxu0 %v863
  %1171 = vmatprep.subr.mxu0 0.0
  %1172 = vmatpush1.msra.mxu0 %v864
  %1173 = vmatprep.subr.mxu0 0.0
  %1174 = vmatpush1.msra.mxu0 %v865
  %1175 = vmatprep.subr.mxu0 0.0
  %1176 = vmatpush1.msra.mxu0 %v866
  %1177 = vmatprep.subr.mxu0 0.0
  %1178 = vmatpush1.msra.mxu0 %v867
  %1179 = vmatprep.subr.mxu0 0.0
  %1180 = vmatpush1.msra.mxu0 %v868
  %1181 = vmatprep.subr.mxu0 0.0
  %1182 = vmatpush1.msra.mxu0 %v869
  %1183 = vmatprep.subr.mxu0 0.0
  %1184 = vmatpush1.msra.mxu0 %v870
  %1185 = vmatprep.subr.mxu0 0.0
  %1186 = vmatpush1.msra.mxu0 %v871
  %1187 = vmatprep.subr.mxu0 0.0
  %1188 = vmatpush1.msra.mxu0 %v872
  %1189 = vmatprep.subr.mxu0 0.0
  %1190 = vmatpush1.msra.mxu0 %v873
  %1191 = vmatprep.subr.mxu0 0.0
  %1192 = vmatpush1.msra.mxu0 %v874
  %1193 = vmatprep.subr.mxu0 0.0
  %1194 = vmatpush1.msra.mxu0 %v875
  %1195 = vmatprep.subr.mxu0 0.0
  %1196 = vmatpush1.msra.mxu0 %v876
  %1197 = vmatprep.subr.mxu0 0.0
  %1198 = vmatpush1.msra.mxu0 %v877
  %1199 = vmatprep.subr.mxu0 0.0
  %1200 = vmatpush1.msra.mxu0 %v878
  %1201 = vmatprep.subr.mxu0 0.0
  %1202 = vmatpush1.msra.mxu0 %v879
  %1203 = vmatprep.subr.mxu0 0.0
  %1204 = vmatpush1.msra.mxu0 %v880
  %1205 = vmatprep.subr.mxu0 0.0
  %1206 = vmatpush1.msra.mxu0 %v881
  %1207 = vmatprep.subr.mxu0 0.0
  %1208 = vmatpush1.msra.mxu0 %v882
  %1209 = vmatprep.subr.mxu0 0.0
  %1210 = vmatpush1.msra.mxu0 %v883
  %1211 = vmatprep.subr.mxu0 0.0
  %1212 = vmatpush1.msra.mxu0 %v884
  %1213 = vmatprep.subr.mxu0 0.0
  %1214 = vmatpush1.msra.mxu0 %v885
  %1215 = vmatprep.subr.mxu0 0.0
  %1216 = vmatpush1.msra.mxu0 %v886
  %1217 = vmatprep.subr.mxu0 0.0
  %1218 = vmatpush1.msra.mxu0 %v887
  %1219 = vmatprep.subr.mxu0 0.0
  %1220 = vmatpush1.msra.mxu0 %v888
  %1221 = vmatprep.subr.mxu0 0.0
  %1222 = vmatpush1.msra.mxu0 %v889
  %1223 = vmatprep.subr.mxu0 0.0
  %1224 = vmatpush1.msra.mxu0 %v890
  %1225 = vmatprep.subr.mxu0 0.0
  %1226 = vmatpush1.msra.mxu0 %v891
  %1227 = vmatprep.subr.mxu0 0.0
  %1228 = vmatpush1.msra.mxu0 %v892
  %1229 = vmatprep.subr.mxu0 0.0
  %1230 = vmatpush1.msra.mxu0 %v893
  %1231 = vmatprep.subr.mxu0 0.0
  %1232 = vmatpush1.msra.mxu0 %v894
  %1233 = vmatprep.mubr.f32.mxu0 %v802
  %1234 = vmatmul.mubr.f32.gmra.mrb[0].mxu0 %v801
  %v1235 = vpop.f32.mrb[0].mxu0
  %v1236 = vadd.f32 %v1161, %v1235
  %v1237 = vpop.f32.mrb[0].mxu0
  %1238 = vmatprep.mubr.f32.mxu0 %v818
  %1239 = vmatmul.mubr.f32.gmra.mrb[0].mxu0 %v817
  %v1240 = vpop.f32.mrb[0].mxu0
  %v1241 = vadd.f32 %v1166, %v1240
  %v1242 = vpop.f32.mrb[0].mxu0
  %1243 = vdwg.mxu0
  %1244 = vmatprep.subr.mxu0 0.0
  %1245 = vmatpush1.msra.mxu0 %v895
  %1246 = vmatprep.subr.mxu0 0.0
  %1247 = vmatpush1.msra.mxu0 %v896
  %1248 = vmatprep.subr.mxu0 0.0
  %1249 = vmatpush1.msra.mxu0 %v897
  %1250 = vmatprep.subr.mxu0 0.0
  %1251 = vmatpush1.msra.mxu0 %v898
  %1252 = vmatprep.subr.mxu0 0.0
  %1253 = vmatpush1.msra.mxu0 %v899
  %1254 = vmatprep.subr.mxu0 0.0
  %1255 = vmatpush1.msra.mxu0 %v900
  %1256 = vmatprep.subr.mxu0 0.0
  %1257 = vmatpush1.msra.mxu0 %v901
  %1258 = vmatprep.subr.mxu0 0.0
  %1259 = vmatpush1.msra.mxu0 %v902
  %1260 = vmatprep.subr.mxu0 0.0
  %1261 = vmatpush1.msra.mxu0 %v903
  %1262 = vmatprep.subr.mxu0 0.0
  %1263 = vmatpush1.msra.mxu0 %v904
  %1264 = vmatprep.subr.mxu0 0.0
  %1265 = vmatpush1.msra.mxu0 %v905
  %1266 = vmatprep.subr.mxu0 0.0
  %1267 = vmatpush1.msra.mxu0 %v906
  %1268 = vmatprep.subr.mxu0 0.0
  %1269 = vmatpush1.msra.mxu0 %v907
  %1270 = vmatprep.subr.mxu0 0.0
  %1271 = vmatpush1.msra.mxu0 %v908
  %1272 = vmatprep.subr.mxu0 0.0
  %1273 = vmatpush1.msra.mxu0 %v909
  %1274 = vmatprep.subr.mxu0 0.0
  %1275 = vmatpush1.msra.mxu0 %v910
  %1276 = vmatprep.subr.mxu0 0.0
  %1277 = vmatpush1.msra.mxu0 %v911
  %1278 = vmatprep.subr.mxu0 0.0
  %1279 = vmatpush1.msra.mxu0 %v912
  %1280 = vmatprep.subr.mxu0 0.0
  %1281 = vmatpush1.msra.mxu0 %v913
  %1282 = vmatprep.subr.mxu0 0.0
  %1283 = vmatpush1.msra.mxu0 %v914
  %1284 = vmatprep.subr.mxu0 0.0
  %1285 = vmatpush1.msra.mxu0 %v915
  %1286 = vmatprep.subr.mxu0 0.0
  %1287 = vmatpush1.msra.mxu0 %v916
  %1288 = vmatprep.subr.mxu0 0.0
  %1289 = vmatpush1.msra.mxu0 %v917
  %1290 = vmatprep.subr.mxu0 0.0
  %1291 = vmatpush1.msra.mxu0 %v918
  %1292 = vmatprep.subr.mxu0 0.0
  %1293 = vmatpush1.msra.mxu0 %v919
  %1294 = vmatprep.subr.mxu0 0.0
  %1295 = vmatpush1.msra.mxu0 %v920
  %1296 = vmatprep.subr.mxu0 0.0
  %1297 = vmatpush1.msra.mxu0 %v921
  %1298 = vmatprep.subr.mxu0 0.0
  %1299 = vmatpush1.msra.mxu0 %v922
  %1300 = vmatprep.subr.mxu0 0.0
  %1301 = vmatpush1.msra.mxu0 %v923
  %1302 = vmatprep.subr.mxu0 0.0
  %1303 = vmatpush1.msra.mxu0 %v924
  %1304 = vmatprep.subr.mxu0 0.0
  %1305 = vmatpush1.msra.mxu0 %v925
  %1306 = vmatprep.subr.mxu0 0.0
  %1307 = vmatpush1.msra.mxu0 %v926
  %1308 = vmatprep.mubr.f32.mxu0 %v804
  %1309 = vmatmul.mubr.f32.gmra.mrb[0].mxu0 %v803
  %v1310 = vpop.f32.mrb[0].mxu0
  %v1311 = vadd.f32 %v1236, %v1310
  %v1312 = vpop.f32.mrb[0].mxu0
  %1313 = vmatprep.mubr.f32.mxu0 %v820
  %1314 = vmatmul.mubr.f32.gmra.mrb[0].mxu0 %v819
  %v1315 = vpop.f32.mrb[0].mxu0
  %v1316 = vadd.f32 %v1241, %v1315
  %v1317 = vpop.f32.mrb[0].mxu0
  %1318 = vdwg.mxu0
  %1319 = vmatprep.subr.mxu0 0.0
  %1320 = vmatpush1.msra.mxu0 %v927
  %1321 = vmatprep.subr.mxu0 0.0
  %1322 = vmatpush1.msra.mxu0 %v928
  %1323 = vmatprep.subr.mxu0 0.0
  %1324 = vmatpush1.msra.mxu0 %v929
  %1325 = vmatprep.subr.mxu0 0.0
  %1326 = vmatpush1.msra.mxu0 %v930
  %1327 = vmatprep.subr.mxu0 0.0
  %1328 = vmatpush1.msra.mxu0 %v931
  %1329 = vmatprep.subr.mxu0 0.0
  %1330 = vmatpush1.msra.mxu0 %v932
  %1331 = vmatprep.subr.mxu0 0.0
  %1332 = vmatpush1.msra.mxu0 %v933
  %1333 = vmatprep.subr.mxu0 0.0
  %1334 = vmatpush1.msra.mxu0 %v934
  %1335 = vmatprep.subr.mxu0 0.0
  %1336 = vmatpush1.msra.mxu0 %v935
  %1337 = vmatprep.subr.mxu0 0.0
  %1338 = vmatpush1.msra.mxu0 %v936
  %1339 = vmatprep.subr.mxu0 0.0
  %1340 = vmatpush1.msra.mxu0 %v937
  %1341 = vmatprep.subr.mxu0 0.0
  %1342 = vmatpush1.msra.mxu0 %v938
  %1343 = vmatprep.subr.mxu0 0.0
  %1344 = vmatpush1.msra.mxu0 %v939
  %1345 = vmatprep.subr.mxu0 0.0
  %1346 = vmatpush1.msra.mxu0 %v940
  %1347 = vmatprep.subr.mxu0 0.0
  %1348 = vmatpush1.msra.mxu0 %v941
  %1349 = vmatprep.subr.mxu0 0.0
  %1350 = vmatpush1.msra.mxu0 %v942
  %1351 = vmatprep.subr.mxu0 0.0
  %1352 = vmatpush1.msra.mxu0 %v943
  %1353 = vmatprep.subr.mxu0 0.0
  %1354 = vmatpush1.msra.mxu0 %v944
  %1355 = vmatprep.subr.mxu0 0.0
  %1356 = vmatpush1.msra.mxu0 %v945
  %1357 = vmatprep.subr.mxu0 0.0
  %1358 = vmatpush1.msra.mxu0 %v946
  %1359 = vmatprep.subr.mxu0 0.0
  %1360 = vmatpush1.msra.mxu0 %v947
  %1361 = vmatprep.subr.mxu0 0.0
  %1362 = vmatpush1.msra.mxu0 %v948
  %1363 = vmatprep.subr.mxu0 0.0
  %1364 = vmatpush1.msra.mxu0 %v949
  %1365 = vmatprep.subr.mxu0 0.0
  %1366 = vmatpush1.msra.mxu0 %v950
  %1367 = vmatprep.subr.mxu0 0.0
  %1368 = vmatpush1.msra.mxu0 %v951
  %1369 = vmatprep.subr.mxu0 0.0
  %1370 = vmatpush1.msra.mxu0 %v952
  %1371 = vmatprep.subr.mxu0 0.0
  %1372 = vmatpush1.msra.mxu0 %v953
  %1373 = vmatprep.subr.mxu0 0.0
  %1374 = vmatpush1.msra.mxu0 %v954
  %1375 = vmatprep.subr.mxu0 0.0
  %1376 = vmatpush1.msra.mxu0 %v955
  %1377 = vmatprep.subr.mxu0 0.0
  %1378 = vmatpush1.msra.mxu0 %v956
  %1379 = vmatprep.subr.mxu0 0.0
  %1380 = vmatpush1.msra.mxu0 %v957
  %1381 = vmatprep.subr.mxu0 0.0
  %1382 = vmatpush1.msra.mxu0 %v958
  %1383 = vmatprep.mubr.f32.mxu0 %v806
  %1384 = vmatmul.mubr.f32.gmra.mrb[0].mxu0 %v805
  %v1385 = vpop.f32.mrb[0].mxu0
  %v1386 = vadd.f32 %v1311, %v1385
  %v1387 = vpop.f32.mrb[0].mxu0
  %1388 = vmatprep.mubr.f32.mxu0 %v822
  %1389 = vmatmul.mubr.f32.gmra.mrb[0].mxu0 %v821
  %v1390 = vpop.f32.mrb[0].mxu0
  %v1391 = vadd.f32 %v1316, %v1390
  %v1392 = vpop.f32.mrb[0].mxu0
  %1393 = vdwg.mxu0
  %1394 = vmatprep.subr.mxu0 0.0
  %1395 = vmatpush1.msra.mxu0 %v959
  %1396 = vmatprep.subr.mxu0 0.0
  %1397 = vmatpush1.msra.mxu0 %v960
  %1398 = vmatprep.subr.mxu0 0.0
  %1399 = vmatpush1.msra.mxu0 %v961
  %1400 = vmatprep.subr.mxu0 0.0
  %1401 = vmatpush1.msra.mxu0 %v962
  %1402 = vmatprep.subr.mxu0 0.0
  %1403 = vmatpush1.msra.mxu0 %v963
  %1404 = vmatprep.subr.mxu0 0.0
  %1405 = vmatpush1.msra.mxu0 %v964
  %1406 = vmatprep.subr.mxu0 0.0
  %1407 = vmatpush1.msra.mxu0 %v965
  %1408 = vmatprep.subr.mxu0 0.0
  %1409 = vmatpush1.msra.mxu0 %v966
  %1410 = vmatprep.subr.mxu0 0.0
  %1411 = vmatpush1.msra.mxu0 %v967
  %1412 = vmatprep.subr.mxu0 0.0
  %1413 = vmatpush1.msra.mxu0 %v968
  %1414 = vmatprep.subr.mxu0 0.0
  %1415 = vmatpush1.msra.mxu0 %v969
  %1416 = vmatprep.subr.mxu0 0.0
  %1417 = vmatpush1.msra.mxu0 %v970
  %1418 = vmatprep.subr.mxu0 0.0
  %1419 = vmatpush1.msra.mxu0 %v971
  %1420 = vmatprep.subr.mxu0 0.0
  %1421 = vmatpush1.msra.mxu0 %v972
  %1422 = vmatprep.subr.mxu0 0.0
  %1423 = vmatpush1.msra.mxu0 %v973
  %1424 = vmatprep.subr.mxu0 0.0
  %1425 = vmatpush1.msra.mxu0 %v974
  %1426 = vmatprep.subr.mxu0 0.0
  %1427 = vmatpush1.msra.mxu0 %v975
  %1428 = vmatprep.subr.mxu0 0.0
  %1429 = vmatpush1.msra.mxu0 %v976
  %1430 = vmatprep.subr.mxu0 0.0
  %1431 = vmatpush1.msra.mxu0 %v977
  %1432 = vmatprep.subr.mxu0 0.0
  %1433 = vmatpush1.msra.mxu0 %v978
  %1434 = vmatprep.subr.mxu0 0.0
  %1435 = vmatpush1.msra.mxu0 %v979
  %1436 = vmatprep.subr.mxu0 0.0
  %1437 = vmatpush1.msra.mxu0 %v980
  %1438 = vmatprep.subr.mxu0 0.0
  %1439 = vmatpush1.msra.mxu0 %v981
  %1440 = vmatprep.subr.mxu0 0.0
  %1441 = vmatpush1.msra.mxu0 %v982
  %1442 = vmatprep.subr.mxu0 0.0
  %1443 = vmatpush1.msra.mxu0 %v983
  %1444 = vmatprep.subr.mxu0 0.0
  %1445 = vmatpush1.msra.mxu0 %v984
  %1446 = vmatprep.subr.mxu0 0.0
  %1447 = vmatpush1.msra.mxu0 %v985
  %1448 = vmatprep.subr.mxu0 0.0
  %1449 = vmatpush1.msra.mxu0 %v986
  %1450 = vmatprep.subr.mxu0 0.0
  %1451 = vmatpush1.msra.mxu0 %v987
  %1452 = vmatprep.subr.mxu0 0.0
  %1453 = vmatpush1.msra.mxu0 %v988
  %1454 = vmatprep.subr.mxu0 0.0
  %1455 = vmatpush1.msra.mxu0 %v989
  %1456 = vmatprep.subr.mxu0 0.0
  %1457 = vmatpush1.msra.mxu0 %v990
  %1458 = vmatprep.mubr.f32.mxu0 %v808
  %1459 = vmatmul.mubr.f32.gmra.mrb[0].mxu0 %v807
  %v1460 = vpop.f32.mrb[0].mxu0
  %v1461 = vadd.f32 %v1386, %v1460
  %v1462 = vpop.f32.mrb[0].mxu0
  %1463 = vmatprep.mubr.f32.mxu0 %v824
  %1464 = vmatmul.mubr.f32.gmra.mrb[0].mxu0 %v823
  %v1465 = vpop.f32.mrb[0].mxu0
  %v1466 = vadd.f32 %v1391, %v1465
  %v1467 = vpop.f32.mrb[0].mxu0
  %1468 = vdwg.mxu0
  %1469 = vmatprep.subr.mxu0 0.0
  %1470 = vmatpush1.msra.mxu0 %v991
  %1471 = vmatprep.subr.mxu0 0.0
  %1472 = vmatpush1.msra.mxu0 %v992
  %1473 = vmatprep.subr.mxu0 0.0
  %1474 = vmatpush1.msra.mxu0 %v993
  %1475 = vmatprep.subr.mxu0 0.0
  %1476 = vmatpush1.msra.mxu0 %v994
  %1477 = vmatprep.subr.mxu0 0.0
  %1478 = vmatpush1.msra.mxu0 %v995
  %1479 = vmatprep.subr.mxu0 0.0
  %1480 = vmatpush1.msra.mxu0 %v996
  %1481 = vmatprep.subr.mxu0 0.0
  %1482 = vmatpush1.msra.mxu0 %v997
  %1483 = vmatprep.subr.mxu0 0.0
  %1484 = vmatpush1.msra.mxu0 %v998
  %1485 = vmatprep.subr.mxu0 0.0
  %1486 = vmatpush1.msra.mxu0 %v999
  %1487 = vmatprep.subr.mxu0 0.0
  %1488 = vmatpush1.msra.mxu0 %v1000
  %1489 = vmatprep.subr.mxu0 0.0
  %1490 = vmatpush1.msra.mxu0 %v1001
  %1491 = vmatprep.subr.mxu0 0.0
  %1492 = vmatpush1.msra.mxu0 %v1002
  %1493 = vmatprep.subr.mxu0 0.0
  %1494 = vmatpush1.msra.mxu0 %v1003
  %1495 = vmatprep.subr.mxu0 0.0
  %1496 = vmatpush1.msra.mxu0 %v1004
  %1497 = vmatprep.subr.mxu0 0.0
  %1498 = vmatpush1.msra.mxu0 %v1005
  %1499 = vmatprep.subr.mxu0 0.0
  %1500 = vmatpush1.msra.mxu0 %v1006
  %1501 = vmatprep.subr.mxu0 0.0
  %1502 = vmatpush1.msra.mxu0 %v1007
  %1503 = vmatprep.subr.mxu0 0.0
  %1504 = vmatpush1.msra.mxu0 %v1008
  %1505 = vmatprep.subr.mxu0 0.0
  %1506 = vmatpush1.msra.mxu0 %v1009
  %1507 = vmatprep.subr.mxu0 0.0
  %1508 = vmatpush1.msra.mxu0 %v1010
  %1509 = vmatprep.subr.mxu0 0.0
  %1510 = vmatpush1.msra.mxu0 %v1011
  %1511 = vmatprep.subr.mxu0 0.0
  %1512 = vmatpush1.msra.mxu0 %v1012
  %1513 = vmatprep.subr.mxu0 0.0
  %1514 = vmatpush1.msra.mxu0 %v1013
  %1515 = vmatprep.subr.mxu0 0.0
  %1516 = vmatpush1.msra.mxu0 %v1014
  %1517 = vmatprep.subr.mxu0 0.0
  %1518 = vmatpush1.msra.mxu0 %v1015
  %1519 = vmatprep.subr.mxu0 0.0
  %1520 = vmatpush1.msra.mxu0 %v1016
  %1521 = vmatprep.subr.mxu0 0.0
  %1522 = vmatpush1.msra.mxu0 %v1017
  %1523 = vmatprep.subr.mxu0 0.0
  %1524 = vmatpush1.msra.mxu0 %v1018
  %1525 = vmatprep.subr.mxu0 0.0
  %1526 = vmatpush1.msra.mxu0 %v1019
  %1527 = vmatprep.subr.mxu0 0.0
  %1528 = vmatpush1.msra.mxu0 %v1020
  %1529 = vmatprep.subr.mxu0 0.0
  %1530 = vmatpush1.msra.mxu0 %v1021
  %1531 = vmatprep.subr.mxu0 0.0
  %1532 = vmatpush1.msra.mxu0 %v1022
  %1533 = vmatprep.mubr.f32.mxu0 %v810
  %1534 = vmatmul.mubr.f32.gmra.mrb[0].mxu0 %v809
  %v1535 = vpop.f32.mrb[0].mxu0
  %v1536 = vadd.f32 %v1461, %v1535
  %v1537 = vpop.f32.mrb[0].mxu0
  %1538 = vmatprep.mubr.f32.mxu0 %v826
  %1539 = vmatmul.mubr.f32.gmra.mrb[0].mxu0 %v825
  %v1540 = vpop.f32.mrb[0].mxu0
  %v1541 = vadd.f32 %v1466, %v1540
  %v1542 = vpop.f32.mrb[0].mxu0
  %1543 = vdwg.mxu0
  %1544 = vmatprep.subr.mxu0 0.0
  %1545 = vmatpush1.msra.mxu0 %v1023
  %1546 = vmatprep.subr.mxu0 0.0
  %1547 = vmatpush1.msra.mxu0 %v1024
  %1548 = vmatprep.subr.mxu0 0.0
  %1549 = vmatpush1.msra.mxu0 %v1025
  %1550 = vmatprep.subr.mxu0 0.0
  %1551 = vmatpush1.msra.mxu0 %v1026
  %1552 = vmatprep.subr.mxu0 0.0
  %1553 = vmatpush1.msra.mxu0 %v1027
  %1554 = vmatprep.subr.mxu0 0.0
  %1555 = vmatpush1.msra.mxu0 %v1028
  %1556 = vmatprep.subr.mxu0 0.0
  %1557 = vmatpush1.msra.mxu0 %v1029
  %1558 = vmatprep.subr.mxu0 0.0
  %1559 = vmatpush1.msra.mxu0 %v1030
  %1560 = vmatprep.subr.mxu0 0.0
  %1561 = vmatpush1.msra.mxu0 %v1031
  %1562 = vmatprep.subr.mxu0 0.0
  %1563 = vmatpush1.msra.mxu0 %v1032
  %1564 = vmatprep.subr.mxu0 0.0
  %1565 = vmatpush1.msra.mxu0 %v1033
  %1566 = vmatprep.subr.mxu0 0.0
  %1567 = vmatpush1.msra.mxu0 %v1034
  %1568 = vmatprep.subr.mxu0 0.0
  %1569 = vmatpush1.msra.mxu0 %v1035
  %1570 = vmatprep.subr.mxu0 0.0
  %1571 = vmatpush1.msra.mxu0 %v1036
  %1572 = vmatprep.subr.mxu0 0.0
  %1573 = vmatpush1.msra.mxu0 %v1037
  %1574 = vmatprep.subr.mxu0 0.0
  %1575 = vmatpush1.msra.mxu0 %v1038
  %1576 = vmatprep.subr.mxu0 0.0
  %1577 = vmatpush1.msra.mxu0 %v1039
  %1578 = vmatprep.subr.mxu0 0.0
  %1579 = vmatpush1.msra.mxu0 %v1040
  %1580 = vmatprep.subr.mxu0 0.0
  %1581 = vmatpush1.msra.mxu0 %v1041
  %1582 = vmatprep.subr.mxu0 0.0
  %1583 = vmatpush1.msra.mxu0 %v1042
  %1584 = vmatprep.subr.mxu0 0.0
  %1585 = vmatpush1.msra.mxu0 %v1043
  %1586 = vmatprep.subr.mxu0 0.0
  %1587 = vmatpush1.msra.mxu0 %v1044
  %1588 = vmatprep.subr.mxu0 0.0
  %1589 = vmatpush1.msra.mxu0 %v1045
  %1590 = vmatprep.subr.mxu0 0.0
  %1591 = vmatpush1.msra.mxu0 %v1046
  %1592 = vmatprep.subr.mxu0 0.0
  %1593 = vmatpush1.msra.mxu0 %v1047
  %1594 = vmatprep.subr.mxu0 0.0
  %1595 = vmatpush1.msra.mxu0 %v1048
  %1596 = vmatprep.subr.mxu0 0.0
  %1597 = vmatpush1.msra.mxu0 %v1049
  %1598 = vmatprep.subr.mxu0 0.0
  %1599 = vmatpush1.msra.mxu0 %v1050
  %1600 = vmatprep.subr.mxu0 0.0
  %1601 = vmatpush1.msra.mxu0 %v1051
  %1602 = vmatprep.subr.mxu0 0.0
  %1603 = vmatpush1.msra.mxu0 %v1052
  %1604 = vmatprep.subr.mxu0 0.0
  %1605 = vmatpush1.msra.mxu0 %v1053
  %1606 = vmatprep.subr.mxu0 0.0
  %1607 = vmatpush1.msra.mxu0 %v1054
  %1608 = vmatprep.mubr.f32.mxu0 %v812
  %1609 = vmatmul.mubr.f32.gmra.mrb[0].mxu0 %v811
  %v1610 = vpop.f32.mrb[0].mxu0
  %v1611 = vadd.f32 %v1536, %v1610
  %v1612 = vpop.f32.mrb[0].mxu0
  %1613 = vmatprep.mubr.f32.mxu0 %v828
  %1614 = vmatmul.mubr.f32.gmra.mrb[0].mxu0 %v827
  %v1615 = vpop.f32.mrb[0].mxu0
  %v1616 = vadd.f32 %v1541, %v1615
  %v1617 = vpop.f32.mrb[0].mxu0
  %1618 = vdwg.mxu0
  %1619 = vmatprep.subr.mxu0 0.0
  %1620 = vmatpush1.msra.mxu0 %v1055
  %1621 = vmatprep.subr.mxu0 0.0
  %1622 = vmatpush1.msra.mxu0 %v1056
  %1623 = vmatprep.subr.mxu0 0.0
  %1624 = vmatpush1.msra.mxu0 %v1057
  %1625 = vmatprep.subr.mxu0 0.0
  %1626 = vmatpush1.msra.mxu0 %v1058
  %1627 = vmatprep.subr.mxu0 0.0
  %1628 = vmatpush1.msra.mxu0 %v1059
  %1629 = vmatprep.subr.mxu0 0.0
  %1630 = vmatpush1.msra.mxu0 %v1060
  %1631 = vmatprep.subr.mxu0 0.0
  %1632 = vmatpush1.msra.mxu0 %v1061
  %1633 = vmatprep.subr.mxu0 0.0
  %1634 = vmatpush1.msra.mxu0 %v1062
  %1635 = vmatprep.subr.mxu0 0.0
  %1636 = vmatpush1.msra.mxu0 %v1063
  %1637 = vmatprep.subr.mxu0 0.0
  %1638 = vmatpush1.msra.mxu0 %v1064
  %1639 = vmatprep.subr.mxu0 0.0
  %1640 = vmatpush1.msra.mxu0 %v1065
  %1641 = vmatprep.subr.mxu0 0.0
  %1642 = vmatpush1.msra.mxu0 %v1066
  %1643 = vmatprep.subr.mxu0 0.0
  %1644 = vmatpush1.msra.mxu0 %v1067
  %1645 = vmatprep.subr.mxu0 0.0
  %1646 = vmatpush1.msra.mxu0 %v1068
  %1647 = vmatprep.subr.mxu0 0.0
  %1648 = vmatpush1.msra.mxu0 %v1069
  %1649 = vmatprep.subr.mxu0 0.0
  %1650 = vmatpush1.msra.mxu0 %v1070
  %1651 = vmatprep.subr.mxu0 0.0
  %1652 = vmatpush1.msra.mxu0 %v1071
  %1653 = vmatprep.subr.mxu0 0.0
  %1654 = vmatpush1.msra.mxu0 %v1072
  %1655 = vmatprep.subr.mxu0 0.0
  %1656 = vmatpush1.msra.mxu0 %v1073
  %1657 = vmatprep.subr.mxu0 0.0
  %1658 = vmatpush1.msra.mxu0 %v1074
  %1659 = vmatprep.subr.mxu0 0.0
  %1660 = vmatpush1.msra.mxu0 %v1075
  %1661 = vmatprep.subr.mxu0 0.0
  %1662 = vmatpush1.msra.mxu0 %v1076
  %1663 = vmatprep.subr.mxu0 0.0
  %1664 = vmatpush1.msra.mxu0 %v1077
  %1665 = vmatprep.subr.mxu0 0.0
  %1666 = vmatpush1.msra.mxu0 %v1078
  %1667 = vmatprep.subr.mxu0 0.0
  %1668 = vmatpush1.msra.mxu0 %v1079
  %1669 = vmatprep.subr.mxu0 0.0
  %1670 = vmatpush1.msra.mxu0 %v1080
  %1671 = vmatprep.subr.mxu0 0.0
  %1672 = vmatpush1.msra.mxu0 %v1081
  %1673 = vmatprep.subr.mxu0 0.0
  %1674 = vmatpush1.msra.mxu0 %v1082
  %1675 = vmatprep.subr.mxu0 0.0
  %1676 = vmatpush1.msra.mxu0 %v1083
  %1677 = vmatprep.subr.mxu0 0.0
  %1678 = vmatpush1.msra.mxu0 %v1084
  %1679 = vmatprep.subr.mxu0 0.0
  %1680 = vmatpush1.msra.mxu0 %v1085
  %1681 = vmatprep.subr.mxu0 0.0
  %1682 = vmatpush1.msra.mxu0 %v1086
  %1683 = vmatprep.mubr.f32.mxu0 %v814
  %1684 = vmatmul.mubr.f32.gmra.mrb[0].mxu0 %v813
  %v1685 = vpop.f32.mrb[0].mxu0
  %v1686 = vadd.f32 %v1611, %v1685
  %v1687 = vpop.f32.mrb[0].mxu0
  %1688 = vmatprep.mubr.f32.mxu0 %v830
  %1689 = vmatmul.mubr.f32.gmra.mrb[0].mxu0 %v829
  %v1690 = vpop.f32.mrb[0].mxu0
  %v1691 = vadd.f32 %v1616, %v1690
  %v1692 = vpop.f32.mrb[0].mxu0
  %1693 = vdwg.mxu0
  %v1694 = vadd.f32 %v26, %v1686
  %v1695 = vadd.f32 %v27, %v1691
  %v1696 = vld [vmem:[%s5] sm:$0x1]
  %v1697 = vld [vmem:[%s6] sm:$0x1]
  %v1698 = vsel %vm176, %v1694, 0.0
  %1699 = vadd.xlane.f32.xlu0 %v1698
  %v1700 = vpop.xlane.xlu0 %1699
  %v1701 = vsel %vm176, %v1695, 0.0
  %1702 = vadd.xlane.f32.xlu0 %v1701
  %v1703 = vpop.xlane.xlu0 %1702
  %v1704 = vrcp.pop 32.0
  %v1705 = vmul.f32 %v1700, %v1704
  %v1706 = vmul.f32 %v1703, %v1704
  %v1707 = vsub.f32 %v1694, %v1705
  %v1708 = vsub.f32 %v1695, %v1706
  %v1709 = vmul.f32 %v1707, %v1707
  %v1710 = vmul.f32 %v1708, %v1708
  %v1711 = vsel %vm176, %v1709, 0.0
  %1712 = vadd.xlane.f32.xlu0 %v1711
  %v1713 = vpop.xlane.xlu0 %1712
  %v1714 = vsel %vm176, %v1710, 0.0
  %1715 = vadd.xlane.f32.xlu0 %v1714
  %v1716 = vpop.xlane.xlu0 %1715
  %v1717 = vmul.f32 %v1713, %v1704
  %v1718 = vmul.f32 %v1716, %v1704
  %v1719 = vadd.f32 %v1717, 1e-05
  %v1720 = vadd.f32 %v1718, 1e-05
  %v1721 = vrsqrt.pop %v1719
  %v1722 = vrsqrt.pop %v1720
  %v1723 = vmul.f32 %v1707, %v1721
  %v1724 = vmul.f32 %v1708, %v1722
  %v1726 = vlaneseq
  %v1727 = vshrl.u32 %v1726, 7
  %v1728 = vsub.s32 0, %v1727
  %v1729 = vrot.slane %v1696, %v1728
  %v1731 = vmul.f32 %v1723, %v1729
  %v1732 = vmul.f32 %v1724, %v1729
  %v1734 = vlaneseq
  %v1735 = vshrl.u32 %v1734, 7
  %v1736 = vsub.s32 0, %v1735
  %v1737 = vrot.slane %v1697, %v1736
  %v1739 = vadd.f32 %v1731, %v1737
  %v1740 = vadd.f32 %v1732, %v1737
  %1741 = vst.msk [vmem:[%s7] sm:$0xff] %vm176, %v1739
  %1742 = vst.msk [vmem:[%s7 + $0x8] sm:$0xff] %vm176, %v1740
  // Predicated region
  $region30: #{captioning_transformer_forward.11} parent=0 // pred_check
    _
  $region31: #{captioning_transformer_forward.11} parent=0 // pred_check_branch
    %1744 = sbr.rel (0) target = $region33
  $region32: #{captioning_transformer_forward.11} parent=0 // pred_region
    _
  $region33: #{captioning_transformer_forward.11} parent=0 // pred_fallthru
    _
  // Predicated region
  $region34: #{captioning_transformer_forward.11} parent=0 // pred_check
    _
  $region35: #{captioning_transformer_forward.11} parent=0 // pred_check_branch
    %1746 = sbr.rel (0) target = $region37
  $region36: #{captioning_transformer_forward.11} parent=0 // pred_region
    _
  $region37: #{captioning_transformer_forward.11} parent=0 // pred_fallthru
    _

</llo_original>
